<compile_context>
chip_gen: v5e
topology: v5e:2x2
jax: 0.10.0
libtpu: 0.0.40
codegen_flags: <defaults>
</compile_context>

<pallas_src>
import functools

import jax
import jax.numpy as jnp
from jax import lax
from jax.experimental import pallas as pl
from jax.experimental.pallas import tpu as pltpu


def _round_up(x, m):
    return (x + m - 1) // m * m


def _model_seq_lab2_kernel(maxlen_ref, len_ref, x_ref, sen_ref,
                           wts_ref, bts_ref,
                           wih0_ref, b0_ref, whh0_ref,
                           wih1_ref, b1_ref, whh1_ref,
                           wfc_ref, bfc_ref,
                           out_ref,
                           xg, hbuf, h_sc, c_sc):
    # x_ref : (T*B, H)   time-major-flattened embeddings (bf16).
    # xg    : (T*B, 8H)  bf16 gate projections, cols 0:4H fwd / 4H:8H bwd.
    # hbuf  : (T*B, 2H)  bf16 bidirectional outputs (shared by both layers).
    # h_sc/c_sc : (B, 2H) f32 recurrent state, cols 0:H fwd / H:2H bwd.
    TB = x_ref.shape[0]
    BP = len_ref.shape[0]
    H2 = h_sc.shape[1]
    H = H2 // 2
    G4 = 4 * H
    n_steps = TB // BP
    bf16 = jnp.bfloat16

    # translate_sen: c0 for every layer/direction (PyTorch: c_0 = Linear(sent),
    # h_0 = 0).  bf16 MXU inputs, f32 accumulation.
    c0 = (jnp.dot(sen_ref[...], wts_ref[...],
                  preferred_element_type=jnp.float32) + bts_ref[...])     # (B, H)

    lengths = len_ref[...]                                 # (B, 1) int32
    max_len = maxlen_ref[0]

    # Zero only the t >= max_len tail of the shared output slab; every row with
    # t < max_len is rewritten each step by both layers (hbuf is reused as
    # layer-1's output buffer), so a single tail pass covers both layers.
    zeros_row = jnp.zeros((BP, H2), bf16)

    @pl.loop(max_len, n_steps)
    def _(t):
        hbuf[pl.ds(pl.multiple_of(t * BP, BP), BP), pl.ds(0, H2)] = zeros_row

    def run_layer(inp2d, wih_ref, b_ref, whh_ref):
        # Fused input projection for BOTH directions over all timesteps:
        # (T*B, Din) @ (Din, 8H), bf16 MXU inputs, f32 accumulation, bf16 store.
        xg[...] = (jnp.dot(inp2d, wih_ref[...],
                           preferred_element_type=jnp.float32)
                   + b_ref[...]).astype(bf16)

        # State layout: cols 0:H forward, H:2H backward.  h0 = 0, c0 = c0.
        h_sc[...] = jnp.zeros_like(h_sc)
        c_sc[pl.ds(0, BP), pl.ds(0, H)] = c0
        c_sc[pl.ds(0, BP), pl.ds(H, H)] = c0

        zeros_h = jnp.zeros((BP, H), jnp.float32)

        def cell(gates, c_prev):
            # PyTorch gate order i, f, g, o; i|f sigmoids fused in one EUP op.
            if_g = jax.nn.sigmoid(gates[:, 0:2 * H])
            g_g = jnp.tanh(gates[:, 2 * H:3 * H])
            o_g = jax.nn.sigmoid(gates[:, 3 * H:4 * H])
            c_new = if_g[:, H:2 * H] * c_prev + if_g[:, 0:H] * g_g
            h_new = o_g * jnp.tanh(c_new)
            return h_new, c_new

        @pl.loop(0, max_len)
        def _(s):
            tf = s                               # forward timestep
            tb = max_len - 1 - s                 # backward timestep
            row_f = pl.multiple_of(tf * BP, BP)
            row_b = pl.multiple_of(tb * BP, BP)

            h_prev = h_sc[...]
            c_prev = c_sc[...]

            # One block-diagonal recurrent matmul covers both directions:
            # cols 0:4H depend only on fwd h, cols 4H:8H only on bwd h.
            hh = jnp.dot(h_prev.astype(bf16), whh_ref[...],
                         preferred_element_type=jnp.float32)              # (B, 8H)

            gates_f = xg[pl.ds(row_f, BP), pl.ds(0, G4)] + hh[:, 0:G4]
            gates_b = xg[pl.ds(row_b, BP), pl.ds(G4, G4)] + hh[:, G4:2 * G4]

            hf_new, cf_new = cell(gates_f, c_prev[:, 0:H])
            hb_new, cb_new = cell(gates_b, c_prev[:, H:2 * H])

            # Packed-sequence mask: freeze state / zero output for t >= length.
            valid_f = lengths > tf
            valid_b = lengths > tb

            h_sc[pl.ds(0, BP), pl.ds(0, H)] = jnp.where(valid_f, hf_new,
                                                        h_prev[:, 0:H])
            h_sc[pl.ds(0, BP), pl.ds(H, H)] = jnp.where(valid_b, hb_new,
                                                        h_prev[:, H:2 * H])
            c_sc[pl.ds(0, BP), pl.ds(0, H)] = jnp.where(valid_f, cf_new,
                                                        c_prev[:, 0:H])
            c_sc[pl.ds(0, BP), pl.ds(H, H)] = jnp.where(valid_b, cb_new,
                                                        c_prev[:, H:2 * H])

            # Each direction writes straight into its half of the (T*B, 2H) slab.
            hbuf[pl.ds(row_f, BP), pl.ds(0, H)] = jnp.where(
                valid_f, hf_new, zeros_h).astype(bf16)
            hbuf[pl.ds(row_b, BP), pl.ds(H, H)] = jnp.where(
                valid_b, hb_new, zeros_h).astype(bf16)

    # Layer 0 on the embeddings; layer 1 on layer-0's bidirectional outputs.
    # hbuf is fully consumed by layer-1's xg projection (loaded below) before
    # layer 1 rewrites it, so the same slab serves both layers.
    run_layer(x_ref[...], wih0_ref, b0_ref, whh0_ref)
    # NOTE: inter-layer dropout (p=0.2) is train-mode only -> omitted.
    run_layer(hbuf[...], wih1_ref, b1_ref, whh1_ref)

    # Final Linear over the concatenated bidirectional outputs (lane-dense OUT).
    out_ref[...] = (jnp.dot(hbuf[...], wfc_ref[...],
                            preferred_element_type=jnp.float32)
                    + bfc_ref[...]).astype(out_ref.dtype)


def model_seq_lab2_forward(input_ids, lengths, sentences, params):
    """input_ids: (B, T) int32, lengths: (B,) int, sentences: (B, 768) f32."""
    B, T = input_ids.shape
    H = params["emb"].shape[1]
    OUT = params["w_fc"].shape[0]
    OUTP = _round_up(OUT, 128)
    BP = _round_up(max(B, 16), 16)        # (16,128) bf16 tile per per-step slice
    bf16 = jnp.bfloat16
    f32 = jnp.float32

    # ---- glue (plain JAX): embedding gather + layout plumbing ----
    emb = params["emb"][input_ids].astype(f32)                      # (B, T, H)
    emb = jnp.pad(emb, ((0, BP - B), (0, 0), (0, 0)))
    x2d = jnp.transpose(emb, (1, 0, 2)).reshape(T * BP, H).astype(bf16)

    sen = jnp.pad(sentences.astype(f32), ((0, BP - B), (0, 0))).astype(bf16)
    lens = jnp.pad(lengths.astype(jnp.int32), (0, BP - B)).reshape(BP, 1)
    max_len = jnp.minimum(jnp.max(lengths), T).astype(jnp.int32).reshape(1)

    wts = params["w_ts"].T.astype(bf16)                             # (768, H)
    bts = params["b_ts"].reshape(1, H).astype(f32)

    def cat_dir(wf, wb, bif, bhf, bib, bhb):
        w = jnp.concatenate([wf.T, wb.T], axis=1).astype(bf16)      # (Din, 8H)
        b = jnp.concatenate([bif + bhf, bib + bhb]).reshape(1, 8 * H).astype(f32)
        return w, b

    def block_diag(wf, wb):
        # (2H, 8H): fwd h rows feed cols 0:4H, bwd h rows feed cols 4H:8H; the
        # zero off-diagonal blocks keep the two directions exactly decoupled.
        z = jnp.zeros((H, 4 * H), f32)
        return jnp.concatenate(
            [jnp.concatenate([wf.T, z], axis=1),
             jnp.concatenate([z, wb.T], axis=1)], axis=0).astype(bf16)

    wih0, b0 = cat_dir(params["w_ih_l0_f"], params["w_ih_l0_b"],
                       params["b_ih_l0_f"], params["b_hh_l0_f"],
                       params["b_ih_l0_b"], params["b_hh_l0_b"])
    whh0 = block_diag(params["w_hh_l0_f"], params["w_hh_l0_b"])
    wih1, b1 = cat_dir(params["w_ih_l1_f"], params["w_ih_l1_b"],
                       params["b_ih_l1_f"], params["b_hh_l1_f"],
                       params["b_ih_l1_b"], params["b_hh_l1_b"])
    whh1 = block_diag(params["w_hh_l1_f"], params["w_hh_l1_b"])

    w_fc = jnp.pad(params["w_fc"].T, ((0, 0), (0, OUTP - OUT))).astype(bf16)
    b_fc = jnp.pad(params["b_fc"], (0, OUTP - OUT)).reshape(1, OUTP).astype(f32)

    vmem = functools.partial(pl.BlockSpec, memory_space=pltpu.MemorySpace.VMEM)
    smem = functools.partial(pl.BlockSpec, memory_space=pltpu.MemorySpace.SMEM)

    out2d = pl.pallas_call(
        _model_seq_lab2_kernel,
        out_shape=jax.ShapeDtypeStruct((T * BP, OUTP), jnp.float32),
        in_specs=[smem(), vmem(), vmem(), vmem(),
                  vmem(), vmem(),
                  vmem(), vmem(), vmem(),
                  vmem(), vmem(), vmem(),
                  vmem(), vmem()],
        out_specs=vmem(),
        scratch_shapes=[
            pltpu.VMEM((T * BP, 8 * H), bf16),   # xg (reused by both layers)
            pltpu.VMEM((T * BP, 2 * H), bf16),   # bi-dir outputs (both layers)
            pltpu.VMEM((BP, 2 * H), f32),        # h state (fwd | bwd columns)
            pltpu.VMEM((BP, 2 * H), f32),        # c state
        ],
        compiler_params=pltpu.CompilerParams(
            # TODO(synk): at real shapes (long T) stream xg in T-chunks instead
            # of raising this further (v7x physical VMEM = 64 MiB).
            vmem_limit_bytes=48 * 1024 * 1024),
    )(max_len, lens, x2d, sen, wts, bts, wih0, b0, whh0, wih1, b1, whh1,
      w_fc, b_fc)

    out = out2d.reshape(T, BP, OUTP).transpose(1, 0, 2)             # (BP, T, OUTP)
    return out[:B, :, :OUT]


def init_params(key, vocab, hidden, out_size, sen_size=768):
    """Deterministic init mimicking PyTorch's uniform(-1/sqrt(H), 1/sqrt(H))."""
    bound = 1.0 / float(hidden) ** 0.5
    keys = jax.random.split(key, 24)

    def u(k, shape):
        return jax.random.uniform(k, shape, jnp.float32, -bound, bound)

    p = dict(
        emb=jax.random.normal(keys[0], (vocab, hidden), jnp.float32),
        w_ts=u(keys[1], (hidden, sen_size)),
        b_ts=u(keys[2], (hidden,)),
        w_fc=u(keys[3], (out_size, 2 * hidden)),
        b_fc=u(keys[4], (out_size,)),
    )
    ki = 5
    for layer, din in ((0, hidden), (1, 2 * hidden)):
        for d in ("f", "b"):
            p[f"w_ih_l{layer}_{d}"] = u(keys[ki], (4 * hidden, din)); ki += 1
            p[f"w_hh_l{layer}_{d}"] = u(keys[ki], (4 * hidden, hidden)); ki += 1
            p[f"b_ih_l{layer}_{d}"] = u(keys[ki], (4 * hidden,)); ki += 1
            p[f"b_hh_l{layer}_{d}"] = u(keys[ki], (4 * hidden,)); ki += 1
    return p


def reference_forward(input_ids, lengths, sentences, params,
                      mxu_dtype=jnp.float32):
    """Pure-JAX reference with identical packed-sequence semantics.

    With mxu_dtype=bfloat16 it mirrors the kernel's mixed-precision scheme
    exactly (bf16 MXU inputs, bf16-stored gate projections / layer outputs,
    f32 accumulation and f32 recurrent h/c state)."""
    f32 = jnp.float32

    def mm(a, b):
        return jnp.dot(a.astype(mxu_dtype), b.astype(mxu_dtype),
                       preferred_element_type=f32)

    emb = params["emb"][input_ids].astype(f32)            # (B, T, H)
    B, T, H = emb.shape
    c0 = mm(sentences.astype(f32), params["w_ts"].T) + params["b_ts"]

    def direction(xgate, whh, reverse):
        def cell(carry, t):
            h, c = carry
            gates = xgate[:, t, :].astype(f32) + mm(h, whh.T)
            i = jax.nn.sigmoid(gates[:, 0:H])
            f = jax.nn.sigmoid(gates[:, H:2 * H])
            g = jnp.tanh(gates[:, 2 * H:3 * H])
            o = jax.nn.sigmoid(gates[:, 3 * H:4 * H])
            c_new = f * c + i * g
            h_new = o * jnp.tanh(c_new)
            valid = (lengths > t)[:, None]
            return ((jnp.where(valid, h_new, h), jnp.where(valid, c_new, c)),
                    jnp.where(valid, h_new, 0.0))

        ts = jnp.arange(T)[::-1] if reverse else jnp.arange(T)
        _, outs = lax.scan(cell, (jnp.zeros((B, H), f32), c0), ts)
        outs = jnp.transpose(outs, (1, 0, 2))
        return outs[:, ::-1, :] if reverse else outs

    def layer(x, l):
        outs = []
        for d, rev in (("f", False), ("b", True)):
            pre = f"l{l}_{d}"
            b = params[f"b_ih_{pre}"] + params[f"b_hh_{pre}"]
            xgate = (mm(x, params[f"w_ih_{pre}"].T) + b).astype(mxu_dtype)
            outs.append(direction(xgate, params[f"w_hh_{pre}"], rev))
        return jnp.concatenate(outs, axis=-1)

    y = layer(layer(emb, 0), 1)
    return mm(y, params["w_fc"].T) + params["b_fc"]


if __name__ == "__main__":
    # Small shapes; the real module uses hidden_dim=150, T up to sentence len.
    B, T, H, OUT, V, SEN = 2, 8, 128, 132, 97, 768

    key = jax.random.PRNGKey(0)
    kid, ks, kp = jax.random.split(key, 3)
    input_ids = jax.random.randint(kid, (B, T), 0, V, dtype=jnp.int32)
    sentences = jax.random.normal(ks, (B, SEN), jnp.float32)
    lengths = jnp.array([T, T - 3], dtype=jnp.int32)      # max(lengths) == T

    params = init_params(kp, V, H, OUT, SEN)

    out = jax.block_until_ready(
        model_seq_lab2_forward(input_ids, lengths, sentences, params))
    assert out.shape == (B, T, OUT), out.shape

    # Tight check vs. a reference that replicates the kernel's mixed-precision
    # scheme (bf16 MXU inputs / bf16 stored activations, f32 accum + state).
    ref_mixed = reference_forward(input_ids, lengths, sentences, params,
                                  mxu_dtype=jnp.bfloat16)
    err_mixed = float(jnp.max(jnp.abs(out - ref_mixed)))
    assert jnp.allclose(out, ref_mixed, rtol=5e-3, atol=5e-3), \
        f"mixed-precision-matched max_err={err_mixed}"

    # Loose sanity vs. a full-f32 reference (bf16 MXU inputs add small drift).
    with jax.default_matmul_precision("highest"):
        ref_f32 = reference_forward(input_ids, lengths, sentences, params,
                                    mxu_dtype=jnp.float32)
    err_f32 = float(jnp.max(jnp.abs(out - ref_f32)))
    assert err_f32 < 1.5e-1, f"f32 max_err={err_f32}"

    print("KERNEL_OK")
</pallas_src>

<mosaic_0001>
module attributes {stable_mosaic.version = 11 : i64} {
  func.func @_model_seq_lab2_kernel(%arg0: memref<1xi32, #tpu.memory_space<smem>>, %arg1: memref<16x1xi32, #tpu.memory_space<vmem>>, %arg2: memref<128x128xbf16, #tpu.memory_space<vmem>>, %arg3: memref<16x768xbf16, #tpu.memory_space<vmem>>, %arg4: memref<768x128xbf16, #tpu.memory_space<vmem>>, %arg5: memref<1x128xf32, #tpu.memory_space<vmem>>, %arg6: memref<128x1024xbf16, #tpu.memory_space<vmem>>, %arg7: memref<1x1024xf32, #tpu.memory_space<vmem>>, %arg8: memref<256x1024xbf16, #tpu.memory_space<vmem>>, %arg9: memref<256x1024xbf16, #tpu.memory_space<vmem>>, %arg10: memref<1x1024xf32, #tpu.memory_space<vmem>>, %arg11: memref<256x1024xbf16, #tpu.memory_space<vmem>>, %arg12: memref<256x256xbf16, #tpu.memory_space<vmem>>, %arg13: memref<1x256xf32, #tpu.memory_space<vmem>>, %arg14: memref<128x256xf32, #tpu.memory_space<vmem>>, %arg15: memref<128x1024xbf16, #tpu.memory_space<vmem>>, %arg16: memref<128x256xbf16, #tpu.memory_space<vmem>>, %arg17: memref<16x256xf32, #tpu.memory_space<vmem>>, %arg18: memref<16x256xf32, #tpu.memory_space<vmem>>) attributes {dimension_semantics = [], scalar_prefetch = 0 : i64, scratch_operands = 4 : i64, tpu.core_type = #tpu.core_type<tc>} {
    %c0 = arith.constant 0 : index
    %c0_0 = arith.constant 0 : index
    %0 = vector.load %arg3[%c0, %c0_0] : memref<16x768xbf16, #tpu.memory_space<vmem>>, vector<16x768xbf16>
    %c0_1 = arith.constant 0 : index
    %c0_2 = arith.constant 0 : index
    %1 = vector.load %arg4[%c0_1, %c0_2] : memref<768x128xbf16, #tpu.memory_space<vmem>>, vector<768x128xbf16>
    %cst = arith.constant dense<0.000000e+00> : vector<16x128xf32>
    %2 = tpu.matmul %0, %1, %cst {dimension_numbers = #tpu.dot_dimension_numbers<[1], [0], [0], [1], [0, 0, 1, 1], [], []>} : vector<16x768xbf16>, vector<768x128xbf16>, vector<16x128xf32> -> vector<16x128xf32>
    %c0_3 = arith.constant 0 : index
    %c0_4 = arith.constant 0 : index
    %3 = vector.load %arg5[%c0_3, %c0_4] : memref<1x128xf32, #tpu.memory_space<vmem>>, vector<1x128xf32>
    %4 = vector.broadcast %3 : vector<1x128xf32> to vector<16x128xf32>
    %5 = arith.addf %2, %4 : vector<16x128xf32>
    %c0_5 = arith.constant 0 : index
    %c0_6 = arith.constant 0 : index
    %6 = vector.load %arg1[%c0_5, %c0_6] : memref<16x1xi32, #tpu.memory_space<vmem>>, vector<16x1xi32>
    %c0_7 = arith.constant 0 : index
    %7 = memref.load %arg0[%c0_7] : memref<1xi32, #tpu.memory_space<smem>>
    %cst_8 = arith.constant 0.000000e+00 : bf16
    %8 = vector.broadcast %cst_8 : bf16 to vector<16x256xbf16>
    %c8_i32 = arith.constant 8 : i32
    %9 = arith.subi %c8_i32, %7 : i32
    %c1_i32 = arith.constant 1 : i32
    %c1_i32_9 = arith.constant 1 : i32
    %10 = arith.subi %c1_i32, %c1_i32_9 : i32
    %11 = arith.addi %9, %10 : i32
    %c1_i32_10 = arith.constant 1 : i32
    %12 = arith.divsi %11, %c1_i32_10 : i32
    %c1_i32_11 = arith.constant 1 : i32
    %c0_i32 = arith.constant 0 : i32
    %13 = arith.subi %12, %c0_i32 : i32
    %14 = arith.addi %c0_i32, %13 : i32
    %c1_i32_12 = arith.constant 1 : i32
    scf.for %arg19 = %c0_i32 to %14 step %c1_i32_12  : i32 {
      %60 = arith.muli %arg19, %c1_i32_11 : i32
      %61 = arith.addi %7, %60 : i32
      %c16_i32 = arith.constant 16 : i32
      %62 = arith.muli %61, %c16_i32 : i32
      %63 = tpu.assume_multiple %62, 16 : i32
      %64 = arith.index_cast %63 : i32 to index
      %c0_71 = arith.constant 0 : index
      %65 = vector.load %arg16[%64, %c0_71] : memref<128x256xbf16, #tpu.memory_space<vmem>>, vector<16x256xbf16>
      tpu.vector_store %arg16[%64, %c0_71], %8 {strides = array<i32>} : memref<128x256xbf16, #tpu.memory_space<vmem>>, vector<16x256xbf16>,
    }
    %c0_13 = arith.constant 0 : index
    %c0_14 = arith.constant 0 : index
    %15 = vector.load %arg2[%c0_13, %c0_14] : memref<128x128xbf16, #tpu.memory_space<vmem>>, vector<128x128xbf16>
    %c0_15 = arith.constant 0 : index
    %c0_16 = arith.constant 0 : index
    %16 = vector.load %arg6[%c0_15, %c0_16] : memref<128x1024xbf16, #tpu.memory_space<vmem>>, vector<128x1024xbf16>
    %cst_17 = arith.constant dense<0.000000e+00> : vector<128x1024xf32>
    %17 = tpu.matmul %15, %16, %cst_17 {dimension_numbers = #tpu.dot_dimension_numbers<[1], [0], [0], [1], [0, 0, 1, 1], [], []>} : vector<128x128xbf16>, vector<128x1024xbf16>, vector<128x1024xf32> -> vector<128x1024xf32>
    %c0_18 = arith.constant 0 : index
    %c0_19 = arith.constant 0 : index
    %18 = vector.load %arg7[%c0_18, %c0_19] : memref<1x1024xf32, #tpu.memory_space<vmem>>, vector<1x1024xf32>
    %19 = vector.broadcast %18 : vector<1x1024xf32> to vector<128x1024xf32>
    %20 = arith.addf %17, %19 : vector<128x1024xf32>
    %21 = arith.truncf %20 : vector<128x1024xf32> to vector<128x1024xbf16>
    %c0_20 = arith.constant 0 : index
    %c0_21 = arith.constant 0 : index
    %22 = vector.load %arg15[%c0_20, %c0_21] : memref<128x1024xbf16, #tpu.memory_space<vmem>>, vector<128x1024xbf16>
    tpu.vector_store %arg15[%c0_20, %c0_21], %21 {strides = array<i32>} : memref<128x1024xbf16, #tpu.memory_space<vmem>>, vector<128x1024xbf16>,
    %cst_22 = arith.constant 0.000000e+00 : f32
    %23 = vector.broadcast %cst_22 : f32 to vector<16x256xf32>
    %c0_23 = arith.constant 0 : index
    %c0_24 = arith.constant 0 : index
    %24 = vector.load %arg17[%c0_23, %c0_24] : memref<16x256xf32, #tpu.memory_space<vmem>>, vector<16x256xf32>
    tpu.vector_store %arg17[%c0_23, %c0_24], %23 {strides = array<i32>} : memref<16x256xf32, #tpu.memory_space<vmem>>, vector<16x256xf32>,
    %c0_25 = arith.constant 0 : index
    %c0_26 = arith.constant 0 : index
    %25 = vector.load %arg18[%c0_25, %c0_26] : memref<16x256xf32, #tpu.memory_space<vmem>>, vector<16x128xf32>
    tpu.vector_store %arg18[%c0_25, %c0_26], %5 {strides = array<i32>} : memref<16x256xf32, #tpu.memory_space<vmem>>, vector<16x128xf32>,
    %c0_27 = arith.constant 0 : index
    %c128 = arith.constant 128 : index
    %26 = vector.load %arg18[%c0_27, %c128] : memref<16x256xf32, #tpu.memory_space<vmem>>, vector<16x128xf32>
    tpu.vector_store %arg18[%c0_27, %c128], %5 {strides = array<i32>} : memref<16x256xf32, #tpu.memory_space<vmem>>, vector<16x128xf32>,
    %cst_28 = arith.constant 0.000000e+00 : f32
    %27 = vector.broadcast %cst_28 : f32 to vector<16x128xf32>
    %c0_i32_29 = arith.constant 0 : i32
    %28 = arith.subi %7, %c0_i32_29 : i32
    %c1_i32_30 = arith.constant 1 : i32
    %c1_i32_31 = arith.constant 1 : i32
    %29 = arith.subi %c1_i32_30, %c1_i32_31 : i32
    %30 = arith.addi %28, %29 : i32
    %c1_i32_32 = arith.constant 1 : i32
    %31 = arith.divsi %30, %c1_i32_32 : i32
    %c1_i32_33 = arith.constant 1 : i32
    %c0_i32_34 = arith.constant 0 : i32
    %c0_i32_35 = arith.constant 0 : i32
    %32 = arith.subi %31, %c0_i32_35 : i32
    %33 = arith.addi %c0_i32_35, %32 : i32
    %c1_i32_36 = arith.constant 1 : i32
    scf.for %arg19 = %c0_i32_35 to %33 step %c1_i32_36  : i32 {
      %60 = arith.muli %arg19, %c1_i32_33 : i32
      %61 = arith.addi %c0_i32_34, %60 : i32
      %c1_i32_71 = arith.constant 1 : i32
      %62 = arith.subi %7, %c1_i32_71 : i32
      %63 = arith.subi %62, %61 : i32
      %c16_i32 = arith.constant 16 : i32
      %64 = arith.muli %61, %c16_i32 : i32
      %65 = tpu.assume_multiple %64, 16 : i32
      %c16_i32_72 = arith.constant 16 : i32
      %66 = arith.muli %63, %c16_i32_72 : i32
      %67 = tpu.assume_multiple %66, 16 : i32
      %c0_73 = arith.constant 0 : index
      %c0_74 = arith.constant 0 : index
      %68 = vector.load %arg17[%c0_73, %c0_74] : memref<16x256xf32, #tpu.memory_space<vmem>>, vector<16x256xf32>
      %c0_75 = arith.constant 0 : index
      %c0_76 = arith.constant 0 : index
      %69 = vector.load %arg18[%c0_75, %c0_76] : memref<16x256xf32, #tpu.memory_space<vmem>>, vector<16x256xf32>
      %70 = arith.truncf %68 : vector<16x256xf32> to vector<16x256xbf16>
      %c0_77 = arith.constant 0 : index
      %c0_78 = arith.constant 0 : index
      %71 = vector.load %arg8[%c0_77, %c0_78] : memref<256x1024xbf16, #tpu.memory_space<vmem>>, vector<256x1024xbf16>
      %cst_79 = arith.constant dense<0.000000e+00> : vector<16x1024xf32>
      %72 = tpu.matmul %70, %71, %cst_79 {dimension_numbers = #tpu.dot_dimension_numbers<[1], [0], [0], [1], [0, 0, 1, 1], [], []>} : vector<16x256xbf16>, vector<256x1024xbf16>, vector<16x1024xf32> -> vector<16x1024xf32>
      %73 = arith.index_cast %65 : i32 to index
      %c0_80 = arith.constant 0 : index
      %74 = vector.load %arg15[%73, %c0_80] : memref<128x1024xbf16, #tpu.memory_space<vmem>>, vector<16x512xbf16>
      %75 = vector.extract_strided_slice %72 {offsets = [0, 0], sizes = [16, 512], strides = [1, 1]} : vector<16x1024xf32> to vector<16x512xf32>
      %76 = arith.extf %74 : vector<16x512xbf16> to vector<16x512xf32>
      %77 = arith.addf %76, %75 : vector<16x512xf32>
      %78 = arith.index_cast %67 : i32 to index
      %c512 = arith.constant 512 : index
      %79 = vector.load %arg15[%78, %c512] : memref<128x1024xbf16, #tpu.memory_space<vmem>>, vector<16x512xbf16>
      %80 = vector.extract_strided_slice %72 {offsets = [0, 512], sizes = [16, 512], strides = [1, 1]} : vector<16x1024xf32> to vector<16x512xf32>
      %81 = arith.extf %79 : vector<16x512xbf16> to vector<16x512xf32>
      %82 = arith.addf %81, %80 : vector<16x512xf32>
      %83 = vector.extract_strided_slice %69 {offsets = [0, 0], sizes = [16, 128], strides = [1, 1]} : vector<16x256xf32> to vector<16x128xf32>
      %84 = vector.extract_strided_slice %77 {offsets = [0, 0], sizes = [16, 256], strides = [1, 1]} : vector<16x512xf32> to vector<16x256xf32>
      %85 = arith.negf %84 : vector<16x256xf32>
      %86 = math.exp %85 : vector<16x256xf32>
      %cst_81 = arith.constant 1.000000e+00 : f32
      %87 = vector.broadcast %cst_81 : f32 to vector<16x256xf32>
      %88 = arith.addf %87, %86 : vector<16x256xf32>
      %89 = arith.divf %87, %88 : vector<16x256xf32>
      %90 = vector.extract_strided_slice %77 {offsets = [0, 256], sizes = [16, 128], strides = [1, 1]} : vector<16x512xf32> to vector<16x128xf32>
      %91 = math.tanh %90 : vector<16x128xf32>
      %92 = vector.extract_strided_slice %77 {offsets = [0, 384], sizes = [16, 128], strides = [1, 1]} : vector<16x512xf32> to vector<16x128xf32>
      %93 = arith.negf %92 : vector<16x128xf32>
      %94 = math.exp %93 : vector<16x128xf32>
      %cst_82 = arith.constant 1.000000e+00 : f32
      %95 = vector.broadcast %cst_82 : f32 to vector<16x128xf32>
      %96 = arith.addf %95, %94 : vector<16x128xf32>
      %97 = arith.divf %95, %96 : vector<16x128xf32>
      %98 = vector.extract_strided_slice %89 {offsets = [0, 128], sizes = [16, 128], strides = [1, 1]} : vector<16x256xf32> to vector<16x128xf32>
      %99 = arith.mulf %98, %83 : vector<16x128xf32>
      %100 = vector.extract_strided_slice %89 {offsets = [0, 0], sizes = [16, 128], strides = [1, 1]} : vector<16x256xf32> to vector<16x128xf32>
      %101 = arith.mulf %100, %91 : vector<16x128xf32>
      %102 = arith.addf %99, %101 : vector<16x128xf32>
      %103 = math.tanh %102 : vector<16x128xf32>
      %104 = arith.mulf %97, %103 : vector<16x128xf32>
      %105 = vector.extract_strided_slice %69 {offsets = [0, 128], sizes = [16, 128], strides = [1, 1]} : vector<16x256xf32> to vector<16x128xf32>
      %106 = vector.extract_strided_slice %82 {offsets = [0, 0], sizes = [16, 256], strides = [1, 1]} : vector<16x512xf32> to vector<16x256xf32>
      %107 = arith.negf %106 : vector<16x256xf32>
      %108 = math.exp %107 : vector<16x256xf32>
      %cst_83 = arith.constant 1.000000e+00 : f32
      %109 = vector.broadcast %cst_83 : f32 to vector<16x256xf32>
      %110 = arith.addf %109, %108 : vector<16x256xf32>
      %111 = arith.divf %109, %110 : vector<16x256xf32>
      %112 = vector.extract_strided_slice %82 {offsets = [0, 256], sizes = [16, 128], strides = [1, 1]} : vector<16x512xf32> to vector<16x128xf32>
      %113 = math.tanh %112 : vector<16x128xf32>
      %114 = vector.extract_strided_slice %82 {offsets = [0, 384], sizes = [16, 128], strides = [1, 1]} : vector<16x512xf32> to vector<16x128xf32>
      %115 = arith.negf %114 : vector<16x128xf32>
      %116 = math.exp %115 : vector<16x128xf32>
      %cst_84 = arith.constant 1.000000e+00 : f32
      %117 = vector.broadcast %cst_84 : f32 to vector<16x128xf32>
      %118 = arith.addf %117, %116 : vector<16x128xf32>
      %119 = arith.divf %117, %118 : vector<16x128xf32>
      %120 = vector.extract_strided_slice %111 {offsets = [0, 128], sizes = [16, 128], strides = [1, 1]} : vector<16x256xf32> to vector<16x128xf32>
      %121 = arith.mulf %120, %105 : vector<16x128xf32>
      %122 = vector.extract_strided_slice %111 {offsets = [0, 0], sizes = [16, 128], strides = [1, 1]} : vector<16x256xf32> to vector<16x128xf32>
      %123 = arith.mulf %122, %113 : vector<16x128xf32>
      %124 = arith.addf %121, %123 : vector<16x128xf32>
      %125 = math.tanh %124 : vector<16x128xf32>
      %126 = arith.mulf %119, %125 : vector<16x128xf32>
      %127 = vector.broadcast %61 : i32 to vector<16x1xi32>
      %128 = arith.cmpi sgt, %6, %127 : vector<16x1xi32>
      %129 = vector.broadcast %63 : i32 to vector<16x1xi32>
      %130 = arith.cmpi sgt, %6, %129 : vector<16x1xi32>
      %131 = vector.extract_strided_slice %68 {offsets = [0, 0], sizes = [16, 128], strides = [1, 1]} : vector<16x256xf32> to vector<16x128xf32>
      %132 = vector.shape_cast %128 : vector<16x1xi1> to vector<16x1xi1>
      %133 = vector.broadcast %132 : vector<16x1xi1> to vector<16x128xi1>
      %134 = arith.select %133, %104, %131 : vector<16x128xi1>, vector<16x128xf32>
      %c0_85 = arith.constant 0 : index
      %c0_86 = arith.constant 0 : index
      %135 = vector.load %arg17[%c0_85, %c0_86] : memref<16x256xf32, #tpu.memory_space<vmem>>, vector<16x128xf32>
      tpu.vector_store %arg17[%c0_85, %c0_86], %134 {strides = array<i32>} : memref<16x256xf32, #tpu.memory_space<vmem>>, vector<16x128xf32>,
      %136 = vector.extract_strided_slice %68 {offsets = [0, 128], sizes = [16, 128], strides = [1, 1]} : vector<16x256xf32> to vector<16x128xf32>
      %137 = vector.shape_cast %130 : vector<16x1xi1> to vector<16x1xi1>
      %138 = vector.broadcast %137 : vector<16x1xi1> to vector<16x128xi1>
      %139 = arith.select %138, %126, %136 : vector<16x128xi1>, vector<16x128xf32>
      %c0_87 = arith.constant 0 : index
      %c128_88 = arith.constant 128 : index
      %140 = vector.load %arg17[%c0_87, %c128_88] : memref<16x256xf32, #tpu.memory_space<vmem>>, vector<16x128xf32>
      tpu.vector_store %arg17[%c0_87, %c128_88], %139 {strides = array<i32>} : memref<16x256xf32, #tpu.memory_space<vmem>>, vector<16x128xf32>,
      %141 = vector.extract_strided_slice %69 {offsets = [0, 0], sizes = [16, 128], strides = [1, 1]} : vector<16x256xf32> to vector<16x128xf32>
      %142 = vector.shape_cast %128 : vector<16x1xi1> to vector<16x1xi1>
      %143 = vector.broadcast %142 : vector<16x1xi1> to vector<16x128xi1>
      %144 = arith.select %143, %102, %141 : vector<16x128xi1>, vector<16x128xf32>
      %c0_89 = arith.constant 0 : index
      %c0_90 = arith.constant 0 : index
      %145 = vector.load %arg18[%c0_89, %c0_90] : memref<16x256xf32, #tpu.memory_space<vmem>>, vector<16x128xf32>
      tpu.vector_store %arg18[%c0_89, %c0_90], %144 {strides = array<i32>} : memref<16x256xf32, #tpu.memory_space<vmem>>, vector<16x128xf32>,
      %146 = vector.extract_strided_slice %69 {offsets = [0, 128], sizes = [16, 128], strides = [1, 1]} : vector<16x256xf32> to vector<16x128xf32>
      %147 = vector.shape_cast %130 : vector<16x1xi1> to vector<16x1xi1>
      %148 = vector.broadcast %147 : vector<16x1xi1> to vector<16x128xi1>
      %149 = arith.select %148, %124, %146 : vector<16x128xi1>, vector<16x128xf32>
      %c0_91 = arith.constant 0 : index
      %c128_92 = arith.constant 128 : index
      %150 = vector.load %arg18[%c0_91, %c128_92] : memref<16x256xf32, #tpu.memory_space<vmem>>, vector<16x128xf32>
      tpu.vector_store %arg18[%c0_91, %c128_92], %149 {strides = array<i32>} : memref<16x256xf32, #tpu.memory_space<vmem>>, vector<16x128xf32>,
      %151 = vector.shape_cast %128 : vector<16x1xi1> to vector<16x1xi1>
      %152 = vector.broadcast %151 : vector<16x1xi1> to vector<16x128xi1>
      %153 = arith.select %152, %104, %27 : vector<16x128xi1>, vector<16x128xf32>
      %154 = arith.truncf %153 : vector<16x128xf32> to vector<16x128xbf16>
      %155 = arith.index_cast %65 : i32 to index
      %c0_93 = arith.constant 0 : index
      %156 = vector.load %arg16[%155, %c0_93] : memref<128x256xbf16, #tpu.memory_space<vmem>>, vector<16x128xbf16>
      tpu.vector_store %arg16[%155, %c0_93], %154 {strides = array<i32>} : memref<128x256xbf16, #tpu.memory_space<vmem>>, vector<16x128xbf16>,
      %157 = vector.shape_cast %130 : vector<16x1xi1> to vector<16x1xi1>
      %158 = vector.broadcast %157 : vector<16x1xi1> to vector<16x128xi1>
      %159 = arith.select %158, %126, %27 : vector<16x128xi1>, vector<16x128xf32>
      %160 = arith.truncf %159 : vector<16x128xf32> to vector<16x128xbf16>
      %161 = arith.index_cast %67 : i32 to index
      %c128_94 = arith.constant 128 : index
      %162 = vector.load %arg16[%161, %c128_94] : memref<128x256xbf16, #tpu.memory_space<vmem>>, vector<16x128xbf16>
      tpu.vector_store %arg16[%161, %c128_94], %160 {strides = array<i32>} : memref<128x256xbf16, #tpu.memory_space<vmem>>, vector<16x128xbf16>,
    }
    %c0_37 = arith.constant 0 : index
    %c0_38 = arith.constant 0 : index
    %34 = vector.load %arg16[%c0_37, %c0_38] : memref<128x256xbf16, #tpu.memory_space<vmem>>, vector<128x256xbf16>
    %c0_39 = arith.constant 0 : index
    %c0_40 = arith.constant 0 : index
    %35 = vector.load %arg9[%c0_39, %c0_40] : memref<256x1024xbf16, #tpu.memory_space<vmem>>, vector<256x1024xbf16>
    %cst_41 = arith.constant dense<0.000000e+00> : vector<128x1024xf32>
    %36 = tpu.matmul %34, %35, %cst_41 {dimension_numbers = #tpu.dot_dimension_numbers<[1], [0], [0], [1], [0, 0, 1, 1], [], []>} : vector<128x256xbf16>, vector<256x1024xbf16>, vector<128x1024xf32> -> vector<128x1024xf32>
    %c0_42 = arith.constant 0 : index
    %c0_43 = arith.constant 0 : index
    %37 = vector.load %arg10[%c0_42, %c0_43] : memref<1x1024xf32, #tpu.memory_space<vmem>>, vector<1x1024xf32>
    %38 = vector.broadcast %37 : vector<1x1024xf32> to vector<128x1024xf32>
    %39 = arith.addf %36, %38 : vector<128x1024xf32>
    %40 = arith.truncf %39 : vector<128x1024xf32> to vector<128x1024xbf16>
    %c0_44 = arith.constant 0 : index
    %c0_45 = arith.constant 0 : index
    %41 = vector.load %arg15[%c0_44, %c0_45] : memref<128x1024xbf16, #tpu.memory_space<vmem>>, vector<128x1024xbf16>
    tpu.vector_store %arg15[%c0_44, %c0_45], %40 {strides = array<i32>} : memref<128x1024xbf16, #tpu.memory_space<vmem>>, vector<128x1024xbf16>,
    %cst_46 = arith.constant 0.000000e+00 : f32
    %42 = vector.broadcast %cst_46 : f32 to vector<16x256xf32>
    %c0_47 = arith.constant 0 : index
    %c0_48 = arith.constant 0 : index
    %43 = vector.load %arg17[%c0_47, %c0_48] : memref<16x256xf32, #tpu.memory_space<vmem>>, vector<16x256xf32>
    tpu.vector_store %arg17[%c0_47, %c0_48], %42 {strides = array<i32>} : memref<16x256xf32, #tpu.memory_space<vmem>>, vector<16x256xf32>,
    %c0_49 = arith.constant 0 : index
    %c0_50 = arith.constant 0 : index
    %44 = vector.load %arg18[%c0_49, %c0_50] : memref<16x256xf32, #tpu.memory_space<vmem>>, vector<16x128xf32>
    tpu.vector_store %arg18[%c0_49, %c0_50], %5 {strides = array<i32>} : memref<16x256xf32, #tpu.memory_space<vmem>>, vector<16x128xf32>,
    %c0_51 = arith.constant 0 : index
    %c128_52 = arith.constant 128 : index
    %45 = vector.load %arg18[%c0_51, %c128_52] : memref<16x256xf32, #tpu.memory_space<vmem>>, vector<16x128xf32>
    tpu.vector_store %arg18[%c0_51, %c128_52], %5 {strides = array<i32>} : memref<16x256xf32, #tpu.memory_space<vmem>>, vector<16x128xf32>,
    %cst_53 = arith.constant 0.000000e+00 : f32
    %46 = vector.broadcast %cst_53 : f32 to vector<16x128xf32>
    %c0_i32_54 = arith.constant 0 : i32
    %47 = arith.subi %7, %c0_i32_54 : i32
    %c1_i32_55 = arith.constant 1 : i32
    %c1_i32_56 = arith.constant 1 : i32
    %48 = arith.subi %c1_i32_55, %c1_i32_56 : i32
    %49 = arith.addi %47, %48 : i32
    %c1_i32_57 = arith.constant 1 : i32
    %50 = arith.divsi %49, %c1_i32_57 : i32
    %c1_i32_58 = arith.constant 1 : i32
    %c0_i32_59 = arith.constant 0 : i32
    %c0_i32_60 = arith.constant 0 : i32
    %51 = arith.subi %50, %c0_i32_60 : i32
    %52 = arith.addi %c0_i32_60, %51 : i32
    %c1_i32_61 = arith.constant 1 : i32
    scf.for %arg19 = %c0_i32_60 to %52 step %c1_i32_61  : i32 {
      %60 = arith.muli %arg19, %c1_i32_58 : i32
      %61 = arith.addi %c0_i32_59, %60 : i32
      %c1_i32_71 = arith.constant 1 : i32
      %62 = arith.subi %7, %c1_i32_71 : i32
      %63 = arith.subi %62, %61 : i32
      %c16_i32 = arith.constant 16 : i32
      %64 = arith.muli %61, %c16_i32 : i32
      %65 = tpu.assume_multiple %64, 16 : i32
      %c16_i32_72 = arith.constant 16 : i32
      %66 = arith.muli %63, %c16_i32_72 : i32
      %67 = tpu.assume_multiple %66, 16 : i32
      %c0_73 = arith.constant 0 : index
      %c0_74 = arith.constant 0 : index
      %68 = vector.load %arg17[%c0_73, %c0_74] : memref<16x256xf32, #tpu.memory_space<vmem>>, vector<16x256xf32>
      %c0_75 = arith.constant 0 : index
      %c0_76 = arith.constant 0 : index
      %69 = vector.load %arg18[%c0_75, %c0_76] : memref<16x256xf32, #tpu.memory_space<vmem>>, vector<16x256xf32>
      %70 = arith.truncf %68 : vector<16x256xf32> to vector<16x256xbf16>
      %c0_77 = arith.constant 0 : index
      %c0_78 = arith.constant 0 : index
      %71 = vector.load %arg11[%c0_77, %c0_78] : memref<256x1024xbf16, #tpu.memory_space<vmem>>, vector<256x1024xbf16>
      %cst_79 = arith.constant dense<0.000000e+00> : vector<16x1024xf32>
      %72 = tpu.matmul %70, %71, %cst_79 {dimension_numbers = #tpu.dot_dimension_numbers<[1], [0], [0], [1], [0, 0, 1, 1], [], []>} : vector<16x256xbf16>, vector<256x1024xbf16>, vector<16x1024xf32> -> vector<16x1024xf32>
      %73 = arith.index_cast %65 : i32 to index
      %c0_80 = arith.constant 0 : index
      %74 = vector.load %arg15[%73, %c0_80] : memref<128x1024xbf16, #tpu.memory_space<vmem>>, vector<16x512xbf16>
      %75 = vector.extract_strided_slice %72 {offsets = [0, 0], sizes = [16, 512], strides = [1, 1]} : vector<16x1024xf32> to vector<16x512xf32>
      %76 = arith.extf %74 : vector<16x512xbf16> to vector<16x512xf32>
      %77 = arith.addf %76, %75 : vector<16x512xf32>
      %78 = arith.index_cast %67 : i32 to index
      %c512 = arith.constant 512 : index
      %79 = vector.load %arg15[%78, %c512] : memref<128x1024xbf16, #tpu.memory_space<vmem>>, vector<16x512xbf16>
      %80 = vector.extract_strided_slice %72 {offsets = [0, 512], sizes = [16, 512], strides = [1, 1]} : vector<16x1024xf32> to vector<16x512xf32>
      %81 = arith.extf %79 : vector<16x512xbf16> to vector<16x512xf32>
      %82 = arith.addf %81, %80 : vector<16x512xf32>
      %83 = vector.extract_strided_slice %69 {offsets = [0, 0], sizes = [16, 128], strides = [1, 1]} : vector<16x256xf32> to vector<16x128xf32>
      %84 = vector.extract_strided_slice %77 {offsets = [0, 0], sizes = [16, 256], strides = [1, 1]} : vector<16x512xf32> to vector<16x256xf32>
      %85 = arith.negf %84 : vector<16x256xf32>
      %86 = math.exp %85 : vector<16x256xf32>
      %cst_81 = arith.constant 1.000000e+00 : f32
      %87 = vector.broadcast %cst_81 : f32 to vector<16x256xf32>
      %88 = arith.addf %87, %86 : vector<16x256xf32>
      %89 = arith.divf %87, %88 : vector<16x256xf32>
      %90 = vector.extract_strided_slice %77 {offsets = [0, 256], sizes = [16, 128], strides = [1, 1]} : vector<16x512xf32> to vector<16x128xf32>
      %91 = math.tanh %90 : vector<16x128xf32>
      %92 = vector.extract_strided_slice %77 {offsets = [0, 384], sizes = [16, 128], strides = [1, 1]} : vector<16x512xf32> to vector<16x128xf32>
      %93 = arith.negf %92 : vector<16x128xf32>
      %94 = math.exp %93 : vector<16x128xf32>
      %cst_82 = arith.constant 1.000000e+00 : f32
      %95 = vector.broadcast %cst_82 : f32 to vector<16x128xf32>
      %96 = arith.addf %95, %94 : vector<16x128xf32>
      %97 = arith.divf %95, %96 : vector<16x128xf32>
      %98 = vector.extract_strided_slice %89 {offsets = [0, 128], sizes = [16, 128], strides = [1, 1]} : vector<16x256xf32> to vector<16x128xf32>
      %99 = arith.mulf %98, %83 : vector<16x128xf32>
      %100 = vector.extract_strided_slice %89 {offsets = [0, 0], sizes = [16, 128], strides = [1, 1]} : vector<16x256xf32> to vector<16x128xf32>
      %101 = arith.mulf %100, %91 : vector<16x128xf32>
      %102 = arith.addf %99, %101 : vector<16x128xf32>
      %103 = math.tanh %102 : vector<16x128xf32>
      %104 = arith.mulf %97, %103 : vector<16x128xf32>
      %105 = vector.extract_strided_slice %69 {offsets = [0, 128], sizes = [16, 128], strides = [1, 1]} : vector<16x256xf32> to vector<16x128xf32>
      %106 = vector.extract_strided_slice %82 {offsets = [0, 0], sizes = [16, 256], strides = [1, 1]} : vector<16x512xf32> to vector<16x256xf32>
      %107 = arith.negf %106 : vector<16x256xf32>
      %108 = math.exp %107 : vector<16x256xf32>
      %cst_83 = arith.constant 1.000000e+00 : f32
      %109 = vector.broadcast %cst_83 : f32 to vector<16x256xf32>
      %110 = arith.addf %109, %108 : vector<16x256xf32>
      %111 = arith.divf %109, %110 : vector<16x256xf32>
      %112 = vector.extract_strided_slice %82 {offsets = [0, 256], sizes = [16, 128], strides = [1, 1]} : vector<16x512xf32> to vector<16x128xf32>
      %113 = math.tanh %112 : vector<16x128xf32>
      %114 = vector.extract_strided_slice %82 {offsets = [0, 384], sizes = [16, 128], strides = [1, 1]} : vector<16x512xf32> to vector<16x128xf32>
      %115 = arith.negf %114 : vector<16x128xf32>
      %116 = math.exp %115 : vector<16x128xf32>
      %cst_84 = arith.constant 1.000000e+00 : f32
      %117 = vector.broadcast %cst_84 : f32 to vector<16x128xf32>
      %118 = arith.addf %117, %116 : vector<16x128xf32>
      %119 = arith.divf %117, %118 : vector<16x128xf32>
      %120 = vector.extract_strided_slice %111 {offsets = [0, 128], sizes = [16, 128], strides = [1, 1]} : vector<16x256xf32> to vector<16x128xf32>
      %121 = arith.mulf %120, %105 : vector<16x128xf32>
      %122 = vector.extract_strided_slice %111 {offsets = [0, 0], sizes = [16, 128], strides = [1, 1]} : vector<16x256xf32> to vector<16x128xf32>
      %123 = arith.mulf %122, %113 : vector<16x128xf32>
      %124 = arith.addf %121, %123 : vector<16x128xf32>
      %125 = math.tanh %124 : vector<16x128xf32>
      %126 = arith.mulf %119, %125 : vector<16x128xf32>
      %127 = vector.broadcast %61 : i32 to vector<16x1xi32>
      %128 = arith.cmpi sgt, %6, %127 : vector<16x1xi32>
      %129 = vector.broadcast %63 : i32 to vector<16x1xi32>
      %130 = arith.cmpi sgt, %6, %129 : vector<16x1xi32>
      %131 = vector.extract_strided_slice %68 {offsets = [0, 0], sizes = [16, 128], strides = [1, 1]} : vector<16x256xf32> to vector<16x128xf32>
      %132 = vector.shape_cast %128 : vector<16x1xi1> to vector<16x1xi1>
      %133 = vector.broadcast %132 : vector<16x1xi1> to vector<16x128xi1>
      %134 = arith.select %133, %104, %131 : vector<16x128xi1>, vector<16x128xf32>
      %c0_85 = arith.constant 0 : index
      %c0_86 = arith.constant 0 : index
      %135 = vector.load %arg17[%c0_85, %c0_86] : memref<16x256xf32, #tpu.memory_space<vmem>>, vector<16x128xf32>
      tpu.vector_store %arg17[%c0_85, %c0_86], %134 {strides = array<i32>} : memref<16x256xf32, #tpu.memory_space<vmem>>, vector<16x128xf32>,
      %136 = vector.extract_strided_slice %68 {offsets = [0, 128], sizes = [16, 128], strides = [1, 1]} : vector<16x256xf32> to vector<16x128xf32>
      %137 = vector.shape_cast %130 : vector<16x1xi1> to vector<16x1xi1>
      %138 = vector.broadcast %137 : vector<16x1xi1> to vector<16x128xi1>
      %139 = arith.select %138, %126, %136 : vector<16x128xi1>, vector<16x128xf32>
      %c0_87 = arith.constant 0 : index
      %c128_88 = arith.constant 128 : index
      %140 = vector.load %arg17[%c0_87, %c128_88] : memref<16x256xf32, #tpu.memory_space<vmem>>, vector<16x128xf32>
      tpu.vector_store %arg17[%c0_87, %c128_88], %139 {strides = array<i32>} : memref<16x256xf32, #tpu.memory_space<vmem>>, vector<16x128xf32>,
      %141 = vector.extract_strided_slice %69 {offsets = [0, 0], sizes = [16, 128], strides = [1, 1]} : vector<16x256xf32> to vector<16x128xf32>
      %142 = vector.shape_cast %128 : vector<16x1xi1> to vector<16x1xi1>
      %143 = vector.broadcast %142 : vector<16x1xi1> to vector<16x128xi1>
      %144 = arith.select %143, %102, %141 : vector<16x128xi1>, vector<16x128xf32>
      %c0_89 = arith.constant 0 : index
      %c0_90 = arith.constant 0 : index
      %145 = vector.load %arg18[%c0_89, %c0_90] : memref<16x256xf32, #tpu.memory_space<vmem>>, vector<16x128xf32>
      tpu.vector_store %arg18[%c0_89, %c0_90], %144 {strides = array<i32>} : memref<16x256xf32, #tpu.memory_space<vmem>>, vector<16x128xf32>,
      %146 = vector.extract_strided_slice %69 {offsets = [0, 128], sizes = [16, 128], strides = [1, 1]} : vector<16x256xf32> to vector<16x128xf32>
      %147 = vector.shape_cast %130 : vector<16x1xi1> to vector<16x1xi1>
      %148 = vector.broadcast %147 : vector<16x1xi1> to vector<16x128xi1>
      %149 = arith.select %148, %124, %146 : vector<16x128xi1>, vector<16x128xf32>
      %c0_91 = arith.constant 0 : index
      %c128_92 = arith.constant 128 : index
      %150 = vector.load %arg18[%c0_91, %c128_92] : memref<16x256xf32, #tpu.memory_space<vmem>>, vector<16x128xf32>
      tpu.vector_store %arg18[%c0_91, %c128_92], %149 {strides = array<i32>} : memref<16x256xf32, #tpu.memory_space<vmem>>, vector<16x128xf32>,
      %151 = vector.shape_cast %128 : vector<16x1xi1> to vector<16x1xi1>
      %152 = vector.broadcast %151 : vector<16x1xi1> to vector<16x128xi1>
      %153 = arith.select %152, %104, %46 : vector<16x128xi1>, vector<16x128xf32>
      %154 = arith.truncf %153 : vector<16x128xf32> to vector<16x128xbf16>
      %155 = arith.index_cast %65 : i32 to index
      %c0_93 = arith.constant 0 : index
      %156 = vector.load %arg16[%155, %c0_93] : memref<128x256xbf16, #tpu.memory_space<vmem>>, vector<16x128xbf16>
      tpu.vector_store %arg16[%155, %c0_93], %154 {strides = array<i32>} : memref<128x256xbf16, #tpu.memory_space<vmem>>, vector<16x128xbf16>,
      %157 = vector.shape_cast %130 : vector<16x1xi1> to vector<16x1xi1>
      %158 = vector.broadcast %157 : vector<16x1xi1> to vector<16x128xi1>
      %159 = arith.select %158, %126, %46 : vector<16x128xi1>, vector<16x128xf32>
      %160 = arith.truncf %159 : vector<16x128xf32> to vector<16x128xbf16>
      %161 = arith.index_cast %67 : i32 to index
      %c128_94 = arith.constant 128 : index
      %162 = vector.load %arg16[%161, %c128_94] : memref<128x256xbf16, #tpu.memory_space<vmem>>, vector<16x128xbf16>
      tpu.vector_store %arg16[%161, %c128_94], %160 {strides = array<i32>} : memref<128x256xbf16, #tpu.memory_space<vmem>>, vector<16x128xbf16>,
    }
    %c0_62 = arith.constant 0 : index
    %c0_63 = arith.constant 0 : index
    %53 = vector.load %arg16[%c0_62, %c0_63] : memref<128x256xbf16, #tpu.memory_space<vmem>>, vector<128x256xbf16>
    %c0_64 = arith.constant 0 : index
    %c0_65 = arith.constant 0 : index
    %54 = vector.load %arg12[%c0_64, %c0_65] : memref<256x256xbf16, #tpu.memory_space<vmem>>, vector<256x256xbf16>
    %cst_66 = arith.constant dense<0.000000e+00> : vector<128x256xf32>
    %55 = tpu.matmul %53, %54, %cst_66 {dimension_numbers = #tpu.dot_dimension_numbers<[1], [0], [0], [1], [0, 0, 1, 1], [], []>} : vector<128x256xbf16>, vector<256x256xbf16>, vector<128x256xf32> -> vector<128x256xf32>
    %c0_67 = arith.constant 0 : index
    %c0_68 = arith.constant 0 : index
    %56 = vector.load %arg13[%c0_67, %c0_68] : memref<1x256xf32, #tpu.memory_space<vmem>>, vector<1x256xf32>
    %57 = vector.broadcast %56 : vector<1x256xf32> to vector<128x256xf32>
    %58 = arith.addf %55, %57 : vector<128x256xf32>
    %c0_69 = arith.constant 0 : index
    %c0_70 = arith.constant 0 : index
    %59 = vector.load %arg14[%c0_69, %c0_70] : memref<128x256xf32, #tpu.memory_space<vmem>>, vector<128x256xf32>
    tpu.vector_store %arg14[%c0_69, %c0_70], %58 {strides = array<i32>} : memref<128x256xf32, #tpu.memory_space<vmem>>, vector<128x256xf32>,
    return
  }
}

</mosaic_0001>

<llo_original>
// kernel: tpu_custom_call.1
$region0: #{tpu_custom_call.1}
  #allocation0 [shape = 'u32[]', space=smem, size = 0x4, offset = 0x4, fixed_abs, tag = 'smem constant byte address 0x4 - core index']
  #allocation1 [shape = 'u32[72,128]{1,0:T(1,128)}', space=vmem, size = 0x9000, scoped, tag = 'internal scratch']
  #allocation2 [shape = 'bf16[128,1024]{1,0:T(8,128)(2,1)}', space=vmem, size = 0x40000, scoped, tag = 'scratch operand']
  #allocation3 [shape = 'bf16[128,256]{1,0:T(8,128)(2,1)}', space=vmem, size = 0x10000, scoped, tag = 'scratch operand']
  #allocation4 [shape = 'f32[16,256]{1,0:T(8,128)}', space=vmem, size = 0x4000, scoped, tag = 'scratch operand']
  #allocation5 [shape = 'f32[16,256]{1,0:T(8,128)}', space=vmem, size = 0x4000, scoped, tag = 'scratch operand']
  #allocation6 [shape = 's32[1]{0:T(128)S(6)}', space=smem, size = 0x200, scoped, tag = 'scoped memory for tpu_custom_call.1']
  %s0 = inlined_call_operand.<no memory space> [shape: s32[1], index: 0, kind: input, shape index: {}]
  %s1 = inlined_call_operand.vmem [shape: s32[16,1], index: 1, kind: input, shape index: {}]
  %s2 = inlined_call_operand.hbm [shape: bf16[128,128], index: 2, kind: input, shape index: {}]
  %s3 = inlined_call_operand.hbm [shape: bf16[16,768], index: 3, kind: input, shape index: {}]
  %s4 = inlined_call_operand.hbm [shape: bf16[768,128], index: 4, kind: input, shape index: {}]
  %s5 = inlined_call_operand.vmem [shape: f32[1,128], index: 5, kind: input, shape index: {}]
  %s6 = inlined_call_operand.hbm [shape: bf16[128,1024], index: 6, kind: input, shape index: {}]
  %s7 = inlined_call_operand.vmem [shape: f32[1,1024], index: 7, kind: input, shape index: {}]
  %s8 = inlined_call_operand.hbm [shape: bf16[256,1024], index: 8, kind: input, shape index: {}]
  %s9 = inlined_call_operand.hbm [shape: bf16[256,1024], index: 9, kind: input, shape index: {}]
  %s10 = inlined_call_operand.vmem [shape: f32[1,1024], index: 10, kind: input, shape index: {}]
  %s11 = inlined_call_operand.hbm [shape: bf16[256,1024], index: 11, kind: input, shape index: {}]
  %s12 = inlined_call_operand.hbm [shape: bf16[256,256], index: 12, kind: input, shape index: {}]
  %s13 = inlined_call_operand.vmem [shape: f32[1,256], index: 13, kind: input, shape index: {}]
  %s14 = inlined_call_operand.hbm [shape: f32[128,256], index: 14, kind: output, shape index: {}]
  %s15 = sld [smem:[#allocation0]]
  $region119: #{tpu_custom_call.1} parent=0
    _
  %s17 = ssub.s32 1, %s15
  %s18 = scalar_select 0, %s17, %s15
  %19 = sst [smem:[#allocation6]] %s0
  $region1: #{tpu_custom_call.1} parent=0
    #allocation7 [shape = 'u8[32768]{0}', space=vmem, size = 0x8000, scoped, tag = 'input window, operand 2, single buffered']
    #allocation8 [shape = 's32[1]{0}', space=sflag, size = 0x4, scoped, tag = 'scoped memory for tpu_custom_call.1']
    #allocation9 [shape = 's32[1]{0}', space=sflag, size = 0x4, scoped, tag = 'scoped memory for tpu_custom_call.1']
    #allocation10 [shape = 'u8[24576]{0}', space=vmem, size = 0x6000, scoped, tag = 'input window, operand 3, single buffered']
    #allocation11 [shape = 's32[1]{0}', space=sflag, size = 0x4, scoped, tag = 'scoped memory for tpu_custom_call.1']
    #allocation12 [shape = 'u8[196608]{0}', space=vmem, size = 0x30000, scoped, tag = 'input window, operand 4, single buffered']
    #allocation13 [shape = 'u8[262144]{0}', space=vmem, size = 0x40000, scoped, tag = 'input window, operand 6, single buffered']
    #allocation14 [shape = 's32[1]{0}', space=sflag, size = 0x4, scoped, tag = 'scoped memory for tpu_custom_call.1']
    #allocation15 [shape = 'u8[524288]{0}', space=vmem, size = 0x80000, scoped, tag = 'input window, operand 8, single buffered']
    #allocation16 [shape = 'u8[524288]{0}', space=vmem, size = 0x80000, scoped, tag = 'input window, operand 9, single buffered']
    #allocation17 [shape = 's32[1]{0}', space=sflag, size = 0x4, scoped, tag = 'scoped memory for tpu_custom_call.1']
    #allocation18 [shape = 'u8[524288]{0}', space=vmem, size = 0x80000, scoped, tag = 'input window, operand 11, single buffered']
    #allocation19 [shape = 'u8[131072]{0}', space=vmem, size = 0x20000, scoped, tag = 'input window, operand 12, single buffered']
    #allocation20 [shape = 's32[1]{0}', space=sflag, size = 0x4, scoped, tag = 'scoped memory for tpu_custom_call.1']
    #allocation21 [shape = 'u8[131072]{0}', space=vmem, size = 0x20000, scoped, tag = 'output window, operand 0, single buffered']
    %20 = vsyncpa [#allocation8], 0
    %21 = vsyncpa [#allocation11], 0
    %22 = vsyncpa [#allocation14], 0
    %23 = vsyncpa [#allocation17], 0
    %24 = vsyncpa [#allocation20], 0
    %25 = vsyncpa [#allocation9], 0
    // Predicated region
    $region2: #{tpu_custom_call.1} parent=1 // pred_check
      _
    $region3: #{tpu_custom_call.1} parent=1 // pred_check_branch
      %27 = sbr.rel (0) target = $region5
    $region4: #{tpu_custom_call.1} parent=1 // pred_region
      _
    $region5: #{tpu_custom_call.1} parent=1 // pred_fallthru
      _
    // Predicated region
    $region6: #{tpu_custom_call.1} parent=1 // pred_check
      _
    $region7: #{tpu_custom_call.1} parent=1 // pred_check_branch
      %29 = sbr.rel (0) target = $region9
    $region8: #{tpu_custom_call.1} parent=1 // pred_region
      _
    $region9: #{tpu_custom_call.1} parent=1 // pred_fallthru
      _
    // Predicated region
    $region10: #{tpu_custom_call.1} parent=1 // pred_check
      _
    $region11: #{tpu_custom_call.1} parent=1 // pred_check_branch
      %31 = sbr.rel (0) target = $region13
    $region12: #{tpu_custom_call.1} parent=1 // pred_region
      %33 = vsyncadd [#allocation8], 0
      %s34 = sshll.u32 %s2, 4
      %s35 = int_to_ptr.hbm [resolvable:$true] %s34
      %s36 = sshll.u32 [#allocation7], 4
      %s37 = int_to_ptr.vmem [resolvable:$true] %s36
      %42 = dma.hbm_to_vmem [thread:$0]  %s35, 1024, %s37, [#allocation8], 64, 64, 4
    $region13: #{tpu_custom_call.1} parent=1 // pred_fallthru
      _
    // Predicated region
    $region14: #{tpu_custom_call.1} parent=1 // pred_check
      _
    $region15: #{tpu_custom_call.1} parent=1 // pred_check_branch
      %44 = sbr.rel (0) target = $region17
    $region16: #{tpu_custom_call.1} parent=1 // pred_region
      %46 = vsyncadd [#allocation11], 0
      %s47 = sshll.u32 %s3, 4
      %s48 = int_to_ptr.hbm [resolvable:$true] %s47
      %s49 = sshll.u32 [#allocation10], 4
      %s50 = int_to_ptr.vmem [resolvable:$true] %s49
      %55 = dma.hbm_to_vmem [thread:$0]  %s48, 768, %s50, [#allocation11], 384, 384, 24
    $region17: #{tpu_custom_call.1} parent=1 // pred_fallthru
      _
    // Predicated region
    $region18: #{tpu_custom_call.1} parent=1 // pred_check
      _
    $region19: #{tpu_custom_call.1} parent=1 // pred_check_branch
      %57 = sbr.rel (0) target = $region21
    $region20: #{tpu_custom_call.1} parent=1 // pred_region
      %59 = vsyncadd [#allocation11], 0
      %s60 = sshll.u32 %s4, 4
      %s61 = int_to_ptr.hbm [resolvable:$true] %s60
      %s62 = sshll.u32 [#allocation12], 4
      %s63 = int_to_ptr.vmem [resolvable:$true] %s62
      %68 = dma.hbm_to_vmem [thread:$0]  %s61, 6144, %s63, [#allocation11], 64, 64, 4
    $region21: #{tpu_custom_call.1} parent=1 // pred_fallthru
      _
    // Predicated region
    $region22: #{tpu_custom_call.1} parent=1 // pred_check
      _
    $region23: #{tpu_custom_call.1} parent=1 // pred_check_branch
      %70 = sbr.rel (0) target = $region25
    $region24: #{tpu_custom_call.1} parent=1 // pred_region
      _
    $region25: #{tpu_custom_call.1} parent=1 // pred_fallthru
      _
    // Predicated region
    $region26: #{tpu_custom_call.1} parent=1 // pred_check
      _
    $region27: #{tpu_custom_call.1} parent=1 // pred_check_branch
      %72 = sbr.rel (0) target = $region29
    $region28: #{tpu_custom_call.1} parent=1 // pred_region
      %74 = vsyncadd [#allocation14], 0
      %s75 = sshll.u32 %s6, 4
      %s76 = int_to_ptr.hbm [resolvable:$true] %s75
      %s77 = sshll.u32 [#allocation13], 4
      %s78 = int_to_ptr.vmem [resolvable:$true] %s77
      %83 = dma.hbm_to_vmem [thread:$0]  %s76, 8192, %s78, [#allocation14], 512, 512, 32
    $region29: #{tpu_custom_call.1} parent=1 // pred_fallthru
      _
    // Predicated region
    $region30: #{tpu_custom_call.1} parent=1 // pred_check
      _
    $region31: #{tpu_custom_call.1} parent=1 // pred_check_branch
      %85 = sbr.rel (0) target = $region33
    $region32: #{tpu_custom_call.1} parent=1 // pred_region
      _
    $region33: #{tpu_custom_call.1} parent=1 // pred_fallthru
      _
    // Predicated region
    $region34: #{tpu_custom_call.1} parent=1 // pred_check
      _
    $region35: #{tpu_custom_call.1} parent=1 // pred_check_branch
      %87 = sbr.rel (0) target = $region37
    $region36: #{tpu_custom_call.1} parent=1 // pred_region
      %89 = vsyncadd [#allocation14], 0
      %s90 = sshll.u32 %s8, 4
      %s91 = int_to_ptr.hbm [resolvable:$true] %s90
      %s92 = sshll.u32 [#allocation15], 4
      %s93 = int_to_ptr.vmem [resolvable:$true] %s92
      %98 = dma.hbm_to_vmem [thread:$0]  %s91, 16384, %s93, [#allocation14], 512, 512, 32
    $region37: #{tpu_custom_call.1} parent=1 // pred_fallthru
      _
    // Predicated region
    $region38: #{tpu_custom_call.1} parent=1 // pred_check
      _
    $region39: #{tpu_custom_call.1} parent=1 // pred_check_branch
      %100 = sbr.rel (0) target = $region41
    $region40: #{tpu_custom_call.1} parent=1 // pred_region
      %102 = vsyncadd [#allocation17], 0
      %s103 = sshll.u32 %s9, 4
      %s104 = int_to_ptr.hbm [resolvable:$true] %s103
      %s105 = sshll.u32 [#allocation16], 4
      %s106 = int_to_ptr.vmem [resolvable:$true] %s105
      %111 = dma.hbm_to_vmem [thread:$0]  %s104, 16384, %s106, [#allocation17], 512, 512, 32
    $region41: #{tpu_custom_call.1} parent=1 // pred_fallthru
      _
    // Predicated region
    $region42: #{tpu_custom_call.1} parent=1 // pred_check
      _
    $region43: #{tpu_custom_call.1} parent=1 // pred_check_branch
      %113 = sbr.rel (0) target = $region45
    $region44: #{tpu_custom_call.1} parent=1 // pred_region
      _
    $region45: #{tpu_custom_call.1} parent=1 // pred_fallthru
      _
    // Predicated region
    $region46: #{tpu_custom_call.1} parent=1 // pred_check
      _
    $region47: #{tpu_custom_call.1} parent=1 // pred_check_branch
      %115 = sbr.rel (0) target = $region49
    $region48: #{tpu_custom_call.1} parent=1 // pred_region
      %117 = vsyncadd [#allocation17], 0
      %s118 = sshll.u32 %s11, 4
      %s119 = int_to_ptr.hbm [resolvable:$true] %s118
      %s120 = sshll.u32 [#allocation18], 4
      %s121 = int_to_ptr.vmem [resolvable:$true] %s120
      %126 = dma.hbm_to_vmem [thread:$0]  %s119, 16384, %s121, [#allocation17], 512, 512, 32
    $region49: #{tpu_custom_call.1} parent=1 // pred_fallthru
      _
    // Predicated region
    $region50: #{tpu_custom_call.1} parent=1 // pred_check
      _
    $region51: #{tpu_custom_call.1} parent=1 // pred_check_branch
      %128 = sbr.rel (0) target = $region53
    $region52: #{tpu_custom_call.1} parent=1 // pred_region
      %130 = vsyncadd [#allocation20], 0
      %s131 = sshll.u32 %s12, 4
      %s132 = int_to_ptr.hbm [resolvable:$true] %s131
      %s133 = sshll.u32 [#allocation19], 4
      %s134 = int_to_ptr.vmem [resolvable:$true] %s133
      %139 = dma.hbm_to_vmem [thread:$0]  %s132, 4096, %s134, [#allocation20], 128, 128, 8
    $region53: #{tpu_custom_call.1} parent=1 // pred_fallthru
      _
    // Predicated region
    $region54: #{tpu_custom_call.1} parent=1 // pred_check
      _
    $region55: #{tpu_custom_call.1} parent=1 // pred_check_branch
      %141 = sbr.rel (0) target = $region57
    $region56: #{tpu_custom_call.1} parent=1 // pred_region
      _
    $region57: #{tpu_custom_call.1} parent=1 // pred_fallthru
      _
    // Predicated region
    $region58: #{tpu_custom_call.1} parent=1 // pred_check
      _
    $region59: #{tpu_custom_call.1} parent=1 // pred_check_branch
      %143 = sbr.rel (0) target = $region61
    $region60: #{tpu_custom_call.1} parent=1 // pred_region
      %145 = dma.done [#allocation8], 1024
    $region61: #{tpu_custom_call.1} parent=1 // pred_fallthru
      _
    // Predicated region
    $region62: #{tpu_custom_call.1} parent=1 // pred_check
      _
    $region63: #{tpu_custom_call.1} parent=1 // pred_check_branch
      %147 = sbr.rel (0) target = $region65
    $region64: #{tpu_custom_call.1} parent=1 // pred_region
      %149 = dma.done [#allocation11], 768
    $region65: #{tpu_custom_call.1} parent=1 // pred_fallthru
      _
    // Predicated region
    $region66: #{tpu_custom_call.1} parent=1 // pred_check
      _
    $region67: #{tpu_custom_call.1} parent=1 // pred_check_branch
      %151 = sbr.rel (0) target = $region69
    $region68: #{tpu_custom_call.1} parent=1 // pred_region
      %153 = dma.done [#allocation11], 6144
    $region69: #{tpu_custom_call.1} parent=1 // pred_fallthru
      _
    // Predicated region
    $region70: #{tpu_custom_call.1} parent=1 // pred_check
      _
    $region71: #{tpu_custom_call.1} parent=1 // pred_check_branch
      %155 = sbr.rel (0) target = $region73
    $region72: #{tpu_custom_call.1} parent=1 // pred_region
      %157 = dma.done [#allocation14], 8192
    $region73: #{tpu_custom_call.1} parent=1 // pred_fallthru
      _
    // Predicated region
    $region74: #{tpu_custom_call.1} parent=1 // pred_check
      _
    $region75: #{tpu_custom_call.1} parent=1 // pred_check_branch
      %159 = sbr.rel (0) target = $region77
    $region76: #{tpu_custom_call.1} parent=1 // pred_region
      %161 = dma.done [#allocation14], 16384
    $region77: #{tpu_custom_call.1} parent=1 // pred_fallthru
      _
    // Predicated region
    $region78: #{tpu_custom_call.1} parent=1 // pred_check
      _
    $region79: #{tpu_custom_call.1} parent=1 // pred_check_branch
      %163 = sbr.rel (0) target = $region81
    $region80: #{tpu_custom_call.1} parent=1 // pred_region
      %165 = dma.done [#allocation17], 16384
    $region81: #{tpu_custom_call.1} parent=1 // pred_fallthru
      _
    // Predicated region
    $region82: #{tpu_custom_call.1} parent=1 // pred_check
      _
    $region83: #{tpu_custom_call.1} parent=1 // pred_check_branch
      %167 = sbr.rel (0) target = $region85
    $region84: #{tpu_custom_call.1} parent=1 // pred_region
      %169 = dma.done [#allocation17], 16384
    $region85: #{tpu_custom_call.1} parent=1 // pred_fallthru
      _
    // Predicated region
    $region86: #{tpu_custom_call.1} parent=1 // pred_check
      _
    $region87: #{tpu_custom_call.1} parent=1 // pred_check_branch
      %171 = sbr.rel (0) target = $region89
    $region88: #{tpu_custom_call.1} parent=1 // pred_region
      %173 = dma.done [#allocation20], 4096
    $region89: #{tpu_custom_call.1} parent=1 // pred_fallthru
      _
    %v175 = vld [vmem:[#allocation10] sm:$0xff]
    %v176 = vld [vmem:[#allocation10 + $0x8] sm:$0xff]
    %v177 = vld [vmem:[#allocation10 + $0x10] sm:$0xff]
    %v178 = vld [vmem:[#allocation10 + $0x18] sm:$0xff]
    %v179 = vld [vmem:[#allocation10 + $0x20] sm:$0xff]
    %v180 = vld [vmem:[#allocation10 + $0x28] sm:$0xff]
    %v181 = vld [vmem:[#allocation12] sm:$0xf]
    %v182 = vld [vmem:[#allocation12 + $0x4] sm:$0xf]
    %v183 = vld [vmem:[#allocation12 + $0x8] sm:$0xf]
    %v184 = vld [vmem:[#allocation12 + $0xc] sm:$0xf]
    %v185 = vld [vmem:[#allocation12 + $0x10] sm:$0xf]
    %v186 = vld [vmem:[#allocation12 + $0x14] sm:$0xf]
    %v187 = vld [vmem:[#allocation12 + $0x18] sm:$0xf]
    %v188 = vld [vmem:[#allocation12 + $0x1c] sm:$0xf]
    %v189 = vld [vmem:[#allocation12 + $0x20] sm:$0xf]
    %v190 = vld [vmem:[#allocation12 + $0x24] sm:$0xf]
    %v191 = vld [vmem:[#allocation12 + $0x28] sm:$0xf]
    %v192 = vld [vmem:[#allocation12 + $0x2c] sm:$0xf]
    %v193 = vld [vmem:[#allocation12 + $0x30] sm:$0xf]
    %v194 = vld [vmem:[#allocation12 + $0x34] sm:$0xf]
    %v195 = vld [vmem:[#allocation12 + $0x38] sm:$0xf]
    %v196 = vld [vmem:[#allocation12 + $0x3c] sm:$0xf]
    %v197 = vld [vmem:[#allocation12 + $0x40] sm:$0xf]
    %v198 = vld [vmem:[#allocation12 + $0x44] sm:$0xf]
    %v199 = vld [vmem:[#allocation12 + $0x48] sm:$0xf]
    %v200 = vld [vmem:[#allocation12 + $0x4c] sm:$0xf]
    %v201 = vld [vmem:[#allocation12 + $0x50] sm:$0xf]
    %v202 = vld [vmem:[#allocation12 + $0x54] sm:$0xf]
    %v203 = vld [vmem:[#allocation12 + $0x58] sm:$0xf]
    %v204 = vld [vmem:[#allocation12 + $0x5c] sm:$0xf]
    %v205 = vld [vmem:[#allocation12 + $0x60] sm:$0xf]
    %v206 = vld [vmem:[#allocation12 + $0x64] sm:$0xf]
    %v207 = vld [vmem:[#allocation12 + $0x68] sm:$0xf]
    %v208 = vld [vmem:[#allocation12 + $0x6c] sm:$0xf]
    %v209 = vld [vmem:[#allocation12 + $0x70] sm:$0xf]
    %v210 = vld [vmem:[#allocation12 + $0x74] sm:$0xf]
    %v211 = vld [vmem:[#allocation12 + $0x78] sm:$0xf]
    %v212 = vld [vmem:[#allocation12 + $0x7c] sm:$0xf]
    %v213 = vld [vmem:[#allocation12 + $0x80] sm:$0xf]
    %v214 = vld [vmem:[#allocation12 + $0x84] sm:$0xf]
    %v215 = vld [vmem:[#allocation12 + $0x88] sm:$0xf]
    %v216 = vld [vmem:[#allocation12 + $0x8c] sm:$0xf]
    %v217 = vld [vmem:[#allocation12 + $0x90] sm:$0xf]
    %v218 = vld [vmem:[#allocation12 + $0x94] sm:$0xf]
    %v219 = vld [vmem:[#allocation12 + $0x98] sm:$0xf]
    %v220 = vld [vmem:[#allocation12 + $0x9c] sm:$0xf]
    %v221 = vld [vmem:[#allocation12 + $0xa0] sm:$0xf]
    %v222 = vld [vmem:[#allocation12 + $0xa4] sm:$0xf]
    %v223 = vld [vmem:[#allocation12 + $0xa8] sm:$0xf]
    %v224 = vld [vmem:[#allocation12 + $0xac] sm:$0xf]
    %v225 = vld [vmem:[#allocation12 + $0xb0] sm:$0xf]
    %v226 = vld [vmem:[#allocation12 + $0xb4] sm:$0xf]
    %v227 = vld [vmem:[#allocation12 + $0xb8] sm:$0xf]
    %v228 = vld [vmem:[#allocation12 + $0xbc] sm:$0xf]
    %v229 = vld [vmem:[#allocation12 + $0xc0] sm:$0xf]
    %v230 = vld [vmem:[#allocation12 + $0xc4] sm:$0xf]
    %v231 = vld [vmem:[#allocation12 + $0xc8] sm:$0xf]
    %v232 = vld [vmem:[#allocation12 + $0xcc] sm:$0xf]
    %v233 = vld [vmem:[#allocation12 + $0xd0] sm:$0xf]
    %v234 = vld [vmem:[#allocation12 + $0xd4] sm:$0xf]
    %v235 = vld [vmem:[#allocation12 + $0xd8] sm:$0xf]
    %v236 = vld [vmem:[#allocation12 + $0xdc] sm:$0xf]
    %v237 = vld [vmem:[#allocation12 + $0xe0] sm:$0xf]
    %v238 = vld [vmem:[#allocation12 + $0xe4] sm:$0xf]
    %v239 = vld [vmem:[#allocation12 + $0xe8] sm:$0xf]
    %v240 = vld [vmem:[#allocation12 + $0xec] sm:$0xf]
    %v241 = vld [vmem:[#allocation12 + $0xf0] sm:$0xf]
    %v242 = vld [vmem:[#allocation12 + $0xf4] sm:$0xf]
    %v243 = vld [vmem:[#allocation12 + $0xf8] sm:$0xf]
    %v244 = vld [vmem:[#allocation12 + $0xfc] sm:$0xf]
    %v245 = vld [vmem:[#allocation12 + $0x100] sm:$0xf]
    %v246 = vld [vmem:[#allocation12 + $0x104] sm:$0xf]
    %v247 = vld [vmem:[#allocation12 + $0x108] sm:$0xf]
    %v248 = vld [vmem:[#allocation12 + $0x10c] sm:$0xf]
    %v249 = vld [vmem:[#allocation12 + $0x110] sm:$0xf]
    %v250 = vld [vmem:[#allocation12 + $0x114] sm:$0xf]
    %v251 = vld [vmem:[#allocation12 + $0x118] sm:$0xf]
    %v252 = vld [vmem:[#allocation12 + $0x11c] sm:$0xf]
    %v253 = vld [vmem:[#allocation12 + $0x120] sm:$0xf]
    %v254 = vld [vmem:[#allocation12 + $0x124] sm:$0xf]
    %v255 = vld [vmem:[#allocation12 + $0x128] sm:$0xf]
    %v256 = vld [vmem:[#allocation12 + $0x12c] sm:$0xf]
    %v257 = vld [vmem:[#allocation12 + $0x130] sm:$0xf]
    %v258 = vld [vmem:[#allocation12 + $0x134] sm:$0xf]
    %v259 = vld [vmem:[#allocation12 + $0x138] sm:$0xf]
    %v260 = vld [vmem:[#allocation12 + $0x13c] sm:$0xf]
    %v261 = vld [vmem:[#allocation12 + $0x140] sm:$0xf]
    %v262 = vld [vmem:[#allocation12 + $0x144] sm:$0xf]
    %v263 = vld [vmem:[#allocation12 + $0x148] sm:$0xf]
    %v264 = vld [vmem:[#allocation12 + $0x14c] sm:$0xf]
    %v265 = vld [vmem:[#allocation12 + $0x150] sm:$0xf]
    %v266 = vld [vmem:[#allocation12 + $0x154] sm:$0xf]
    %v267 = vld [vmem:[#allocation12 + $0x158] sm:$0xf]
    %v268 = vld [vmem:[#allocation12 + $0x15c] sm:$0xf]
    %v269 = vld [vmem:[#allocation12 + $0x160] sm:$0xf]
    %v270 = vld [vmem:[#allocation12 + $0x164] sm:$0xf]
    %v271 = vld [vmem:[#allocation12 + $0x168] sm:$0xf]
    %v272 = vld [vmem:[#allocation12 + $0x16c] sm:$0xf]
    %v273 = vld [vmem:[#allocation12 + $0x170] sm:$0xf]
    %v274 = vld [vmem:[#allocation12 + $0x174] sm:$0xf]
    %v275 = vld [vmem:[#allocation12 + $0x178] sm:$0xf]
    %v276 = vld [vmem:[#allocation12 + $0x17c] sm:$0xf]
    %v277 = vld [vmem:[%s5] sm:$0x1]
    %v279 = vperm.slane %v277, 0
    %v287 = vunpack.c.l.b16 %v175
    %v288 = vunpack.c.h.b16 %v175
    %v289 = vunpack.c.l.b16 %v176
    %v290 = vunpack.c.h.b16 %v176
    %v291 = vunpack.c.l.b16 %v177
    %v292 = vunpack.c.h.b16 %v177
    %v293 = vunpack.c.l.b16 %v178
    %v294 = vunpack.c.h.b16 %v178
    %v295 = vunpack.c.l.b16 %v179
    %v296 = vunpack.c.h.b16 %v179
    %v297 = vunpack.c.l.b16 %v180
    %v298 = vunpack.c.h.b16 %v180
    %v299 = vpack.c.b16 %v293, %v287
    %v300 = vpack.c.b16 %v294, %v288
    %v301 = vpack.c.b16 %v295, %v289
    %v302 = vpack.c.b16 %v296, %v290
    %v303 = vpack.c.b16 %v297, %v291
    %v304 = vpack.c.b16 %v298, %v292
    %v407 = vunpack.c.l.b16 %v181
    %v408 = vunpack.c.l.b16 %v182
    %v409 = vunpack.c.l.b16 %v183
    %v410 = vunpack.c.l.b16 %v184
    %v411 = vunpack.c.l.b16 %v185
    %v412 = vunpack.c.l.b16 %v186
    %v413 = vunpack.c.l.b16 %v187
    %v414 = vunpack.c.l.b16 %v188
    %v415 = vunpack.c.l.b16 %v189
    %v416 = vunpack.c.l.b16 %v190
    %v417 = vunpack.c.l.b16 %v191
    %v418 = vunpack.c.l.b16 %v192
    %v419 = vunpack.c.l.b16 %v193
    %v420 = vunpack.c.l.b16 %v194
    %v421 = vunpack.c.l.b16 %v195
    %v422 = vunpack.c.l.b16 %v196
    %v423 = vunpack.c.l.b16 %v197
    %v424 = vunpack.c.l.b16 %v198
    %v425 = vunpack.c.l.b16 %v199
    %v426 = vunpack.c.l.b16 %v200
    %v427 = vunpack.c.l.b16 %v201
    %v428 = vunpack.c.l.b16 %v202
    %v429 = vunpack.c.l.b16 %v203
    %v430 = vunpack.c.l.b16 %v204
    %v431 = vunpack.c.l.b16 %v205
    %v432 = vunpack.c.l.b16 %v206
    %v433 = vunpack.c.l.b16 %v207
    %v434 = vunpack.c.l.b16 %v208
    %v435 = vunpack.c.l.b16 %v209
    %v436 = vunpack.c.l.b16 %v210
    %v437 = vunpack.c.l.b16 %v211
    %v438 = vunpack.c.l.b16 %v212
    %v439 = vunpack.c.l.b16 %v213
    %v440 = vunpack.c.l.b16 %v214
    %v441 = vunpack.c.l.b16 %v215
    %v442 = vunpack.c.l.b16 %v216
    %v443 = vunpack.c.l.b16 %v217
    %v444 = vunpack.c.l.b16 %v218
    %v445 = vunpack.c.l.b16 %v219
    %v446 = vunpack.c.l.b16 %v220
    %v447 = vunpack.c.l.b16 %v221
    %v448 = vunpack.c.l.b16 %v222
    %v449 = vunpack.c.l.b16 %v223
    %v450 = vunpack.c.l.b16 %v224
    %v451 = vunpack.c.l.b16 %v225
    %v452 = vunpack.c.l.b16 %v226
    %v453 = vunpack.c.l.b16 %v227
    %v454 = vunpack.c.l.b16 %v228
    %v455 = vunpack.c.l.b16 %v229
    %v456 = vunpack.c.l.b16 %v230
    %v457 = vunpack.c.l.b16 %v231
    %v458 = vunpack.c.l.b16 %v232
    %v459 = vunpack.c.l.b16 %v233
    %v460 = vunpack.c.l.b16 %v234
    %v461 = vunpack.c.l.b16 %v235
    %v462 = vunpack.c.l.b16 %v236
    %v463 = vunpack.c.l.b16 %v237
    %v464 = vunpack.c.l.b16 %v238
    %v465 = vunpack.c.l.b16 %v239
    %v466 = vunpack.c.l.b16 %v240
    %v467 = vunpack.c.l.b16 %v241
    %v468 = vunpack.c.l.b16 %v242
    %v469 = vunpack.c.l.b16 %v243
    %v470 = vunpack.c.l.b16 %v244
    %v471 = vunpack.c.l.b16 %v245
    %v472 = vunpack.c.l.b16 %v246
    %v473 = vunpack.c.l.b16 %v247
    %v474 = vunpack.c.l.b16 %v248
    %v475 = vunpack.c.l.b16 %v249
    %v476 = vunpack.c.l.b16 %v250
    %v477 = vunpack.c.l.b16 %v251
    %v478 = vunpack.c.l.b16 %v252
    %v479 = vunpack.c.l.b16 %v253
    %v480 = vunpack.c.l.b16 %v254
    %v481 = vunpack.c.l.b16 %v255
    %v482 = vunpack.c.l.b16 %v256
    %v483 = vunpack.c.l.b16 %v257
    %v484 = vunpack.c.l.b16 %v258
    %v485 = vunpack.c.l.b16 %v259
    %v486 = vunpack.c.l.b16 %v260
    %v487 = vunpack.c.l.b16 %v261
    %v488 = vunpack.c.l.b16 %v262
    %v489 = vunpack.c.l.b16 %v263
    %v490 = vunpack.c.l.b16 %v264
    %v491 = vunpack.c.l.b16 %v265
    %v492 = vunpack.c.l.b16 %v266
    %v493 = vunpack.c.l.b16 %v267
    %v494 = vunpack.c.l.b16 %v268
    %v495 = vunpack.c.l.b16 %v269
    %v496 = vunpack.c.l.b16 %v270
    %v497 = vunpack.c.l.b16 %v271
    %v498 = vunpack.c.l.b16 %v272
    %v499 = vunpack.c.l.b16 %v273
    %v500 = vunpack.c.l.b16 %v274
    %v501 = vunpack.c.l.b16 %v275
    %v502 = vunpack.c.l.b16 %v276
    %v503 = vpack.c.b16 %v408, %v407
    %v504 = vpack.c.b16 %v410, %v409
    %v505 = vpack.c.b16 %v412, %v411
    %v506 = vpack.c.b16 %v414, %v413
    %v507 = vpack.c.b16 %v416, %v415
    %v508 = vpack.c.b16 %v418, %v417
    %v509 = vpack.c.b16 %v420, %v419
    %v510 = vpack.c.b16 %v422, %v421
    %v511 = vpack.c.b16 %v424, %v423
    %v512 = vpack.c.b16 %v426, %v425
    %v513 = vpack.c.b16 %v428, %v427
    %v514 = vpack.c.b16 %v430, %v429
    %v515 = vpack.c.b16 %v432, %v431
    %v516 = vpack.c.b16 %v434, %v433
    %v517 = vpack.c.b16 %v436, %v435
    %v518 = vpack.c.b16 %v438, %v437
    %v519 = vpack.c.b16 %v440, %v439
    %v520 = vpack.c.b16 %v442, %v441
    %v521 = vpack.c.b16 %v444, %v443
    %v522 = vpack.c.b16 %v446, %v445
    %v523 = vpack.c.b16 %v448, %v447
    %v524 = vpack.c.b16 %v450, %v449
    %v525 = vpack.c.b16 %v452, %v451
    %v526 = vpack.c.b16 %v454, %v453
    %v527 = vpack.c.b16 %v456, %v455
    %v528 = vpack.c.b16 %v458, %v457
    %v529 = vpack.c.b16 %v460, %v459
    %v530 = vpack.c.b16 %v462, %v461
    %v531 = vpack.c.b16 %v464, %v463
    %v532 = vpack.c.b16 %v466, %v465
    %v533 = vpack.c.b16 %v468, %v467
    %v534 = vpack.c.b16 %v470, %v469
    %v535 = vpack.c.b16 %v472, %v471
    %v536 = vpack.c.b16 %v474, %v473
    %v537 = vpack.c.b16 %v476, %v475
    %v538 = vpack.c.b16 %v478, %v477
    %v539 = vpack.c.b16 %v480, %v479
    %v540 = vpack.c.b16 %v482, %v481
    %v541 = vpack.c.b16 %v484, %v483
    %v542 = vpack.c.b16 %v486, %v485
    %v543 = vpack.c.b16 %v488, %v487
    %v544 = vpack.c.b16 %v490, %v489
    %v545 = vpack.c.b16 %v492, %v491
    %v546 = vpack.c.b16 %v494, %v493
    %v547 = vpack.c.b16 %v496, %v495
    %v548 = vpack.c.b16 %v498, %v497
    %v549 = vpack.c.b16 %v500, %v499
    %v550 = vpack.c.b16 %v502, %v501
    %599 = vmatpush.bf16.msra.mxu0 %v510
    %600 = vmatpush.bf16.msra.mxu0 %v509
    %601 = vmatpush.bf16.msra.mxu0 %v508
    %602 = vmatpush.bf16.msra.mxu0 %v507
    %603 = vmatpush.bf16.msra.mxu0 %v506
    %604 = vmatpush.bf16.msra.mxu0 %v505
    %605 = vmatpush.bf16.msra.mxu0 %v504
    %606 = vmatpush.bf16.msra.mxu0 %v503
    %607 = vmatmul.bf16.gmra.mxu0 %v299
    %v608 = vpop.f32.mrf.mxu0
    %v609 = vadd.f32 %v279, %v608
    %v610 = vpop.f32.mrf.mxu0
    %v611 = vadd.f32 %v279, %v610
    %612 = vdwg.mxu0
    %613 = vmatpush.bf16.msra.mxu0 %v518
    %614 = vmatpush.bf16.msra.mxu0 %v517
    %615 = vmatpush.bf16.msra.mxu0 %v516
    %616 = vmatpush.bf16.msra.mxu0 %v515
    %617 = vmatpush.bf16.msra.mxu0 %v514
    %618 = vmatpush.bf16.msra.mxu0 %v513
    %619 = vmatpush.bf16.msra.mxu0 %v512
    %620 = vmatpush.bf16.msra.mxu0 %v511
    %621 = vmatmul.bf16.gmra.mxu0 %v300
    %v622 = vpop.f32.mrf.mxu0
    %v623 = vadd.f32 %v609, %v622
    %v624 = vpop.f32.mrf.mxu0
    %v625 = vadd.f32 %v611, %v624
    %626 = vdwg.mxu0
    %627 = vmatpush.bf16.msra.mxu0 %v526
    %628 = vmatpush.bf16.msra.mxu0 %v525
    %629 = vmatpush.bf16.msra.mxu0 %v524
    %630 = vmatpush.bf16.msra.mxu0 %v523
    %631 = vmatpush.bf16.msra.mxu0 %v522
    %632 = vmatpush.bf16.msra.mxu0 %v521
    %633 = vmatpush.bf16.msra.mxu0 %v520
    %634 = vmatpush.bf16.msra.mxu0 %v519
    %635 = vmatmul.bf16.gmra.mxu0 %v301
    %v636 = vpop.f32.mrf.mxu0
    %v637 = vadd.f32 %v623, %v636
    %v638 = vpop.f32.mrf.mxu0
    %v639 = vadd.f32 %v625, %v638
    %640 = vdwg.mxu0
    %641 = vmatpush.bf16.msra.mxu0 %v534
    %642 = vmatpush.bf16.msra.mxu0 %v533
    %643 = vmatpush.bf16.msra.mxu0 %v532
    %644 = vmatpush.bf16.msra.mxu0 %v531
    %645 = vmatpush.bf16.msra.mxu0 %v530
    %646 = vmatpush.bf16.msra.mxu0 %v529
    %647 = vmatpush.bf16.msra.mxu0 %v528
    %648 = vmatpush.bf16.msra.mxu0 %v527
    %649 = vmatmul.bf16.gmra.mxu0 %v302
    %v650 = vpop.f32.mrf.mxu0
    %v651 = vadd.f32 %v637, %v650
    %v652 = vpop.f32.mrf.mxu0
    %v653 = vadd.f32 %v639, %v652
    %654 = vdwg.mxu0
    %655 = vmatpush.bf16.msra.mxu0 %v542
    %656 = vmatpush.bf16.msra.mxu0 %v541
    %657 = vmatpush.bf16.msra.mxu0 %v540
    %658 = vmatpush.bf16.msra.mxu0 %v539
    %659 = vmatpush.bf16.msra.mxu0 %v538
    %660 = vmatpush.bf16.msra.mxu0 %v537
    %661 = vmatpush.bf16.msra.mxu0 %v536
    %662 = vmatpush.bf16.msra.mxu0 %v535
    %663 = vmatmul.bf16.gmra.mxu0 %v303
    %v664 = vpop.f32.mrf.mxu0
    %v665 = vadd.f32 %v651, %v664
    %v666 = vpop.f32.mrf.mxu0
    %v667 = vadd.f32 %v653, %v666
    %668 = vdwg.mxu0
    %669 = vmatpush.bf16.msra.mxu0 %v550
    %670 = vmatpush.bf16.msra.mxu0 %v549
    %671 = vmatpush.bf16.msra.mxu0 %v548
    %672 = vmatpush.bf16.msra.mxu0 %v547
    %673 = vmatpush.bf16.msra.mxu0 %v546
    %674 = vmatpush.bf16.msra.mxu0 %v545
    %675 = vmatpush.bf16.msra.mxu0 %v544
    %676 = vmatpush.bf16.msra.mxu0 %v543
    %677 = vmatmul.bf16.gmra.mxu0 %v304
    %v678 = vpop.f32.mrf.mxu0
    %v679 = vadd.f32 %v665, %v678
    %v680 = vpop.f32.mrf.mxu0
    %v681 = vadd.f32 %v667, %v680
    %682 = vdwg.mxu0
    %v683 = vld [vmem:[%s1] sm:$0xff]
    %v684 = vld [vmem:[%s1 + $0x8] sm:$0xff]
    %s685 = sld [smem:[#allocation6]]
    %s686 = ssub.s32 8, %s685
    // While loop
    $region90: #{tpu_custom_call.1} parent=1 // loop_pre_header
      _
    $region91: #{tpu_custom_call.1} parent=1 // loop_header
      %s688 = sphi 0, %s690
      %p689 = scmp.ge.s32.totalorder %s688, %s686
    $region92: #{tpu_custom_call.1} parent=1 // loop_header_branch
      %692 = sbr.rel (%p689) target = $region96
    $region93: #{tpu_custom_call.1} parent=1 // loop_body
      %s693 = sadd.s32 %s685, %s688
      %s694 = smul.u32 %s693, 16
      %s695 = sshra.s32 %s694, 3
      %s696 = sand.u32 %s694, 7
      %s697 = smul.u32 %s695, 2
      %s698 = smul.addr %s697, 4
      %s699 = scalar_lea.vmem [#allocation3], %s698
      %700 = vst [vmem:[%s699] sm:$0xff] 0
      %701 = vst [vmem:[%s699 + $0x8] sm:$0xff] 0
    $region94: #{tpu_custom_call.1} parent=1 // loop_footer
      %s690 = sadd.s32 %s688, 1
    $region95: #{tpu_custom_call.1} parent=1 // loop_footer_branch
      %687 = sbr.rel target = $region91
    $region96: #{tpu_custom_call.1} parent=1 // loop_exit
      _
    %v702 = vld [vmem:[#allocation7] sm:$0xf]
    %v703 = vld [vmem:[#allocation7 + $0x4] sm:$0xf]
    %v704 = vld [vmem:[#allocation7 + $0x8] sm:$0xf]
    %v705 = vld [vmem:[#allocation7 + $0xc] sm:$0xf]
    %v706 = vld [vmem:[#allocation7 + $0x10] sm:$0xf]
    %v707 = vld [vmem:[#allocation7 + $0x14] sm:$0xf]
    %v708 = vld [vmem:[#allocation7 + $0x18] sm:$0xf]
    %v709 = vld [vmem:[#allocation7 + $0x1c] sm:$0xf]
    %v710 = vld [vmem:[#allocation7 + $0x20] sm:$0xf]
    %v711 = vld [vmem:[#allocation7 + $0x24] sm:$0xf]
    %v712 = vld [vmem:[#allocation7 + $0x28] sm:$0xf]
    %v713 = vld [vmem:[#allocation7 + $0x2c] sm:$0xf]
    %v714 = vld [vmem:[#allocation7 + $0x30] sm:$0xf]
    %v715 = vld [vmem:[#allocation7 + $0x34] sm:$0xf]
    %v716 = vld [vmem:[#allocation7 + $0x38] sm:$0xf]
    %v717 = vld [vmem:[#allocation7 + $0x3c] sm:$0xf]
    %v718 = vld [vmem:[#allocation13] sm:$0xff]
    %v719 = vld [vmem:[#allocation13 + $0x8] sm:$0xff]
    %v720 = vld [vmem:[#allocation13 + $0x10] sm:$0xff]
    %v721 = vld [vmem:[#allocation13 + $0x18] sm:$0xff]
    %v722 = vld [vmem:[#allocation13 + $0x20] sm:$0xff]
    %v723 = vld [vmem:[#allocation13 + $0x28] sm:$0xff]
    %v724 = vld [vmem:[#allocation13 + $0x30] sm:$0xff]
    %v725 = vld [vmem:[#allocation13 + $0x38] sm:$0xff]
    %v726 = vld [vmem:[#allocation13 + $0x40] sm:$0xff]
    %v727 = vld [vmem:[#allocation13 + $0x48] sm:$0xff]
    %v728 = vld [vmem:[#allocation13 + $0x50] sm:$0xff]
    %v729 = vld [vmem:[#allocation13 + $0x58] sm:$0xff]
    %v730 = vld [vmem:[#allocation13 + $0x60] sm:$0xff]
    %v731 = vld [vmem:[#allocation13 + $0x68] sm:$0xff]
    %v732 = vld [vmem:[#allocation13 + $0x70] sm:$0xff]
    %v733 = vld [vmem:[#allocation13 + $0x78] sm:$0xff]
    %v734 = vld [vmem:[#allocation13 + $0x80] sm:$0xff]
    %v735 = vld [vmem:[#allocation13 + $0x88] sm:$0xff]
    %v736 = vld [vmem:[#allocation13 + $0x90] sm:$0xff]
    %v737 = vld [vmem:[#allocation13 + $0x98] sm:$0xff]
    %v738 = vld [vmem:[#allocation13 + $0xa0] sm:$0xff]
    %v739 = vld [vmem:[#allocation13 + $0xa8] sm:$0xff]
    %v740 = vld [vmem:[#allocation13 + $0xb0] sm:$0xff]
    %v741 = vld [vmem:[#allocation13 + $0xb8] sm:$0xff]
    %v742 = vld [vmem:[#allocation13 + $0xc0] sm:$0xff]
    %v743 = vld [vmem:[#allocation13 + $0xc8] sm:$0xff]
    %v744 = vld [vmem:[#allocation13 + $0xd0] sm:$0xff]
    %v745 = vld [vmem:[#allocation13 + $0xd8] sm:$0xff]
    %v746 = vld [vmem:[#allocation13 + $0xe0] sm:$0xff]
    %v747 = vld [vmem:[#allocation13 + $0xe8] sm:$0xff]
    %v748 = vld [vmem:[#allocation13 + $0xf0] sm:$0xff]
    %v749 = vld [vmem:[#allocation13 + $0xf8] sm:$0xff]
    %v750 = vld [vmem:[#allocation13 + $0x100] sm:$0xff]
    %v751 = vld [vmem:[#allocation13 + $0x108] sm:$0xff]
    %v752 = vld [vmem:[#allocation13 + $0x110] sm:$0xff]
    %v753 = vld [vmem:[#allocation13 + $0x118] sm:$0xff]
    %v754 = vld [vmem:[#allocation13 + $0x120] sm:$0xff]
    %v755 = vld [vmem:[#allocation13 + $0x128] sm:$0xff]
    %v756 = vld [vmem:[#allocation13 + $0x130] sm:$0xff]
    %v757 = vld [vmem:[#allocation13 + $0x138] sm:$0xff]
    %v758 = vld [vmem:[#allocation13 + $0x140] sm:$0xff]
    %v759 = vld [vmem:[#allocation13 + $0x148] sm:$0xff]
    %v760 = vld [vmem:[#allocation13 + $0x150] sm:$0xff]
    %v761 = vld [vmem:[#allocation13 + $0x158] sm:$0xff]
    %v762 = vld [vmem:[#allocation13 + $0x160] sm:$0xff]
    %v763 = vld [vmem:[#allocation13 + $0x168] sm:$0xff]
    %v764 = vld [vmem:[#allocation13 + $0x170] sm:$0xff]
    %v765 = vld [vmem:[#allocation13 + $0x178] sm:$0xff]
    %v766 = vld [vmem:[#allocation13 + $0x180] sm:$0xff]
    %v767 = vld [vmem:[#allocation13 + $0x188] sm:$0xff]
    %v768 = vld [vmem:[#allocation13 + $0x190] sm:$0xff]
    %v769 = vld [vmem:[#allocation13 + $0x198] sm:$0xff]
    %v770 = vld [vmem:[#allocation13 + $0x1a0] sm:$0xff]
    %v771 = vld [vmem:[#allocation13 + $0x1a8] sm:$0xff]
    %v772 = vld [vmem:[#allocation13 + $0x1b0] sm:$0xff]
    %v773 = vld [vmem:[#allocation13 + $0x1b8] sm:$0xff]
    %v774 = vld [vmem:[#allocation13 + $0x1c0] sm:$0xff]
    %v775 = vld [vmem:[#allocation13 + $0x1c8] sm:$0xff]
    %v776 = vld [vmem:[#allocation13 + $0x1d0] sm:$0xff]
    %v777 = vld [vmem:[#allocation13 + $0x1d8] sm:$0xff]
    %v778 = vld [vmem:[#allocation13 + $0x1e0] sm:$0xff]
    %v779 = vld [vmem:[#allocation13 + $0x1e8] sm:$0xff]
    %v780 = vld [vmem:[#allocation13 + $0x1f0] sm:$0xff]
    %v781 = vld [vmem:[#allocation13 + $0x1f8] sm:$0xff]
    %v782 = vld [vmem:[%s7] sm:$0xff]
    %v784 = vperm.slane %v782, 0
    %v785 = vperm.slane %v782, 1
    %v786 = vperm.slane %v782, 2
    %v787 = vperm.slane %v782, 3
    %v788 = vperm.slane %v782, 4
    %v789 = vperm.slane %v782, 5
    %v790 = vperm.slane %v782, 6
    %v791 = vperm.slane %v782, 7
    %v816 = vunpack.c.l.b16 %v702
    %v817 = vunpack.c.l.b16 %v703
    %v818 = vunpack.c.l.b16 %v704
    %v819 = vunpack.c.l.b16 %v705
    %v820 = vunpack.c.l.b16 %v706
    %v821 = vunpack.c.l.b16 %v707
    %v822 = vunpack.c.l.b16 %v708
    %v823 = vunpack.c.l.b16 %v709
    %v824 = vunpack.c.l.b16 %v710
    %v825 = vunpack.c.l.b16 %v711
    %v826 = vunpack.c.l.b16 %v712
    %v827 = vunpack.c.l.b16 %v713
    %v828 = vunpack.c.l.b16 %v714
    %v829 = vunpack.c.l.b16 %v715
    %v830 = vunpack.c.l.b16 %v716
    %v831 = vunpack.c.l.b16 %v717
    %v832 = vpack.c.b16 %v817, %v816
    %v833 = vpack.c.b16 %v819, %v818
    %v834 = vpack.c.b16 %v821, %v820
    %v835 = vpack.c.b16 %v823, %v822
    %v836 = vpack.c.b16 %v825, %v824
    %v837 = vpack.c.b16 %v827, %v826
    %v838 = vpack.c.b16 %v829, %v828
    %v839 = vpack.c.b16 %v831, %v830
    %v912 = vunpack.c.l.b16 %v718
    %v913 = vunpack.c.h.b16 %v718
    %v914 = vunpack.c.l.b16 %v719
    %v915 = vunpack.c.h.b16 %v719
    %v916 = vunpack.c.l.b16 %v720
    %v917 = vunpack.c.h.b16 %v720
    %v918 = vunpack.c.l.b16 %v721
    %v919 = vunpack.c.h.b16 %v721
    %v920 = vunpack.c.l.b16 %v722
    %v921 = vunpack.c.h.b16 %v722
    %v922 = vunpack.c.l.b16 %v723
    %v923 = vunpack.c.h.b16 %v723
    %v924 = vunpack.c.l.b16 %v724
    %v925 = vunpack.c.h.b16 %v724
    %v926 = vunpack.c.l.b16 %v725
    %v927 = vunpack.c.h.b16 %v725
    %v928 = vunpack.c.l.b16 %v726
    %v929 = vunpack.c.h.b16 %v726
    %v930 = vunpack.c.l.b16 %v727
    %v931 = vunpack.c.h.b16 %v727
    %v932 = vunpack.c.l.b16 %v728
    %v933 = vunpack.c.h.b16 %v728
    %v934 = vunpack.c.l.b16 %v729
    %v935 = vunpack.c.h.b16 %v729
    %v936 = vunpack.c.l.b16 %v730
    %v937 = vunpack.c.h.b16 %v730
    %v938 = vunpack.c.l.b16 %v731
    %v939 = vunpack.c.h.b16 %v731
    %v940 = vunpack.c.l.b16 %v732
    %v941 = vunpack.c.h.b16 %v732
    %v942 = vunpack.c.l.b16 %v733
    %v943 = vunpack.c.h.b16 %v733
    %v944 = vunpack.c.l.b16 %v734
    %v945 = vunpack.c.h.b16 %v734
    %v946 = vunpack.c.l.b16 %v735
    %v947 = vunpack.c.h.b16 %v735
    %v948 = vunpack.c.l.b16 %v736
    %v949 = vunpack.c.h.b16 %v736
    %v950 = vunpack.c.l.b16 %v737
    %v951 = vunpack.c.h.b16 %v737
    %v952 = vunpack.c.l.b16 %v738
    %v953 = vunpack.c.h.b16 %v738
    %v954 = vunpack.c.l.b16 %v739
    %v955 = vunpack.c.h.b16 %v739
    %v956 = vunpack.c.l.b16 %v740
    %v957 = vunpack.c.h.b16 %v740
    %v958 = vunpack.c.l.b16 %v741
    %v959 = vunpack.c.h.b16 %v741
    %v960 = vunpack.c.l.b16 %v742
    %v961 = vunpack.c.h.b16 %v742
    %v962 = vunpack.c.l.b16 %v743
    %v963 = vunpack.c.h.b16 %v743
    %v964 = vunpack.c.l.b16 %v744
    %v965 = vunpack.c.h.b16 %v744
    %v966 = vunpack.c.l.b16 %v745
    %v967 = vunpack.c.h.b16 %v745
    %v968 = vunpack.c.l.b16 %v746
    %v969 = vunpack.c.h.b16 %v746
    %v970 = vunpack.c.l.b16 %v747
    %v971 = vunpack.c.h.b16 %v747
    %v972 = vunpack.c.l.b16 %v748
    %v973 = vunpack.c.h.b16 %v748
    %v974 = vunpack.c.l.b16 %v749
    %v975 = vunpack.c.h.b16 %v749
    %v976 = vunpack.c.l.b16 %v750
    %v977 = vunpack.c.h.b16 %v750
    %v978 = vunpack.c.l.b16 %v751
    %v979 = vunpack.c.h.b16 %v751
    %v980 = vunpack.c.l.b16 %v752
    %v981 = vunpack.c.h.b16 %v752
    %v982 = vunpack.c.l.b16 %v753
    %v983 = vunpack.c.h.b16 %v753
    %v984 = vunpack.c.l.b16 %v754
    %v985 = vunpack.c.h.b16 %v754
    %v986 = vunpack.c.l.b16 %v755
    %v987 = vunpack.c.h.b16 %v755
    %v988 = vunpack.c.l.b16 %v756
    %v989 = vunpack.c.h.b16 %v756
    %v990 = vunpack.c.l.b16 %v757
    %v991 = vunpack.c.h.b16 %v757
    %v992 = vunpack.c.l.b16 %v758
    %v993 = vunpack.c.h.b16 %v758
    %v994 = vunpack.c.l.b16 %v759
    %v995 = vunpack.c.h.b16 %v759
    %v996 = vunpack.c.l.b16 %v760
    %v997 = vunpack.c.h.b16 %v760
    %v998 = vunpack.c.l.b16 %v761
    %v999 = vunpack.c.h.b16 %v761
    %v1000 = vunpack.c.l.b16 %v762
    %v1001 = vunpack.c.h.b16 %v762
    %v1002 = vunpack.c.l.b16 %v763
    %v1003 = vunpack.c.h.b16 %v763
    %v1004 = vunpack.c.l.b16 %v764
    %v1005 = vunpack.c.h.b16 %v764
    %v1006 = vunpack.c.l.b16 %v765
    %v1007 = vunpack.c.h.b16 %v765
    %v1008 = vunpack.c.l.b16 %v766
    %v1009 = vunpack.c.h.b16 %v766
    %v1010 = vunpack.c.l.b16 %v767
    %v1011 = vunpack.c.h.b16 %v767
    %v1012 = vunpack.c.l.b16 %v768
    %v1013 = vunpack.c.h.b16 %v768
    %v1014 = vunpack.c.l.b16 %v769
    %v1015 = vunpack.c.h.b16 %v769
    %v1016 = vunpack.c.l.b16 %v770
    %v1017 = vunpack.c.h.b16 %v770
    %v1018 = vunpack.c.l.b16 %v771
    %v1019 = vunpack.c.h.b16 %v771
    %v1020 = vunpack.c.l.b16 %v772
    %v1021 = vunpack.c.h.b16 %v772
    %v1022 = vunpack.c.l.b16 %v773
    %v1023 = vunpack.c.h.b16 %v773
    %v1024 = vunpack.c.l.b16 %v774
    %v1025 = vunpack.c.h.b16 %v774
    %v1026 = vunpack.c.l.b16 %v775
    %v1027 = vunpack.c.h.b16 %v775
    %v1028 = vunpack.c.l.b16 %v776
    %v1029 = vunpack.c.h.b16 %v776
    %v1030 = vunpack.c.l.b16 %v777
    %v1031 = vunpack.c.h.b16 %v777
    %v1032 = vunpack.c.l.b16 %v778
    %v1033 = vunpack.c.h.b16 %v778
    %v1034 = vunpack.c.l.b16 %v779
    %v1035 = vunpack.c.h.b16 %v779
    %v1036 = vunpack.c.l.b16 %v780
    %v1037 = vunpack.c.h.b16 %v780
    %v1038 = vunpack.c.l.b16 %v781
    %v1039 = vunpack.c.h.b16 %v781
    %v1040 = vpack.c.b16 %v920, %v912
    %v1041 = vpack.c.b16 %v921, %v913
    %v1042 = vpack.c.b16 %v922, %v914
    %v1043 = vpack.c.b16 %v923, %v915
    %v1044 = vpack.c.b16 %v924, %v916
    %v1045 = vpack.c.b16 %v925, %v917
    %v1046 = vpack.c.b16 %v926, %v918
    %v1047 = vpack.c.b16 %v927, %v919
    %v1048 = vpack.c.b16 %v936, %v928
    %v1049 = vpack.c.b16 %v937, %v929
    %v1050 = vpack.c.b16 %v938, %v930
    %v1051 = vpack.c.b16 %v939, %v931
    %v1052 = vpack.c.b16 %v940, %v932
    %v1053 = vpack.c.b16 %v941, %v933
    %v1054 = vpack.c.b16 %v942, %v934
    %v1055 = vpack.c.b16 %v943, %v935
    %v1056 = vpack.c.b16 %v952, %v944
    %v1057 = vpack.c.b16 %v953, %v945
    %v1058 = vpack.c.b16 %v954, %v946
    %v1059 = vpack.c.b16 %v955, %v947
    %v1060 = vpack.c.b16 %v956, %v948
    %v1061 = vpack.c.b16 %v957, %v949
    %v1062 = vpack.c.b16 %v958, %v950
    %v1063 = vpack.c.b16 %v959, %v951
    %v1064 = vpack.c.b16 %v968, %v960
    %v1065 = vpack.c.b16 %v969, %v961
    %v1066 = vpack.c.b16 %v970, %v962
    %v1067 = vpack.c.b16 %v971, %v963
    %v1068 = vpack.c.b16 %v972, %v964
    %v1069 = vpack.c.b16 %v973, %v965
    %v1070 = vpack.c.b16 %v974, %v966
    %v1071 = vpack.c.b16 %v975, %v967
    %v1072 = vpack.c.b16 %v984, %v976
    %v1073 = vpack.c.b16 %v985, %v977
    %v1074 = vpack.c.b16 %v986, %v978
    %v1075 = vpack.c.b16 %v987, %v979
    %v1076 = vpack.c.b16 %v988, %v980
    %v1077 = vpack.c.b16 %v989, %v981
    %v1078 = vpack.c.b16 %v990, %v982
    %v1079 = vpack.c.b16 %v991, %v983
    %v1080 = vpack.c.b16 %v1000, %v992
    %v1081 = vpack.c.b16 %v1001, %v993
    %v1082 = vpack.c.b16 %v1002, %v994
    %v1083 = vpack.c.b16 %v1003, %v995
    %v1084 = vpack.c.b16 %v1004, %v996
    %v1085 = vpack.c.b16 %v1005, %v997
    %v1086 = vpack.c.b16 %v1006, %v998
    %v1087 = vpack.c.b16 %v1007, %v999
    %v1088 = vpack.c.b16 %v1016, %v1008
    %v1089 = vpack.c.b16 %v1017, %v1009
    %v1090 = vpack.c.b16 %v1018, %v1010
    %v1091 = vpack.c.b16 %v1019, %v1011
    %v1092 = vpack.c.b16 %v1020, %v1012
    %v1093 = vpack.c.b16 %v1021, %v1013
    %v1094 = vpack.c.b16 %v1022, %v1014
    %v1095 = vpack.c.b16 %v1023, %v1015
    %v1096 = vpack.c.b16 %v1032, %v1024
    %v1097 = vpack.c.b16 %v1033, %v1025
    %v1098 = vpack.c.b16 %v1034, %v1026
    %v1099 = vpack.c.b16 %v1035, %v1027
    %v1100 = vpack.c.b16 %v1036, %v1028
    %v1101 = vpack.c.b16 %v1037, %v1029
    %v1102 = vpack.c.b16 %v1038, %v1030
    %v1103 = vpack.c.b16 %v1039, %v1031
    %1168 = vmatpush.bf16.msra.mxu0 %v1096
    %1169 = vmatpush.bf16.msra.mxu0 %v1088
    %1170 = vmatpush.bf16.msra.mxu0 %v1080
    %1171 = vmatpush.bf16.msra.mxu0 %v1072
    %1172 = vmatpush.bf16.msra.mxu0 %v1064
    %1173 = vmatpush.bf16.msra.mxu0 %v1056
    %1174 = vmatpush.bf16.msra.mxu0 %v1048
    %1175 = vmatpush.bf16.msra.mxu0 %v1040
    %1176 = vmatmul.bf16.gmra.mxu0 %v832
    %v1177 = vpop.f32.mrf.mxu0
    %v1178 = vadd.f32 %v784, %v1177
    %v1179 = vpop.f32.mrf.mxu0
    %v1180 = vadd.f32 %v784, %v1179
    %1181 = vmatmul.bf16.gmra.mxu0 %v833
    %v1182 = vpop.f32.mrf.mxu0
    %v1183 = vadd.f32 %v784, %v1182
    %v1184 = vpop.f32.mrf.mxu0
    %v1185 = vadd.f32 %v784, %v1184
    %1186 = vmatmul.bf16.gmra.mxu0 %v834
    %v1187 = vpop.f32.mrf.mxu0
    %v1188 = vadd.f32 %v784, %v1187
    %v1189 = vpop.f32.mrf.mxu0
    %v1190 = vadd.f32 %v784, %v1189
    %1191 = vmatmul.bf16.gmra.mxu0 %v835
    %v1192 = vpop.f32.mrf.mxu0
    %v1193 = vadd.f32 %v784, %v1192
    %v1194 = vpop.f32.mrf.mxu0
    %v1195 = vadd.f32 %v784, %v1194
    %1196 = vmatmul.bf16.gmra.mxu0 %v836
    %v1197 = vpop.f32.mrf.mxu0
    %v1198 = vadd.f32 %v784, %v1197
    %v1199 = vpop.f32.mrf.mxu0
    %v1200 = vadd.f32 %v784, %v1199
    %1201 = vmatmul.bf16.gmra.mxu0 %v837
    %v1202 = vpop.f32.mrf.mxu0
    %v1203 = vadd.f32 %v784, %v1202
    %v1204 = vpop.f32.mrf.mxu0
    %v1205 = vadd.f32 %v784, %v1204
    %1206 = vmatmul.bf16.gmra.mxu0 %v838
    %v1207 = vpop.f32.mrf.mxu0
    %v1208 = vadd.f32 %v784, %v1207
    %v1209 = vpop.f32.mrf.mxu0
    %v1210 = vadd.f32 %v784, %v1209
    %1211 = vmatmul.bf16.gmra.mxu0 %v839
    %v1212 = vpop.f32.mrf.mxu0
    %v1213 = vadd.f32 %v784, %v1212
    %v1214 = vpop.f32.mrf.mxu0
    %v1215 = vadd.f32 %v784, %v1214
    %1216 = vdwg.mxu0
    %1217 = vmatpush.bf16.msra.mxu0 %v1097
    %1218 = vmatpush.bf16.msra.mxu0 %v1089
    %1219 = vmatpush.bf16.msra.mxu0 %v1081
    %1220 = vmatpush.bf16.msra.mxu0 %v1073
    %1221 = vmatpush.bf16.msra.mxu0 %v1065
    %1222 = vmatpush.bf16.msra.mxu0 %v1057
    %1223 = vmatpush.bf16.msra.mxu0 %v1049
    %1224 = vmatpush.bf16.msra.mxu0 %v1041
    %1225 = vmatmul.bf16.gmra.mxu0 %v832
    %v1226 = vpop.f32.mrf.mxu0
    %v1227 = vadd.f32 %v785, %v1226
    %v1228 = vpop.f32.mrf.mxu0
    %v1229 = vadd.f32 %v785, %v1228
    %1230 = vmatmul.bf16.gmra.mxu0 %v833
    %v1231 = vpop.f32.mrf.mxu0
    %v1232 = vadd.f32 %v785, %v1231
    %v1233 = vpop.f32.mrf.mxu0
    %v1234 = vadd.f32 %v785, %v1233
    %1235 = vmatmul.bf16.gmra.mxu0 %v834
    %v1236 = vpop.f32.mrf.mxu0
    %v1237 = vadd.f32 %v785, %v1236
    %v1238 = vpop.f32.mrf.mxu0
    %v1239 = vadd.f32 %v785, %v1238
    %1240 = vmatmul.bf16.gmra.mxu0 %v835
    %v1241 = vpop.f32.mrf.mxu0
    %v1242 = vadd.f32 %v785, %v1241
    %v1243 = vpop.f32.mrf.mxu0
    %v1244 = vadd.f32 %v785, %v1243
    %1245 = vmatmul.bf16.gmra.mxu0 %v836
    %v1246 = vpop.f32.mrf.mxu0
    %v1247 = vadd.f32 %v785, %v1246
    %v1248 = vpop.f32.mrf.mxu0
    %v1249 = vadd.f32 %v785, %v1248
    %1250 = vmatmul.bf16.gmra.mxu0 %v837
    %v1251 = vpop.f32.mrf.mxu0
    %v1252 = vadd.f32 %v785, %v1251
    %v1253 = vpop.f32.mrf.mxu0
    %v1254 = vadd.f32 %v785, %v1253
    %1255 = vmatmul.bf16.gmra.mxu0 %v838
    %v1256 = vpop.f32.mrf.mxu0
    %v1257 = vadd.f32 %v785, %v1256
    %v1258 = vpop.f32.mrf.mxu0
    %v1259 = vadd.f32 %v785, %v1258
    %1260 = vmatmul.bf16.gmra.mxu0 %v839
    %v1261 = vpop.f32.mrf.mxu0
    %v1262 = vadd.f32 %v785, %v1261
    %v1263 = vpop.f32.mrf.mxu0
    %v1264 = vadd.f32 %v785, %v1263
    %1265 = vdwg.mxu0
    %1266 = vmatpush.bf16.msra.mxu0 %v1098
    %1267 = vmatpush.bf16.msra.mxu0 %v1090
    %1268 = vmatpush.bf16.msra.mxu0 %v1082
    %1269 = vmatpush.bf16.msra.mxu0 %v1074
    %1270 = vmatpush.bf16.msra.mxu0 %v1066
    %1271 = vmatpush.bf16.msra.mxu0 %v1058
    %1272 = vmatpush.bf16.msra.mxu0 %v1050
    %1273 = vmatpush.bf16.msra.mxu0 %v1042
    %1274 = vmatmul.bf16.gmra.mxu0 %v832
    %v1275 = vpop.f32.mrf.mxu0
    %v1276 = vadd.f32 %v786, %v1275
    %v1277 = vpop.f32.mrf.mxu0
    %v1278 = vadd.f32 %v786, %v1277
    %1279 = vmatmul.bf16.gmra.mxu0 %v833
    %v1280 = vpop.f32.mrf.mxu0
    %v1281 = vadd.f32 %v786, %v1280
    %v1282 = vpop.f32.mrf.mxu0
    %v1283 = vadd.f32 %v786, %v1282
    %1284 = vmatmul.bf16.gmra.mxu0 %v834
    %v1285 = vpop.f32.mrf.mxu0
    %v1286 = vadd.f32 %v786, %v1285
    %v1287 = vpop.f32.mrf.mxu0
    %v1288 = vadd.f32 %v786, %v1287
    %1289 = vmatmul.bf16.gmra.mxu0 %v835
    %v1290 = vpop.f32.mrf.mxu0
    %v1291 = vadd.f32 %v786, %v1290
    %v1292 = vpop.f32.mrf.mxu0
    %v1293 = vadd.f32 %v786, %v1292
    %1294 = vmatmul.bf16.gmra.mxu0 %v836
    %v1295 = vpop.f32.mrf.mxu0
    %v1296 = vadd.f32 %v786, %v1295
    %v1297 = vpop.f32.mrf.mxu0
    %v1298 = vadd.f32 %v786, %v1297
    %1299 = vmatmul.bf16.gmra.mxu0 %v837
    %v1300 = vpop.f32.mrf.mxu0
    %v1301 = vadd.f32 %v786, %v1300
    %v1302 = vpop.f32.mrf.mxu0
    %v1303 = vadd.f32 %v786, %v1302
    %1304 = vmatmul.bf16.gmra.mxu0 %v838
    %v1305 = vpop.f32.mrf.mxu0
    %v1306 = vadd.f32 %v786, %v1305
    %v1307 = vpop.f32.mrf.mxu0
    %v1308 = vadd.f32 %v786, %v1307
    %1309 = vmatmul.bf16.gmra.mxu0 %v839
    %v1310 = vpop.f32.mrf.mxu0
    %v1311 = vadd.f32 %v786, %v1310
    %v1312 = vpop.f32.mrf.mxu0
    %v1313 = vadd.f32 %v786, %v1312
    %1314 = vdwg.mxu0
    %1315 = vmatpush.bf16.msra.mxu0 %v1099
    %1316 = vmatpush.bf16.msra.mxu0 %v1091
    %1317 = vmatpush.bf16.msra.mxu0 %v1083
    %1318 = vmatpush.bf16.msra.mxu0 %v1075
    %1319 = vmatpush.bf16.msra.mxu0 %v1067
    %1320 = vmatpush.bf16.msra.mxu0 %v1059
    %1321 = vmatpush.bf16.msra.mxu0 %v1051
    %1322 = vmatpush.bf16.msra.mxu0 %v1043
    %1323 = vmatmul.bf16.gmra.mxu0 %v832
    %v1324 = vpop.f32.mrf.mxu0
    %v1325 = vadd.f32 %v787, %v1324
    %v1326 = vpop.f32.mrf.mxu0
    %v1327 = vadd.f32 %v787, %v1326
    %1328 = vmatmul.bf16.gmra.mxu0 %v833
    %v1329 = vpop.f32.mrf.mxu0
    %v1330 = vadd.f32 %v787, %v1329
    %v1331 = vpop.f32.mrf.mxu0
    %v1332 = vadd.f32 %v787, %v1331
    %1333 = vmatmul.bf16.gmra.mxu0 %v834
    %v1334 = vpop.f32.mrf.mxu0
    %v1335 = vadd.f32 %v787, %v1334
    %v1336 = vpop.f32.mrf.mxu0
    %v1337 = vadd.f32 %v787, %v1336
    %1338 = vmatmul.bf16.gmra.mxu0 %v835
    %v1339 = vpop.f32.mrf.mxu0
    %v1340 = vadd.f32 %v787, %v1339
    %v1341 = vpop.f32.mrf.mxu0
    %v1342 = vadd.f32 %v787, %v1341
    %1343 = vmatmul.bf16.gmra.mxu0 %v836
    %v1344 = vpop.f32.mrf.mxu0
    %v1345 = vadd.f32 %v787, %v1344
    %v1346 = vpop.f32.mrf.mxu0
    %v1347 = vadd.f32 %v787, %v1346
    %1348 = vmatmul.bf16.gmra.mxu0 %v837
    %v1349 = vpop.f32.mrf.mxu0
    %v1350 = vadd.f32 %v787, %v1349
    %v1351 = vpop.f32.mrf.mxu0
    %v1352 = vadd.f32 %v787, %v1351
    %1353 = vmatmul.bf16.gmra.mxu0 %v838
    %v1354 = vpop.f32.mrf.mxu0
    %v1355 = vadd.f32 %v787, %v1354
    %v1356 = vpop.f32.mrf.mxu0
    %v1357 = vadd.f32 %v787, %v1356
    %1358 = vmatmul.bf16.gmra.mxu0 %v839
    %v1359 = vpop.f32.mrf.mxu0
    %v1360 = vadd.f32 %v787, %v1359
    %v1361 = vpop.f32.mrf.mxu0
    %v1362 = vadd.f32 %v787, %v1361
    %1363 = vdwg.mxu0
    %1364 = vmatpush.bf16.msra.mxu0 %v1100
    %1365 = vmatpush.bf16.msra.mxu0 %v1092
    %1366 = vmatpush.bf16.msra.mxu0 %v1084
    %1367 = vmatpush.bf16.msra.mxu0 %v1076
    %1368 = vmatpush.bf16.msra.mxu0 %v1068
    %1369 = vmatpush.bf16.msra.mxu0 %v1060
    %1370 = vmatpush.bf16.msra.mxu0 %v1052
    %1371 = vmatpush.bf16.msra.mxu0 %v1044
    %1372 = vmatmul.bf16.gmra.mxu0 %v832
    %v1373 = vpop.f32.mrf.mxu0
    %v1374 = vadd.f32 %v788, %v1373
    %v1375 = vpop.f32.mrf.mxu0
    %v1376 = vadd.f32 %v788, %v1375
    %1377 = vmatmul.bf16.gmra.mxu0 %v833
    %v1378 = vpop.f32.mrf.mxu0
    %v1379 = vadd.f32 %v788, %v1378
    %v1380 = vpop.f32.mrf.mxu0
    %v1381 = vadd.f32 %v788, %v1380
    %1382 = vmatmul.bf16.gmra.mxu0 %v834
    %v1383 = vpop.f32.mrf.mxu0
    %v1384 = vadd.f32 %v788, %v1383
    %v1385 = vpop.f32.mrf.mxu0
    %v1386 = vadd.f32 %v788, %v1385
    %1387 = vmatmul.bf16.gmra.mxu0 %v835
    %v1388 = vpop.f32.mrf.mxu0
    %v1389 = vadd.f32 %v788, %v1388
    %v1390 = vpop.f32.mrf.mxu0
    %v1391 = vadd.f32 %v788, %v1390
    %1392 = vmatmul.bf16.gmra.mxu0 %v836
    %v1393 = vpop.f32.mrf.mxu0
    %v1394 = vadd.f32 %v788, %v1393
    %v1395 = vpop.f32.mrf.mxu0
    %v1396 = vadd.f32 %v788, %v1395
    %1397 = vmatmul.bf16.gmra.mxu0 %v837
    %v1398 = vpop.f32.mrf.mxu0
    %v1399 = vadd.f32 %v788, %v1398
    %v1400 = vpop.f32.mrf.mxu0
    %v1401 = vadd.f32 %v788, %v1400
    %1402 = vmatmul.bf16.gmra.mxu0 %v838
    %v1403 = vpop.f32.mrf.mxu0
    %v1404 = vadd.f32 %v788, %v1403
    %v1405 = vpop.f32.mrf.mxu0
    %v1406 = vadd.f32 %v788, %v1405
    %1407 = vmatmul.bf16.gmra.mxu0 %v839
    %v1408 = vpop.f32.mrf.mxu0
    %v1409 = vadd.f32 %v788, %v1408
    %v1410 = vpop.f32.mrf.mxu0
    %v1411 = vadd.f32 %v788, %v1410
    %1412 = vdwg.mxu0
    %1413 = vmatpush.bf16.msra.mxu0 %v1101
    %1414 = vmatpush.bf16.msra.mxu0 %v1093
    %1415 = vmatpush.bf16.msra.mxu0 %v1085
    %1416 = vmatpush.bf16.msra.mxu0 %v1077
    %1417 = vmatpush.bf16.msra.mxu0 %v1069
    %1418 = vmatpush.bf16.msra.mxu0 %v1061
    %1419 = vmatpush.bf16.msra.mxu0 %v1053
    %1420 = vmatpush.bf16.msra.mxu0 %v1045
    %1421 = vmatmul.bf16.gmra.mxu0 %v832
    %v1422 = vpop.f32.mrf.mxu0
    %v1423 = vadd.f32 %v789, %v1422
    %v1424 = vpop.f32.mrf.mxu0
    %v1425 = vadd.f32 %v789, %v1424
    %1426 = vmatmul.bf16.gmra.mxu0 %v833
    %v1427 = vpop.f32.mrf.mxu0
    %v1428 = vadd.f32 %v789, %v1427
    %v1429 = vpop.f32.mrf.mxu0
    %v1430 = vadd.f32 %v789, %v1429
    %1431 = vmatmul.bf16.gmra.mxu0 %v834
    %v1432 = vpop.f32.mrf.mxu0
    %v1433 = vadd.f32 %v789, %v1432
    %v1434 = vpop.f32.mrf.mxu0
    %v1435 = vadd.f32 %v789, %v1434
    %1436 = vmatmul.bf16.gmra.mxu0 %v835
    %v1437 = vpop.f32.mrf.mxu0
    %v1438 = vadd.f32 %v789, %v1437
    %v1439 = vpop.f32.mrf.mxu0
    %v1440 = vadd.f32 %v789, %v1439
    %1441 = vmatmul.bf16.gmra.mxu0 %v836
    %v1442 = vpop.f32.mrf.mxu0
    %v1443 = vadd.f32 %v789, %v1442
    %v1444 = vpop.f32.mrf.mxu0
    %v1445 = vadd.f32 %v789, %v1444
    %1446 = vmatmul.bf16.gmra.mxu0 %v837
    %v1447 = vpop.f32.mrf.mxu0
    %v1448 = vadd.f32 %v789, %v1447
    %v1449 = vpop.f32.mrf.mxu0
    %v1450 = vadd.f32 %v789, %v1449
    %1451 = vmatmul.bf16.gmra.mxu0 %v838
    %v1452 = vpop.f32.mrf.mxu0
    %v1453 = vadd.f32 %v789, %v1452
    %v1454 = vpop.f32.mrf.mxu0
    %v1455 = vadd.f32 %v789, %v1454
    %1456 = vmatmul.bf16.gmra.mxu0 %v839
    %v1457 = vpop.f32.mrf.mxu0
    %v1458 = vadd.f32 %v789, %v1457
    %v1459 = vpop.f32.mrf.mxu0
    %v1460 = vadd.f32 %v789, %v1459
    %1461 = vdwg.mxu0
    %1462 = vmatpush.bf16.msra.mxu0 %v1102
    %1463 = vmatpush.bf16.msra.mxu0 %v1094
    %1464 = vmatpush.bf16.msra.mxu0 %v1086
    %1465 = vmatpush.bf16.msra.mxu0 %v1078
    %1466 = vmatpush.bf16.msra.mxu0 %v1070
    %1467 = vmatpush.bf16.msra.mxu0 %v1062
    %1468 = vmatpush.bf16.msra.mxu0 %v1054
    %1469 = vmatpush.bf16.msra.mxu0 %v1046
    %1470 = vmatmul.bf16.gmra.mxu0 %v832
    %v1471 = vpop.f32.mrf.mxu0
    %v1472 = vadd.f32 %v790, %v1471
    %v1473 = vpop.f32.mrf.mxu0
    %v1474 = vadd.f32 %v790, %v1473
    %1475 = vmatmul.bf16.gmra.mxu0 %v833
    %v1476 = vpop.f32.mrf.mxu0
    %v1477 = vadd.f32 %v790, %v1476
    %v1478 = vpop.f32.mrf.mxu0
    %v1479 = vadd.f32 %v790, %v1478
    %1480 = vmatmul.bf16.gmra.mxu0 %v834
    %v1481 = vpop.f32.mrf.mxu0
    %v1482 = vadd.f32 %v790, %v1481
    %v1483 = vpop.f32.mrf.mxu0
    %v1484 = vadd.f32 %v790, %v1483
    %1485 = vmatmul.bf16.gmra.mxu0 %v835
    %v1486 = vpop.f32.mrf.mxu0
    %v1487 = vadd.f32 %v790, %v1486
    %v1488 = vpop.f32.mrf.mxu0
    %v1489 = vadd.f32 %v790, %v1488
    %1490 = vmatmul.bf16.gmra.mxu0 %v836
    %v1491 = vpop.f32.mrf.mxu0
    %v1492 = vadd.f32 %v790, %v1491
    %v1493 = vpop.f32.mrf.mxu0
    %v1494 = vadd.f32 %v790, %v1493
    %1495 = vmatmul.bf16.gmra.mxu0 %v837
    %v1496 = vpop.f32.mrf.mxu0
    %v1497 = vadd.f32 %v790, %v1496
    %v1498 = vpop.f32.mrf.mxu0
    %v1499 = vadd.f32 %v790, %v1498
    %1500 = vmatmul.bf16.gmra.mxu0 %v838
    %v1501 = vpop.f32.mrf.mxu0
    %v1502 = vadd.f32 %v790, %v1501
    %v1503 = vpop.f32.mrf.mxu0
    %v1504 = vadd.f32 %v790, %v1503
    %1505 = vmatmul.bf16.gmra.mxu0 %v839
    %v1506 = vpop.f32.mrf.mxu0
    %v1507 = vadd.f32 %v790, %v1506
    %v1508 = vpop.f32.mrf.mxu0
    %v1509 = vadd.f32 %v790, %v1508
    %1510 = vdwg.mxu0
    %1511 = vmatpush.bf16.msra.mxu0 %v1103
    %1512 = vmatpush.bf16.msra.mxu0 %v1095
    %1513 = vmatpush.bf16.msra.mxu0 %v1087
    %1514 = vmatpush.bf16.msra.mxu0 %v1079
    %1515 = vmatpush.bf16.msra.mxu0 %v1071
    %1516 = vmatpush.bf16.msra.mxu0 %v1063
    %1517 = vmatpush.bf16.msra.mxu0 %v1055
    %1518 = vmatpush.bf16.msra.mxu0 %v1047
    %1519 = vmatmul.bf16.gmra.mxu0 %v832
    %v1520 = vpop.f32.mrf.mxu0
    %v1521 = vadd.f32 %v791, %v1520
    %v1522 = vpop.f32.mrf.mxu0
    %v1523 = vadd.f32 %v791, %v1522
    %1524 = vmatmul.bf16.gmra.mxu0 %v833
    %v1525 = vpop.f32.mrf.mxu0
    %v1526 = vadd.f32 %v791, %v1525
    %v1527 = vpop.f32.mrf.mxu0
    %v1528 = vadd.f32 %v791, %v1527
    %1529 = vmatmul.bf16.gmra.mxu0 %v834
    %v1530 = vpop.f32.mrf.mxu0
    %v1531 = vadd.f32 %v791, %v1530
    %v1532 = vpop.f32.mrf.mxu0
    %v1533 = vadd.f32 %v791, %v1532
    %1534 = vmatmul.bf16.gmra.mxu0 %v835
    %v1535 = vpop.f32.mrf.mxu0
    %v1536 = vadd.f32 %v791, %v1535
    %v1537 = vpop.f32.mrf.mxu0
    %v1538 = vadd.f32 %v791, %v1537
    %1539 = vmatmul.bf16.gmra.mxu0 %v836
    %v1540 = vpop.f32.mrf.mxu0
    %v1541 = vadd.f32 %v791, %v1540
    %v1542 = vpop.f32.mrf.mxu0
    %v1543 = vadd.f32 %v791, %v1542
    %1544 = vmatmul.bf16.gmra.mxu0 %v837
    %v1545 = vpop.f32.mrf.mxu0
    %v1546 = vadd.f32 %v791, %v1545
    %v1547 = vpop.f32.mrf.mxu0
    %v1548 = vadd.f32 %v791, %v1547
    %1549 = vmatmul.bf16.gmra.mxu0 %v838
    %v1550 = vpop.f32.mrf.mxu0
    %v1551 = vadd.f32 %v791, %v1550
    %v1552 = vpop.f32.mrf.mxu0
    %v1553 = vadd.f32 %v791, %v1552
    %1554 = vmatmul.bf16.gmra.mxu0 %v839
    %v1555 = vpop.f32.mrf.mxu0
    %v1556 = vadd.f32 %v791, %v1555
    %v1557 = vpop.f32.mrf.mxu0
    %v1558 = vadd.f32 %v791, %v1557
    %1559 = vdwg.mxu0
    %v1560 = vpack.c.bf16 %v1227, %v1178
    %v1561 = vpack.c.bf16 %v1325, %v1276
    %v1562 = vpack.c.bf16 %v1423, %v1374
    %v1563 = vpack.c.bf16 %v1521, %v1472
    %v1564 = vpack.c.bf16 %v1229, %v1180
    %v1565 = vpack.c.bf16 %v1327, %v1278
    %v1566 = vpack.c.bf16 %v1425, %v1376
    %v1567 = vpack.c.bf16 %v1523, %v1474
    %v1568 = vpack.c.bf16 %v1232, %v1183
    %v1569 = vpack.c.bf16 %v1330, %v1281
    %v1570 = vpack.c.bf16 %v1428, %v1379
    %v1571 = vpack.c.bf16 %v1526, %v1477
    %v1572 = vpack.c.bf16 %v1234, %v1185
    %v1573 = vpack.c.bf16 %v1332, %v1283
    %v1574 = vpack.c.bf16 %v1430, %v1381
    %v1575 = vpack.c.bf16 %v1528, %v1479
    %v1576 = vpack.c.bf16 %v1237, %v1188
    %v1577 = vpack.c.bf16 %v1335, %v1286
    %v1578 = vpack.c.bf16 %v1433, %v1384
    %v1579 = vpack.c.bf16 %v1531, %v1482
    %v1580 = vpack.c.bf16 %v1239, %v1190
    %v1581 = vpack.c.bf16 %v1337, %v1288
    %v1582 = vpack.c.bf16 %v1435, %v1386
    %v1583 = vpack.c.bf16 %v1533, %v1484
    %v1584 = vpack.c.bf16 %v1242, %v1193
    %v1585 = vpack.c.bf16 %v1340, %v1291
    %v1586 = vpack.c.bf16 %v1438, %v1389
    %v1587 = vpack.c.bf16 %v1536, %v1487
    %v1588 = vpack.c.bf16 %v1244, %v1195
    %v1589 = vpack.c.bf16 %v1342, %v1293
    %v1590 = vpack.c.bf16 %v1440, %v1391
    %v1591 = vpack.c.bf16 %v1538, %v1489
    %v1592 = vpack.c.bf16 %v1247, %v1198
    %v1593 = vpack.c.bf16 %v1345, %v1296
    %v1594 = vpack.c.bf16 %v1443, %v1394
    %v1595 = vpack.c.bf16 %v1541, %v1492
    %v1596 = vpack.c.bf16 %v1249, %v1200
    %v1597 = vpack.c.bf16 %v1347, %v1298
    %v1598 = vpack.c.bf16 %v1445, %v1396
    %v1599 = vpack.c.bf16 %v1543, %v1494
    %v1600 = vpack.c.bf16 %v1252, %v1203
    %v1601 = vpack.c.bf16 %v1350, %v1301
    %v1602 = vpack.c.bf16 %v1448, %v1399
    %v1603 = vpack.c.bf16 %v1546, %v1497
    %v1604 = vpack.c.bf16 %v1254, %v1205
    %v1605 = vpack.c.bf16 %v1352, %v1303
    %v1606 = vpack.c.bf16 %v1450, %v1401
    %v1607 = vpack.c.bf16 %v1548, %v1499
    %v1608 = vpack.c.bf16 %v1257, %v1208
    %v1609 = vpack.c.bf16 %v1355, %v1306
    %v1610 = vpack.c.bf16 %v1453, %v1404
    %v1611 = vpack.c.bf16 %v1551, %v1502
    %v1612 = vpack.c.bf16 %v1259, %v1210
    %v1613 = vpack.c.bf16 %v1357, %v1308
    %v1614 = vpack.c.bf16 %v1455, %v1406
    %v1615 = vpack.c.bf16 %v1553, %v1504
    %v1616 = vpack.c.bf16 %v1262, %v1213
    %v1617 = vpack.c.bf16 %v1360, %v1311
    %v1618 = vpack.c.bf16 %v1458, %v1409
    %v1619 = vpack.c.bf16 %v1556, %v1507
    %v1620 = vpack.c.bf16 %v1264, %v1215
    %v1621 = vpack.c.bf16 %v1362, %v1313
    %v1622 = vpack.c.bf16 %v1460, %v1411
    %v1623 = vpack.c.bf16 %v1558, %v1509
    %1624 = vst [vmem:[#allocation2] sm:$0xff] %v1560
    %1625 = vst [vmem:[#allocation2 + $0x8] sm:$0xff] %v1561
    %1626 = vst [vmem:[#allocation2 + $0x10] sm:$0xff] %v1562
    %1627 = vst [vmem:[#allocation2 + $0x18] sm:$0xff] %v1563
    %1628 = vst [vmem:[#allocation2 + $0x20] sm:$0xff] %v1564
    %1629 = vst [vmem:[#allocation2 + $0x28] sm:$0xff] %v1565
    %1630 = vst [vmem:[#allocation2 + $0x30] sm:$0xff] %v1566
    %1631 = vst [vmem:[#allocation2 + $0x38] sm:$0xff] %v1567
    %1632 = vst [vmem:[#allocation2 + $0x40] sm:$0xff] %v1568
    %1633 = vst [vmem:[#allocation2 + $0x48] sm:$0xff] %v1569
    %1634 = vst [vmem:[#allocation2 + $0x50] sm:$0xff] %v1570
    %1635 = vst [vmem:[#allocation2 + $0x58] sm:$0xff] %v1571
    %1636 = vst [vmem:[#allocation2 + $0x60] sm:$0xff] %v1572
    %1637 = vst [vmem:[#allocation2 + $0x68] sm:$0xff] %v1573
    %1638 = vst [vmem:[#allocation2 + $0x70] sm:$0xff] %v1574
    %1639 = vst [vmem:[#allocation2 + $0x78] sm:$0xff] %v1575
    %1640 = vst [vmem:[#allocation2 + $0x80] sm:$0xff] %v1576
    %1641 = vst [vmem:[#allocation2 + $0x88] sm:$0xff] %v1577
    %1642 = vst [vmem:[#allocation2 + $0x90] sm:$0xff] %v1578
    %1643 = vst [vmem:[#allocation2 + $0x98] sm:$0xff] %v1579
    %1644 = vst [vmem:[#allocation2 + $0xa0] sm:$0xff] %v1580
    %1645 = vst [vmem:[#allocation2 + $0xa8] sm:$0xff] %v1581
    %1646 = vst [vmem:[#allocation2 + $0xb0] sm:$0xff] %v1582
    %1647 = vst [vmem:[#allocation2 + $0xb8] sm:$0xff] %v1583
    %1648 = vst [vmem:[#allocation2 + $0xc0] sm:$0xff] %v1584
    %1649 = vst [vmem:[#allocation2 + $0xc8] sm:$0xff] %v1585
    %1650 = vst [vmem:[#allocation2 + $0xd0] sm:$0xff] %v1586
    %1651 = vst [vmem:[#allocation2 + $0xd8] sm:$0xff] %v1587
    %1652 = vst [vmem:[#allocation2 + $0xe0] sm:$0xff] %v1588
    %1653 = vst [vmem:[#allocation2 + $0xe8] sm:$0xff] %v1589
    %1654 = vst [vmem:[#allocation2 + $0xf0] sm:$0xff] %v1590
    %1655 = vst [vmem:[#allocation2 + $0xf8] sm:$0xff] %v1591
    %1656 = vst [vmem:[#allocation2 + $0x100] sm:$0xff] %v1592
    %1657 = vst [vmem:[#allocation2 + $0x108] sm:$0xff] %v1593
    %1658 = vst [vmem:[#allocation2 + $0x110] sm:$0xff] %v1594
    %1659 = vst [vmem:[#allocation2 + $0x118] sm:$0xff] %v1595
    %1660 = vst [vmem:[#allocation2 + $0x120] sm:$0xff] %v1596
    %1661 = vst [vmem:[#allocation2 + $0x128] sm:$0xff] %v1597
    %1662 = vst [vmem:[#allocation2 + $0x130] sm:$0xff] %v1598
    %1663 = vst [vmem:[#allocation2 + $0x138] sm:$0xff] %v1599
    %1664 = vst [vmem:[#allocation2 + $0x140] sm:$0xff] %v1600
    %1665 = vst [vmem:[#allocation2 + $0x148] sm:$0xff] %v1601
    %1666 = vst [vmem:[#allocation2 + $0x150] sm:$0xff] %v1602
    %1667 = vst [vmem:[#allocation2 + $0x158] sm:$0xff] %v1603
    %1668 = vst [vmem:[#allocation2 + $0x160] sm:$0xff] %v1604
    %1669 = vst [vmem:[#allocation2 + $0x168] sm:$0xff] %v1605
    %1670 = vst [vmem:[#allocation2 + $0x170] sm:$0xff] %v1606
    %1671 = vst [vmem:[#allocation2 + $0x178] sm:$0xff] %v1607
    %1672 = vst [vmem:[#allocation2 + $0x180] sm:$0xff] %v1608
    %1673 = vst [vmem:[#allocation2 + $0x188] sm:$0xff] %v1609
    %1674 = vst [vmem:[#allocation2 + $0x190] sm:$0xff] %v1610
    %1675 = vst [vmem:[#allocation2 + $0x198] sm:$0xff] %v1611
    %1676 = vst [vmem:[#allocation2 + $0x1a0] sm:$0xff] %v1612
    %1677 = vst [vmem:[#allocation2 + $0x1a8] sm:$0xff] %v1613
    %1678 = vst [vmem:[#allocation2 + $0x1b0] sm:$0xff] %v1614
    %1679 = vst [vmem:[#allocation2 + $0x1b8] sm:$0xff] %v1615
    %1680 = vst [vmem:[#allocation2 + $0x1c0] sm:$0xff] %v1616
    %1681 = vst [vmem:[#allocation2 + $0x1c8] sm:$0xff] %v1617
    %1682 = vst [vmem:[#allocation2 + $0x1d0] sm:$0xff] %v1618
    %1683 = vst [vmem:[#allocation2 + $0x1d8] sm:$0xff] %v1619
    %1684 = vst [vmem:[#allocation2 + $0x1e0] sm:$0xff] %v1620
    %1685 = vst [vmem:[#allocation2 + $0x1e8] sm:$0xff] %v1621
    %1686 = vst [vmem:[#allocation2 + $0x1f0] sm:$0xff] %v1622
    %1687 = vst [vmem:[#allocation2 + $0x1f8] sm:$0xff] %v1623
    %1688 = vst [vmem:[#allocation4] sm:$0xff] 0.0
    %1689 = vst [vmem:[#allocation4 + $0x8] sm:$0xff] 0.0
    %1690 = vst [vmem:[#allocation4 + $0x10] sm:$0xff] 0.0
    %1691 = vst [vmem:[#allocation4 + $0x18] sm:$0xff] 0.0
    %1692 = vst [vmem:[#allocation5] sm:$0xff] %v679
    %1693 = vst [vmem:[#allocation5 + $0x10] sm:$0xff] %v681
    %1694 = vst [vmem:[#allocation5 + $0x8] sm:$0xff] %v679
    %1695 = vst [vmem:[#allocation5 + $0x18] sm:$0xff] %v681
    // While loop
    $region97: #{tpu_custom_call.1} parent=1 // loop_pre_header
      _
    $region98: #{tpu_custom_call.1} parent=1 // loop_header
      %s1697 = sphi 0, %s1699
      %p1698 = scmp.ge.s32.totalorder %s1697, %s685
    $region99: #{tpu_custom_call.1} parent=1 // loop_header_branch
      %1701 = sbr.rel (%p1698) target = $region103
    $region100: #{tpu_custom_call.1} parent=1 // loop_body
      %s1702 = ssub.s32 %s685, 1
      %s1703 = ssub.s32 %s1702, %s1697
      %s1704 = smul.u32 %s1697, 16
      %s1705 = smul.u32 %s1703, 16
      %v1706 = vld [vmem:[#allocation4] sm:$0xff]
      %v1707 = vld [vmem:[#allocation4 + $0x8] sm:$0xff]
      %v1708 = vld [vmem:[#allocation4 + $0x10] sm:$0xff]
      %v1709 = vld [vmem:[#allocation4 + $0x18] sm:$0xff]
      %v1710 = vld [vmem:[#allocation5] sm:$0xff]
      %v1711 = vld [vmem:[#allocation5 + $0x8] sm:$0xff]
      %v1712 = vld [vmem:[#allocation5 + $0x10] sm:$0xff]
      %v1713 = vld [vmem:[#allocation5 + $0x18] sm:$0xff]
      %v1714 = vpack.c.bf16 %v1708, %v1706
      %v1715 = vpack.c.bf16 %v1709, %v1707
      %v1716 = vld [vmem:[#allocation15] sm:$0xff]
      %v1717 = vld [vmem:[#allocation15 + $0x8] sm:$0xff]
      %v1718 = vld [vmem:[#allocation15 + $0x10] sm:$0xff]
      %v1719 = vld [vmem:[#allocation15 + $0x18] sm:$0xff]
      %v1720 = vld [vmem:[#allocation15 + $0x20] sm:$0xff]
      %v1721 = vld [vmem:[#allocation15 + $0x28] sm:$0xff]
      %v1722 = vld [vmem:[#allocation15 + $0x30] sm:$0xff]
      %v1723 = vld [vmem:[#allocation15 + $0x38] sm:$0xff]
      %v1724 = vld [vmem:[#allocation15 + $0x40] sm:$0xff]
      %v1725 = vld [vmem:[#allocation15 + $0x48] sm:$0xff]
      %v1726 = vld [vmem:[#allocation15 + $0x50] sm:$0xff]
      %v1727 = vld [vmem:[#allocation15 + $0x58] sm:$0xff]
      %v1728 = vld [vmem:[#allocation15 + $0x60] sm:$0xff]
      %v1729 = vld [vmem:[#allocation15 + $0x68] sm:$0xff]
      %v1730 = vld [vmem:[#allocation15 + $0x70] sm:$0xff]
      %v1731 = vld [vmem:[#allocation15 + $0x78] sm:$0xff]
      %v1732 = vld [vmem:[#allocation15 + $0x80] sm:$0xff]
      %v1733 = vld [vmem:[#allocation15 + $0x88] sm:$0xff]
      %v1734 = vld [vmem:[#allocation15 + $0x90] sm:$0xff]
      %v1735 = vld [vmem:[#allocation15 + $0x98] sm:$0xff]
      %v1736 = vld [vmem:[#allocation15 + $0xa0] sm:$0xff]
      %v1737 = vld [vmem:[#allocation15 + $0xa8] sm:$0xff]
      %v1738 = vld [vmem:[#allocation15 + $0xb0] sm:$0xff]
      %v1739 = vld [vmem:[#allocation15 + $0xb8] sm:$0xff]
      %v1740 = vld [vmem:[#allocation15 + $0xc0] sm:$0xff]
      %v1741 = vld [vmem:[#allocation15 + $0xc8] sm:$0xff]
      %v1742 = vld [vmem:[#allocation15 + $0xd0] sm:$0xff]
      %v1743 = vld [vmem:[#allocation15 + $0xd8] sm:$0xff]
      %v1744 = vld [vmem:[#allocation15 + $0xe0] sm:$0xff]
      %v1745 = vld [vmem:[#allocation15 + $0xe8] sm:$0xff]
      %v1746 = vld [vmem:[#allocation15 + $0xf0] sm:$0xff]
      %v1747 = vld [vmem:[#allocation15 + $0xf8] sm:$0xff]
      %v1748 = vld [vmem:[#allocation15 + $0x100] sm:$0xff]
      %v1749 = vld [vmem:[#allocation15 + $0x108] sm:$0xff]
      %v1750 = vld [vmem:[#allocation15 + $0x110] sm:$0xff]
      %v1751 = vld [vmem:[#allocation15 + $0x118] sm:$0xff]
      %v1752 = vld [vmem:[#allocation15 + $0x120] sm:$0xff]
      %v1753 = vld [vmem:[#allocation15 + $0x128] sm:$0xff]
      %v1754 = vld [vmem:[#allocation15 + $0x130] sm:$0xff]
      %v1755 = vld [vmem:[#allocation15 + $0x138] sm:$0xff]
      %v1756 = vld [vmem:[#allocation15 + $0x140] sm:$0xff]
      %v1757 = vld [vmem:[#allocation15 + $0x148] sm:$0xff]
      %v1758 = vld [vmem:[#allocation15 + $0x150] sm:$0xff]
      %v1759 = vld [vmem:[#allocation15 + $0x158] sm:$0xff]
      %v1760 = vld [vmem:[#allocation15 + $0x160] sm:$0xff]
      %v1761 = vld [vmem:[#allocation15 + $0x168] sm:$0xff]
      %v1762 = vld [vmem:[#allocation15 + $0x170] sm:$0xff]
      %v1763 = vld [vmem:[#allocation15 + $0x178] sm:$0xff]
      %v1764 = vld [vmem:[#allocation15 + $0x180] sm:$0xff]
      %v1765 = vld [vmem:[#allocation15 + $0x188] sm:$0xff]
      %v1766 = vld [vmem:[#allocation15 + $0x190] sm:$0xff]
      %v1767 = vld [vmem:[#allocation15 + $0x198] sm:$0xff]
      %v1768 = vld [vmem:[#allocation15 + $0x1a0] sm:$0xff]
      %v1769 = vld [vmem:[#allocation15 + $0x1a8] sm:$0xff]
      %v1770 = vld [vmem:[#allocation15 + $0x1b0] sm:$0xff]
      %v1771 = vld [vmem:[#allocation15 + $0x1b8] sm:$0xff]
      %v1772 = vld [vmem:[#allocation15 + $0x1c0] sm:$0xff]
      %v1773 = vld [vmem:[#allocation15 + $0x1c8] sm:$0xff]
      %v1774 = vld [vmem:[#allocation15 + $0x1d0] sm:$0xff]
      %v1775 = vld [vmem:[#allocation15 + $0x1d8] sm:$0xff]
      %v1776 = vld [vmem:[#allocation15 + $0x1e0] sm:$0xff]
      %v1777 = vld [vmem:[#allocation15 + $0x1e8] sm:$0xff]
      %v1778 = vld [vmem:[#allocation15 + $0x1f0] sm:$0xff]
      %v1779 = vld [vmem:[#allocation15 + $0x1f8] sm:$0xff]
      %v1780 = vld [vmem:[#allocation15 + $0x200] sm:$0xff]
      %v1781 = vld [vmem:[#allocation15 + $0x208] sm:$0xff]
      %v1782 = vld [vmem:[#allocation15 + $0x210] sm:$0xff]
      %v1783 = vld [vmem:[#allocation15 + $0x218] sm:$0xff]
      %v1784 = vld [vmem:[#allocation15 + $0x220] sm:$0xff]
      %v1785 = vld [vmem:[#allocation15 + $0x228] sm:$0xff]
      %v1786 = vld [vmem:[#allocation15 + $0x230] sm:$0xff]
      %v1787 = vld [vmem:[#allocation15 + $0x238] sm:$0xff]
      %v1788 = vld [vmem:[#allocation15 + $0x240] sm:$0xff]
      %v1789 = vld [vmem:[#allocation15 + $0x248] sm:$0xff]
      %v1790 = vld [vmem:[#allocation15 + $0x250] sm:$0xff]
      %v1791 = vld [vmem:[#allocation15 + $0x258] sm:$0xff]
      %v1792 = vld [vmem:[#allocation15 + $0x260] sm:$0xff]
      %v1793 = vld [vmem:[#allocation15 + $0x268] sm:$0xff]
      %v1794 = vld [vmem:[#allocation15 + $0x270] sm:$0xff]
      %v1795 = vld [vmem:[#allocation15 + $0x278] sm:$0xff]
      %v1796 = vld [vmem:[#allocation15 + $0x280] sm:$0xff]
      %v1797 = vld [vmem:[#allocation15 + $0x288] sm:$0xff]
      %v1798 = vld [vmem:[#allocation15 + $0x290] sm:$0xff]
      %v1799 = vld [vmem:[#allocation15 + $0x298] sm:$0xff]
      %v1800 = vld [vmem:[#allocation15 + $0x2a0] sm:$0xff]
      %v1801 = vld [vmem:[#allocation15 + $0x2a8] sm:$0xff]
      %v1802 = vld [vmem:[#allocation15 + $0x2b0] sm:$0xff]
      %v1803 = vld [vmem:[#allocation15 + $0x2b8] sm:$0xff]
      %v1804 = vld [vmem:[#allocation15 + $0x2c0] sm:$0xff]
      %v1805 = vld [vmem:[#allocation15 + $0x2c8] sm:$0xff]
      %v1806 = vld [vmem:[#allocation15 + $0x2d0] sm:$0xff]
      %v1807 = vld [vmem:[#allocation15 + $0x2d8] sm:$0xff]
      %v1808 = vld [vmem:[#allocation15 + $0x2e0] sm:$0xff]
      %v1809 = vld [vmem:[#allocation15 + $0x2e8] sm:$0xff]
      %v1810 = vld [vmem:[#allocation15 + $0x2f0] sm:$0xff]
      %v1811 = vld [vmem:[#allocation15 + $0x2f8] sm:$0xff]
      %v1812 = vld [vmem:[#allocation15 + $0x300] sm:$0xff]
      %v1813 = vld [vmem:[#allocation15 + $0x308] sm:$0xff]
      %v1814 = vld [vmem:[#allocation15 + $0x310] sm:$0xff]
      %v1815 = vld [vmem:[#allocation15 + $0x318] sm:$0xff]
      %v1816 = vld [vmem:[#allocation15 + $0x320] sm:$0xff]
      %v1817 = vld [vmem:[#allocation15 + $0x328] sm:$0xff]
      %v1818 = vld [vmem:[#allocation15 + $0x330] sm:$0xff]
      %v1819 = vld [vmem:[#allocation15 + $0x338] sm:$0xff]
      %v1820 = vld [vmem:[#allocation15 + $0x340] sm:$0xff]
      %v1821 = vld [vmem:[#allocation15 + $0x348] sm:$0xff]
      %v1822 = vld [vmem:[#allocation15 + $0x350] sm:$0xff]
      %v1823 = vld [vmem:[#allocation15 + $0x358] sm:$0xff]
      %v1824 = vld [vmem:[#allocation15 + $0x360] sm:$0xff]
      %v1825 = vld [vmem:[#allocation15 + $0x368] sm:$0xff]
      %v1826 = vld [vmem:[#allocation15 + $0x370] sm:$0xff]
      %v1827 = vld [vmem:[#allocation15 + $0x378] sm:$0xff]
      %v1828 = vld [vmem:[#allocation15 + $0x380] sm:$0xff]
      %v1829 = vld [vmem:[#allocation15 + $0x388] sm:$0xff]
      %v1830 = vld [vmem:[#allocation15 + $0x390] sm:$0xff]
      %v1831 = vld [vmem:[#allocation15 + $0x398] sm:$0xff]
      %v1832 = vld [vmem:[#allocation15 + $0x3a0] sm:$0xff]
      %v1833 = vld [vmem:[#allocation15 + $0x3a8] sm:$0xff]
      %v1834 = vld [vmem:[#allocation15 + $0x3b0] sm:$0xff]
      %v1835 = vld [vmem:[#allocation15 + $0x3b8] sm:$0xff]
      %v1836 = vld [vmem:[#allocation15 + $0x3c0] sm:$0xff]
      %v1837 = vld [vmem:[#allocation15 + $0x3c8] sm:$0xff]
      %v1838 = vld [vmem:[#allocation15 + $0x3d0] sm:$0xff]
      %v1839 = vld [vmem:[#allocation15 + $0x3d8] sm:$0xff]
      %v1840 = vld [vmem:[#allocation15 + $0x3e0] sm:$0xff]
      %v1841 = vld [vmem:[#allocation15 + $0x3e8] sm:$0xff]
      %v1842 = vld [vmem:[#allocation15 + $0x3f0] sm:$0xff]
      %v1843 = vld [vmem:[#allocation15 + $0x3f8] sm:$0xff]
      %v1972 = vunpack.c.l.b16 %v1716
      %v1973 = vunpack.c.h.b16 %v1716
      %v1974 = vunpack.c.l.b16 %v1717
      %v1975 = vunpack.c.h.b16 %v1717
      %v1976 = vunpack.c.l.b16 %v1718
      %v1977 = vunpack.c.h.b16 %v1718
      %v1978 = vunpack.c.l.b16 %v1719
      %v1979 = vunpack.c.h.b16 %v1719
      %v1980 = vunpack.c.l.b16 %v1720
      %v1981 = vunpack.c.h.b16 %v1720
      %v1982 = vunpack.c.l.b16 %v1721
      %v1983 = vunpack.c.h.b16 %v1721
      %v1984 = vunpack.c.l.b16 %v1722
      %v1985 = vunpack.c.h.b16 %v1722
      %v1986 = vunpack.c.l.b16 %v1723
      %v1987 = vunpack.c.h.b16 %v1723
      %v1988 = vunpack.c.l.b16 %v1724
      %v1989 = vunpack.c.h.b16 %v1724
      %v1990 = vunpack.c.l.b16 %v1725
      %v1991 = vunpack.c.h.b16 %v1725
      %v1992 = vunpack.c.l.b16 %v1726
      %v1993 = vunpack.c.h.b16 %v1726
      %v1994 = vunpack.c.l.b16 %v1727
      %v1995 = vunpack.c.h.b16 %v1727
      %v1996 = vunpack.c.l.b16 %v1728
      %v1997 = vunpack.c.h.b16 %v1728
      %v1998 = vunpack.c.l.b16 %v1729
      %v1999 = vunpack.c.h.b16 %v1729
      %v2000 = vunpack.c.l.b16 %v1730
      %v2001 = vunpack.c.h.b16 %v1730
      %v2002 = vunpack.c.l.b16 %v1731
      %v2003 = vunpack.c.h.b16 %v1731
      %v2004 = vunpack.c.l.b16 %v1732
      %v2005 = vunpack.c.h.b16 %v1732
      %v2006 = vunpack.c.l.b16 %v1733
      %v2007 = vunpack.c.h.b16 %v1733
      %v2008 = vunpack.c.l.b16 %v1734
      %v2009 = vunpack.c.h.b16 %v1734
      %v2010 = vunpack.c.l.b16 %v1735
      %v2011 = vunpack.c.h.b16 %v1735
      %v2012 = vunpack.c.l.b16 %v1736
      %v2013 = vunpack.c.h.b16 %v1736
      %v2014 = vunpack.c.l.b16 %v1737
      %v2015 = vunpack.c.h.b16 %v1737
      %v2016 = vunpack.c.l.b16 %v1738
      %v2017 = vunpack.c.h.b16 %v1738
      %v2018 = vunpack.c.l.b16 %v1739
      %v2019 = vunpack.c.h.b16 %v1739
      %v2020 = vunpack.c.l.b16 %v1740
      %v2021 = vunpack.c.h.b16 %v1740
      %v2022 = vunpack.c.l.b16 %v1741
      %v2023 = vunpack.c.h.b16 %v1741
      %v2024 = vunpack.c.l.b16 %v1742
      %v2025 = vunpack.c.h.b16 %v1742
      %v2026 = vunpack.c.l.b16 %v1743
      %v2027 = vunpack.c.h.b16 %v1743
      %v2028 = vunpack.c.l.b16 %v1744
      %v2029 = vunpack.c.h.b16 %v1744
      %v2030 = vunpack.c.l.b16 %v1745
      %v2031 = vunpack.c.h.b16 %v1745
      %v2032 = vunpack.c.l.b16 %v1746
      %v2033 = vunpack.c.h.b16 %v1746
      %v2034 = vunpack.c.l.b16 %v1747
      %v2035 = vunpack.c.h.b16 %v1747
      %v2036 = vunpack.c.l.b16 %v1748
      %v2037 = vunpack.c.h.b16 %v1748
      %v2038 = vunpack.c.l.b16 %v1749
      %v2039 = vunpack.c.h.b16 %v1749
      %v2040 = vunpack.c.l.b16 %v1750
      %v2041 = vunpack.c.h.b16 %v1750
      %v2042 = vunpack.c.l.b16 %v1751
      %v2043 = vunpack.c.h.b16 %v1751
      %v2044 = vunpack.c.l.b16 %v1752
      %v2045 = vunpack.c.h.b16 %v1752
      %v2046 = vunpack.c.l.b16 %v1753
      %v2047 = vunpack.c.h.b16 %v1753
      %v2048 = vunpack.c.l.b16 %v1754
      %v2049 = vunpack.c.h.b16 %v1754
      %v2050 = vunpack.c.l.b16 %v1755
      %v2051 = vunpack.c.h.b16 %v1755
      %v2052 = vunpack.c.l.b16 %v1756
      %v2053 = vunpack.c.h.b16 %v1756
      %v2054 = vunpack.c.l.b16 %v1757
      %v2055 = vunpack.c.h.b16 %v1757
      %v2056 = vunpack.c.l.b16 %v1758
      %v2057 = vunpack.c.h.b16 %v1758
      %v2058 = vunpack.c.l.b16 %v1759
      %v2059 = vunpack.c.h.b16 %v1759
      %v2060 = vunpack.c.l.b16 %v1760
      %v2061 = vunpack.c.h.b16 %v1760
      %v2062 = vunpack.c.l.b16 %v1761
      %v2063 = vunpack.c.h.b16 %v1761
      %v2064 = vunpack.c.l.b16 %v1762
      %v2065 = vunpack.c.h.b16 %v1762
      %v2066 = vunpack.c.l.b16 %v1763
      %v2067 = vunpack.c.h.b16 %v1763
      %v2068 = vunpack.c.l.b16 %v1764
      %v2069 = vunpack.c.h.b16 %v1764
      %v2070 = vunpack.c.l.b16 %v1765
      %v2071 = vunpack.c.h.b16 %v1765
      %v2072 = vunpack.c.l.b16 %v1766
      %v2073 = vunpack.c.h.b16 %v1766
      %v2074 = vunpack.c.l.b16 %v1767
      %v2075 = vunpack.c.h.b16 %v1767
      %v2076 = vunpack.c.l.b16 %v1768
      %v2077 = vunpack.c.h.b16 %v1768
      %v2078 = vunpack.c.l.b16 %v1769
      %v2079 = vunpack.c.h.b16 %v1769
      %v2080 = vunpack.c.l.b16 %v1770
      %v2081 = vunpack.c.h.b16 %v1770
      %v2082 = vunpack.c.l.b16 %v1771
      %v2083 = vunpack.c.h.b16 %v1771
      %v2084 = vunpack.c.l.b16 %v1772
      %v2085 = vunpack.c.h.b16 %v1772
      %v2086 = vunpack.c.l.b16 %v1773
      %v2087 = vunpack.c.h.b16 %v1773
      %v2088 = vunpack.c.l.b16 %v1774
      %v2089 = vunpack.c.h.b16 %v1774
      %v2090 = vunpack.c.l.b16 %v1775
      %v2091 = vunpack.c.h.b16 %v1775
      %v2092 = vunpack.c.l.b16 %v1776
      %v2093 = vunpack.c.h.b16 %v1776
      %v2094 = vunpack.c.l.b16 %v1777
      %v2095 = vunpack.c.h.b16 %v1777
      %v2096 = vunpack.c.l.b16 %v1778
      %v2097 = vunpack.c.h.b16 %v1778
      %v2098 = vunpack.c.l.b16 %v1779
      %v2099 = vunpack.c.h.b16 %v1779
      %v2100 = vunpack.c.l.b16 %v1780
      %v2101 = vunpack.c.h.b16 %v1780
      %v2102 = vunpack.c.l.b16 %v1781
      %v2103 = vunpack.c.h.b16 %v1781
      %v2104 = vunpack.c.l.b16 %v1782
      %v2105 = vunpack.c.h.b16 %v1782
      %v2106 = vunpack.c.l.b16 %v1783
      %v2107 = vunpack.c.h.b16 %v1783
      %v2108 = vunpack.c.l.b16 %v1784
      %v2109 = vunpack.c.h.b16 %v1784
      %v2110 = vunpack.c.l.b16 %v1785
      %v2111 = vunpack.c.h.b16 %v1785
      %v2112 = vunpack.c.l.b16 %v1786
      %v2113 = vunpack.c.h.b16 %v1786
      %v2114 = vunpack.c.l.b16 %v1787
      %v2115 = vunpack.c.h.b16 %v1787
      %v2116 = vunpack.c.l.b16 %v1788
      %v2117 = vunpack.c.h.b16 %v1788
      %v2118 = vunpack.c.l.b16 %v1789
      %v2119 = vunpack.c.h.b16 %v1789
      %v2120 = vunpack.c.l.b16 %v1790
      %v2121 = vunpack.c.h.b16 %v1790
      %v2122 = vunpack.c.l.b16 %v1791
      %v2123 = vunpack.c.h.b16 %v1791
      %v2124 = vunpack.c.l.b16 %v1792
      %v2125 = vunpack.c.h.b16 %v1792
      %v2126 = vunpack.c.l.b16 %v1793
      %v2127 = vunpack.c.h.b16 %v1793
      %v2128 = vunpack.c.l.b16 %v1794
      %v2129 = vunpack.c.h.b16 %v1794
      %v2130 = vunpack.c.l.b16 %v1795
      %v2131 = vunpack.c.h.b16 %v1795
      %v2132 = vunpack.c.l.b16 %v1796
      %v2133 = vunpack.c.h.b16 %v1796
      %v2134 = vunpack.c.l.b16 %v1797
      %v2135 = vunpack.c.h.b16 %v1797
      %v2136 = vunpack.c.l.b16 %v1798
      %v2137 = vunpack.c.h.b16 %v1798
      %v2138 = vunpack.c.l.b16 %v1799
      %v2139 = vunpack.c.h.b16 %v1799
      %v2140 = vunpack.c.l.b16 %v1800
      %v2141 = vunpack.c.h.b16 %v1800
      %v2142 = vunpack.c.l.b16 %v1801
      %v2143 = vunpack.c.h.b16 %v1801
      %v2144 = vunpack.c.l.b16 %v1802
      %v2145 = vunpack.c.h.b16 %v1802
      %v2146 = vunpack.c.l.b16 %v1803
      %v2147 = vunpack.c.h.b16 %v1803
      %v2148 = vunpack.c.l.b16 %v1804
      %v2149 = vunpack.c.h.b16 %v1804
      %v2150 = vunpack.c.l.b16 %v1805
      %v2151 = vunpack.c.h.b16 %v1805
      %v2152 = vunpack.c.l.b16 %v1806
      %v2153 = vunpack.c.h.b16 %v1806
      %v2154 = vunpack.c.l.b16 %v1807
      %v2155 = vunpack.c.h.b16 %v1807
      %v2156 = vunpack.c.l.b16 %v1808
      %v2157 = vunpack.c.h.b16 %v1808
      %v2158 = vunpack.c.l.b16 %v1809
      %v2159 = vunpack.c.h.b16 %v1809
      %v2160 = vunpack.c.l.b16 %v1810
      %v2161 = vunpack.c.h.b16 %v1810
      %v2162 = vunpack.c.l.b16 %v1811
      %v2163 = vunpack.c.h.b16 %v1811
      %v2164 = vunpack.c.l.b16 %v1812
      %v2165 = vunpack.c.h.b16 %v1812
      %v2166 = vunpack.c.l.b16 %v1813
      %v2167 = vunpack.c.h.b16 %v1813
      %v2168 = vunpack.c.l.b16 %v1814
      %v2169 = vunpack.c.h.b16 %v1814
      %v2170 = vunpack.c.l.b16 %v1815
      %v2171 = vunpack.c.h.b16 %v1815
      %v2172 = vunpack.c.l.b16 %v1816
      %v2173 = vunpack.c.h.b16 %v1816
      %v2174 = vunpack.c.l.b16 %v1817
      %v2175 = vunpack.c.h.b16 %v1817
      %v2176 = vunpack.c.l.b16 %v1818
      %v2177 = vunpack.c.h.b16 %v1818
      %v2178 = vunpack.c.l.b16 %v1819
      %v2179 = vunpack.c.h.b16 %v1819
      %v2180 = vunpack.c.l.b16 %v1820
      %v2181 = vunpack.c.h.b16 %v1820
      %v2182 = vunpack.c.l.b16 %v1821
      %v2183 = vunpack.c.h.b16 %v1821
      %v2184 = vunpack.c.l.b16 %v1822
      %v2185 = vunpack.c.h.b16 %v1822
      %v2186 = vunpack.c.l.b16 %v1823
      %v2187 = vunpack.c.h.b16 %v1823
      %v2188 = vunpack.c.l.b16 %v1824
      %v2189 = vunpack.c.h.b16 %v1824
      %v2190 = vunpack.c.l.b16 %v1825
      %v2191 = vunpack.c.h.b16 %v1825
      %v2192 = vunpack.c.l.b16 %v1826
      %v2193 = vunpack.c.h.b16 %v1826
      %v2194 = vunpack.c.l.b16 %v1827
      %v2195 = vunpack.c.h.b16 %v1827
      %v2196 = vunpack.c.l.b16 %v1828
      %v2197 = vunpack.c.h.b16 %v1828
      %v2198 = vunpack.c.l.b16 %v1829
      %v2199 = vunpack.c.h.b16 %v1829
      %v2200 = vunpack.c.l.b16 %v1830
      %v2201 = vunpack.c.h.b16 %v1830
      %v2202 = vunpack.c.l.b16 %v1831
      %v2203 = vunpack.c.h.b16 %v1831
      %v2204 = vunpack.c.l.b16 %v1832
      %v2205 = vunpack.c.h.b16 %v1832
      %v2206 = vunpack.c.l.b16 %v1833
      %v2207 = vunpack.c.h.b16 %v1833
      %v2208 = vunpack.c.l.b16 %v1834
      %v2209 = vunpack.c.h.b16 %v1834
      %v2210 = vunpack.c.l.b16 %v1835
      %v2211 = vunpack.c.h.b16 %v1835
      %v2212 = vunpack.c.l.b16 %v1836
      %v2213 = vunpack.c.h.b16 %v1836
      %v2214 = vunpack.c.l.b16 %v1837
      %v2215 = vunpack.c.h.b16 %v1837
      %v2216 = vunpack.c.l.b16 %v1838
      %v2217 = vunpack.c.h.b16 %v1838
      %v2218 = vunpack.c.l.b16 %v1839
      %v2219 = vunpack.c.h.b16 %v1839
      %v2220 = vunpack.c.l.b16 %v1840
      %v2221 = vunpack.c.h.b16 %v1840
      %v2222 = vunpack.c.l.b16 %v1841
      %v2223 = vunpack.c.h.b16 %v1841
      %v2224 = vunpack.c.l.b16 %v1842
      %v2225 = vunpack.c.h.b16 %v1842
      %v2226 = vunpack.c.l.b16 %v1843
      %v2227 = vunpack.c.h.b16 %v1843
      %v2228 = vpack.c.b16 %v1980, %v1972
      %v2229 = vpack.c.b16 %v1981, %v1973
      %v2230 = vpack.c.b16 %v1982, %v1974
      %v2231 = vpack.c.b16 %v1983, %v1975
      %v2232 = vpack.c.b16 %v1984, %v1976
      %v2233 = vpack.c.b16 %v1985, %v1977
      %v2234 = vpack.c.b16 %v1986, %v1978
      %v2235 = vpack.c.b16 %v1987, %v1979
      %v2236 = vpack.c.b16 %v1996, %v1988
      %v2237 = vpack.c.b16 %v1997, %v1989
      %v2238 = vpack.c.b16 %v1998, %v1990
      %v2239 = vpack.c.b16 %v1999, %v1991
      %v2240 = vpack.c.b16 %v2000, %v1992
      %v2241 = vpack.c.b16 %v2001, %v1993
      %v2242 = vpack.c.b16 %v2002, %v1994
      %v2243 = vpack.c.b16 %v2003, %v1995
      %v2244 = vpack.c.b16 %v2012, %v2004
      %v2245 = vpack.c.b16 %v2013, %v2005
      %v2246 = vpack.c.b16 %v2014, %v2006
      %v2247 = vpack.c.b16 %v2015, %v2007
      %v2248 = vpack.c.b16 %v2016, %v2008
      %v2249 = vpack.c.b16 %v2017, %v2009
      %v2250 = vpack.c.b16 %v2018, %v2010
      %v2251 = vpack.c.b16 %v2019, %v2011
      %v2252 = vpack.c.b16 %v2028, %v2020
      %v2253 = vpack.c.b16 %v2029, %v2021
      %v2254 = vpack.c.b16 %v2030, %v2022
      %v2255 = vpack.c.b16 %v2031, %v2023
      %v2256 = vpack.c.b16 %v2032, %v2024
      %v2257 = vpack.c.b16 %v2033, %v2025
      %v2258 = vpack.c.b16 %v2034, %v2026
      %v2259 = vpack.c.b16 %v2035, %v2027
      %v2260 = vpack.c.b16 %v2044, %v2036
      %v2261 = vpack.c.b16 %v2045, %v2037
      %v2262 = vpack.c.b16 %v2046, %v2038
      %v2263 = vpack.c.b16 %v2047, %v2039
      %v2264 = vpack.c.b16 %v2048, %v2040
      %v2265 = vpack.c.b16 %v2049, %v2041
      %v2266 = vpack.c.b16 %v2050, %v2042
      %v2267 = vpack.c.b16 %v2051, %v2043
      %v2268 = vpack.c.b16 %v2060, %v2052
      %v2269 = vpack.c.b16 %v2061, %v2053
      %v2270 = vpack.c.b16 %v2062, %v2054
      %v2271 = vpack.c.b16 %v2063, %v2055
      %v2272 = vpack.c.b16 %v2064, %v2056
      %v2273 = vpack.c.b16 %v2065, %v2057
      %v2274 = vpack.c.b16 %v2066, %v2058
      %v2275 = vpack.c.b16 %v2067, %v2059
      %v2276 = vpack.c.b16 %v2076, %v2068
      %v2277 = vpack.c.b16 %v2077, %v2069
      %v2278 = vpack.c.b16 %v2078, %v2070
      %v2279 = vpack.c.b16 %v2079, %v2071
      %v2280 = vpack.c.b16 %v2080, %v2072
      %v2281 = vpack.c.b16 %v2081, %v2073
      %v2282 = vpack.c.b16 %v2082, %v2074
      %v2283 = vpack.c.b16 %v2083, %v2075
      %v2284 = vpack.c.b16 %v2092, %v2084
      %v2285 = vpack.c.b16 %v2093, %v2085
      %v2286 = vpack.c.b16 %v2094, %v2086
      %v2287 = vpack.c.b16 %v2095, %v2087
      %v2288 = vpack.c.b16 %v2096, %v2088
      %v2289 = vpack.c.b16 %v2097, %v2089
      %v2290 = vpack.c.b16 %v2098, %v2090
      %v2291 = vpack.c.b16 %v2099, %v2091
      %v2292 = vpack.c.b16 %v2108, %v2100
      %v2293 = vpack.c.b16 %v2109, %v2101
      %v2294 = vpack.c.b16 %v2110, %v2102
      %v2295 = vpack.c.b16 %v2111, %v2103
      %v2296 = vpack.c.b16 %v2112, %v2104
      %v2297 = vpack.c.b16 %v2113, %v2105
      %v2298 = vpack.c.b16 %v2114, %v2106
      %v2299 = vpack.c.b16 %v2115, %v2107
      %v2300 = vpack.c.b16 %v2124, %v2116
      %v2301 = vpack.c.b16 %v2125, %v2117
      %v2302 = vpack.c.b16 %v2126, %v2118
      %v2303 = vpack.c.b16 %v2127, %v2119
      %v2304 = vpack.c.b16 %v2128, %v2120
      %v2305 = vpack.c.b16 %v2129, %v2121
      %v2306 = vpack.c.b16 %v2130, %v2122
      %v2307 = vpack.c.b16 %v2131, %v2123
      %v2308 = vpack.c.b16 %v2140, %v2132
      %v2309 = vpack.c.b16 %v2141, %v2133
      %v2310 = vpack.c.b16 %v2142, %v2134
      %v2311 = vpack.c.b16 %v2143, %v2135
      %v2312 = vpack.c.b16 %v2144, %v2136
      %v2313 = vpack.c.b16 %v2145, %v2137
      %v2314 = vpack.c.b16 %v2146, %v2138
      %v2315 = vpack.c.b16 %v2147, %v2139
      %v2316 = vpack.c.b16 %v2156, %v2148
      %v2317 = vpack.c.b16 %v2157, %v2149
      %v2318 = vpack.c.b16 %v2158, %v2150
      %v2319 = vpack.c.b16 %v2159, %v2151
      %v2320 = vpack.c.b16 %v2160, %v2152
      %v2321 = vpack.c.b16 %v2161, %v2153
      %v2322 = vpack.c.b16 %v2162, %v2154
      %v2323 = vpack.c.b16 %v2163, %v2155
      %v2324 = vpack.c.b16 %v2172, %v2164
      %v2325 = vpack.c.b16 %v2173, %v2165
      %v2326 = vpack.c.b16 %v2174, %v2166
      %v2327 = vpack.c.b16 %v2175, %v2167
      %v2328 = vpack.c.b16 %v2176, %v2168
      %v2329 = vpack.c.b16 %v2177, %v2169
      %v2330 = vpack.c.b16 %v2178, %v2170
      %v2331 = vpack.c.b16 %v2179, %v2171
      %v2332 = vpack.c.b16 %v2188, %v2180
      %v2333 = vpack.c.b16 %v2189, %v2181
      %v2334 = vpack.c.b16 %v2190, %v2182
      %v2335 = vpack.c.b16 %v2191, %v2183
      %v2336 = vpack.c.b16 %v2192, %v2184
      %v2337 = vpack.c.b16 %v2193, %v2185
      %v2338 = vpack.c.b16 %v2194, %v2186
      %v2339 = vpack.c.b16 %v2195, %v2187
      %v2340 = vpack.c.b16 %v2204, %v2196
      %v2341 = vpack.c.b16 %v2205, %v2197
      %v2342 = vpack.c.b16 %v2206, %v2198
      %v2343 = vpack.c.b16 %v2207, %v2199
      %v2344 = vpack.c.b16 %v2208, %v2200
      %v2345 = vpack.c.b16 %v2209, %v2201
      %v2346 = vpack.c.b16 %v2210, %v2202
      %v2347 = vpack.c.b16 %v2211, %v2203
      %v2348 = vpack.c.b16 %v2220, %v2212
      %v2349 = vpack.c.b16 %v2221, %v2213
      %v2350 = vpack.c.b16 %v2222, %v2214
      %v2351 = vpack.c.b16 %v2223, %v2215
      %v2352 = vpack.c.b16 %v2224, %v2216
      %v2353 = vpack.c.b16 %v2225, %v2217
      %v2354 = vpack.c.b16 %v2226, %v2218
      %v2355 = vpack.c.b16 %v2227, %v2219
      %2484 = vmatpush.bf16.msra.mxu0 %v2284
      %2485 = vmatpush.bf16.msra.mxu0 %v2276
      %2486 = vmatpush.bf16.msra.mxu0 %v2268
      %2487 = vmatpush.bf16.msra.mxu0 %v2260
      %2488 = vmatpush.bf16.msra.mxu0 %v2252
      %2489 = vmatpush.bf16.msra.mxu0 %v2244
      %2490 = vmatpush.bf16.msra.mxu0 %v2236
      %2491 = vmatpush.bf16.msra.mxu0 %v2228
      %2492 = vmatmul.bf16.gmra.mxu0 %v1714
      %v2493 = vpop.f32.mrf.mxu0
      %v2494 = vadd.f32 0.0, %v2493
      %v2495 = vpop.f32.mrf.mxu0
      %v2496 = vadd.f32 0.0, %v2495
      %2497 = vdwg.mxu0
      %2498 = vmatpush.bf16.msra.mxu0 %v2348
      %2499 = vmatpush.bf16.msra.mxu0 %v2340
      %2500 = vmatpush.bf16.msra.mxu0 %v2332
      %2501 = vmatpush.bf16.msra.mxu0 %v2324
      %2502 = vmatpush.bf16.msra.mxu0 %v2316
      %2503 = vmatpush.bf16.msra.mxu0 %v2308
      %2504 = vmatpush.bf16.msra.mxu0 %v2300
      %2505 = vmatpush.bf16.msra.mxu0 %v2292
      %2506 = vmatmul.bf16.gmra.mxu0 %v1715
      %v2507 = vpop.f32.mrf.mxu0
      %v2508 = vadd.f32 %v2494, %v2507
      %v2509 = vpop.f32.mrf.mxu0
      %v2510 = vadd.f32 %v2496, %v2509
      %2511 = vdwg.mxu0
      %2512 = vmatpush.bf16.msra.mxu0 %v2285
      %2513 = vmatpush.bf16.msra.mxu0 %v2277
      %2514 = vmatpush.bf16.msra.mxu0 %v2269
      %2515 = vmatpush.bf16.msra.mxu0 %v2261
      %2516 = vmatpush.bf16.msra.mxu0 %v2253
      %2517 = vmatpush.bf16.msra.mxu0 %v2245
      %2518 = vmatpush.bf16.msra.mxu0 %v2237
      %2519 = vmatpush.bf16.msra.mxu0 %v2229
      %2520 = vmatmul.bf16.gmra.mxu0 %v1714
      %v2521 = vpop.f32.mrf.mxu0
      %v2522 = vadd.f32 0.0, %v2521
      %v2523 = vpop.f32.mrf.mxu0
      %v2524 = vadd.f32 0.0, %v2523
      %2525 = vdwg.mxu0
      %2526 = vmatpush.bf16.msra.mxu0 %v2349
      %2527 = vmatpush.bf16.msra.mxu0 %v2341
      %2528 = vmatpush.bf16.msra.mxu0 %v2333
      %2529 = vmatpush.bf16.msra.mxu0 %v2325
      %2530 = vmatpush.bf16.msra.mxu0 %v2317
      %2531 = vmatpush.bf16.msra.mxu0 %v2309
      %2532 = vmatpush.bf16.msra.mxu0 %v2301
      %2533 = vmatpush.bf16.msra.mxu0 %v2293
      %2534 = vmatmul.bf16.gmra.mxu0 %v1715
      %v2535 = vpop.f32.mrf.mxu0
      %v2536 = vadd.f32 %v2522, %v2535
      %v2537 = vpop.f32.mrf.mxu0
      %v2538 = vadd.f32 %v2524, %v2537
      %2539 = vdwg.mxu0
      %2540 = vmatpush.bf16.msra.mxu0 %v2286
      %2541 = vmatpush.bf16.msra.mxu0 %v2278
      %2542 = vmatpush.bf16.msra.mxu0 %v2270
      %2543 = vmatpush.bf16.msra.mxu0 %v2262
      %2544 = vmatpush.bf16.msra.mxu0 %v2254
      %2545 = vmatpush.bf16.msra.mxu0 %v2246
      %2546 = vmatpush.bf16.msra.mxu0 %v2238
      %2547 = vmatpush.bf16.msra.mxu0 %v2230
      %2548 = vmatmul.bf16.gmra.mxu0 %v1714
      %v2549 = vpop.f32.mrf.mxu0
      %v2550 = vadd.f32 0.0, %v2549
      %v2551 = vpop.f32.mrf.mxu0
      %v2552 = vadd.f32 0.0, %v2551
      %2553 = vdwg.mxu0
      %2554 = vmatpush.bf16.msra.mxu0 %v2350
      %2555 = vmatpush.bf16.msra.mxu0 %v2342
      %2556 = vmatpush.bf16.msra.mxu0 %v2334
      %2557 = vmatpush.bf16.msra.mxu0 %v2326
      %2558 = vmatpush.bf16.msra.mxu0 %v2318
      %2559 = vmatpush.bf16.msra.mxu0 %v2310
      %2560 = vmatpush.bf16.msra.mxu0 %v2302
      %2561 = vmatpush.bf16.msra.mxu0 %v2294
      %2562 = vmatmul.bf16.gmra.mxu0 %v1715
      %v2563 = vpop.f32.mrf.mxu0
      %v2564 = vadd.f32 %v2550, %v2563
      %v2565 = vpop.f32.mrf.mxu0
      %v2566 = vadd.f32 %v2552, %v2565
      %2567 = vdwg.mxu0
      %2568 = vmatpush.bf16.msra.mxu0 %v2287
      %2569 = vmatpush.bf16.msra.mxu0 %v2279
      %2570 = vmatpush.bf16.msra.mxu0 %v2271
      %2571 = vmatpush.bf16.msra.mxu0 %v2263
      %2572 = vmatpush.bf16.msra.mxu0 %v2255
      %2573 = vmatpush.bf16.msra.mxu0 %v2247
      %2574 = vmatpush.bf16.msra.mxu0 %v2239
      %2575 = vmatpush.bf16.msra.mxu0 %v2231
      %2576 = vmatmul.bf16.gmra.mxu0 %v1714
      %v2577 = vpop.f32.mrf.mxu0
      %v2578 = vadd.f32 0.0, %v2577
      %v2579 = vpop.f32.mrf.mxu0
      %v2580 = vadd.f32 0.0, %v2579
      %2581 = vdwg.mxu0
      %2582 = vmatpush.bf16.msra.mxu0 %v2351
      %2583 = vmatpush.bf16.msra.mxu0 %v2343
      %2584 = vmatpush.bf16.msra.mxu0 %v2335
      %2585 = vmatpush.bf16.msra.mxu0 %v2327
      %2586 = vmatpush.bf16.msra.mxu0 %v2319
      %2587 = vmatpush.bf16.msra.mxu0 %v2311
      %2588 = vmatpush.bf16.msra.mxu0 %v2303
      %2589 = vmatpush.bf16.msra.mxu0 %v2295
      %2590 = vmatmul.bf16.gmra.mxu0 %v1715
      %v2591 = vpop.f32.mrf.mxu0
      %v2592 = vadd.f32 %v2578, %v2591
      %v2593 = vpop.f32.mrf.mxu0
      %v2594 = vadd.f32 %v2580, %v2593
      %2595 = vdwg.mxu0
      %2596 = vmatpush.bf16.msra.mxu0 %v2288
      %2597 = vmatpush.bf16.msra.mxu0 %v2280
      %2598 = vmatpush.bf16.msra.mxu0 %v2272
      %2599 = vmatpush.bf16.msra.mxu0 %v2264
      %2600 = vmatpush.bf16.msra.mxu0 %v2256
      %2601 = vmatpush.bf16.msra.mxu0 %v2248
      %2602 = vmatpush.bf16.msra.mxu0 %v2240
      %2603 = vmatpush.bf16.msra.mxu0 %v2232
      %2604 = vmatmul.bf16.gmra.mxu0 %v1714
      %v2605 = vpop.f32.mrf.mxu0
      %v2606 = vadd.f32 0.0, %v2605
      %v2607 = vpop.f32.mrf.mxu0
      %v2608 = vadd.f32 0.0, %v2607
      %2609 = vdwg.mxu0
      %2610 = vmatpush.bf16.msra.mxu0 %v2352
      %2611 = vmatpush.bf16.msra.mxu0 %v2344
      %2612 = vmatpush.bf16.msra.mxu0 %v2336
      %2613 = vmatpush.bf16.msra.mxu0 %v2328
      %2614 = vmatpush.bf16.msra.mxu0 %v2320
      %2615 = vmatpush.bf16.msra.mxu0 %v2312
      %2616 = vmatpush.bf16.msra.mxu0 %v2304
      %2617 = vmatpush.bf16.msra.mxu0 %v2296
      %2618 = vmatmul.bf16.gmra.mxu0 %v1715
      %v2619 = vpop.f32.mrf.mxu0
      %v2620 = vadd.f32 %v2606, %v2619
      %v2621 = vpop.f32.mrf.mxu0
      %v2622 = vadd.f32 %v2608, %v2621
      %2623 = vdwg.mxu0
      %2624 = vmatpush.bf16.msra.mxu0 %v2289
      %2625 = vmatpush.bf16.msra.mxu0 %v2281
      %2626 = vmatpush.bf16.msra.mxu0 %v2273
      %2627 = vmatpush.bf16.msra.mxu0 %v2265
      %2628 = vmatpush.bf16.msra.mxu0 %v2257
      %2629 = vmatpush.bf16.msra.mxu0 %v2249
      %2630 = vmatpush.bf16.msra.mxu0 %v2241
      %2631 = vmatpush.bf16.msra.mxu0 %v2233
      %2632 = vmatmul.bf16.gmra.mxu0 %v1714
      %v2633 = vpop.f32.mrf.mxu0
      %v2634 = vadd.f32 0.0, %v2633
      %v2635 = vpop.f32.mrf.mxu0
      %v2636 = vadd.f32 0.0, %v2635
      %2637 = vdwg.mxu0
      %2638 = vmatpush.bf16.msra.mxu0 %v2353
      %2639 = vmatpush.bf16.msra.mxu0 %v2345
      %2640 = vmatpush.bf16.msra.mxu0 %v2337
      %2641 = vmatpush.bf16.msra.mxu0 %v2329
      %2642 = vmatpush.bf16.msra.mxu0 %v2321
      %2643 = vmatpush.bf16.msra.mxu0 %v2313
      %2644 = vmatpush.bf16.msra.mxu0 %v2305
      %2645 = vmatpush.bf16.msra.mxu0 %v2297
      %2646 = vmatmul.bf16.gmra.mxu0 %v1715
      %v2647 = vpop.f32.mrf.mxu0
      %v2648 = vadd.f32 %v2634, %v2647
      %v2649 = vpop.f32.mrf.mxu0
      %v2650 = vadd.f32 %v2636, %v2649
      %2651 = vdwg.mxu0
      %2652 = vmatpush.bf16.msra.mxu0 %v2290
      %2653 = vmatpush.bf16.msra.mxu0 %v2282
      %2654 = vmatpush.bf16.msra.mxu0 %v2274
      %2655 = vmatpush.bf16.msra.mxu0 %v2266
      %2656 = vmatpush.bf16.msra.mxu0 %v2258
      %2657 = vmatpush.bf16.msra.mxu0 %v2250
      %2658 = vmatpush.bf16.msra.mxu0 %v2242
      %2659 = vmatpush.bf16.msra.mxu0 %v2234
      %2660 = vmatmul.bf16.gmra.mxu0 %v1714
      %v2661 = vpop.f32.mrf.mxu0
      %v2662 = vadd.f32 0.0, %v2661
      %v2663 = vpop.f32.mrf.mxu0
      %v2664 = vadd.f32 0.0, %v2663
      %2665 = vdwg.mxu0
      %2666 = vmatpush.bf16.msra.mxu0 %v2354
      %2667 = vmatpush.bf16.msra.mxu0 %v2346
      %2668 = vmatpush.bf16.msra.mxu0 %v2338
      %2669 = vmatpush.bf16.msra.mxu0 %v2330
      %2670 = vmatpush.bf16.msra.mxu0 %v2322
      %2671 = vmatpush.bf16.msra.mxu0 %v2314
      %2672 = vmatpush.bf16.msra.mxu0 %v2306
      %2673 = vmatpush.bf16.msra.mxu0 %v2298
      %2674 = vmatmul.bf16.gmra.mxu0 %v1715
      %v2675 = vpop.f32.mrf.mxu0
      %v2676 = vadd.f32 %v2662, %v2675
      %v2677 = vpop.f32.mrf.mxu0
      %v2678 = vadd.f32 %v2664, %v2677
      %2679 = vdwg.mxu0
      %2680 = vmatpush.bf16.msra.mxu0 %v2291
      %2681 = vmatpush.bf16.msra.mxu0 %v2283
      %2682 = vmatpush.bf16.msra.mxu0 %v2275
      %2683 = vmatpush.bf16.msra.mxu0 %v2267
      %2684 = vmatpush.bf16.msra.mxu0 %v2259
      %2685 = vmatpush.bf16.msra.mxu0 %v2251
      %2686 = vmatpush.bf16.msra.mxu0 %v2243
      %2687 = vmatpush.bf16.msra.mxu0 %v2235
      %2688 = vmatmul.bf16.gmra.mxu0 %v1714
      %v2689 = vpop.f32.mrf.mxu0
      %v2690 = vadd.f32 0.0, %v2689
      %v2691 = vpop.f32.mrf.mxu0
      %v2692 = vadd.f32 0.0, %v2691
      %2693 = vdwg.mxu0
      %2694 = vmatpush.bf16.msra.mxu0 %v2355
      %2695 = vmatpush.bf16.msra.mxu0 %v2347
      %2696 = vmatpush.bf16.msra.mxu0 %v2339
      %2697 = vmatpush.bf16.msra.mxu0 %v2331
      %2698 = vmatpush.bf16.msra.mxu0 %v2323
      %2699 = vmatpush.bf16.msra.mxu0 %v2315
      %2700 = vmatpush.bf16.msra.mxu0 %v2307
      %2701 = vmatpush.bf16.msra.mxu0 %v2299
      %2702 = vmatmul.bf16.gmra.mxu0 %v1715
      %v2703 = vpop.f32.mrf.mxu0
      %v2704 = vadd.f32 %v2690, %v2703
      %v2705 = vpop.f32.mrf.mxu0
      %v2706 = vadd.f32 %v2692, %v2705
      %2707 = vdwg.mxu0
      %s2708 = sshra.s32 %s1704, 3
      %s2709 = sand.u32 %s1704, 7
      %s2710 = smul.u32 %s2708, 8
      %s2711 = smul.addr %s2710, 4
      %s2712 = scalar_lea.vmem [#allocation2], %s2711
      %v2713 = vld [vmem:[%s2712] sm:$0xff]
      %v2714 = vld [vmem:[%s2712 + $0x8] sm:$0xff]
      %v2715 = vld [vmem:[%s2712 + $0x20] sm:$0xff]
      %v2716 = vld [vmem:[%s2712 + $0x28] sm:$0xff]
      %v2717 = vunpack.c.l.bf16 %v2713
      %v2718 = vunpack.c.h.bf16 %v2713
      %v2719 = vunpack.c.l.bf16 %v2714
      %v2720 = vunpack.c.h.bf16 %v2714
      %v2721 = vunpack.c.l.bf16 %v2715
      %v2722 = vunpack.c.h.bf16 %v2715
      %v2723 = vunpack.c.l.bf16 %v2716
      %v2724 = vunpack.c.h.bf16 %v2716
      %v2725 = vadd.f32 %v2717, %v2508
      %v2726 = vadd.f32 %v2718, %v2536
      %v2727 = vadd.f32 %v2719, %v2564
      %v2728 = vadd.f32 %v2720, %v2592
      %v2729 = vadd.f32 %v2721, %v2510
      %v2730 = vadd.f32 %v2722, %v2538
      %v2731 = vadd.f32 %v2723, %v2566
      %v2732 = vadd.f32 %v2724, %v2594
      %s2733 = sshra.s32 %s1705, 3
      %s2734 = sand.u32 %s1705, 7
      %s2735 = smul.u32 %s2733, 8
      %s2736 = smul.addr %s2735, 4
      %s2737 = scalar_lea.vmem [#allocation2], %s2736
      %v2738 = vld [vmem:[%s2737 + $0x10] sm:$0xff]
      %v2739 = vld [vmem:[%s2737 + $0x18] sm:$0xff]
      %v2740 = vld [vmem:[%s2737 + $0x30] sm:$0xff]
      %v2741 = vld [vmem:[%s2737 + $0x38] sm:$0xff]
      %v2742 = vunpack.c.l.bf16 %v2738
      %v2743 = vunpack.c.h.bf16 %v2738
      %v2744 = vunpack.c.l.bf16 %v2739
      %v2745 = vunpack.c.h.bf16 %v2739
      %v2746 = vunpack.c.l.bf16 %v2740
      %v2747 = vunpack.c.h.bf16 %v2740
      %v2748 = vunpack.c.l.bf16 %v2741
      %v2749 = vunpack.c.h.bf16 %v2741
      %v2750 = vadd.f32 %v2742, %v2620
      %v2751 = vadd.f32 %v2743, %v2648
      %v2752 = vadd.f32 %v2744, %v2676
      %v2753 = vadd.f32 %v2745, %v2704
      %v2754 = vadd.f32 %v2746, %v2622
      %v2755 = vadd.f32 %v2747, %v2650
      %v2756 = vadd.f32 %v2748, %v2678
      %v2757 = vadd.f32 %v2749, %v2706
      %v2758 = vxor.u32 %v2725, 2147483648
      %v2759 = vxor.u32 %v2726, 2147483648
      %v2760 = vxor.u32 %v2729, 2147483648
      %v2761 = vxor.u32 %v2730, 2147483648
      %v2762 = vmul.f32 %v2758, 1.442695
      %v2763 = vpow.pop %v2762
      %v2764 = vmul.f32 %v2759, 1.442695
      %v2765 = vpow.pop %v2764
      %v2766 = vmul.f32 %v2760, 1.442695
      %v2767 = vpow.pop %v2766
      %v2768 = vmul.f32 %v2761, 1.442695
      %v2769 = vpow.pop %v2768
      %v2770 = vadd.f32 %v2763, 1.0
      %v2771 = vadd.f32 %v2765, 1.0
      %v2772 = vadd.f32 %v2767, 1.0
      %v2773 = vadd.f32 %v2769, 1.0
      %v2774 = vrcp.pop %v2770
      %v2775 = vmul.f32 %v2770, %v2774
      %v2776 = vsub.f32 1.0, %v2775
      %v2777 = vmul.f32 %v2774, %v2776
      %v2778 = vadd.f32 %v2774, %v2777
      %vm2779 = vweird.f32 %v2770
      %vm2780 = vweird.f32 %v2774
      %vm2781 = vmor %vm2779, %vm2780
      %v2782 = vsel %vm2781, %v2774, %v2778
      %v2783 = vand.u32 2147483647, %v2770
      %vm2784 = vcmp.eq.f32.partialorder %v2783, 8.507059e+37
      %v2785 = vand.u32 %v2770, 2147483648
      %v2786 = vor.u32 1.1754944e-38, %v2785
      %v2787 = vsel %vm2784, %v2786, %v2782
      %v2788 = vmul.f32 1.0, %v2787
      %v2789 = vrcp.pop %v2771
      %v2790 = vmul.f32 %v2771, %v2789
      %v2791 = vsub.f32 1.0, %v2790
      %v2792 = vmul.f32 %v2789, %v2791
      %v2793 = vadd.f32 %v2789, %v2792
      %vm2794 = vweird.f32 %v2771
      %vm2795 = vweird.f32 %v2789
      %vm2796 = vmor %vm2794, %vm2795
      %v2797 = vsel %vm2796, %v2789, %v2793
      %v2798 = vand.u32 2147483647, %v2771
      %vm2799 = vcmp.eq.f32.partialorder %v2798, 8.507059e+37
      %v2800 = vand.u32 %v2771, 2147483648
      %v2801 = vor.u32 1.1754944e-38, %v2800
      %v2802 = vsel %vm2799, %v2801, %v2797
      %v2803 = vmul.f32 1.0, %v2802
      %v2804 = vrcp.pop %v2772
      %v2805 = vmul.f32 %v2772, %v2804
      %v2806 = vsub.f32 1.0, %v2805
      %v2807 = vmul.f32 %v2804, %v2806
      %v2808 = vadd.f32 %v2804, %v2807
      %vm2809 = vweird.f32 %v2772
      %vm2810 = vweird.f32 %v2804
      %vm2811 = vmor %vm2809, %vm2810
      %v2812 = vsel %vm2811, %v2804, %v2808
      %v2813 = vand.u32 2147483647, %v2772
      %vm2814 = vcmp.eq.f32.partialorder %v2813, 8.507059e+37
      %v2815 = vand.u32 %v2772, 2147483648
      %v2816 = vor.u32 1.1754944e-38, %v2815
      %v2817 = vsel %vm2814, %v2816, %v2812
      %v2818 = vmul.f32 1.0, %v2817
      %v2819 = vrcp.pop %v2773
      %v2820 = vmul.f32 %v2773, %v2819
      %v2821 = vsub.f32 1.0, %v2820
      %v2822 = vmul.f32 %v2819, %v2821
      %v2823 = vadd.f32 %v2819, %v2822
      %vm2824 = vweird.f32 %v2773
      %vm2825 = vweird.f32 %v2819
      %vm2826 = vmor %vm2824, %vm2825
      %v2827 = vsel %vm2826, %v2819, %v2823
      %v2828 = vand.u32 2147483647, %v2773
      %vm2829 = vcmp.eq.f32.partialorder %v2828, 8.507059e+37
      %v2830 = vand.u32 %v2773, 2147483648
      %v2831 = vor.u32 1.1754944e-38, %v2830
      %v2832 = vsel %vm2829, %v2831, %v2827
      %v2833 = vmul.f32 1.0, %v2832
      %v2834 = vtanh.pop %v2727
      %v2835 = vtanh.pop %v2731
      %v2836 = vxor.u32 %v2728, 2147483648
      %v2837 = vxor.u32 %v2732, 2147483648
      %v2838 = vmul.f32 %v2836, 1.442695
      %v2839 = vpow.pop %v2838
      %v2840 = vmul.f32 %v2837, 1.442695
      %v2841 = vpow.pop %v2840
      %v2842 = vadd.f32 %v2839, 1.0
      %v2843 = vadd.f32 %v2841, 1.0
      %v2844 = vrcp.pop %v2842
      %v2845 = vmul.f32 %v2842, %v2844
      %v2846 = vsub.f32 1.0, %v2845
      %v2847 = vmul.f32 %v2844, %v2846
      %v2848 = vadd.f32 %v2844, %v2847
      %vm2849 = vweird.f32 %v2842
      %vm2850 = vweird.f32 %v2844
      %vm2851 = vmor %vm2849, %vm2850
      %v2852 = vsel %vm2851, %v2844, %v2848
      %v2853 = vand.u32 2147483647, %v2842
      %vm2854 = vcmp.eq.f32.partialorder %v2853, 8.507059e+37
      %v2855 = vand.u32 %v2842, 2147483648
      %v2856 = vor.u32 1.1754944e-38, %v2855
      %v2857 = vsel %vm2854, %v2856, %v2852
      %v2858 = vmul.f32 1.0, %v2857
      %v2859 = vrcp.pop %v2843
      %v2860 = vmul.f32 %v2843, %v2859
      %v2861 = vsub.f32 1.0, %v2860
      %v2862 = vmul.f32 %v2859, %v2861
      %v2863 = vadd.f32 %v2859, %v2862
      %vm2864 = vweird.f32 %v2843
      %vm2865 = vweird.f32 %v2859
      %vm2866 = vmor %vm2864, %vm2865
      %v2867 = vsel %vm2866, %v2859, %v2863
      %v2868 = vand.u32 2147483647, %v2843
      %vm2869 = vcmp.eq.f32.partialorder %v2868, 8.507059e+37
      %v2870 = vand.u32 %v2843, 2147483648
      %v2871 = vor.u32 1.1754944e-38, %v2870
      %v2872 = vsel %vm2869, %v2871, %v2867
      %v2873 = vmul.f32 1.0, %v2872
      %v2874 = vmul.f32 %v2803, %v1710
      %v2875 = vmul.f32 %v2833, %v1712
      %v2876 = vmul.f32 %v2788, %v2834
      %v2877 = vmul.f32 %v2818, %v2835
      %v2878 = vadd.f32 %v2874, %v2876
      %v2879 = vadd.f32 %v2875, %v2877
      %v2880 = vtanh.pop %v2878
      %v2881 = vtanh.pop %v2879
      %v2882 = vmul.f32 %v2858, %v2880
      %v2883 = vmul.f32 %v2873, %v2881
      %v2884 = vxor.u32 %v2750, 2147483648
      %v2885 = vxor.u32 %v2751, 2147483648
      %v2886 = vxor.u32 %v2754, 2147483648
      %v2887 = vxor.u32 %v2755, 2147483648
      %v2888 = vmul.f32 %v2884, 1.442695
      %v2889 = vpow.pop %v2888
      %v2890 = vmul.f32 %v2885, 1.442695
      %v2891 = vpow.pop %v2890
      %v2892 = vmul.f32 %v2886, 1.442695
      %v2893 = vpow.pop %v2892
      %v2894 = vmul.f32 %v2887, 1.442695
      %v2895 = vpow.pop %v2894
      %v2896 = vadd.f32 %v2889, 1.0
      %v2897 = vadd.f32 %v2891, 1.0
      %v2898 = vadd.f32 %v2893, 1.0
      %v2899 = vadd.f32 %v2895, 1.0
      %v2900 = vrcp.pop %v2896
      %v2901 = vmul.f32 %v2896, %v2900
      %v2902 = vsub.f32 1.0, %v2901
      %v2903 = vmul.f32 %v2900, %v2902
      %v2904 = vadd.f32 %v2900, %v2903
      %vm2905 = vweird.f32 %v2896
      %vm2906 = vweird.f32 %v2900
      %vm2907 = vmor %vm2905, %vm2906
      %v2908 = vsel %vm2907, %v2900, %v2904
      %v2909 = vand.u32 2147483647, %v2896
      %vm2910 = vcmp.eq.f32.partialorder %v2909, 8.507059e+37
      %v2911 = vand.u32 %v2896, 2147483648
      %v2912 = vor.u32 1.1754944e-38, %v2911
      %v2913 = vsel %vm2910, %v2912, %v2908
      %v2914 = vmul.f32 1.0, %v2913
      %v2915 = vrcp.pop %v2897
      %v2916 = vmul.f32 %v2897, %v2915
      %v2917 = vsub.f32 1.0, %v2916
      %v2918 = vmul.f32 %v2915, %v2917
      %v2919 = vadd.f32 %v2915, %v2918
      %vm2920 = vweird.f32 %v2897
      %vm2921 = vweird.f32 %v2915
      %vm2922 = vmor %vm2920, %vm2921
      %v2923 = vsel %vm2922, %v2915, %v2919
      %v2924 = vand.u32 2147483647, %v2897
      %vm2925 = vcmp.eq.f32.partialorder %v2924, 8.507059e+37
      %v2926 = vand.u32 %v2897, 2147483648
      %v2927 = vor.u32 1.1754944e-38, %v2926
      %v2928 = vsel %vm2925, %v2927, %v2923
      %v2929 = vmul.f32 1.0, %v2928
      %v2930 = vrcp.pop %v2898
      %v2931 = vmul.f32 %v2898, %v2930
      %v2932 = vsub.f32 1.0, %v2931
      %v2933 = vmul.f32 %v2930, %v2932
      %v2934 = vadd.f32 %v2930, %v2933
      %vm2935 = vweird.f32 %v2898
      %vm2936 = vweird.f32 %v2930
      %vm2937 = vmor %vm2935, %vm2936
      %v2938 = vsel %vm2937, %v2930, %v2934
      %v2939 = vand.u32 2147483647, %v2898
      %vm2940 = vcmp.eq.f32.partialorder %v2939, 8.507059e+37
      %v2941 = vand.u32 %v2898, 2147483648
      %v2942 = vor.u32 1.1754944e-38, %v2941
      %v2943 = vsel %vm2940, %v2942, %v2938
      %v2944 = vmul.f32 1.0, %v2943
      %v2945 = vrcp.pop %v2899
      %v2946 = vmul.f32 %v2899, %v2945
      %v2947 = vsub.f32 1.0, %v2946
      %v2948 = vmul.f32 %v2945, %v2947
      %v2949 = vadd.f32 %v2945, %v2948
      %vm2950 = vweird.f32 %v2899
      %vm2951 = vweird.f32 %v2945
      %vm2952 = vmor %vm2950, %vm2951
      %v2953 = vsel %vm2952, %v2945, %v2949
      %v2954 = vand.u32 2147483647, %v2899
      %vm2955 = vcmp.eq.f32.partialorder %v2954, 8.507059e+37
      %v2956 = vand.u32 %v2899, 2147483648
      %v2957 = vor.u32 1.1754944e-38, %v2956
      %v2958 = vsel %vm2955, %v2957, %v2953
      %v2959 = vmul.f32 1.0, %v2958
      %v2960 = vtanh.pop %v2752
      %v2961 = vtanh.pop %v2756
      %v2962 = vxor.u32 %v2753, 2147483648
      %v2963 = vxor.u32 %v2757, 2147483648
      %v2964 = vmul.f32 %v2962, 1.442695
      %v2965 = vpow.pop %v2964
      %v2966 = vmul.f32 %v2963, 1.442695
      %v2967 = vpow.pop %v2966
      %v2968 = vadd.f32 %v2965, 1.0
      %v2969 = vadd.f32 %v2967, 1.0
      %v2970 = vrcp.pop %v2968
      %v2971 = vmul.f32 %v2968, %v2970
      %v2972 = vsub.f32 1.0, %v2971
      %v2973 = vmul.f32 %v2970, %v2972
      %v2974 = vadd.f32 %v2970, %v2973
      %vm2975 = vweird.f32 %v2968
      %vm2976 = vweird.f32 %v2970
      %vm2977 = vmor %vm2975, %vm2976
      %v2978 = vsel %vm2977, %v2970, %v2974
      %v2979 = vand.u32 2147483647, %v2968
      %vm2980 = vcmp.eq.f32.partialorder %v2979, 8.507059e+37
      %v2981 = vand.u32 %v2968, 2147483648
      %v2982 = vor.u32 1.1754944e-38, %v2981
      %v2983 = vsel %vm2980, %v2982, %v2978
      %v2984 = vmul.f32 1.0, %v2983
      %v2985 = vrcp.pop %v2969
      %v2986 = vmul.f32 %v2969, %v2985
      %v2987 = vsub.f32 1.0, %v2986
      %v2988 = vmul.f32 %v2985, %v2987
      %v2989 = vadd.f32 %v2985, %v2988
      %vm2990 = vweird.f32 %v2969
      %vm2991 = vweird.f32 %v2985
      %vm2992 = vmor %vm2990, %vm2991
      %v2993 = vsel %vm2992, %v2985, %v2989
      %v2994 = vand.u32 2147483647, %v2969
      %vm2995 = vcmp.eq.f32.partialorder %v2994, 8.507059e+37
      %v2996 = vand.u32 %v2969, 2147483648
      %v2997 = vor.u32 1.1754944e-38, %v2996
      %v2998 = vsel %vm2995, %v2997, %v2993
      %v2999 = vmul.f32 1.0, %v2998
      %v3000 = vmul.f32 %v2929, %v1711
      %v3001 = vmul.f32 %v2959, %v1713
      %v3002 = vmul.f32 %v2914, %v2960
      %v3003 = vmul.f32 %v2944, %v2961
      %v3004 = vadd.f32 %v3000, %v3002
      %v3005 = vadd.f32 %v3001, %v3003
      %v3006 = vtanh.pop %v3004
      %v3007 = vtanh.pop %v3005
      %v3008 = vmul.f32 %v2984, %v3006
      %v3009 = vmul.f32 %v2999, %v3007
      %v3010 = vstv %s1697
      %vm3011 = vcmp.gt.s32.totalorder %v683, %v3010
      %vm3012 = vcmp.gt.s32.totalorder %v684, %v3010
      %v3013 = vstv %s1703
      %vm3014 = vcmp.gt.s32.totalorder %v683, %v3013
      %vm3015 = vcmp.gt.s32.totalorder %v684, %v3013
      %v3016 = vsel %vm3011, 1, 0
      %v3017 = vsel %vm3012, 1, 0
      %3018 = vset.pattern.permute.xlu0 0
      %3019 = vperm.xlu0 %3018, %v3016
      %v3020 = vpop.permute.xlu0 %3019
      %3021 = vset.pattern.permute.xlu0 0
      %3022 = vperm.xlu0 %3021, %v3017
      %v3023 = vpop.permute.xlu0 %3022
      %vm3024 = vcmp.eq.s32.totalorder %v3020, 1
      %vm3025 = vcmp.eq.s32.totalorder %v3023, 1
      %v3026 = vsel %vm3024, %v2882, %v1706
      %v3027 = vsel %vm3025, %v2883, %v1708
      %3028 = vst [vmem:[#allocation4] sm:$0xff] %v3026
      %3029 = vst [vmem:[#allocation4 + $0x10] sm:$0xff] %v3027
      %v3030 = vsel %vm3014, 1, 0
      %v3031 = vsel %vm3015, 1, 0
      %3032 = vset.pattern.permute.xlu0 0
      %3033 = vperm.xlu0 %3032, %v3030
      %v3034 = vpop.permute.xlu0 %3033
      %3035 = vset.pattern.permute.xlu0 0
      %3036 = vperm.xlu0 %3035, %v3031
      %v3037 = vpop.permute.xlu0 %3036
      %vm3038 = vcmp.eq.s32.totalorder %v3034, 1
      %vm3039 = vcmp.eq.s32.totalorder %v3037, 1
      %v3040 = vsel %vm3038, %v3008, %v1707
      %v3041 = vsel %vm3039, %v3009, %v1709
      %3042 = vst [vmem:[#allocation4 + $0x8] sm:$0xff] %v3040
      %3043 = vst [vmem:[#allocation4 + $0x18] sm:$0xff] %v3041
      %v3044 = vsel %vm3024, %v2878, %v1710
      %v3045 = vsel %vm3025, %v2879, %v1712
      %3046 = vst [vmem:[#allocation5] sm:$0xff] %v3044
      %3047 = vst [vmem:[#allocation5 + $0x10] sm:$0xff] %v3045
      %v3048 = vsel %vm3038, %v3004, %v1711
      %v3049 = vsel %vm3039, %v3005, %v1713
      %3050 = vst [vmem:[#allocation5 + $0x8] sm:$0xff] %v3048
      %3051 = vst [vmem:[#allocation5 + $0x18] sm:$0xff] %v3049
      %v3052 = vsel %vm3024, %v2882, 0.0
      %v3053 = vsel %vm3025, %v2883, 0.0
      %v3054 = vpack.c.bf16 %v3052, %v3052
      %v3055 = vpack.c.bf16 %v3053, %v3053
      %s3056 = smul.u32 %s2708, 2
      %s3057 = smul.addr %s3056, 4
      %s3058 = scalar_lea.vmem [#allocation3], %s3057
      %3059 = vst [vmem:[%s3058] sm:$0xf] %v3054
      %3060 = vst [vmem:[%s3058 + $0x8] sm:$0xf] %v3055
      %v3061 = vsel %vm3038, %v3008, 0.0
      %v3062 = vsel %vm3039, %v3009, 0.0
      %v3063 = vpack.c.bf16 %v3061, %v3061
      %v3064 = vpack.c.bf16 %v3062, %v3062
      %s3065 = smul.u32 %s2733, 2
      %s3066 = smul.addr %s3065, 4
      %s3067 = scalar_lea.vmem [#allocation3], %s3066
      %3068 = vst [vmem:[%s3067 + $0x4] sm:$0xf] %v3063
      %3069 = vst [vmem:[%s3067 + $0xc] sm:$0xf] %v3064
    $region101: #{tpu_custom_call.1} parent=1 // loop_footer
      %s1699 = sadd.s32 %s1697, 1
    $region102: #{tpu_custom_call.1} parent=1 // loop_footer_branch
      %1696 = sbr.rel target = $region98
    $region103: #{tpu_custom_call.1} parent=1 // loop_exit
      _
    %v3070 = vld [vmem:[#allocation3] sm:$0xff]
    %v3071 = vld [vmem:[#allocation3 + $0x8] sm:$0xff]
    %v3072 = vld [vmem:[#allocation3 + $0x10] sm:$0xff]
    %v3073 = vld [vmem:[#allocation3 + $0x18] sm:$0xff]
    %v3074 = vld [vmem:[#allocation3 + $0x20] sm:$0xff]
    %v3075 = vld [vmem:[#allocation3 + $0x28] sm:$0xff]
    %v3076 = vld [vmem:[#allocation3 + $0x30] sm:$0xff]
    %v3077 = vld [vmem:[#allocation3 + $0x38] sm:$0xff]
    %v3078 = vld [vmem:[#allocation3 + $0x40] sm:$0xff]
    %v3079 = vld [vmem:[#allocation3 + $0x48] sm:$0xff]
    %v3080 = vld [vmem:[#allocation3 + $0x50] sm:$0xff]
    %v3081 = vld [vmem:[#allocation3 + $0x58] sm:$0xff]
    %v3082 = vld [vmem:[#allocation3 + $0x60] sm:$0xff]
    %v3083 = vld [vmem:[#allocation3 + $0x68] sm:$0xff]
    %v3084 = vld [vmem:[#allocation3 + $0x70] sm:$0xff]
    %v3085 = vld [vmem:[#allocation3 + $0x78] sm:$0xff]
    %v3086 = vld [vmem:[#allocation16] sm:$0xff]
    %v3087 = vld [vmem:[#allocation16 + $0x8] sm:$0xff]
    %v3088 = vld [vmem:[#allocation16 + $0x10] sm:$0xff]
    %v3089 = vld [vmem:[#allocation16 + $0x18] sm:$0xff]
    %v3090 = vld [vmem:[#allocation16 + $0x20] sm:$0xff]
    %v3091 = vld [vmem:[#allocation16 + $0x28] sm:$0xff]
    %v3092 = vld [vmem:[#allocation16 + $0x30] sm:$0xff]
    %v3093 = vld [vmem:[#allocation16 + $0x38] sm:$0xff]
    %v3094 = vld [vmem:[#allocation16 + $0x40] sm:$0xff]
    %v3095 = vld [vmem:[#allocation16 + $0x48] sm:$0xff]
    %v3096 = vld [vmem:[#allocation16 + $0x50] sm:$0xff]
    %v3097 = vld [vmem:[#allocation16 + $0x58] sm:$0xff]
    %v3098 = vld [vmem:[#allocation16 + $0x60] sm:$0xff]
    %v3099 = vld [vmem:[#allocation16 + $0x68] sm:$0xff]
    %v3100 = vld [vmem:[#allocation16 + $0x70] sm:$0xff]
    %v3101 = vld [vmem:[#allocation16 + $0x78] sm:$0xff]
    %v3102 = vld [vmem:[#allocation16 + $0x80] sm:$0xff]
    %v3103 = vld [vmem:[#allocation16 + $0x88] sm:$0xff]
    %v3104 = vld [vmem:[#allocation16 + $0x90] sm:$0xff]
    %v3105 = vld [vmem:[#allocation16 + $0x98] sm:$0xff]
    %v3106 = vld [vmem:[#allocation16 + $0xa0] sm:$0xff]
    %v3107 = vld [vmem:[#allocation16 + $0xa8] sm:$0xff]
    %v3108 = vld [vmem:[#allocation16 + $0xb0] sm:$0xff]
    %v3109 = vld [vmem:[#allocation16 + $0xb8] sm:$0xff]
    %v3110 = vld [vmem:[#allocation16 + $0xc0] sm:$0xff]
    %v3111 = vld [vmem:[#allocation16 + $0xc8] sm:$0xff]
    %v3112 = vld [vmem:[#allocation16 + $0xd0] sm:$0xff]
    %v3113 = vld [vmem:[#allocation16 + $0xd8] sm:$0xff]
    %v3114 = vld [vmem:[#allocation16 + $0xe0] sm:$0xff]
    %v3115 = vld [vmem:[#allocation16 + $0xe8] sm:$0xff]
    %v3116 = vld [vmem:[#allocation16 + $0xf0] sm:$0xff]
    %v3117 = vld [vmem:[#allocation16 + $0xf8] sm:$0xff]
    %v3118 = vld [vmem:[#allocation16 + $0x100] sm:$0xff]
    %v3119 = vld [vmem:[#allocation16 + $0x108] sm:$0xff]
    %v3120 = vld [vmem:[#allocation16 + $0x110] sm:$0xff]
    %v3121 = vld [vmem:[#allocation16 + $0x118] sm:$0xff]
    %v3122 = vld [vmem:[#allocation16 + $0x120] sm:$0xff]
    %v3123 = vld [vmem:[#allocation16 + $0x128] sm:$0xff]
    %v3124 = vld [vmem:[#allocation16 + $0x130] sm:$0xff]
    %v3125 = vld [vmem:[#allocation16 + $0x138] sm:$0xff]
    %v3126 = vld [vmem:[#allocation16 + $0x140] sm:$0xff]
    %v3127 = vld [vmem:[#allocation16 + $0x148] sm:$0xff]
    %v3128 = vld [vmem:[#allocation16 + $0x150] sm:$0xff]
    %v3129 = vld [vmem:[#allocation16 + $0x158] sm:$0xff]
    %v3130 = vld [vmem:[#allocation16 + $0x160] sm:$0xff]
    %v3131 = vld [vmem:[#allocation16 + $0x168] sm:$0xff]
    %v3132 = vld [vmem:[#allocation16 + $0x170] sm:$0xff]
    %v3133 = vld [vmem:[#allocation16 + $0x178] sm:$0xff]
    %v3134 = vld [vmem:[#allocation16 + $0x180] sm:$0xff]
    %v3135 = vld [vmem:[#allocation16 + $0x188] sm:$0xff]
    %v3136 = vld [vmem:[#allocation16 + $0x190] sm:$0xff]
    %v3137 = vld [vmem:[#allocation16 + $0x198] sm:$0xff]
    %v3138 = vld [vmem:[#allocation16 + $0x1a0] sm:$0xff]
    %v3139 = vld [vmem:[#allocation16 + $0x1a8] sm:$0xff]
    %v3140 = vld [vmem:[#allocation16 + $0x1b0] sm:$0xff]
    %v3141 = vld [vmem:[#allocation16 + $0x1b8] sm:$0xff]
    %v3142 = vld [vmem:[#allocation16 + $0x1c0] sm:$0xff]
    %v3143 = vld [vmem:[#allocation16 + $0x1c8] sm:$0xff]
    %v3144 = vld [vmem:[#allocation16 + $0x1d0] sm:$0xff]
    %v3145 = vld [vmem:[#allocation16 + $0x1d8] sm:$0xff]
    %v3146 = vld [vmem:[#allocation16 + $0x1e0] sm:$0xff]
    %v3147 = vld [vmem:[#allocation16 + $0x1e8] sm:$0xff]
    %v3148 = vld [vmem:[#allocation16 + $0x1f0] sm:$0xff]
    %v3149 = vld [vmem:[#allocation16 + $0x1f8] sm:$0xff]
    %v3150 = vld [vmem:[#allocation16 + $0x200] sm:$0xff]
    %v3151 = vld [vmem:[#allocation16 + $0x208] sm:$0xff]
    %v3152 = vld [vmem:[#allocation16 + $0x210] sm:$0xff]
    %v3153 = vld [vmem:[#allocation16 + $0x218] sm:$0xff]
    %v3154 = vld [vmem:[#allocation16 + $0x220] sm:$0xff]
    %v3155 = vld [vmem:[#allocation16 + $0x228] sm:$0xff]
    %v3156 = vld [vmem:[#allocation16 + $0x230] sm:$0xff]
    %v3157 = vld [vmem:[#allocation16 + $0x238] sm:$0xff]
    %v3158 = vld [vmem:[#allocation16 + $0x240] sm:$0xff]
    %v3159 = vld [vmem:[#allocation16 + $0x248] sm:$0xff]
    %v3160 = vld [vmem:[#allocation16 + $0x250] sm:$0xff]
    %v3161 = vld [vmem:[#allocation16 + $0x258] sm:$0xff]
    %v3162 = vld [vmem:[#allocation16 + $0x260] sm:$0xff]
    %v3163 = vld [vmem:[#allocation16 + $0x268] sm:$0xff]
    %v3164 = vld [vmem:[#allocation16 + $0x270] sm:$0xff]
    %v3165 = vld [vmem:[#allocation16 + $0x278] sm:$0xff]
    %v3166 = vld [vmem:[#allocation16 + $0x280] sm:$0xff]
    %v3167 = vld [vmem:[#allocation16 + $0x288] sm:$0xff]
    %v3168 = vld [vmem:[#allocation16 + $0x290] sm:$0xff]
    %v3169 = vld [vmem:[#allocation16 + $0x298] sm:$0xff]
    %v3170 = vld [vmem:[#allocation16 + $0x2a0] sm:$0xff]
    %v3171 = vld [vmem:[#allocation16 + $0x2a8] sm:$0xff]
    %v3172 = vld [vmem:[#allocation16 + $0x2b0] sm:$0xff]
    %v3173 = vld [vmem:[#allocation16 + $0x2b8] sm:$0xff]
    %v3174 = vld [vmem:[#allocation16 + $0x2c0] sm:$0xff]
    %v3175 = vld [vmem:[#allocation16 + $0x2c8] sm:$0xff]
    %v3176 = vld [vmem:[#allocation16 + $0x2d0] sm:$0xff]
    %v3177 = vld [vmem:[#allocation16 + $0x2d8] sm:$0xff]
    %v3178 = vld [vmem:[#allocation16 + $0x2e0] sm:$0xff]
    %v3179 = vld [vmem:[#allocation16 + $0x2e8] sm:$0xff]
    %v3180 = vld [vmem:[#allocation16 + $0x2f0] sm:$0xff]
    %v3181 = vld [vmem:[#allocation16 + $0x2f8] sm:$0xff]
    %v3182 = vld [vmem:[#allocation16 + $0x300] sm:$0xff]
    %v3183 = vld [vmem:[#allocation16 + $0x308] sm:$0xff]
    %v3184 = vld [vmem:[#allocation16 + $0x310] sm:$0xff]
    %v3185 = vld [vmem:[#allocation16 + $0x318] sm:$0xff]
    %v3186 = vld [vmem:[#allocation16 + $0x320] sm:$0xff]
    %v3187 = vld [vmem:[#allocation16 + $0x328] sm:$0xff]
    %v3188 = vld [vmem:[#allocation16 + $0x330] sm:$0xff]
    %v3189 = vld [vmem:[#allocation16 + $0x338] sm:$0xff]
    %v3190 = vld [vmem:[#allocation16 + $0x340] sm:$0xff]
    %v3191 = vld [vmem:[#allocation16 + $0x348] sm:$0xff]
    %v3192 = vld [vmem:[#allocation16 + $0x350] sm:$0xff]
    %v3193 = vld [vmem:[#allocation16 + $0x358] sm:$0xff]
    %v3194 = vld [vmem:[#allocation16 + $0x360] sm:$0xff]
    %v3195 = vld [vmem:[#allocation16 + $0x368] sm:$0xff]
    %v3196 = vld [vmem:[#allocation16 + $0x370] sm:$0xff]
    %v3197 = vld [vmem:[#allocation16 + $0x378] sm:$0xff]
    %v3198 = vld [vmem:[#allocation16 + $0x380] sm:$0xff]
    %v3199 = vld [vmem:[#allocation16 + $0x388] sm:$0xff]
    %v3200 = vld [vmem:[#allocation16 + $0x390] sm:$0xff]
    %v3201 = vld [vmem:[#allocation16 + $0x398] sm:$0xff]
    %v3202 = vld [vmem:[#allocation16 + $0x3a0] sm:$0xff]
    %v3203 = vld [vmem:[#allocation16 + $0x3a8] sm:$0xff]
    %v3204 = vld [vmem:[#allocation16 + $0x3b0] sm:$0xff]
    %v3205 = vld [vmem:[#allocation16 + $0x3b8] sm:$0xff]
    %v3206 = vld [vmem:[#allocation16 + $0x3c0] sm:$0xff]
    %v3207 = vld [vmem:[#allocation16 + $0x3c8] sm:$0xff]
    %v3208 = vld [vmem:[#allocation16 + $0x3d0] sm:$0xff]
    %v3209 = vld [vmem:[#allocation16 + $0x3d8] sm:$0xff]
    %v3210 = vld [vmem:[#allocation16 + $0x3e0] sm:$0xff]
    %v3211 = vld [vmem:[#allocation16 + $0x3e8] sm:$0xff]
    %v3212 = vld [vmem:[#allocation16 + $0x3f0] sm:$0xff]
    %v3213 = vld [vmem:[#allocation16 + $0x3f8] sm:$0xff]
    %v3214 = vld [vmem:[%s10] sm:$0xff]
    %v3216 = vperm.slane %v3214, 0
    %v3217 = vperm.slane %v3214, 1
    %v3218 = vperm.slane %v3214, 2
    %v3219 = vperm.slane %v3214, 3
    %v3220 = vperm.slane %v3214, 4
    %v3221 = vperm.slane %v3214, 5
    %v3222 = vperm.slane %v3214, 6
    %v3223 = vperm.slane %v3214, 7
    %v3248 = vunpack.c.l.b16 %v3070
    %v3249 = vunpack.c.h.b16 %v3070
    %v3250 = vunpack.c.l.b16 %v3071
    %v3251 = vunpack.c.h.b16 %v3071
    %v3252 = vunpack.c.l.b16 %v3072
    %v3253 = vunpack.c.h.b16 %v3072
    %v3254 = vunpack.c.l.b16 %v3073
    %v3255 = vunpack.c.h.b16 %v3073
    %v3256 = vunpack.c.l.b16 %v3074
    %v3257 = vunpack.c.h.b16 %v3074
    %v3258 = vunpack.c.l.b16 %v3075
    %v3259 = vunpack.c.h.b16 %v3075
    %v3260 = vunpack.c.l.b16 %v3076
    %v3261 = vunpack.c.h.b16 %v3076
    %v3262 = vunpack.c.l.b16 %v3077
    %v3263 = vunpack.c.h.b16 %v3077
    %v3264 = vunpack.c.l.b16 %v3078
    %v3265 = vunpack.c.h.b16 %v3078
    %v3266 = vunpack.c.l.b16 %v3079
    %v3267 = vunpack.c.h.b16 %v3079
    %v3268 = vunpack.c.l.b16 %v3080
    %v3269 = vunpack.c.h.b16 %v3080
    %v3270 = vunpack.c.l.b16 %v3081
    %v3271 = vunpack.c.h.b16 %v3081
    %v3272 = vunpack.c.l.b16 %v3082
    %v3273 = vunpack.c.h.b16 %v3082
    %v3274 = vunpack.c.l.b16 %v3083
    %v3275 = vunpack.c.h.b16 %v3083
    %v3276 = vunpack.c.l.b16 %v3084
    %v3277 = vunpack.c.h.b16 %v3084
    %v3278 = vunpack.c.l.b16 %v3085
    %v3279 = vunpack.c.h.b16 %v3085
    %v3280 = vpack.c.b16 %v3250, %v3248
    %v3281 = vpack.c.b16 %v3251, %v3249
    %v3282 = vpack.c.b16 %v3254, %v3252
    %v3283 = vpack.c.b16 %v3255, %v3253
    %v3284 = vpack.c.b16 %v3258, %v3256
    %v3285 = vpack.c.b16 %v3259, %v3257
    %v3286 = vpack.c.b16 %v3262, %v3260
    %v3287 = vpack.c.b16 %v3263, %v3261
    %v3288 = vpack.c.b16 %v3266, %v3264
    %v3289 = vpack.c.b16 %v3267, %v3265
    %v3290 = vpack.c.b16 %v3270, %v3268
    %v3291 = vpack.c.b16 %v3271, %v3269
    %v3292 = vpack.c.b16 %v3274, %v3272
    %v3293 = vpack.c.b16 %v3275, %v3273
    %v3294 = vpack.c.b16 %v3278, %v3276
    %v3295 = vpack.c.b16 %v3279, %v3277
    %v3440 = vunpack.c.l.b16 %v3086
    %v3441 = vunpack.c.h.b16 %v3086
    %v3442 = vunpack.c.l.b16 %v3087
    %v3443 = vunpack.c.h.b16 %v3087
    %v3444 = vunpack.c.l.b16 %v3088
    %v3445 = vunpack.c.h.b16 %v3088
    %v3446 = vunpack.c.l.b16 %v3089
    %v3447 = vunpack.c.h.b16 %v3089
    %v3448 = vunpack.c.l.b16 %v3090
    %v3449 = vunpack.c.h.b16 %v3090
    %v3450 = vunpack.c.l.b16 %v3091
    %v3451 = vunpack.c.h.b16 %v3091
    %v3452 = vunpack.c.l.b16 %v3092
    %v3453 = vunpack.c.h.b16 %v3092
    %v3454 = vunpack.c.l.b16 %v3093
    %v3455 = vunpack.c.h.b16 %v3093
    %v3456 = vunpack.c.l.b16 %v3094
    %v3457 = vunpack.c.h.b16 %v3094
    %v3458 = vunpack.c.l.b16 %v3095
    %v3459 = vunpack.c.h.b16 %v3095
    %v3460 = vunpack.c.l.b16 %v3096
    %v3461 = vunpack.c.h.b16 %v3096
    %v3462 = vunpack.c.l.b16 %v3097
    %v3463 = vunpack.c.h.b16 %v3097
    %v3464 = vunpack.c.l.b16 %v3098
    %v3465 = vunpack.c.h.b16 %v3098
    %v3466 = vunpack.c.l.b16 %v3099
    %v3467 = vunpack.c.h.b16 %v3099
    %v3468 = vunpack.c.l.b16 %v3100
    %v3469 = vunpack.c.h.b16 %v3100
    %v3470 = vunpack.c.l.b16 %v3101
    %v3471 = vunpack.c.h.b16 %v3101
    %v3472 = vunpack.c.l.b16 %v3102
    %v3473 = vunpack.c.h.b16 %v3102
    %v3474 = vunpack.c.l.b16 %v3103
    %v3475 = vunpack.c.h.b16 %v3103
    %v3476 = vunpack.c.l.b16 %v3104
    %v3477 = vunpack.c.h.b16 %v3104
    %v3478 = vunpack.c.l.b16 %v3105
    %v3479 = vunpack.c.h.b16 %v3105
    %v3480 = vunpack.c.l.b16 %v3106
    %v3481 = vunpack.c.h.b16 %v3106
    %v3482 = vunpack.c.l.b16 %v3107
    %v3483 = vunpack.c.h.b16 %v3107
    %v3484 = vunpack.c.l.b16 %v3108
    %v3485 = vunpack.c.h.b16 %v3108
    %v3486 = vunpack.c.l.b16 %v3109
    %v3487 = vunpack.c.h.b16 %v3109
    %v3488 = vunpack.c.l.b16 %v3110
    %v3489 = vunpack.c.h.b16 %v3110
    %v3490 = vunpack.c.l.b16 %v3111
    %v3491 = vunpack.c.h.b16 %v3111
    %v3492 = vunpack.c.l.b16 %v3112
    %v3493 = vunpack.c.h.b16 %v3112
    %v3494 = vunpack.c.l.b16 %v3113
    %v3495 = vunpack.c.h.b16 %v3113
    %v3496 = vunpack.c.l.b16 %v3114
    %v3497 = vunpack.c.h.b16 %v3114
    %v3498 = vunpack.c.l.b16 %v3115
    %v3499 = vunpack.c.h.b16 %v3115
    %v3500 = vunpack.c.l.b16 %v3116
    %v3501 = vunpack.c.h.b16 %v3116
    %v3502 = vunpack.c.l.b16 %v3117
    %v3503 = vunpack.c.h.b16 %v3117
    %v3504 = vunpack.c.l.b16 %v3118
    %v3505 = vunpack.c.h.b16 %v3118
    %v3506 = vunpack.c.l.b16 %v3119
    %v3507 = vunpack.c.h.b16 %v3119
    %v3508 = vunpack.c.l.b16 %v3120
    %v3509 = vunpack.c.h.b16 %v3120
    %v3510 = vunpack.c.l.b16 %v3121
    %v3511 = vunpack.c.h.b16 %v3121
    %v3512 = vunpack.c.l.b16 %v3122
    %v3513 = vunpack.c.h.b16 %v3122
    %v3514 = vunpack.c.l.b16 %v3123
    %v3515 = vunpack.c.h.b16 %v3123
    %v3516 = vunpack.c.l.b16 %v3124
    %v3517 = vunpack.c.h.b16 %v3124
    %v3518 = vunpack.c.l.b16 %v3125
    %v3519 = vunpack.c.h.b16 %v3125
    %v3520 = vunpack.c.l.b16 %v3126
    %v3521 = vunpack.c.h.b16 %v3126
    %v3522 = vunpack.c.l.b16 %v3127
    %v3523 = vunpack.c.h.b16 %v3127
    %v3524 = vunpack.c.l.b16 %v3128
    %v3525 = vunpack.c.h.b16 %v3128
    %v3526 = vunpack.c.l.b16 %v3129
    %v3527 = vunpack.c.h.b16 %v3129
    %v3528 = vunpack.c.l.b16 %v3130
    %v3529 = vunpack.c.h.b16 %v3130
    %v3530 = vunpack.c.l.b16 %v3131
    %v3531 = vunpack.c.h.b16 %v3131
    %v3532 = vunpack.c.l.b16 %v3132
    %v3533 = vunpack.c.h.b16 %v3132
    %v3534 = vunpack.c.l.b16 %v3133
    %v3535 = vunpack.c.h.b16 %v3133
    %v3536 = vunpack.c.l.b16 %v3134
    %v3537 = vunpack.c.h.b16 %v3134
    %v3538 = vunpack.c.l.b16 %v3135
    %v3539 = vunpack.c.h.b16 %v3135
    %v3540 = vunpack.c.l.b16 %v3136
    %v3541 = vunpack.c.h.b16 %v3136
    %v3542 = vunpack.c.l.b16 %v3137
    %v3543 = vunpack.c.h.b16 %v3137
    %v3544 = vunpack.c.l.b16 %v3138
    %v3545 = vunpack.c.h.b16 %v3138
    %v3546 = vunpack.c.l.b16 %v3139
    %v3547 = vunpack.c.h.b16 %v3139
    %v3548 = vunpack.c.l.b16 %v3140
    %v3549 = vunpack.c.h.b16 %v3140
    %v3550 = vunpack.c.l.b16 %v3141
    %v3551 = vunpack.c.h.b16 %v3141
    %v3552 = vunpack.c.l.b16 %v3142
    %v3553 = vunpack.c.h.b16 %v3142
    %v3554 = vunpack.c.l.b16 %v3143
    %v3555 = vunpack.c.h.b16 %v3143
    %v3556 = vunpack.c.l.b16 %v3144
    %v3557 = vunpack.c.h.b16 %v3144
    %v3558 = vunpack.c.l.b16 %v3145
    %v3559 = vunpack.c.h.b16 %v3145
    %v3560 = vunpack.c.l.b16 %v3146
    %v3561 = vunpack.c.h.b16 %v3146
    %v3562 = vunpack.c.l.b16 %v3147
    %v3563 = vunpack.c.h.b16 %v3147
    %v3564 = vunpack.c.l.b16 %v3148
    %v3565 = vunpack.c.h.b16 %v3148
    %v3566 = vunpack.c.l.b16 %v3149
    %v3567 = vunpack.c.h.b16 %v3149
    %v3568 = vunpack.c.l.b16 %v3150
    %v3569 = vunpack.c.h.b16 %v3150
    %v3570 = vunpack.c.l.b16 %v3151
    %v3571 = vunpack.c.h.b16 %v3151
    %v3572 = vunpack.c.l.b16 %v3152
    %v3573 = vunpack.c.h.b16 %v3152
    %v3574 = vunpack.c.l.b16 %v3153
    %v3575 = vunpack.c.h.b16 %v3153
    %v3576 = vunpack.c.l.b16 %v3154
    %v3577 = vunpack.c.h.b16 %v3154
    %v3578 = vunpack.c.l.b16 %v3155
    %v3579 = vunpack.c.h.b16 %v3155
    %v3580 = vunpack.c.l.b16 %v3156
    %v3581 = vunpack.c.h.b16 %v3156
    %v3582 = vunpack.c.l.b16 %v3157
    %v3583 = vunpack.c.h.b16 %v3157
    %v3584 = vunpack.c.l.b16 %v3158
    %v3585 = vunpack.c.h.b16 %v3158
    %v3586 = vunpack.c.l.b16 %v3159
    %v3587 = vunpack.c.h.b16 %v3159
    %v3588 = vunpack.c.l.b16 %v3160
    %v3589 = vunpack.c.h.b16 %v3160
    %v3590 = vunpack.c.l.b16 %v3161
    %v3591 = vunpack.c.h.b16 %v3161
    %v3592 = vunpack.c.l.b16 %v3162
    %v3593 = vunpack.c.h.b16 %v3162
    %v3594 = vunpack.c.l.b16 %v3163
    %v3595 = vunpack.c.h.b16 %v3163
    %v3596 = vunpack.c.l.b16 %v3164
    %v3597 = vunpack.c.h.b16 %v3164
    %v3598 = vunpack.c.l.b16 %v3165
    %v3599 = vunpack.c.h.b16 %v3165
    %v3600 = vunpack.c.l.b16 %v3166
    %v3601 = vunpack.c.h.b16 %v3166
    %v3602 = vunpack.c.l.b16 %v3167
    %v3603 = vunpack.c.h.b16 %v3167
    %v3604 = vunpack.c.l.b16 %v3168
    %v3605 = vunpack.c.h.b16 %v3168
    %v3606 = vunpack.c.l.b16 %v3169
    %v3607 = vunpack.c.h.b16 %v3169
    %v3608 = vunpack.c.l.b16 %v3170
    %v3609 = vunpack.c.h.b16 %v3170
    %v3610 = vunpack.c.l.b16 %v3171
    %v3611 = vunpack.c.h.b16 %v3171
    %v3612 = vunpack.c.l.b16 %v3172
    %v3613 = vunpack.c.h.b16 %v3172
    %v3614 = vunpack.c.l.b16 %v3173
    %v3615 = vunpack.c.h.b16 %v3173
    %v3616 = vunpack.c.l.b16 %v3174
    %v3617 = vunpack.c.h.b16 %v3174
    %v3618 = vunpack.c.l.b16 %v3175
    %v3619 = vunpack.c.h.b16 %v3175
    %v3620 = vunpack.c.l.b16 %v3176
    %v3621 = vunpack.c.h.b16 %v3176
    %v3622 = vunpack.c.l.b16 %v3177
    %v3623 = vunpack.c.h.b16 %v3177
    %v3624 = vunpack.c.l.b16 %v3178
    %v3625 = vunpack.c.h.b16 %v3178
    %v3626 = vunpack.c.l.b16 %v3179
    %v3627 = vunpack.c.h.b16 %v3179
    %v3628 = vunpack.c.l.b16 %v3180
    %v3629 = vunpack.c.h.b16 %v3180
    %v3630 = vunpack.c.l.b16 %v3181
    %v3631 = vunpack.c.h.b16 %v3181
    %v3632 = vunpack.c.l.b16 %v3182
    %v3633 = vunpack.c.h.b16 %v3182
    %v3634 = vunpack.c.l.b16 %v3183
    %v3635 = vunpack.c.h.b16 %v3183
    %v3636 = vunpack.c.l.b16 %v3184
    %v3637 = vunpack.c.h.b16 %v3184
    %v3638 = vunpack.c.l.b16 %v3185
    %v3639 = vunpack.c.h.b16 %v3185
    %v3640 = vunpack.c.l.b16 %v3186
    %v3641 = vunpack.c.h.b16 %v3186
    %v3642 = vunpack.c.l.b16 %v3187
    %v3643 = vunpack.c.h.b16 %v3187
    %v3644 = vunpack.c.l.b16 %v3188
    %v3645 = vunpack.c.h.b16 %v3188
    %v3646 = vunpack.c.l.b16 %v3189
    %v3647 = vunpack.c.h.b16 %v3189
    %v3648 = vunpack.c.l.b16 %v3190
    %v3649 = vunpack.c.h.b16 %v3190
    %v3650 = vunpack.c.l.b16 %v3191
    %v3651 = vunpack.c.h.b16 %v3191
    %v3652 = vunpack.c.l.b16 %v3192
    %v3653 = vunpack.c.h.b16 %v3192
    %v3654 = vunpack.c.l.b16 %v3193
    %v3655 = vunpack.c.h.b16 %v3193
    %v3656 = vunpack.c.l.b16 %v3194
    %v3657 = vunpack.c.h.b16 %v3194
    %v3658 = vunpack.c.l.b16 %v3195
    %v3659 = vunpack.c.h.b16 %v3195
    %v3660 = vunpack.c.l.b16 %v3196
    %v3661 = vunpack.c.h.b16 %v3196
    %v3662 = vunpack.c.l.b16 %v3197
    %v3663 = vunpack.c.h.b16 %v3197
    %v3664 = vunpack.c.l.b16 %v3198
    %v3665 = vunpack.c.h.b16 %v3198
    %v3666 = vunpack.c.l.b16 %v3199
    %v3667 = vunpack.c.h.b16 %v3199
    %v3668 = vunpack.c.l.b16 %v3200
    %v3669 = vunpack.c.h.b16 %v3200
    %v3670 = vunpack.c.l.b16 %v3201
    %v3671 = vunpack.c.h.b16 %v3201
    %v3672 = vunpack.c.l.b16 %v3202
    %v3673 = vunpack.c.h.b16 %v3202
    %v3674 = vunpack.c.l.b16 %v3203
    %v3675 = vunpack.c.h.b16 %v3203
    %v3676 = vunpack.c.l.b16 %v3204
    %v3677 = vunpack.c.h.b16 %v3204
    %v3678 = vunpack.c.l.b16 %v3205
    %v3679 = vunpack.c.h.b16 %v3205
    %v3680 = vunpack.c.l.b16 %v3206
    %v3681 = vunpack.c.h.b16 %v3206
    %v3682 = vunpack.c.l.b16 %v3207
    %v3683 = vunpack.c.h.b16 %v3207
    %v3684 = vunpack.c.l.b16 %v3208
    %v3685 = vunpack.c.h.b16 %v3208
    %v3686 = vunpack.c.l.b16 %v3209
    %v3687 = vunpack.c.h.b16 %v3209
    %v3688 = vunpack.c.l.b16 %v3210
    %v3689 = vunpack.c.h.b16 %v3210
    %v3690 = vunpack.c.l.b16 %v3211
    %v3691 = vunpack.c.h.b16 %v3211
    %v3692 = vunpack.c.l.b16 %v3212
    %v3693 = vunpack.c.h.b16 %v3212
    %v3694 = vunpack.c.l.b16 %v3213
    %v3695 = vunpack.c.h.b16 %v3213
    %v3696 = vpack.c.b16 %v3448, %v3440
    %v3697 = vpack.c.b16 %v3449, %v3441
    %v3698 = vpack.c.b16 %v3450, %v3442
    %v3699 = vpack.c.b16 %v3451, %v3443
    %v3700 = vpack.c.b16 %v3452, %v3444
    %v3701 = vpack.c.b16 %v3453, %v3445
    %v3702 = vpack.c.b16 %v3454, %v3446
    %v3703 = vpack.c.b16 %v3455, %v3447
    %v3704 = vpack.c.b16 %v3464, %v3456
    %v3705 = vpack.c.b16 %v3465, %v3457
    %v3706 = vpack.c.b16 %v3466, %v3458
    %v3707 = vpack.c.b16 %v3467, %v3459
    %v3708 = vpack.c.b16 %v3468, %v3460
    %v3709 = vpack.c.b16 %v3469, %v3461
    %v3710 = vpack.c.b16 %v3470, %v3462
    %v3711 = vpack.c.b16 %v3471, %v3463
    %v3712 = vpack.c.b16 %v3480, %v3472
    %v3713 = vpack.c.b16 %v3481, %v3473
    %v3714 = vpack.c.b16 %v3482, %v3474
    %v3715 = vpack.c.b16 %v3483, %v3475
    %v3716 = vpack.c.b16 %v3484, %v3476
    %v3717 = vpack.c.b16 %v3485, %v3477
    %v3718 = vpack.c.b16 %v3486, %v3478
    %v3719 = vpack.c.b16 %v3487, %v3479
    %v3720 = vpack.c.b16 %v3496, %v3488
    %v3721 = vpack.c.b16 %v3497, %v3489
    %v3722 = vpack.c.b16 %v3498, %v3490
    %v3723 = vpack.c.b16 %v3499, %v3491
    %v3724 = vpack.c.b16 %v3500, %v3492
    %v3725 = vpack.c.b16 %v3501, %v3493
    %v3726 = vpack.c.b16 %v3502, %v3494
    %v3727 = vpack.c.b16 %v3503, %v3495
    %v3728 = vpack.c.b16 %v3512, %v3504
    %v3729 = vpack.c.b16 %v3513, %v3505
    %v3730 = vpack.c.b16 %v3514, %v3506
    %v3731 = vpack.c.b16 %v3515, %v3507
    %v3732 = vpack.c.b16 %v3516, %v3508
    %v3733 = vpack.c.b16 %v3517, %v3509
    %v3734 = vpack.c.b16 %v3518, %v3510
    %v3735 = vpack.c.b16 %v3519, %v3511
    %v3736 = vpack.c.b16 %v3528, %v3520
    %v3737 = vpack.c.b16 %v3529, %v3521
    %v3738 = vpack.c.b16 %v3530, %v3522
    %v3739 = vpack.c.b16 %v3531, %v3523
    %v3740 = vpack.c.b16 %v3532, %v3524
    %v3741 = vpack.c.b16 %v3533, %v3525
    %v3742 = vpack.c.b16 %v3534, %v3526
    %v3743 = vpack.c.b16 %v3535, %v3527
    %v3744 = vpack.c.b16 %v3544, %v3536
    %v3745 = vpack.c.b16 %v3545, %v3537
    %v3746 = vpack.c.b16 %v3546, %v3538
    %v3747 = vpack.c.b16 %v3547, %v3539
    %v3748 = vpack.c.b16 %v3548, %v3540
    %v3749 = vpack.c.b16 %v3549, %v3541
    %v3750 = vpack.c.b16 %v3550, %v3542
    %v3751 = vpack.c.b16 %v3551, %v3543
    %v3752 = vpack.c.b16 %v3560, %v3552
    %v3753 = vpack.c.b16 %v3561, %v3553
    %v3754 = vpack.c.b16 %v3562, %v3554
    %v3755 = vpack.c.b16 %v3563, %v3555
    %v3756 = vpack.c.b16 %v3564, %v3556
    %v3757 = vpack.c.b16 %v3565, %v3557
    %v3758 = vpack.c.b16 %v3566, %v3558
    %v3759 = vpack.c.b16 %v3567, %v3559
    %v3760 = vpack.c.b16 %v3576, %v3568
    %v3761 = vpack.c.b16 %v3577, %v3569
    %v3762 = vpack.c.b16 %v3578, %v3570
    %v3763 = vpack.c.b16 %v3579, %v3571
    %v3764 = vpack.c.b16 %v3580, %v3572
    %v3765 = vpack.c.b16 %v3581, %v3573
    %v3766 = vpack.c.b16 %v3582, %v3574
    %v3767 = vpack.c.b16 %v3583, %v3575
    %v3768 = vpack.c.b16 %v3592, %v3584
    %v3769 = vpack.c.b16 %v3593, %v3585
    %v3770 = vpack.c.b16 %v3594, %v3586
    %v3771 = vpack.c.b16 %v3595, %v3587
    %v3772 = vpack.c.b16 %v3596, %v3588
    %v3773 = vpack.c.b16 %v3597, %v3589
    %v3774 = vpack.c.b16 %v3598, %v3590
    %v3775 = vpack.c.b16 %v3599, %v3591
    %v3776 = vpack.c.b16 %v3608, %v3600
    %v3777 = vpack.c.b16 %v3609, %v3601
    %v3778 = vpack.c.b16 %v3610, %v3602
    %v3779 = vpack.c.b16 %v3611, %v3603
    %v3780 = vpack.c.b16 %v3612, %v3604
    %v3781 = vpack.c.b16 %v3613, %v3605
    %v3782 = vpack.c.b16 %v3614, %v3606
    %v3783 = vpack.c.b16 %v3615, %v3607
    %v3784 = vpack.c.b16 %v3624, %v3616
    %v3785 = vpack.c.b16 %v3625, %v3617
    %v3786 = vpack.c.b16 %v3626, %v3618
    %v3787 = vpack.c.b16 %v3627, %v3619
    %v3788 = vpack.c.b16 %v3628, %v3620
    %v3789 = vpack.c.b16 %v3629, %v3621
    %v3790 = vpack.c.b16 %v3630, %v3622
    %v3791 = vpack.c.b16 %v3631, %v3623
    %v3792 = vpack.c.b16 %v3640, %v3632
    %v3793 = vpack.c.b16 %v3641, %v3633
    %v3794 = vpack.c.b16 %v3642, %v3634
    %v3795 = vpack.c.b16 %v3643, %v3635
    %v3796 = vpack.c.b16 %v3644, %v3636
    %v3797 = vpack.c.b16 %v3645, %v3637
    %v3798 = vpack.c.b16 %v3646, %v3638
    %v3799 = vpack.c.b16 %v3647, %v3639
    %v3800 = vpack.c.b16 %v3656, %v3648
    %v3801 = vpack.c.b16 %v3657, %v3649
    %v3802 = vpack.c.b16 %v3658, %v3650
    %v3803 = vpack.c.b16 %v3659, %v3651
    %v3804 = vpack.c.b16 %v3660, %v3652
    %v3805 = vpack.c.b16 %v3661, %v3653
    %v3806 = vpack.c.b16 %v3662, %v3654
    %v3807 = vpack.c.b16 %v3663, %v3655
    %v3808 = vpack.c.b16 %v3672, %v3664
    %v3809 = vpack.c.b16 %v3673, %v3665
    %v3810 = vpack.c.b16 %v3674, %v3666
    %v3811 = vpack.c.b16 %v3675, %v3667
    %v3812 = vpack.c.b16 %v3676, %v3668
    %v3813 = vpack.c.b16 %v3677, %v3669
    %v3814 = vpack.c.b16 %v3678, %v3670
    %v3815 = vpack.c.b16 %v3679, %v3671
    %v3816 = vpack.c.b16 %v3688, %v3680
    %v3817 = vpack.c.b16 %v3689, %v3681
    %v3818 = vpack.c.b16 %v3690, %v3682
    %v3819 = vpack.c.b16 %v3691, %v3683
    %v3820 = vpack.c.b16 %v3692, %v3684
    %v3821 = vpack.c.b16 %v3693, %v3685
    %v3822 = vpack.c.b16 %v3694, %v3686
    %v3823 = vpack.c.b16 %v3695, %v3687
    %3952 = vmatpush.bf16.msra.mxu0 %v3752
    %3953 = vmatpush.bf16.msra.mxu0 %v3744
    %3954 = vmatpush.bf16.msra.mxu0 %v3736
    %3955 = vmatpush.bf16.msra.mxu0 %v3728
    %3956 = vmatpush.bf16.msra.mxu0 %v3720
    %3957 = vmatpush.bf16.msra.mxu0 %v3712
    %3958 = vmatpush.bf16.msra.mxu0 %v3704
    %3959 = vmatpush.bf16.msra.mxu0 %v3696
    %3960 = vmatmul.bf16.gmra.mxu0 %v3280
    %v3961 = vpop.f32.mrf.mxu0
    %v3962 = vadd.f32 %v3216, %v3961
    %v3963 = vpop.f32.mrf.mxu0
    %v3964 = vadd.f32 %v3216, %v3963
    %3965 = vmatmul.bf16.gmra.mxu0 %v3282
    %v3966 = vpop.f32.mrf.mxu0
    %v3967 = vadd.f32 %v3216, %v3966
    %v3968 = vpop.f32.mrf.mxu0
    %v3969 = vadd.f32 %v3216, %v3968
    %3970 = vmatmul.bf16.gmra.mxu0 %v3284
    %v3971 = vpop.f32.mrf.mxu0
    %v3972 = vadd.f32 %v3216, %v3971
    %v3973 = vpop.f32.mrf.mxu0
    %v3974 = vadd.f32 %v3216, %v3973
    %3975 = vmatmul.bf16.gmra.mxu0 %v3286
    %v3976 = vpop.f32.mrf.mxu0
    %v3977 = vadd.f32 %v3216, %v3976
    %v3978 = vpop.f32.mrf.mxu0
    %v3979 = vadd.f32 %v3216, %v3978
    %3980 = vmatmul.bf16.gmra.mxu0 %v3288
    %v3981 = vpop.f32.mrf.mxu0
    %v3982 = vadd.f32 %v3216, %v3981
    %v3983 = vpop.f32.mrf.mxu0
    %v3984 = vadd.f32 %v3216, %v3983
    %3985 = vmatmul.bf16.gmra.mxu0 %v3290
    %v3986 = vpop.f32.mrf.mxu0
    %v3987 = vadd.f32 %v3216, %v3986
    %v3988 = vpop.f32.mrf.mxu0
    %v3989 = vadd.f32 %v3216, %v3988
    %3990 = vmatmul.bf16.gmra.mxu0 %v3292
    %v3991 = vpop.f32.mrf.mxu0
    %v3992 = vadd.f32 %v3216, %v3991
    %v3993 = vpop.f32.mrf.mxu0
    %v3994 = vadd.f32 %v3216, %v3993
    %3995 = vmatmul.bf16.gmra.mxu0 %v3294
    %v3996 = vpop.f32.mrf.mxu0
    %v3997 = vadd.f32 %v3216, %v3996
    %v3998 = vpop.f32.mrf.mxu0
    %v3999 = vadd.f32 %v3216, %v3998
    %4000 = vdwg.mxu0
    %4001 = vmatpush.bf16.msra.mxu0 %v3816
    %4002 = vmatpush.bf16.msra.mxu0 %v3808
    %4003 = vmatpush.bf16.msra.mxu0 %v3800
    %4004 = vmatpush.bf16.msra.mxu0 %v3792
    %4005 = vmatpush.bf16.msra.mxu0 %v3784
    %4006 = vmatpush.bf16.msra.mxu0 %v3776
    %4007 = vmatpush.bf16.msra.mxu0 %v3768
    %4008 = vmatpush.bf16.msra.mxu0 %v3760
    %4009 = vmatmul.bf16.gmra.mxu0 %v3281
    %v4010 = vpop.f32.mrf.mxu0
    %v4011 = vadd.f32 %v3962, %v4010
    %v4012 = vpop.f32.mrf.mxu0
    %v4013 = vadd.f32 %v3964, %v4012
    %4014 = vmatmul.bf16.gmra.mxu0 %v3283
    %v4015 = vpop.f32.mrf.mxu0
    %v4016 = vadd.f32 %v3967, %v4015
    %v4017 = vpop.f32.mrf.mxu0
    %v4018 = vadd.f32 %v3969, %v4017
    %4019 = vmatmul.bf16.gmra.mxu0 %v3285
    %v4020 = vpop.f32.mrf.mxu0
    %v4021 = vadd.f32 %v3972, %v4020
    %v4022 = vpop.f32.mrf.mxu0
    %v4023 = vadd.f32 %v3974, %v4022
    %4024 = vmatmul.bf16.gmra.mxu0 %v3287
    %v4025 = vpop.f32.mrf.mxu0
    %v4026 = vadd.f32 %v3977, %v4025
    %v4027 = vpop.f32.mrf.mxu0
    %v4028 = vadd.f32 %v3979, %v4027
    %4029 = vmatmul.bf16.gmra.mxu0 %v3289
    %v4030 = vpop.f32.mrf.mxu0
    %v4031 = vadd.f32 %v3982, %v4030
    %v4032 = vpop.f32.mrf.mxu0
    %v4033 = vadd.f32 %v3984, %v4032
    %4034 = vmatmul.bf16.gmra.mxu0 %v3291
    %v4035 = vpop.f32.mrf.mxu0
    %v4036 = vadd.f32 %v3987, %v4035
    %v4037 = vpop.f32.mrf.mxu0
    %v4038 = vadd.f32 %v3989, %v4037
    %4039 = vmatmul.bf16.gmra.mxu0 %v3293
    %v4040 = vpop.f32.mrf.mxu0
    %v4041 = vadd.f32 %v3992, %v4040
    %v4042 = vpop.f32.mrf.mxu0
    %v4043 = vadd.f32 %v3994, %v4042
    %4044 = vmatmul.bf16.gmra.mxu0 %v3295
    %v4045 = vpop.f32.mrf.mxu0
    %v4046 = vadd.f32 %v3997, %v4045
    %v4047 = vpop.f32.mrf.mxu0
    %v4048 = vadd.f32 %v3999, %v4047
    %4049 = vdwg.mxu0
    %4050 = vmatpush.bf16.msra.mxu0 %v3753
    %4051 = vmatpush.bf16.msra.mxu0 %v3745
    %4052 = vmatpush.bf16.msra.mxu0 %v3737
    %4053 = vmatpush.bf16.msra.mxu0 %v3729
    %4054 = vmatpush.bf16.msra.mxu0 %v3721
    %4055 = vmatpush.bf16.msra.mxu0 %v3713
    %4056 = vmatpush.bf16.msra.mxu0 %v3705
    %4057 = vmatpush.bf16.msra.mxu0 %v3697
    %4058 = vmatmul.bf16.gmra.mxu0 %v3280
    %v4059 = vpop.f32.mrf.mxu0
    %v4060 = vadd.f32 %v3217, %v4059
    %v4061 = vpop.f32.mrf.mxu0
    %v4062 = vadd.f32 %v3217, %v4061
    %4063 = vmatmul.bf16.gmra.mxu0 %v3282
    %v4064 = vpop.f32.mrf.mxu0
    %v4065 = vadd.f32 %v3217, %v4064
    %v4066 = vpop.f32.mrf.mxu0
    %v4067 = vadd.f32 %v3217, %v4066
    %4068 = vmatmul.bf16.gmra.mxu0 %v3284
    %v4069 = vpop.f32.mrf.mxu0
    %v4070 = vadd.f32 %v3217, %v4069
    %v4071 = vpop.f32.mrf.mxu0
    %v4072 = vadd.f32 %v3217, %v4071
    %4073 = vmatmul.bf16.gmra.mxu0 %v3286
    %v4074 = vpop.f32.mrf.mxu0
    %v4075 = vadd.f32 %v3217, %v4074
    %v4076 = vpop.f32.mrf.mxu0
    %v4077 = vadd.f32 %v3217, %v4076
    %4078 = vmatmul.bf16.gmra.mxu0 %v3288
    %v4079 = vpop.f32.mrf.mxu0
    %v4080 = vadd.f32 %v3217, %v4079
    %v4081 = vpop.f32.mrf.mxu0
    %v4082 = vadd.f32 %v3217, %v4081
    %4083 = vmatmul.bf16.gmra.mxu0 %v3290
    %v4084 = vpop.f32.mrf.mxu0
    %v4085 = vadd.f32 %v3217, %v4084
    %v4086 = vpop.f32.mrf.mxu0
    %v4087 = vadd.f32 %v3217, %v4086
    %4088 = vmatmul.bf16.gmra.mxu0 %v3292
    %v4089 = vpop.f32.mrf.mxu0
    %v4090 = vadd.f32 %v3217, %v4089
    %v4091 = vpop.f32.mrf.mxu0
    %v4092 = vadd.f32 %v3217, %v4091
    %4093 = vmatmul.bf16.gmra.mxu0 %v3294
    %v4094 = vpop.f32.mrf.mxu0
    %v4095 = vadd.f32 %v3217, %v4094
    %v4096 = vpop.f32.mrf.mxu0
    %v4097 = vadd.f32 %v3217, %v4096
    %4098 = vdwg.mxu0
    %4099 = vmatpush.bf16.msra.mxu0 %v3817
    %4100 = vmatpush.bf16.msra.mxu0 %v3809
    %4101 = vmatpush.bf16.msra.mxu0 %v3801
    %4102 = vmatpush.bf16.msra.mxu0 %v3793
    %4103 = vmatpush.bf16.msra.mxu0 %v3785
    %4104 = vmatpush.bf16.msra.mxu0 %v3777
    %4105 = vmatpush.bf16.msra.mxu0 %v3769
    %4106 = vmatpush.bf16.msra.mxu0 %v3761
    %4107 = vmatmul.bf16.gmra.mxu0 %v3281
    %v4108 = vpop.f32.mrf.mxu0
    %v4109 = vadd.f32 %v4060, %v4108
    %v4110 = vpop.f32.mrf.mxu0
    %v4111 = vadd.f32 %v4062, %v4110
    %4112 = vmatmul.bf16.gmra.mxu0 %v3283
    %v4113 = vpop.f32.mrf.mxu0
    %v4114 = vadd.f32 %v4065, %v4113
    %v4115 = vpop.f32.mrf.mxu0
    %v4116 = vadd.f32 %v4067, %v4115
    %4117 = vmatmul.bf16.gmra.mxu0 %v3285
    %v4118 = vpop.f32.mrf.mxu0
    %v4119 = vadd.f32 %v4070, %v4118
    %v4120 = vpop.f32.mrf.mxu0
    %v4121 = vadd.f32 %v4072, %v4120
    %4122 = vmatmul.bf16.gmra.mxu0 %v3287
    %v4123 = vpop.f32.mrf.mxu0
    %v4124 = vadd.f32 %v4075, %v4123
    %v4125 = vpop.f32.mrf.mxu0
    %v4126 = vadd.f32 %v4077, %v4125
    %4127 = vmatmul.bf16.gmra.mxu0 %v3289
    %v4128 = vpop.f32.mrf.mxu0
    %v4129 = vadd.f32 %v4080, %v4128
    %v4130 = vpop.f32.mrf.mxu0
    %v4131 = vadd.f32 %v4082, %v4130
    %4132 = vmatmul.bf16.gmra.mxu0 %v3291
    %v4133 = vpop.f32.mrf.mxu0
    %v4134 = vadd.f32 %v4085, %v4133
    %v4135 = vpop.f32.mrf.mxu0
    %v4136 = vadd.f32 %v4087, %v4135
    %4137 = vmatmul.bf16.gmra.mxu0 %v3293
    %v4138 = vpop.f32.mrf.mxu0
    %v4139 = vadd.f32 %v4090, %v4138
    %v4140 = vpop.f32.mrf.mxu0
    %v4141 = vadd.f32 %v4092, %v4140
    %4142 = vmatmul.bf16.gmra.mxu0 %v3295
    %v4143 = vpop.f32.mrf.mxu0
    %v4144 = vadd.f32 %v4095, %v4143
    %v4145 = vpop.f32.mrf.mxu0
    %v4146 = vadd.f32 %v4097, %v4145
    %4147 = vdwg.mxu0
    %4148 = vmatpush.bf16.msra.mxu0 %v3754
    %4149 = vmatpush.bf16.msra.mxu0 %v3746
    %4150 = vmatpush.bf16.msra.mxu0 %v3738
    %4151 = vmatpush.bf16.msra.mxu0 %v3730
    %4152 = vmatpush.bf16.msra.mxu0 %v3722
    %4153 = vmatpush.bf16.msra.mxu0 %v3714
    %4154 = vmatpush.bf16.msra.mxu0 %v3706
    %4155 = vmatpush.bf16.msra.mxu0 %v3698
    %4156 = vmatmul.bf16.gmra.mxu0 %v3280
    %v4157 = vpop.f32.mrf.mxu0
    %v4158 = vadd.f32 %v3218, %v4157
    %v4159 = vpop.f32.mrf.mxu0
    %v4160 = vadd.f32 %v3218, %v4159
    %4161 = vmatmul.bf16.gmra.mxu0 %v3282
    %v4162 = vpop.f32.mrf.mxu0
    %v4163 = vadd.f32 %v3218, %v4162
    %v4164 = vpop.f32.mrf.mxu0
    %v4165 = vadd.f32 %v3218, %v4164
    %4166 = vmatmul.bf16.gmra.mxu0 %v3284
    %v4167 = vpop.f32.mrf.mxu0
    %v4168 = vadd.f32 %v3218, %v4167
    %v4169 = vpop.f32.mrf.mxu0
    %v4170 = vadd.f32 %v3218, %v4169
    %4171 = vmatmul.bf16.gmra.mxu0 %v3286
    %v4172 = vpop.f32.mrf.mxu0
    %v4173 = vadd.f32 %v3218, %v4172
    %v4174 = vpop.f32.mrf.mxu0
    %v4175 = vadd.f32 %v3218, %v4174
    %4176 = vmatmul.bf16.gmra.mxu0 %v3288
    %v4177 = vpop.f32.mrf.mxu0
    %v4178 = vadd.f32 %v3218, %v4177
    %v4179 = vpop.f32.mrf.mxu0
    %v4180 = vadd.f32 %v3218, %v4179
    %4181 = vmatmul.bf16.gmra.mxu0 %v3290
    %v4182 = vpop.f32.mrf.mxu0
    %v4183 = vadd.f32 %v3218, %v4182
    %v4184 = vpop.f32.mrf.mxu0
    %v4185 = vadd.f32 %v3218, %v4184
    %4186 = vmatmul.bf16.gmra.mxu0 %v3292
    %v4187 = vpop.f32.mrf.mxu0
    %v4188 = vadd.f32 %v3218, %v4187
    %v4189 = vpop.f32.mrf.mxu0
    %v4190 = vadd.f32 %v3218, %v4189
    %4191 = vmatmul.bf16.gmra.mxu0 %v3294
    %v4192 = vpop.f32.mrf.mxu0
    %v4193 = vadd.f32 %v3218, %v4192
    %v4194 = vpop.f32.mrf.mxu0
    %v4195 = vadd.f32 %v3218, %v4194
    %4196 = vdwg.mxu0
    %4197 = vmatpush.bf16.msra.mxu0 %v3818
    %4198 = vmatpush.bf16.msra.mxu0 %v3810
    %4199 = vmatpush.bf16.msra.mxu0 %v3802
    %4200 = vmatpush.bf16.msra.mxu0 %v3794
    %4201 = vmatpush.bf16.msra.mxu0 %v3786
    %4202 = vmatpush.bf16.msra.mxu0 %v3778
    %4203 = vmatpush.bf16.msra.mxu0 %v3770
    %4204 = vmatpush.bf16.msra.mxu0 %v3762
    %4205 = vmatmul.bf16.gmra.mxu0 %v3281
    %v4206 = vpop.f32.mrf.mxu0
    %v4207 = vadd.f32 %v4158, %v4206
    %v4208 = vpop.f32.mrf.mxu0
    %v4209 = vadd.f32 %v4160, %v4208
    %4210 = vmatmul.bf16.gmra.mxu0 %v3283
    %v4211 = vpop.f32.mrf.mxu0
    %v4212 = vadd.f32 %v4163, %v4211
    %v4213 = vpop.f32.mrf.mxu0
    %v4214 = vadd.f32 %v4165, %v4213
    %4215 = vmatmul.bf16.gmra.mxu0 %v3285
    %v4216 = vpop.f32.mrf.mxu0
    %v4217 = vadd.f32 %v4168, %v4216
    %v4218 = vpop.f32.mrf.mxu0
    %v4219 = vadd.f32 %v4170, %v4218
    %4220 = vmatmul.bf16.gmra.mxu0 %v3287
    %v4221 = vpop.f32.mrf.mxu0
    %v4222 = vadd.f32 %v4173, %v4221
    %v4223 = vpop.f32.mrf.mxu0
    %v4224 = vadd.f32 %v4175, %v4223
    %4225 = vmatmul.bf16.gmra.mxu0 %v3289
    %v4226 = vpop.f32.mrf.mxu0
    %v4227 = vadd.f32 %v4178, %v4226
    %v4228 = vpop.f32.mrf.mxu0
    %v4229 = vadd.f32 %v4180, %v4228
    %4230 = vmatmul.bf16.gmra.mxu0 %v3291
    %v4231 = vpop.f32.mrf.mxu0
    %v4232 = vadd.f32 %v4183, %v4231
    %v4233 = vpop.f32.mrf.mxu0
    %v4234 = vadd.f32 %v4185, %v4233
    %4235 = vmatmul.bf16.gmra.mxu0 %v3293
    %v4236 = vpop.f32.mrf.mxu0
    %v4237 = vadd.f32 %v4188, %v4236
    %v4238 = vpop.f32.mrf.mxu0
    %v4239 = vadd.f32 %v4190, %v4238
    %4240 = vmatmul.bf16.gmra.mxu0 %v3295
    %v4241 = vpop.f32.mrf.mxu0
    %v4242 = vadd.f32 %v4193, %v4241
    %v4243 = vpop.f32.mrf.mxu0
    %v4244 = vadd.f32 %v4195, %v4243
    %4245 = vdwg.mxu0
    %4246 = vmatpush.bf16.msra.mxu0 %v3755
    %4247 = vmatpush.bf16.msra.mxu0 %v3747
    %4248 = vmatpush.bf16.msra.mxu0 %v3739
    %4249 = vmatpush.bf16.msra.mxu0 %v3731
    %4250 = vmatpush.bf16.msra.mxu0 %v3723
    %4251 = vmatpush.bf16.msra.mxu0 %v3715
    %4252 = vmatpush.bf16.msra.mxu0 %v3707
    %4253 = vmatpush.bf16.msra.mxu0 %v3699
    %4254 = vmatmul.bf16.gmra.mxu0 %v3280
    %v4255 = vpop.f32.mrf.mxu0
    %v4256 = vadd.f32 %v3219, %v4255
    %v4257 = vpop.f32.mrf.mxu0
    %v4258 = vadd.f32 %v3219, %v4257
    %4259 = vmatmul.bf16.gmra.mxu0 %v3282
    %v4260 = vpop.f32.mrf.mxu0
    %v4261 = vadd.f32 %v3219, %v4260
    %v4262 = vpop.f32.mrf.mxu0
    %v4263 = vadd.f32 %v3219, %v4262
    %4264 = vmatmul.bf16.gmra.mxu0 %v3284
    %v4265 = vpop.f32.mrf.mxu0
    %v4266 = vadd.f32 %v3219, %v4265
    %v4267 = vpop.f32.mrf.mxu0
    %v4268 = vadd.f32 %v3219, %v4267
    %4269 = vmatmul.bf16.gmra.mxu0 %v3286
    %v4270 = vpop.f32.mrf.mxu0
    %v4271 = vadd.f32 %v3219, %v4270
    %v4272 = vpop.f32.mrf.mxu0
    %v4273 = vadd.f32 %v3219, %v4272
    %4274 = vmatmul.bf16.gmra.mxu0 %v3288
    %v4275 = vpop.f32.mrf.mxu0
    %v4276 = vadd.f32 %v3219, %v4275
    %v4277 = vpop.f32.mrf.mxu0
    %v4278 = vadd.f32 %v3219, %v4277
    %4279 = vmatmul.bf16.gmra.mxu0 %v3290
    %v4280 = vpop.f32.mrf.mxu0
    %v4281 = vadd.f32 %v3219, %v4280
    %v4282 = vpop.f32.mrf.mxu0
    %v4283 = vadd.f32 %v3219, %v4282
    %4284 = vmatmul.bf16.gmra.mxu0 %v3292
    %v4285 = vpop.f32.mrf.mxu0
    %v4286 = vadd.f32 %v3219, %v4285
    %v4287 = vpop.f32.mrf.mxu0
    %v4288 = vadd.f32 %v3219, %v4287
    %4289 = vmatmul.bf16.gmra.mxu0 %v3294
    %v4290 = vpop.f32.mrf.mxu0
    %v4291 = vadd.f32 %v3219, %v4290
    %v4292 = vpop.f32.mrf.mxu0
    %v4293 = vadd.f32 %v3219, %v4292
    %4294 = vdwg.mxu0
    %4295 = vmatpush.bf16.msra.mxu0 %v3819
    %4296 = vmatpush.bf16.msra.mxu0 %v3811
    %4297 = vmatpush.bf16.msra.mxu0 %v3803
    %4298 = vmatpush.bf16.msra.mxu0 %v3795
    %4299 = vmatpush.bf16.msra.mxu0 %v3787
    %4300 = vmatpush.bf16.msra.mxu0 %v3779
    %4301 = vmatpush.bf16.msra.mxu0 %v3771
    %4302 = vmatpush.bf16.msra.mxu0 %v3763
    %4303 = vmatmul.bf16.gmra.mxu0 %v3281
    %v4304 = vpop.f32.mrf.mxu0
    %v4305 = vadd.f32 %v4256, %v4304
    %v4306 = vpop.f32.mrf.mxu0
    %v4307 = vadd.f32 %v4258, %v4306
    %4308 = vmatmul.bf16.gmra.mxu0 %v3283
    %v4309 = vpop.f32.mrf.mxu0
    %v4310 = vadd.f32 %v4261, %v4309
    %v4311 = vpop.f32.mrf.mxu0
    %v4312 = vadd.f32 %v4263, %v4311
    %4313 = vmatmul.bf16.gmra.mxu0 %v3285
    %v4314 = vpop.f32.mrf.mxu0
    %v4315 = vadd.f32 %v4266, %v4314
    %v4316 = vpop.f32.mrf.mxu0
    %v4317 = vadd.f32 %v4268, %v4316
    %4318 = vmatmul.bf16.gmra.mxu0 %v3287
    %v4319 = vpop.f32.mrf.mxu0
    %v4320 = vadd.f32 %v4271, %v4319
    %v4321 = vpop.f32.mrf.mxu0
    %v4322 = vadd.f32 %v4273, %v4321
    %4323 = vmatmul.bf16.gmra.mxu0 %v3289
    %v4324 = vpop.f32.mrf.mxu0
    %v4325 = vadd.f32 %v4276, %v4324
    %v4326 = vpop.f32.mrf.mxu0
    %v4327 = vadd.f32 %v4278, %v4326
    %4328 = vmatmul.bf16.gmra.mxu0 %v3291
    %v4329 = vpop.f32.mrf.mxu0
    %v4330 = vadd.f32 %v4281, %v4329
    %v4331 = vpop.f32.mrf.mxu0
    %v4332 = vadd.f32 %v4283, %v4331
    %4333 = vmatmul.bf16.gmra.mxu0 %v3293
    %v4334 = vpop.f32.mrf.mxu0
    %v4335 = vadd.f32 %v4286, %v4334
    %v4336 = vpop.f32.mrf.mxu0
    %v4337 = vadd.f32 %v4288, %v4336
    %4338 = vmatmul.bf16.gmra.mxu0 %v3295
    %v4339 = vpop.f32.mrf.mxu0
    %v4340 = vadd.f32 %v4291, %v4339
    %v4341 = vpop.f32.mrf.mxu0
    %v4342 = vadd.f32 %v4293, %v4341
    %4343 = vdwg.mxu0
    %4344 = vmatpush.bf16.msra.mxu0 %v3756
    %4345 = vmatpush.bf16.msra.mxu0 %v3748
    %4346 = vmatpush.bf16.msra.mxu0 %v3740
    %4347 = vmatpush.bf16.msra.mxu0 %v3732
    %4348 = vmatpush.bf16.msra.mxu0 %v3724
    %4349 = vmatpush.bf16.msra.mxu0 %v3716
    %4350 = vmatpush.bf16.msra.mxu0 %v3708
    %4351 = vmatpush.bf16.msra.mxu0 %v3700
    %4352 = vmatmul.bf16.gmra.mxu0 %v3280
    %v4353 = vpop.f32.mrf.mxu0
    %v4354 = vadd.f32 %v3220, %v4353
    %v4355 = vpop.f32.mrf.mxu0
    %v4356 = vadd.f32 %v3220, %v4355
    %4357 = vmatmul.bf16.gmra.mxu0 %v3282
    %v4358 = vpop.f32.mrf.mxu0
    %v4359 = vadd.f32 %v3220, %v4358
    %v4360 = vpop.f32.mrf.mxu0
    %v4361 = vadd.f32 %v3220, %v4360
    %4362 = vmatmul.bf16.gmra.mxu0 %v3284
    %v4363 = vpop.f32.mrf.mxu0
    %v4364 = vadd.f32 %v3220, %v4363
    %v4365 = vpop.f32.mrf.mxu0
    %v4366 = vadd.f32 %v3220, %v4365
    %4367 = vmatmul.bf16.gmra.mxu0 %v3286
    %v4368 = vpop.f32.mrf.mxu0
    %v4369 = vadd.f32 %v3220, %v4368
    %v4370 = vpop.f32.mrf.mxu0
    %v4371 = vadd.f32 %v3220, %v4370
    %4372 = vmatmul.bf16.gmra.mxu0 %v3288
    %v4373 = vpop.f32.mrf.mxu0
    %v4374 = vadd.f32 %v3220, %v4373
    %v4375 = vpop.f32.mrf.mxu0
    %v4376 = vadd.f32 %v3220, %v4375
    %4377 = vmatmul.bf16.gmra.mxu0 %v3290
    %v4378 = vpop.f32.mrf.mxu0
    %v4379 = vadd.f32 %v3220, %v4378
    %v4380 = vpop.f32.mrf.mxu0
    %v4381 = vadd.f32 %v3220, %v4380
    %4382 = vmatmul.bf16.gmra.mxu0 %v3292
    %v4383 = vpop.f32.mrf.mxu0
    %v4384 = vadd.f32 %v3220, %v4383
    %v4385 = vpop.f32.mrf.mxu0
    %v4386 = vadd.f32 %v3220, %v4385
    %4387 = vmatmul.bf16.gmra.mxu0 %v3294
    %v4388 = vpop.f32.mrf.mxu0
    %v4389 = vadd.f32 %v3220, %v4388
    %v4390 = vpop.f32.mrf.mxu0
    %v4391 = vadd.f32 %v3220, %v4390
    %4392 = vdwg.mxu0
    %4393 = vmatpush.bf16.msra.mxu0 %v3820
    %4394 = vmatpush.bf16.msra.mxu0 %v3812
    %4395 = vmatpush.bf16.msra.mxu0 %v3804
    %4396 = vmatpush.bf16.msra.mxu0 %v3796
    %4397 = vmatpush.bf16.msra.mxu0 %v3788
    %4398 = vmatpush.bf16.msra.mxu0 %v3780
    %4399 = vmatpush.bf16.msra.mxu0 %v3772
    %4400 = vmatpush.bf16.msra.mxu0 %v3764
    %4401 = vmatmul.bf16.gmra.mxu0 %v3281
    %v4402 = vpop.f32.mrf.mxu0
    %v4403 = vadd.f32 %v4354, %v4402
    %v4404 = vpop.f32.mrf.mxu0
    %v4405 = vadd.f32 %v4356, %v4404
    %4406 = vmatmul.bf16.gmra.mxu0 %v3283
    %v4407 = vpop.f32.mrf.mxu0
    %v4408 = vadd.f32 %v4359, %v4407
    %v4409 = vpop.f32.mrf.mxu0
    %v4410 = vadd.f32 %v4361, %v4409
    %4411 = vmatmul.bf16.gmra.mxu0 %v3285
    %v4412 = vpop.f32.mrf.mxu0
    %v4413 = vadd.f32 %v4364, %v4412
    %v4414 = vpop.f32.mrf.mxu0
    %v4415 = vadd.f32 %v4366, %v4414
    %4416 = vmatmul.bf16.gmra.mxu0 %v3287
    %v4417 = vpop.f32.mrf.mxu0
    %v4418 = vadd.f32 %v4369, %v4417
    %v4419 = vpop.f32.mrf.mxu0
    %v4420 = vadd.f32 %v4371, %v4419
    %4421 = vmatmul.bf16.gmra.mxu0 %v3289
    %v4422 = vpop.f32.mrf.mxu0
    %v4423 = vadd.f32 %v4374, %v4422
    %v4424 = vpop.f32.mrf.mxu0
    %v4425 = vadd.f32 %v4376, %v4424
    %4426 = vmatmul.bf16.gmra.mxu0 %v3291
    %v4427 = vpop.f32.mrf.mxu0
    %v4428 = vadd.f32 %v4379, %v4427
    %v4429 = vpop.f32.mrf.mxu0
    %v4430 = vadd.f32 %v4381, %v4429
    %4431 = vmatmul.bf16.gmra.mxu0 %v3293
    %v4432 = vpop.f32.mrf.mxu0
    %v4433 = vadd.f32 %v4384, %v4432
    %v4434 = vpop.f32.mrf.mxu0
    %v4435 = vadd.f32 %v4386, %v4434
    %4436 = vmatmul.bf16.gmra.mxu0 %v3295
    %v4437 = vpop.f32.mrf.mxu0
    %v4438 = vadd.f32 %v4389, %v4437
    %v4439 = vpop.f32.mrf.mxu0
    %v4440 = vadd.f32 %v4391, %v4439
    %4441 = vdwg.mxu0
    %4442 = vmatpush.bf16.msra.mxu0 %v3757
    %4443 = vmatpush.bf16.msra.mxu0 %v3749
    %4444 = vmatpush.bf16.msra.mxu0 %v3741
    %4445 = vmatpush.bf16.msra.mxu0 %v3733
    %4446 = vmatpush.bf16.msra.mxu0 %v3725
    %4447 = vmatpush.bf16.msra.mxu0 %v3717
    %4448 = vmatpush.bf16.msra.mxu0 %v3709
    %4449 = vmatpush.bf16.msra.mxu0 %v3701
    %4450 = vmatmul.bf16.gmra.mxu0 %v3280
    %v4451 = vpop.f32.mrf.mxu0
    %v4452 = vadd.f32 %v3221, %v4451
    %v4453 = vpop.f32.mrf.mxu0
    %v4454 = vadd.f32 %v3221, %v4453
    %4455 = vmatmul.bf16.gmra.mxu0 %v3282
    %v4456 = vpop.f32.mrf.mxu0
    %v4457 = vadd.f32 %v3221, %v4456
    %v4458 = vpop.f32.mrf.mxu0
    %v4459 = vadd.f32 %v3221, %v4458
    %4460 = vmatmul.bf16.gmra.mxu0 %v3284
    %v4461 = vpop.f32.mrf.mxu0
    %v4462 = vadd.f32 %v3221, %v4461
    %v4463 = vpop.f32.mrf.mxu0
    %v4464 = vadd.f32 %v3221, %v4463
    %4465 = vmatmul.bf16.gmra.mxu0 %v3286
    %v4466 = vpop.f32.mrf.mxu0
    %v4467 = vadd.f32 %v3221, %v4466
    %v4468 = vpop.f32.mrf.mxu0
    %v4469 = vadd.f32 %v3221, %v4468
    %4470 = vmatmul.bf16.gmra.mxu0 %v3288
    %v4471 = vpop.f32.mrf.mxu0
    %v4472 = vadd.f32 %v3221, %v4471
    %v4473 = vpop.f32.mrf.mxu0
    %v4474 = vadd.f32 %v3221, %v4473
    %4475 = vmatmul.bf16.gmra.mxu0 %v3290
    %v4476 = vpop.f32.mrf.mxu0
    %v4477 = vadd.f32 %v3221, %v4476
    %v4478 = vpop.f32.mrf.mxu0
    %v4479 = vadd.f32 %v3221, %v4478
    %4480 = vmatmul.bf16.gmra.mxu0 %v3292
    %v4481 = vpop.f32.mrf.mxu0
    %v4482 = vadd.f32 %v3221, %v4481
    %v4483 = vpop.f32.mrf.mxu0
    %v4484 = vadd.f32 %v3221, %v4483
    %4485 = vmatmul.bf16.gmra.mxu0 %v3294
    %v4486 = vpop.f32.mrf.mxu0
    %v4487 = vadd.f32 %v3221, %v4486
    %v4488 = vpop.f32.mrf.mxu0
    %v4489 = vadd.f32 %v3221, %v4488
    %4490 = vdwg.mxu0
    %4491 = vmatpush.bf16.msra.mxu0 %v3821
    %4492 = vmatpush.bf16.msra.mxu0 %v3813
    %4493 = vmatpush.bf16.msra.mxu0 %v3805
    %4494 = vmatpush.bf16.msra.mxu0 %v3797
    %4495 = vmatpush.bf16.msra.mxu0 %v3789
    %4496 = vmatpush.bf16.msra.mxu0 %v3781
    %4497 = vmatpush.bf16.msra.mxu0 %v3773
    %4498 = vmatpush.bf16.msra.mxu0 %v3765
    %4499 = vmatmul.bf16.gmra.mxu0 %v3281
    %v4500 = vpop.f32.mrf.mxu0
    %v4501 = vadd.f32 %v4452, %v4500
    %v4502 = vpop.f32.mrf.mxu0
    %v4503 = vadd.f32 %v4454, %v4502
    %4504 = vmatmul.bf16.gmra.mxu0 %v3283
    %v4505 = vpop.f32.mrf.mxu0
    %v4506 = vadd.f32 %v4457, %v4505
    %v4507 = vpop.f32.mrf.mxu0
    %v4508 = vadd.f32 %v4459, %v4507
    %4509 = vmatmul.bf16.gmra.mxu0 %v3285
    %v4510 = vpop.f32.mrf.mxu0
    %v4511 = vadd.f32 %v4462, %v4510
    %v4512 = vpop.f32.mrf.mxu0
    %v4513 = vadd.f32 %v4464, %v4512
    %4514 = vmatmul.bf16.gmra.mxu0 %v3287
    %v4515 = vpop.f32.mrf.mxu0
    %v4516 = vadd.f32 %v4467, %v4515
    %v4517 = vpop.f32.mrf.mxu0
    %v4518 = vadd.f32 %v4469, %v4517
    %4519 = vmatmul.bf16.gmra.mxu0 %v3289
    %v4520 = vpop.f32.mrf.mxu0
    %v4521 = vadd.f32 %v4472, %v4520
    %v4522 = vpop.f32.mrf.mxu0
    %v4523 = vadd.f32 %v4474, %v4522
    %4524 = vmatmul.bf16.gmra.mxu0 %v3291
    %v4525 = vpop.f32.mrf.mxu0
    %v4526 = vadd.f32 %v4477, %v4525
    %v4527 = vpop.f32.mrf.mxu0
    %v4528 = vadd.f32 %v4479, %v4527
    %4529 = vmatmul.bf16.gmra.mxu0 %v3293
    %v4530 = vpop.f32.mrf.mxu0
    %v4531 = vadd.f32 %v4482, %v4530
    %v4532 = vpop.f32.mrf.mxu0
    %v4533 = vadd.f32 %v4484, %v4532
    %4534 = vmatmul.bf16.gmra.mxu0 %v3295
    %v4535 = vpop.f32.mrf.mxu0
    %v4536 = vadd.f32 %v4487, %v4535
    %v4537 = vpop.f32.mrf.mxu0
    %v4538 = vadd.f32 %v4489, %v4537
    %4539 = vdwg.mxu0
    %4540 = vmatpush.bf16.msra.mxu0 %v3758
    %4541 = vmatpush.bf16.msra.mxu0 %v3750
    %4542 = vmatpush.bf16.msra.mxu0 %v3742
    %4543 = vmatpush.bf16.msra.mxu0 %v3734
    %4544 = vmatpush.bf16.msra.mxu0 %v3726
    %4545 = vmatpush.bf16.msra.mxu0 %v3718
    %4546 = vmatpush.bf16.msra.mxu0 %v3710
    %4547 = vmatpush.bf16.msra.mxu0 %v3702
    %4548 = vmatmul.bf16.gmra.mxu0 %v3280
    %v4549 = vpop.f32.mrf.mxu0
    %v4550 = vadd.f32 %v3222, %v4549
    %v4551 = vpop.f32.mrf.mxu0
    %v4552 = vadd.f32 %v3222, %v4551
    %4553 = vmatmul.bf16.gmra.mxu0 %v3282
    %v4554 = vpop.f32.mrf.mxu0
    %v4555 = vadd.f32 %v3222, %v4554
    %v4556 = vpop.f32.mrf.mxu0
    %v4557 = vadd.f32 %v3222, %v4556
    %4558 = vmatmul.bf16.gmra.mxu0 %v3284
    %v4559 = vpop.f32.mrf.mxu0
    %v4560 = vadd.f32 %v3222, %v4559
    %v4561 = vpop.f32.mrf.mxu0
    %v4562 = vadd.f32 %v3222, %v4561
    %4563 = vmatmul.bf16.gmra.mxu0 %v3286
    %v4564 = vpop.f32.mrf.mxu0
    %v4565 = vadd.f32 %v3222, %v4564
    %v4566 = vpop.f32.mrf.mxu0
    %v4567 = vadd.f32 %v3222, %v4566
    %4568 = vmatmul.bf16.gmra.mxu0 %v3288
    %v4569 = vpop.f32.mrf.mxu0
    %v4570 = vadd.f32 %v3222, %v4569
    %v4571 = vpop.f32.mrf.mxu0
    %v4572 = vadd.f32 %v3222, %v4571
    %4573 = vmatmul.bf16.gmra.mxu0 %v3290
    %v4574 = vpop.f32.mrf.mxu0
    %v4575 = vadd.f32 %v3222, %v4574
    %v4576 = vpop.f32.mrf.mxu0
    %v4577 = vadd.f32 %v3222, %v4576
    %4578 = vmatmul.bf16.gmra.mxu0 %v3292
    %v4579 = vpop.f32.mrf.mxu0
    %v4580 = vadd.f32 %v3222, %v4579
    %v4581 = vpop.f32.mrf.mxu0
    %v4582 = vadd.f32 %v3222, %v4581
    %4583 = vmatmul.bf16.gmra.mxu0 %v3294
    %v4584 = vpop.f32.mrf.mxu0
    %v4585 = vadd.f32 %v3222, %v4584
    %v4586 = vpop.f32.mrf.mxu0
    %v4587 = vadd.f32 %v3222, %v4586
    %4588 = vdwg.mxu0
    %4589 = vmatpush.bf16.msra.mxu0 %v3822
    %4590 = vmatpush.bf16.msra.mxu0 %v3814
    %4591 = vmatpush.bf16.msra.mxu0 %v3806
    %4592 = vmatpush.bf16.msra.mxu0 %v3798
    %4593 = vmatpush.bf16.msra.mxu0 %v3790
    %4594 = vmatpush.bf16.msra.mxu0 %v3782
    %4595 = vmatpush.bf16.msra.mxu0 %v3774
    %4596 = vmatpush.bf16.msra.mxu0 %v3766
    %4597 = vmatmul.bf16.gmra.mxu0 %v3281
    %v4598 = vpop.f32.mrf.mxu0
    %v4599 = vadd.f32 %v4550, %v4598
    %v4600 = vpop.f32.mrf.mxu0
    %v4601 = vadd.f32 %v4552, %v4600
    %4602 = vmatmul.bf16.gmra.mxu0 %v3283
    %v4603 = vpop.f32.mrf.mxu0
    %v4604 = vadd.f32 %v4555, %v4603
    %v4605 = vpop.f32.mrf.mxu0
    %v4606 = vadd.f32 %v4557, %v4605
    %4607 = vmatmul.bf16.gmra.mxu0 %v3285
    %v4608 = vpop.f32.mrf.mxu0
    %v4609 = vadd.f32 %v4560, %v4608
    %v4610 = vpop.f32.mrf.mxu0
    %v4611 = vadd.f32 %v4562, %v4610
    %4612 = vmatmul.bf16.gmra.mxu0 %v3287
    %v4613 = vpop.f32.mrf.mxu0
    %v4614 = vadd.f32 %v4565, %v4613
    %v4615 = vpop.f32.mrf.mxu0
    %v4616 = vadd.f32 %v4567, %v4615
    %4617 = vmatmul.bf16.gmra.mxu0 %v3289
    %v4618 = vpop.f32.mrf.mxu0
    %v4619 = vadd.f32 %v4570, %v4618
    %v4620 = vpop.f32.mrf.mxu0
    %v4621 = vadd.f32 %v4572, %v4620
    %4622 = vmatmul.bf16.gmra.mxu0 %v3291
    %v4623 = vpop.f32.mrf.mxu0
    %v4624 = vadd.f32 %v4575, %v4623
    %v4625 = vpop.f32.mrf.mxu0
    %v4626 = vadd.f32 %v4577, %v4625
    %4627 = vmatmul.bf16.gmra.mxu0 %v3293
    %v4628 = vpop.f32.mrf.mxu0
    %v4629 = vadd.f32 %v4580, %v4628
    %v4630 = vpop.f32.mrf.mxu0
    %v4631 = vadd.f32 %v4582, %v4630
    %4632 = vmatmul.bf16.gmra.mxu0 %v3295
    %v4633 = vpop.f32.mrf.mxu0
    %v4634 = vadd.f32 %v4585, %v4633
    %v4635 = vpop.f32.mrf.mxu0
    %v4636 = vadd.f32 %v4587, %v4635
    %4637 = vdwg.mxu0
    %4638 = vmatpush.bf16.msra.mxu0 %v3759
    %4639 = vmatpush.bf16.msra.mxu0 %v3751
    %4640 = vmatpush.bf16.msra.mxu0 %v3743
    %4641 = vmatpush.bf16.msra.mxu0 %v3735
    %4642 = vmatpush.bf16.msra.mxu0 %v3727
    %4643 = vmatpush.bf16.msra.mxu0 %v3719
    %4644 = vmatpush.bf16.msra.mxu0 %v3711
    %4645 = vmatpush.bf16.msra.mxu0 %v3703
    %4646 = vmatmul.bf16.gmra.mxu0 %v3280
    %v4647 = vpop.f32.mrf.mxu0
    %v4648 = vadd.f32 %v3223, %v4647
    %v4649 = vpop.f32.mrf.mxu0
    %v4650 = vadd.f32 %v3223, %v4649
    %4651 = vmatmul.bf16.gmra.mxu0 %v3282
    %v4652 = vpop.f32.mrf.mxu0
    %v4653 = vadd.f32 %v3223, %v4652
    %v4654 = vpop.f32.mrf.mxu0
    %v4655 = vadd.f32 %v3223, %v4654
    %4656 = vmatmul.bf16.gmra.mxu0 %v3284
    %v4657 = vpop.f32.mrf.mxu0
    %v4658 = vadd.f32 %v3223, %v4657
    %v4659 = vpop.f32.mrf.mxu0
    %v4660 = vadd.f32 %v3223, %v4659
    %4661 = vmatmul.bf16.gmra.mxu0 %v3286
    %v4662 = vpop.f32.mrf.mxu0
    %v4663 = vadd.f32 %v3223, %v4662
    %v4664 = vpop.f32.mrf.mxu0
    %v4665 = vadd.f32 %v3223, %v4664
    %4666 = vmatmul.bf16.gmra.mxu0 %v3288
    %v4667 = vpop.f32.mrf.mxu0
    %v4668 = vadd.f32 %v3223, %v4667
    %v4669 = vpop.f32.mrf.mxu0
    %v4670 = vadd.f32 %v3223, %v4669
    %4671 = vmatmul.bf16.gmra.mxu0 %v3290
    %v4672 = vpop.f32.mrf.mxu0
    %v4673 = vadd.f32 %v3223, %v4672
    %v4674 = vpop.f32.mrf.mxu0
    %v4675 = vadd.f32 %v3223, %v4674
    %4676 = vmatmul.bf16.gmra.mxu0 %v3292
    %v4677 = vpop.f32.mrf.mxu0
    %v4678 = vadd.f32 %v3223, %v4677
    %v4679 = vpop.f32.mrf.mxu0
    %v4680 = vadd.f32 %v3223, %v4679
    %4681 = vmatmul.bf16.gmra.mxu0 %v3294
    %v4682 = vpop.f32.mrf.mxu0
    %v4683 = vadd.f32 %v3223, %v4682
    %v4684 = vpop.f32.mrf.mxu0
    %v4685 = vadd.f32 %v3223, %v4684
    %4686 = vdwg.mxu0
    %4687 = vmatpush.bf16.msra.mxu0 %v3823
    %4688 = vmatpush.bf16.msra.mxu0 %v3815
    %4689 = vmatpush.bf16.msra.mxu0 %v3807
    %4690 = vmatpush.bf16.msra.mxu0 %v3799
    %4691 = vmatpush.bf16.msra.mxu0 %v3791
    %4692 = vmatpush.bf16.msra.mxu0 %v3783
    %4693 = vmatpush.bf16.msra.mxu0 %v3775
    %4694 = vmatpush.bf16.msra.mxu0 %v3767
    %4695 = vmatmul.bf16.gmra.mxu0 %v3281
    %v4696 = vpop.f32.mrf.mxu0
    %v4697 = vadd.f32 %v4648, %v4696
    %v4698 = vpop.f32.mrf.mxu0
    %v4699 = vadd.f32 %v4650, %v4698
    %4700 = vmatmul.bf16.gmra.mxu0 %v3283
    %v4701 = vpop.f32.mrf.mxu0
    %v4702 = vadd.f32 %v4653, %v4701
    %v4703 = vpop.f32.mrf.mxu0
    %v4704 = vadd.f32 %v4655, %v4703
    %4705 = vmatmul.bf16.gmra.mxu0 %v3285
    %v4706 = vpop.f32.mrf.mxu0
    %v4707 = vadd.f32 %v4658, %v4706
    %v4708 = vpop.f32.mrf.mxu0
    %v4709 = vadd.f32 %v4660, %v4708
    %4710 = vmatmul.bf16.gmra.mxu0 %v3287
    %v4711 = vpop.f32.mrf.mxu0
    %v4712 = vadd.f32 %v4663, %v4711
    %v4713 = vpop.f32.mrf.mxu0
    %v4714 = vadd.f32 %v4665, %v4713
    %4715 = vmatmul.bf16.gmra.mxu0 %v3289
    %v4716 = vpop.f32.mrf.mxu0
    %v4717 = vadd.f32 %v4668, %v4716
    %v4718 = vpop.f32.mrf.mxu0
    %v4719 = vadd.f32 %v4670, %v4718
    %4720 = vmatmul.bf16.gmra.mxu0 %v3291
    %v4721 = vpop.f32.mrf.mxu0
    %v4722 = vadd.f32 %v4673, %v4721
    %v4723 = vpop.f32.mrf.mxu0
    %v4724 = vadd.f32 %v4675, %v4723
    %4725 = vmatmul.bf16.gmra.mxu0 %v3293
    %v4726 = vpop.f32.mrf.mxu0
    %v4727 = vadd.f32 %v4678, %v4726
    %v4728 = vpop.f32.mrf.mxu0
    %v4729 = vadd.f32 %v4680, %v4728
    %4730 = vmatmul.bf16.gmra.mxu0 %v3295
    %v4731 = vpop.f32.mrf.mxu0
    %v4732 = vadd.f32 %v4683, %v4731
    %v4733 = vpop.f32.mrf.mxu0
    %v4734 = vadd.f32 %v4685, %v4733
    %4735 = vdwg.mxu0
    %v4736 = vpack.c.bf16 %v4109, %v4011
    %v4737 = vpack.c.bf16 %v4305, %v4207
    %v4738 = vpack.c.bf16 %v4501, %v4403
    %v4739 = vpack.c.bf16 %v4697, %v4599
    %v4740 = vpack.c.bf16 %v4111, %v4013
    %v4741 = vpack.c.bf16 %v4307, %v4209
    %v4742 = vpack.c.bf16 %v4503, %v4405
    %v4743 = vpack.c.bf16 %v4699, %v4601
    %v4744 = vpack.c.bf16 %v4114, %v4016
    %v4745 = vpack.c.bf16 %v4310, %v4212
    %v4746 = vpack.c.bf16 %v4506, %v4408
    %v4747 = vpack.c.bf16 %v4702, %v4604
    %v4748 = vpack.c.bf16 %v4116, %v4018
    %v4749 = vpack.c.bf16 %v4312, %v4214
    %v4750 = vpack.c.bf16 %v4508, %v4410
    %v4751 = vpack.c.bf16 %v4704, %v4606
    %v4752 = vpack.c.bf16 %v4119, %v4021
    %v4753 = vpack.c.bf16 %v4315, %v4217
    %v4754 = vpack.c.bf16 %v4511, %v4413
    %v4755 = vpack.c.bf16 %v4707, %v4609
    %v4756 = vpack.c.bf16 %v4121, %v4023
    %v4757 = vpack.c.bf16 %v4317, %v4219
    %v4758 = vpack.c.bf16 %v4513, %v4415
    %v4759 = vpack.c.bf16 %v4709, %v4611
    %v4760 = vpack.c.bf16 %v4124, %v4026
    %v4761 = vpack.c.bf16 %v4320, %v4222
    %v4762 = vpack.c.bf16 %v4516, %v4418
    %v4763 = vpack.c.bf16 %v4712, %v4614
    %v4764 = vpack.c.bf16 %v4126, %v4028
    %v4765 = vpack.c.bf16 %v4322, %v4224
    %v4766 = vpack.c.bf16 %v4518, %v4420
    %v4767 = vpack.c.bf16 %v4714, %v4616
    %v4768 = vpack.c.bf16 %v4129, %v4031
    %v4769 = vpack.c.bf16 %v4325, %v4227
    %v4770 = vpack.c.bf16 %v4521, %v4423
    %v4771 = vpack.c.bf16 %v4717, %v4619
    %v4772 = vpack.c.bf16 %v4131, %v4033
    %v4773 = vpack.c.bf16 %v4327, %v4229
    %v4774 = vpack.c.bf16 %v4523, %v4425
    %v4775 = vpack.c.bf16 %v4719, %v4621
    %v4776 = vpack.c.bf16 %v4134, %v4036
    %v4777 = vpack.c.bf16 %v4330, %v4232
    %v4778 = vpack.c.bf16 %v4526, %v4428
    %v4779 = vpack.c.bf16 %v4722, %v4624
    %v4780 = vpack.c.bf16 %v4136, %v4038
    %v4781 = vpack.c.bf16 %v4332, %v4234
    %v4782 = vpack.c.bf16 %v4528, %v4430
    %v4783 = vpack.c.bf16 %v4724, %v4626
    %v4784 = vpack.c.bf16 %v4139, %v4041
    %v4785 = vpack.c.bf16 %v4335, %v4237
    %v4786 = vpack.c.bf16 %v4531, %v4433
    %v4787 = vpack.c.bf16 %v4727, %v4629
    %v4788 = vpack.c.bf16 %v4141, %v4043
    %v4789 = vpack.c.bf16 %v4337, %v4239
    %v4790 = vpack.c.bf16 %v4533, %v4435
    %v4791 = vpack.c.bf16 %v4729, %v4631
    %v4792 = vpack.c.bf16 %v4144, %v4046
    %v4793 = vpack.c.bf16 %v4340, %v4242
    %v4794 = vpack.c.bf16 %v4536, %v4438
    %v4795 = vpack.c.bf16 %v4732, %v4634
    %v4796 = vpack.c.bf16 %v4146, %v4048
    %v4797 = vpack.c.bf16 %v4342, %v4244
    %v4798 = vpack.c.bf16 %v4538, %v4440
    %v4799 = vpack.c.bf16 %v4734, %v4636
    %4800 = vst [vmem:[#allocation2] sm:$0xff] %v4736
    %4801 = vst [vmem:[#allocation2 + $0x8] sm:$0xff] %v4737
    %4802 = vst [vmem:[#allocation2 + $0x10] sm:$0xff] %v4738
    %4803 = vst [vmem:[#allocation2 + $0x18] sm:$0xff] %v4739
    %4804 = vst [vmem:[#allocation2 + $0x20] sm:$0xff] %v4740
    %4805 = vst [vmem:[#allocation2 + $0x28] sm:$0xff] %v4741
    %4806 = vst [vmem:[#allocation2 + $0x30] sm:$0xff] %v4742
    %4807 = vst [vmem:[#allocation2 + $0x38] sm:$0xff] %v4743
    %4808 = vst [vmem:[#allocation2 + $0x40] sm:$0xff] %v4744
    %4809 = vst [vmem:[#allocation2 + $0x48] sm:$0xff] %v4745
    %4810 = vst [vmem:[#allocation2 + $0x50] sm:$0xff] %v4746
    %4811 = vst [vmem:[#allocation2 + $0x58] sm:$0xff] %v4747
    %4812 = vst [vmem:[#allocation2 + $0x60] sm:$0xff] %v4748
    %4813 = vst [vmem:[#allocation2 + $0x68] sm:$0xff] %v4749
    %4814 = vst [vmem:[#allocation2 + $0x70] sm:$0xff] %v4750
    %4815 = vst [vmem:[#allocation2 + $0x78] sm:$0xff] %v4751
    %4816 = vst [vmem:[#allocation2 + $0x80] sm:$0xff] %v4752
    %4817 = vst [vmem:[#allocation2 + $0x88] sm:$0xff] %v4753
    %4818 = vst [vmem:[#allocation2 + $0x90] sm:$0xff] %v4754
    %4819 = vst [vmem:[#allocation2 + $0x98] sm:$0xff] %v4755
    %4820 = vst [vmem:[#allocation2 + $0xa0] sm:$0xff] %v4756
    %4821 = vst [vmem:[#allocation2 + $0xa8] sm:$0xff] %v4757
    %4822 = vst [vmem:[#allocation2 + $0xb0] sm:$0xff] %v4758
    %4823 = vst [vmem:[#allocation2 + $0xb8] sm:$0xff] %v4759
    %4824 = vst [vmem:[#allocation2 + $0xc0] sm:$0xff] %v4760
    %4825 = vst [vmem:[#allocation2 + $0xc8] sm:$0xff] %v4761
    %4826 = vst [vmem:[#allocation2 + $0xd0] sm:$0xff] %v4762
    %4827 = vst [vmem:[#allocation2 + $0xd8] sm:$0xff] %v4763
    %4828 = vst [vmem:[#allocation2 + $0xe0] sm:$0xff] %v4764
    %4829 = vst [vmem:[#allocation2 + $0xe8] sm:$0xff] %v4765
    %4830 = vst [vmem:[#allocation2 + $0xf0] sm:$0xff] %v4766
    %4831 = vst [vmem:[#allocation2 + $0xf8] sm:$0xff] %v4767
    %4832 = vst [vmem:[#allocation2 + $0x100] sm:$0xff] %v4768
    %4833 = vst [vmem:[#allocation2 + $0x108] sm:$0xff] %v4769
    %4834 = vst [vmem:[#allocation2 + $0x110] sm:$0xff] %v4770
    %4835 = vst [vmem:[#allocation2 + $0x118] sm:$0xff] %v4771
    %4836 = vst [vmem:[#allocation2 + $0x120] sm:$0xff] %v4772
    %4837 = vst [vmem:[#allocation2 + $0x128] sm:$0xff] %v4773
    %4838 = vst [vmem:[#allocation2 + $0x130] sm:$0xff] %v4774
    %4839 = vst [vmem:[#allocation2 + $0x138] sm:$0xff] %v4775
    %4840 = vst [vmem:[#allocation2 + $0x140] sm:$0xff] %v4776
    %4841 = vst [vmem:[#allocation2 + $0x148] sm:$0xff] %v4777
    %4842 = vst [vmem:[#allocation2 + $0x150] sm:$0xff] %v4778
    %4843 = vst [vmem:[#allocation2 + $0x158] sm:$0xff] %v4779
    %4844 = vst [vmem:[#allocation2 + $0x160] sm:$0xff] %v4780
    %4845 = vst [vmem:[#allocation2 + $0x168] sm:$0xff] %v4781
    %4846 = vst [vmem:[#allocation2 + $0x170] sm:$0xff] %v4782
    %4847 = vst [vmem:[#allocation2 + $0x178] sm:$0xff] %v4783
    %4848 = vst [vmem:[#allocation2 + $0x180] sm:$0xff] %v4784
    %4849 = vst [vmem:[#allocation2 + $0x188] sm:$0xff] %v4785
    %4850 = vst [vmem:[#allocation2 + $0x190] sm:$0xff] %v4786
    %4851 = vst [vmem:[#allocation2 + $0x198] sm:$0xff] %v4787
    %4852 = vst [vmem:[#allocation2 + $0x1a0] sm:$0xff] %v4788
    %4853 = vst [vmem:[#allocation2 + $0x1a8] sm:$0xff] %v4789
    %4854 = vst [vmem:[#allocation2 + $0x1b0] sm:$0xff] %v4790
    %4855 = vst [vmem:[#allocation2 + $0x1b8] sm:$0xff] %v4791
    %4856 = vst [vmem:[#allocation2 + $0x1c0] sm:$0xff] %v4792
    %4857 = vst [vmem:[#allocation2 + $0x1c8] sm:$0xff] %v4793
    %4858 = vst [vmem:[#allocation2 + $0x1d0] sm:$0xff] %v4794
    %4859 = vst [vmem:[#allocation2 + $0x1d8] sm:$0xff] %v4795
    %4860 = vst [vmem:[#allocation2 + $0x1e0] sm:$0xff] %v4796
    %4861 = vst [vmem:[#allocation2 + $0x1e8] sm:$0xff] %v4797
    %4862 = vst [vmem:[#allocation2 + $0x1f0] sm:$0xff] %v4798
    %4863 = vst [vmem:[#allocation2 + $0x1f8] sm:$0xff] %v4799
    %4864 = vst [vmem:[#allocation4] sm:$0xff] 0.0
    %4865 = vst [vmem:[#allocation4 + $0x8] sm:$0xff] 0.0
    %4866 = vst [vmem:[#allocation4 + $0x10] sm:$0xff] 0.0
    %4867 = vst [vmem:[#allocation4 + $0x18] sm:$0xff] 0.0
    %4868 = vst [vmem:[#allocation5] sm:$0xff] %v679
    %4869 = vst [vmem:[#allocation5 + $0x10] sm:$0xff] %v681
    %4870 = vst [vmem:[#allocation5 + $0x8] sm:$0xff] %v679
    %4871 = vst [vmem:[#allocation5 + $0x18] sm:$0xff] %v681
    // While loop
    $region104: #{tpu_custom_call.1} parent=1 // loop_pre_header
      _
    $region105: #{tpu_custom_call.1} parent=1 // loop_header
      %s4873 = sphi 0, %s4875
      %p4874 = scmp.ge.s32.totalorder %s4873, %s685
    $region106: #{tpu_custom_call.1} parent=1 // loop_header_branch
      %4877 = sbr.rel (%p4874) target = $region110
    $region107: #{tpu_custom_call.1} parent=1 // loop_body
      %s4878 = ssub.s32 %s685, 1
      %s4879 = ssub.s32 %s4878, %s4873
      %s4880 = smul.u32 %s4873, 16
      %s4881 = smul.u32 %s4879, 16
      %v4882 = vld [vmem:[#allocation4] sm:$0xff]
      %v4883 = vld [vmem:[#allocation4 + $0x8] sm:$0xff]
      %v4884 = vld [vmem:[#allocation4 + $0x10] sm:$0xff]
      %v4885 = vld [vmem:[#allocation4 + $0x18] sm:$0xff]
      %v4886 = vld [vmem:[#allocation5] sm:$0xff]
      %v4887 = vld [vmem:[#allocation5 + $0x8] sm:$0xff]
      %v4888 = vld [vmem:[#allocation5 + $0x10] sm:$0xff]
      %v4889 = vld [vmem:[#allocation5 + $0x18] sm:$0xff]
      %v4890 = vpack.c.bf16 %v4884, %v4882
      %v4891 = vpack.c.bf16 %v4885, %v4883
      %v4892 = vld [vmem:[#allocation18] sm:$0xff]
      %v4893 = vld [vmem:[#allocation18 + $0x8] sm:$0xff]
      %v4894 = vld [vmem:[#allocation18 + $0x10] sm:$0xff]
      %v4895 = vld [vmem:[#allocation18 + $0x18] sm:$0xff]
      %v4896 = vld [vmem:[#allocation18 + $0x20] sm:$0xff]
      %v4897 = vld [vmem:[#allocation18 + $0x28] sm:$0xff]
      %v4898 = vld [vmem:[#allocation18 + $0x30] sm:$0xff]
      %v4899 = vld [vmem:[#allocation18 + $0x38] sm:$0xff]
      %v4900 = vld [vmem:[#allocation18 + $0x40] sm:$0xff]
      %v4901 = vld [vmem:[#allocation18 + $0x48] sm:$0xff]
      %v4902 = vld [vmem:[#allocation18 + $0x50] sm:$0xff]
      %v4903 = vld [vmem:[#allocation18 + $0x58] sm:$0xff]
      %v4904 = vld [vmem:[#allocation18 + $0x60] sm:$0xff]
      %v4905 = vld [vmem:[#allocation18 + $0x68] sm:$0xff]
      %v4906 = vld [vmem:[#allocation18 + $0x70] sm:$0xff]
      %v4907 = vld [vmem:[#allocation18 + $0x78] sm:$0xff]
      %v4908 = vld [vmem:[#allocation18 + $0x80] sm:$0xff]
      %v4909 = vld [vmem:[#allocation18 + $0x88] sm:$0xff]
      %v4910 = vld [vmem:[#allocation18 + $0x90] sm:$0xff]
      %v4911 = vld [vmem:[#allocation18 + $0x98] sm:$0xff]
      %v4912 = vld [vmem:[#allocation18 + $0xa0] sm:$0xff]
      %v4913 = vld [vmem:[#allocation18 + $0xa8] sm:$0xff]
      %v4914 = vld [vmem:[#allocation18 + $0xb0] sm:$0xff]
      %v4915 = vld [vmem:[#allocation18 + $0xb8] sm:$0xff]
      %v4916 = vld [vmem:[#allocation18 + $0xc0] sm:$0xff]
      %v4917 = vld [vmem:[#allocation18 + $0xc8] sm:$0xff]
      %v4918 = vld [vmem:[#allocation18 + $0xd0] sm:$0xff]
      %v4919 = vld [vmem:[#allocation18 + $0xd8] sm:$0xff]
      %v4920 = vld [vmem:[#allocation18 + $0xe0] sm:$0xff]
      %v4921 = vld [vmem:[#allocation18 + $0xe8] sm:$0xff]
      %v4922 = vld [vmem:[#allocation18 + $0xf0] sm:$0xff]
      %v4923 = vld [vmem:[#allocation18 + $0xf8] sm:$0xff]
      %v4924 = vld [vmem:[#allocation18 + $0x100] sm:$0xff]
      %v4925 = vld [vmem:[#allocation18 + $0x108] sm:$0xff]
      %v4926 = vld [vmem:[#allocation18 + $0x110] sm:$0xff]
      %v4927 = vld [vmem:[#allocation18 + $0x118] sm:$0xff]
      %v4928 = vld [vmem:[#allocation18 + $0x120] sm:$0xff]
      %v4929 = vld [vmem:[#allocation18 + $0x128] sm:$0xff]
      %v4930 = vld [vmem:[#allocation18 + $0x130] sm:$0xff]
      %v4931 = vld [vmem:[#allocation18 + $0x138] sm:$0xff]
      %v4932 = vld [vmem:[#allocation18 + $0x140] sm:$0xff]
      %v4933 = vld [vmem:[#allocation18 + $0x148] sm:$0xff]
      %v4934 = vld [vmem:[#allocation18 + $0x150] sm:$0xff]
      %v4935 = vld [vmem:[#allocation18 + $0x158] sm:$0xff]
      %v4936 = vld [vmem:[#allocation18 + $0x160] sm:$0xff]
      %v4937 = vld [vmem:[#allocation18 + $0x168] sm:$0xff]
      %v4938 = vld [vmem:[#allocation18 + $0x170] sm:$0xff]
      %v4939 = vld [vmem:[#allocation18 + $0x178] sm:$0xff]
      %v4940 = vld [vmem:[#allocation18 + $0x180] sm:$0xff]
      %v4941 = vld [vmem:[#allocation18 + $0x188] sm:$0xff]
      %v4942 = vld [vmem:[#allocation18 + $0x190] sm:$0xff]
      %v4943 = vld [vmem:[#allocation18 + $0x198] sm:$0xff]
      %v4944 = vld [vmem:[#allocation18 + $0x1a0] sm:$0xff]
      %v4945 = vld [vmem:[#allocation18 + $0x1a8] sm:$0xff]
      %v4946 = vld [vmem:[#allocation18 + $0x1b0] sm:$0xff]
      %v4947 = vld [vmem:[#allocation18 + $0x1b8] sm:$0xff]
      %v4948 = vld [vmem:[#allocation18 + $0x1c0] sm:$0xff]
      %v4949 = vld [vmem:[#allocation18 + $0x1c8] sm:$0xff]
      %v4950 = vld [vmem:[#allocation18 + $0x1d0] sm:$0xff]
      %v4951 = vld [vmem:[#allocation18 + $0x1d8] sm:$0xff]
      %v4952 = vld [vmem:[#allocation18 + $0x1e0] sm:$0xff]
      %v4953 = vld [vmem:[#allocation18 + $0x1e8] sm:$0xff]
      %v4954 = vld [vmem:[#allocation18 + $0x1f0] sm:$0xff]
      %v4955 = vld [vmem:[#allocation18 + $0x1f8] sm:$0xff]
      %v4956 = vld [vmem:[#allocation18 + $0x200] sm:$0xff]
      %v4957 = vld [vmem:[#allocation18 + $0x208] sm:$0xff]
      %v4958 = vld [vmem:[#allocation18 + $0x210] sm:$0xff]
      %v4959 = vld [vmem:[#allocation18 + $0x218] sm:$0xff]
      %v4960 = vld [vmem:[#allocation18 + $0x220] sm:$0xff]
      %v4961 = vld [vmem:[#allocation18 + $0x228] sm:$0xff]
      %v4962 = vld [vmem:[#allocation18 + $0x230] sm:$0xff]
      %v4963 = vld [vmem:[#allocation18 + $0x238] sm:$0xff]
      %v4964 = vld [vmem:[#allocation18 + $0x240] sm:$0xff]
      %v4965 = vld [vmem:[#allocation18 + $0x248] sm:$0xff]
      %v4966 = vld [vmem:[#allocation18 + $0x250] sm:$0xff]
      %v4967 = vld [vmem:[#allocation18 + $0x258] sm:$0xff]
      %v4968 = vld [vmem:[#allocation18 + $0x260] sm:$0xff]
      %v4969 = vld [vmem:[#allocation18 + $0x268] sm:$0xff]
      %v4970 = vld [vmem:[#allocation18 + $0x270] sm:$0xff]
      %v4971 = vld [vmem:[#allocation18 + $0x278] sm:$0xff]
      %v4972 = vld [vmem:[#allocation18 + $0x280] sm:$0xff]
      %v4973 = vld [vmem:[#allocation18 + $0x288] sm:$0xff]
      %v4974 = vld [vmem:[#allocation18 + $0x290] sm:$0xff]
      %v4975 = vld [vmem:[#allocation18 + $0x298] sm:$0xff]
      %v4976 = vld [vmem:[#allocation18 + $0x2a0] sm:$0xff]
      %v4977 = vld [vmem:[#allocation18 + $0x2a8] sm:$0xff]
      %v4978 = vld [vmem:[#allocation18 + $0x2b0] sm:$0xff]
      %v4979 = vld [vmem:[#allocation18 + $0x2b8] sm:$0xff]
      %v4980 = vld [vmem:[#allocation18 + $0x2c0] sm:$0xff]
      %v4981 = vld [vmem:[#allocation18 + $0x2c8] sm:$0xff]
      %v4982 = vld [vmem:[#allocation18 + $0x2d0] sm:$0xff]
      %v4983 = vld [vmem:[#allocation18 + $0x2d8] sm:$0xff]
      %v4984 = vld [vmem:[#allocation18 + $0x2e0] sm:$0xff]
      %v4985 = vld [vmem:[#allocation18 + $0x2e8] sm:$0xff]
      %v4986 = vld [vmem:[#allocation18 + $0x2f0] sm:$0xff]
      %v4987 = vld [vmem:[#allocation18 + $0x2f8] sm:$0xff]
      %v4988 = vld [vmem:[#allocation18 + $0x300] sm:$0xff]
      %v4989 = vld [vmem:[#allocation18 + $0x308] sm:$0xff]
      %v4990 = vld [vmem:[#allocation18 + $0x310] sm:$0xff]
      %v4991 = vld [vmem:[#allocation18 + $0x318] sm:$0xff]
      %v4992 = vld [vmem:[#allocation18 + $0x320] sm:$0xff]
      %v4993 = vld [vmem:[#allocation18 + $0x328] sm:$0xff]
      %v4994 = vld [vmem:[#allocation18 + $0x330] sm:$0xff]
      %v4995 = vld [vmem:[#allocation18 + $0x338] sm:$0xff]
      %v4996 = vld [vmem:[#allocation18 + $0x340] sm:$0xff]
      %v4997 = vld [vmem:[#allocation18 + $0x348] sm:$0xff]
      %v4998 = vld [vmem:[#allocation18 + $0x350] sm:$0xff]
      %v4999 = vld [vmem:[#allocation18 + $0x358] sm:$0xff]
      %v5000 = vld [vmem:[#allocation18 + $0x360] sm:$0xff]
      %v5001 = vld [vmem:[#allocation18 + $0x368] sm:$0xff]
      %v5002 = vld [vmem:[#allocation18 + $0x370] sm:$0xff]
      %v5003 = vld [vmem:[#allocation18 + $0x378] sm:$0xff]
      %v5004 = vld [vmem:[#allocation18 + $0x380] sm:$0xff]
      %v5005 = vld [vmem:[#allocation18 + $0x388] sm:$0xff]
      %v5006 = vld [vmem:[#allocation18 + $0x390] sm:$0xff]
      %v5007 = vld [vmem:[#allocation18 + $0x398] sm:$0xff]
      %v5008 = vld [vmem:[#allocation18 + $0x3a0] sm:$0xff]
      %v5009 = vld [vmem:[#allocation18 + $0x3a8] sm:$0xff]
      %v5010 = vld [vmem:[#allocation18 + $0x3b0] sm:$0xff]
      %v5011 = vld [vmem:[#allocation18 + $0x3b8] sm:$0xff]
      %v5012 = vld [vmem:[#allocation18 + $0x3c0] sm:$0xff]
      %v5013 = vld [vmem:[#allocation18 + $0x3c8] sm:$0xff]
      %v5014 = vld [vmem:[#allocation18 + $0x3d0] sm:$0xff]
      %v5015 = vld [vmem:[#allocation18 + $0x3d8] sm:$0xff]
      %v5016 = vld [vmem:[#allocation18 + $0x3e0] sm:$0xff]
      %v5017 = vld [vmem:[#allocation18 + $0x3e8] sm:$0xff]
      %v5018 = vld [vmem:[#allocation18 + $0x3f0] sm:$0xff]
      %v5019 = vld [vmem:[#allocation18 + $0x3f8] sm:$0xff]
      %v5148 = vunpack.c.l.b16 %v4892
      %v5149 = vunpack.c.h.b16 %v4892
      %v5150 = vunpack.c.l.b16 %v4893
      %v5151 = vunpack.c.h.b16 %v4893
      %v5152 = vunpack.c.l.b16 %v4894
      %v5153 = vunpack.c.h.b16 %v4894
      %v5154 = vunpack.c.l.b16 %v4895
      %v5155 = vunpack.c.h.b16 %v4895
      %v5156 = vunpack.c.l.b16 %v4896
      %v5157 = vunpack.c.h.b16 %v4896
      %v5158 = vunpack.c.l.b16 %v4897
      %v5159 = vunpack.c.h.b16 %v4897
      %v5160 = vunpack.c.l.b16 %v4898
      %v5161 = vunpack.c.h.b16 %v4898
      %v5162 = vunpack.c.l.b16 %v4899
      %v5163 = vunpack.c.h.b16 %v4899
      %v5164 = vunpack.c.l.b16 %v4900
      %v5165 = vunpack.c.h.b16 %v4900
      %v5166 = vunpack.c.l.b16 %v4901
      %v5167 = vunpack.c.h.b16 %v4901
      %v5168 = vunpack.c.l.b16 %v4902
      %v5169 = vunpack.c.h.b16 %v4902
      %v5170 = vunpack.c.l.b16 %v4903
      %v5171 = vunpack.c.h.b16 %v4903
      %v5172 = vunpack.c.l.b16 %v4904
      %v5173 = vunpack.c.h.b16 %v4904
      %v5174 = vunpack.c.l.b16 %v4905
      %v5175 = vunpack.c.h.b16 %v4905
      %v5176 = vunpack.c.l.b16 %v4906
      %v5177 = vunpack.c.h.b16 %v4906
      %v5178 = vunpack.c.l.b16 %v4907
      %v5179 = vunpack.c.h.b16 %v4907
      %v5180 = vunpack.c.l.b16 %v4908
      %v5181 = vunpack.c.h.b16 %v4908
      %v5182 = vunpack.c.l.b16 %v4909
      %v5183 = vunpack.c.h.b16 %v4909
      %v5184 = vunpack.c.l.b16 %v4910
      %v5185 = vunpack.c.h.b16 %v4910
      %v5186 = vunpack.c.l.b16 %v4911
      %v5187 = vunpack.c.h.b16 %v4911
      %v5188 = vunpack.c.l.b16 %v4912
      %v5189 = vunpack.c.h.b16 %v4912
      %v5190 = vunpack.c.l.b16 %v4913
      %v5191 = vunpack.c.h.b16 %v4913
      %v5192 = vunpack.c.l.b16 %v4914
      %v5193 = vunpack.c.h.b16 %v4914
      %v5194 = vunpack.c.l.b16 %v4915
      %v5195 = vunpack.c.h.b16 %v4915
      %v5196 = vunpack.c.l.b16 %v4916
      %v5197 = vunpack.c.h.b16 %v4916
      %v5198 = vunpack.c.l.b16 %v4917
      %v5199 = vunpack.c.h.b16 %v4917
      %v5200 = vunpack.c.l.b16 %v4918
      %v5201 = vunpack.c.h.b16 %v4918
      %v5202 = vunpack.c.l.b16 %v4919
      %v5203 = vunpack.c.h.b16 %v4919
      %v5204 = vunpack.c.l.b16 %v4920
      %v5205 = vunpack.c.h.b16 %v4920
      %v5206 = vunpack.c.l.b16 %v4921
      %v5207 = vunpack.c.h.b16 %v4921
      %v5208 = vunpack.c.l.b16 %v4922
      %v5209 = vunpack.c.h.b16 %v4922
      %v5210 = vunpack.c.l.b16 %v4923
      %v5211 = vunpack.c.h.b16 %v4923
      %v5212 = vunpack.c.l.b16 %v4924
      %v5213 = vunpack.c.h.b16 %v4924
      %v5214 = vunpack.c.l.b16 %v4925
      %v5215 = vunpack.c.h.b16 %v4925
      %v5216 = vunpack.c.l.b16 %v4926
      %v5217 = vunpack.c.h.b16 %v4926
      %v5218 = vunpack.c.l.b16 %v4927
      %v5219 = vunpack.c.h.b16 %v4927
      %v5220 = vunpack.c.l.b16 %v4928
      %v5221 = vunpack.c.h.b16 %v4928
      %v5222 = vunpack.c.l.b16 %v4929
      %v5223 = vunpack.c.h.b16 %v4929
      %v5224 = vunpack.c.l.b16 %v4930
      %v5225 = vunpack.c.h.b16 %v4930
      %v5226 = vunpack.c.l.b16 %v4931
      %v5227 = vunpack.c.h.b16 %v4931
      %v5228 = vunpack.c.l.b16 %v4932
      %v5229 = vunpack.c.h.b16 %v4932
      %v5230 = vunpack.c.l.b16 %v4933
      %v5231 = vunpack.c.h.b16 %v4933
      %v5232 = vunpack.c.l.b16 %v4934
      %v5233 = vunpack.c.h.b16 %v4934
      %v5234 = vunpack.c.l.b16 %v4935
      %v5235 = vunpack.c.h.b16 %v4935
      %v5236 = vunpack.c.l.b16 %v4936
      %v5237 = vunpack.c.h.b16 %v4936
      %v5238 = vunpack.c.l.b16 %v4937
      %v5239 = vunpack.c.h.b16 %v4937
      %v5240 = vunpack.c.l.b16 %v4938
      %v5241 = vunpack.c.h.b16 %v4938
      %v5242 = vunpack.c.l.b16 %v4939
      %v5243 = vunpack.c.h.b16 %v4939
      %v5244 = vunpack.c.l.b16 %v4940
      %v5245 = vunpack.c.h.b16 %v4940
      %v5246 = vunpack.c.l.b16 %v4941
      %v5247 = vunpack.c.h.b16 %v4941
      %v5248 = vunpack.c.l.b16 %v4942
      %v5249 = vunpack.c.h.b16 %v4942
      %v5250 = vunpack.c.l.b16 %v4943
      %v5251 = vunpack.c.h.b16 %v4943
      %v5252 = vunpack.c.l.b16 %v4944
      %v5253 = vunpack.c.h.b16 %v4944
      %v5254 = vunpack.c.l.b16 %v4945
      %v5255 = vunpack.c.h.b16 %v4945
      %v5256 = vunpack.c.l.b16 %v4946
      %v5257 = vunpack.c.h.b16 %v4946
      %v5258 = vunpack.c.l.b16 %v4947
      %v5259 = vunpack.c.h.b16 %v4947
      %v5260 = vunpack.c.l.b16 %v4948
      %v5261 = vunpack.c.h.b16 %v4948
      %v5262 = vunpack.c.l.b16 %v4949
      %v5263 = vunpack.c.h.b16 %v4949
      %v5264 = vunpack.c.l.b16 %v4950
      %v5265 = vunpack.c.h.b16 %v4950
      %v5266 = vunpack.c.l.b16 %v4951
      %v5267 = vunpack.c.h.b16 %v4951
      %v5268 = vunpack.c.l.b16 %v4952
      %v5269 = vunpack.c.h.b16 %v4952
      %v5270 = vunpack.c.l.b16 %v4953
      %v5271 = vunpack.c.h.b16 %v4953
      %v5272 = vunpack.c.l.b16 %v4954
      %v5273 = vunpack.c.h.b16 %v4954
      %v5274 = vunpack.c.l.b16 %v4955
      %v5275 = vunpack.c.h.b16 %v4955
      %v5276 = vunpack.c.l.b16 %v4956
      %v5277 = vunpack.c.h.b16 %v4956
      %v5278 = vunpack.c.l.b16 %v4957
      %v5279 = vunpack.c.h.b16 %v4957
      %v5280 = vunpack.c.l.b16 %v4958
      %v5281 = vunpack.c.h.b16 %v4958
      %v5282 = vunpack.c.l.b16 %v4959
      %v5283 = vunpack.c.h.b16 %v4959
      %v5284 = vunpack.c.l.b16 %v4960
      %v5285 = vunpack.c.h.b16 %v4960
      %v5286 = vunpack.c.l.b16 %v4961
      %v5287 = vunpack.c.h.b16 %v4961
      %v5288 = vunpack.c.l.b16 %v4962
      %v5289 = vunpack.c.h.b16 %v4962
      %v5290 = vunpack.c.l.b16 %v4963
      %v5291 = vunpack.c.h.b16 %v4963
      %v5292 = vunpack.c.l.b16 %v4964
      %v5293 = vunpack.c.h.b16 %v4964
      %v5294 = vunpack.c.l.b16 %v4965
      %v5295 = vunpack.c.h.b16 %v4965
      %v5296 = vunpack.c.l.b16 %v4966
      %v5297 = vunpack.c.h.b16 %v4966
      %v5298 = vunpack.c.l.b16 %v4967
      %v5299 = vunpack.c.h.b16 %v4967
      %v5300 = vunpack.c.l.b16 %v4968
      %v5301 = vunpack.c.h.b16 %v4968
      %v5302 = vunpack.c.l.b16 %v4969
      %v5303 = vunpack.c.h.b16 %v4969
      %v5304 = vunpack.c.l.b16 %v4970
      %v5305 = vunpack.c.h.b16 %v4970
      %v5306 = vunpack.c.l.b16 %v4971
      %v5307 = vunpack.c.h.b16 %v4971
      %v5308 = vunpack.c.l.b16 %v4972
      %v5309 = vunpack.c.h.b16 %v4972
      %v5310 = vunpack.c.l.b16 %v4973
      %v5311 = vunpack.c.h.b16 %v4973
      %v5312 = vunpack.c.l.b16 %v4974
      %v5313 = vunpack.c.h.b16 %v4974
      %v5314 = vunpack.c.l.b16 %v4975
      %v5315 = vunpack.c.h.b16 %v4975
      %v5316 = vunpack.c.l.b16 %v4976
      %v5317 = vunpack.c.h.b16 %v4976
      %v5318 = vunpack.c.l.b16 %v4977
      %v5319 = vunpack.c.h.b16 %v4977
      %v5320 = vunpack.c.l.b16 %v4978
      %v5321 = vunpack.c.h.b16 %v4978
      %v5322 = vunpack.c.l.b16 %v4979
      %v5323 = vunpack.c.h.b16 %v4979
      %v5324 = vunpack.c.l.b16 %v4980
      %v5325 = vunpack.c.h.b16 %v4980
      %v5326 = vunpack.c.l.b16 %v4981
      %v5327 = vunpack.c.h.b16 %v4981
      %v5328 = vunpack.c.l.b16 %v4982
      %v5329 = vunpack.c.h.b16 %v4982
      %v5330 = vunpack.c.l.b16 %v4983
      %v5331 = vunpack.c.h.b16 %v4983
      %v5332 = vunpack.c.l.b16 %v4984
      %v5333 = vunpack.c.h.b16 %v4984
      %v5334 = vunpack.c.l.b16 %v4985
      %v5335 = vunpack.c.h.b16 %v4985
      %v5336 = vunpack.c.l.b16 %v4986
      %v5337 = vunpack.c.h.b16 %v4986
      %v5338 = vunpack.c.l.b16 %v4987
      %v5339 = vunpack.c.h.b16 %v4987
      %v5340 = vunpack.c.l.b16 %v4988
      %v5341 = vunpack.c.h.b16 %v4988
      %v5342 = vunpack.c.l.b16 %v4989
      %v5343 = vunpack.c.h.b16 %v4989
      %v5344 = vunpack.c.l.b16 %v4990
      %v5345 = vunpack.c.h.b16 %v4990
      %v5346 = vunpack.c.l.b16 %v4991
      %v5347 = vunpack.c.h.b16 %v4991
      %v5348 = vunpack.c.l.b16 %v4992
      %v5349 = vunpack.c.h.b16 %v4992
      %v5350 = vunpack.c.l.b16 %v4993
      %v5351 = vunpack.c.h.b16 %v4993
      %v5352 = vunpack.c.l.b16 %v4994
      %v5353 = vunpack.c.h.b16 %v4994
      %v5354 = vunpack.c.l.b16 %v4995
      %v5355 = vunpack.c.h.b16 %v4995
      %v5356 = vunpack.c.l.b16 %v4996
      %v5357 = vunpack.c.h.b16 %v4996
      %v5358 = vunpack.c.l.b16 %v4997
      %v5359 = vunpack.c.h.b16 %v4997
      %v5360 = vunpack.c.l.b16 %v4998
      %v5361 = vunpack.c.h.b16 %v4998
      %v5362 = vunpack.c.l.b16 %v4999
      %v5363 = vunpack.c.h.b16 %v4999
      %v5364 = vunpack.c.l.b16 %v5000
      %v5365 = vunpack.c.h.b16 %v5000
      %v5366 = vunpack.c.l.b16 %v5001
      %v5367 = vunpack.c.h.b16 %v5001
      %v5368 = vunpack.c.l.b16 %v5002
      %v5369 = vunpack.c.h.b16 %v5002
      %v5370 = vunpack.c.l.b16 %v5003
      %v5371 = vunpack.c.h.b16 %v5003
      %v5372 = vunpack.c.l.b16 %v5004
      %v5373 = vunpack.c.h.b16 %v5004
      %v5374 = vunpack.c.l.b16 %v5005
      %v5375 = vunpack.c.h.b16 %v5005
      %v5376 = vunpack.c.l.b16 %v5006
      %v5377 = vunpack.c.h.b16 %v5006
      %v5378 = vunpack.c.l.b16 %v5007
      %v5379 = vunpack.c.h.b16 %v5007
      %v5380 = vunpack.c.l.b16 %v5008
      %v5381 = vunpack.c.h.b16 %v5008
      %v5382 = vunpack.c.l.b16 %v5009
      %v5383 = vunpack.c.h.b16 %v5009
      %v5384 = vunpack.c.l.b16 %v5010
      %v5385 = vunpack.c.h.b16 %v5010
      %v5386 = vunpack.c.l.b16 %v5011
      %v5387 = vunpack.c.h.b16 %v5011
      %v5388 = vunpack.c.l.b16 %v5012
      %v5389 = vunpack.c.h.b16 %v5012
      %v5390 = vunpack.c.l.b16 %v5013
      %v5391 = vunpack.c.h.b16 %v5013
      %v5392 = vunpack.c.l.b16 %v5014
      %v5393 = vunpack.c.h.b16 %v5014
      %v5394 = vunpack.c.l.b16 %v5015
      %v5395 = vunpack.c.h.b16 %v5015
      %v5396 = vunpack.c.l.b16 %v5016
      %v5397 = vunpack.c.h.b16 %v5016
      %v5398 = vunpack.c.l.b16 %v5017
      %v5399 = vunpack.c.h.b16 %v5017
      %v5400 = vunpack.c.l.b16 %v5018
      %v5401 = vunpack.c.h.b16 %v5018
      %v5402 = vunpack.c.l.b16 %v5019
      %v5403 = vunpack.c.h.b16 %v5019
      %v5404 = vpack.c.b16 %v5156, %v5148
      %v5405 = vpack.c.b16 %v5157, %v5149
      %v5406 = vpack.c.b16 %v5158, %v5150
      %v5407 = vpack.c.b16 %v5159, %v5151
      %v5408 = vpack.c.b16 %v5160, %v5152
      %v5409 = vpack.c.b16 %v5161, %v5153
      %v5410 = vpack.c.b16 %v5162, %v5154
      %v5411 = vpack.c.b16 %v5163, %v5155
      %v5412 = vpack.c.b16 %v5172, %v5164
      %v5413 = vpack.c.b16 %v5173, %v5165
      %v5414 = vpack.c.b16 %v5174, %v5166
      %v5415 = vpack.c.b16 %v5175, %v5167
      %v5416 = vpack.c.b16 %v5176, %v5168
      %v5417 = vpack.c.b16 %v5177, %v5169
      %v5418 = vpack.c.b16 %v5178, %v5170
      %v5419 = vpack.c.b16 %v5179, %v5171
      %v5420 = vpack.c.b16 %v5188, %v5180
      %v5421 = vpack.c.b16 %v5189, %v5181
      %v5422 = vpack.c.b16 %v5190, %v5182
      %v5423 = vpack.c.b16 %v5191, %v5183
      %v5424 = vpack.c.b16 %v5192, %v5184
      %v5425 = vpack.c.b16 %v5193, %v5185
      %v5426 = vpack.c.b16 %v5194, %v5186
      %v5427 = vpack.c.b16 %v5195, %v5187
      %v5428 = vpack.c.b16 %v5204, %v5196
      %v5429 = vpack.c.b16 %v5205, %v5197
      %v5430 = vpack.c.b16 %v5206, %v5198
      %v5431 = vpack.c.b16 %v5207, %v5199
      %v5432 = vpack.c.b16 %v5208, %v5200
      %v5433 = vpack.c.b16 %v5209, %v5201
      %v5434 = vpack.c.b16 %v5210, %v5202
      %v5435 = vpack.c.b16 %v5211, %v5203
      %v5436 = vpack.c.b16 %v5220, %v5212
      %v5437 = vpack.c.b16 %v5221, %v5213
      %v5438 = vpack.c.b16 %v5222, %v5214
      %v5439 = vpack.c.b16 %v5223, %v5215
      %v5440 = vpack.c.b16 %v5224, %v5216
      %v5441 = vpack.c.b16 %v5225, %v5217
      %v5442 = vpack.c.b16 %v5226, %v5218
      %v5443 = vpack.c.b16 %v5227, %v5219
      %v5444 = vpack.c.b16 %v5236, %v5228
      %v5445 = vpack.c.b16 %v5237, %v5229
      %v5446 = vpack.c.b16 %v5238, %v5230
      %v5447 = vpack.c.b16 %v5239, %v5231
      %v5448 = vpack.c.b16 %v5240, %v5232
      %v5449 = vpack.c.b16 %v5241, %v5233
      %v5450 = vpack.c.b16 %v5242, %v5234
      %v5451 = vpack.c.b16 %v5243, %v5235
      %v5452 = vpack.c.b16 %v5252, %v5244
      %v5453 = vpack.c.b16 %v5253, %v5245
      %v5454 = vpack.c.b16 %v5254, %v5246
      %v5455 = vpack.c.b16 %v5255, %v5247
      %v5456 = vpack.c.b16 %v5256, %v5248
      %v5457 = vpack.c.b16 %v5257, %v5249
      %v5458 = vpack.c.b16 %v5258, %v5250
      %v5459 = vpack.c.b16 %v5259, %v5251
      %v5460 = vpack.c.b16 %v5268, %v5260
      %v5461 = vpack.c.b16 %v5269, %v5261
      %v5462 = vpack.c.b16 %v5270, %v5262
      %v5463 = vpack.c.b16 %v5271, %v5263
      %v5464 = vpack.c.b16 %v5272, %v5264
      %v5465 = vpack.c.b16 %v5273, %v5265
      %v5466 = vpack.c.b16 %v5274, %v5266
      %v5467 = vpack.c.b16 %v5275, %v5267
      %v5468 = vpack.c.b16 %v5284, %v5276
      %v5469 = vpack.c.b16 %v5285, %v5277
      %v5470 = vpack.c.b16 %v5286, %v5278
      %v5471 = vpack.c.b16 %v5287, %v5279
      %v5472 = vpack.c.b16 %v5288, %v5280
      %v5473 = vpack.c.b16 %v5289, %v5281
      %v5474 = vpack.c.b16 %v5290, %v5282
      %v5475 = vpack.c.b16 %v5291, %v5283
      %v5476 = vpack.c.b16 %v5300, %v5292
      %v5477 = vpack.c.b16 %v5301, %v5293
      %v5478 = vpack.c.b16 %v5302, %v5294
      %v5479 = vpack.c.b16 %v5303, %v5295
      %v5480 = vpack.c.b16 %v5304, %v5296
      %v5481 = vpack.c.b16 %v5305, %v5297
      %v5482 = vpack.c.b16 %v5306, %v5298
      %v5483 = vpack.c.b16 %v5307, %v5299
      %v5484 = vpack.c.b16 %v5316, %v5308
      %v5485 = vpack.c.b16 %v5317, %v5309
      %v5486 = vpack.c.b16 %v5318, %v5310
      %v5487 = vpack.c.b16 %v5319, %v5311
      %v5488 = vpack.c.b16 %v5320, %v5312
      %v5489 = vpack.c.b16 %v5321, %v5313
      %v5490 = vpack.c.b16 %v5322, %v5314
      %v5491 = vpack.c.b16 %v5323, %v5315
      %v5492 = vpack.c.b16 %v5332, %v5324
      %v5493 = vpack.c.b16 %v5333, %v5325
      %v5494 = vpack.c.b16 %v5334, %v5326
      %v5495 = vpack.c.b16 %v5335, %v5327
      %v5496 = vpack.c.b16 %v5336, %v5328
      %v5497 = vpack.c.b16 %v5337, %v5329
      %v5498 = vpack.c.b16 %v5338, %v5330
      %v5499 = vpack.c.b16 %v5339, %v5331
      %v5500 = vpack.c.b16 %v5348, %v5340
      %v5501 = vpack.c.b16 %v5349, %v5341
      %v5502 = vpack.c.b16 %v5350, %v5342
      %v5503 = vpack.c.b16 %v5351, %v5343
      %v5504 = vpack.c.b16 %v5352, %v5344
      %v5505 = vpack.c.b16 %v5353, %v5345
      %v5506 = vpack.c.b16 %v5354, %v5346
      %v5507 = vpack.c.b16 %v5355, %v5347
      %v5508 = vpack.c.b16 %v5364, %v5356
      %v5509 = vpack.c.b16 %v5365, %v5357
      %v5510 = vpack.c.b16 %v5366, %v5358
      %v5511 = vpack.c.b16 %v5367, %v5359
      %v5512 = vpack.c.b16 %v5368, %v5360
      %v5513 = vpack.c.b16 %v5369, %v5361
      %v5514 = vpack.c.b16 %v5370, %v5362
      %v5515 = vpack.c.b16 %v5371, %v5363
      %v5516 = vpack.c.b16 %v5380, %v5372
      %v5517 = vpack.c.b16 %v5381, %v5373
      %v5518 = vpack.c.b16 %v5382, %v5374
      %v5519 = vpack.c.b16 %v5383, %v5375
      %v5520 = vpack.c.b16 %v5384, %v5376
      %v5521 = vpack.c.b16 %v5385, %v5377
      %v5522 = vpack.c.b16 %v5386, %v5378
      %v5523 = vpack.c.b16 %v5387, %v5379
      %v5524 = vpack.c.b16 %v5396, %v5388
      %v5525 = vpack.c.b16 %v5397, %v5389
      %v5526 = vpack.c.b16 %v5398, %v5390
      %v5527 = vpack.c.b16 %v5399, %v5391
      %v5528 = vpack.c.b16 %v5400, %v5392
      %v5529 = vpack.c.b16 %v5401, %v5393
      %v5530 = vpack.c.b16 %v5402, %v5394
      %v5531 = vpack.c.b16 %v5403, %v5395
      %5660 = vmatpush.bf16.msra.mxu0 %v5460
      %5661 = vmatpush.bf16.msra.mxu0 %v5452
      %5662 = vmatpush.bf16.msra.mxu0 %v5444
      %5663 = vmatpush.bf16.msra.mxu0 %v5436
      %5664 = vmatpush.bf16.msra.mxu0 %v5428
      %5665 = vmatpush.bf16.msra.mxu0 %v5420
      %5666 = vmatpush.bf16.msra.mxu0 %v5412
      %5667 = vmatpush.bf16.msra.mxu0 %v5404
      %5668 = vmatmul.bf16.gmra.mxu0 %v4890
      %v5669 = vpop.f32.mrf.mxu0
      %v5670 = vadd.f32 0.0, %v5669
      %v5671 = vpop.f32.mrf.mxu0
      %v5672 = vadd.f32 0.0, %v5671
      %5673 = vdwg.mxu0
      %5674 = vmatpush.bf16.msra.mxu0 %v5524
      %5675 = vmatpush.bf16.msra.mxu0 %v5516
      %5676 = vmatpush.bf16.msra.mxu0 %v5508
      %5677 = vmatpush.bf16.msra.mxu0 %v5500
      %5678 = vmatpush.bf16.msra.mxu0 %v5492
      %5679 = vmatpush.bf16.msra.mxu0 %v5484
      %5680 = vmatpush.bf16.msra.mxu0 %v5476
      %5681 = vmatpush.bf16.msra.mxu0 %v5468
      %5682 = vmatmul.bf16.gmra.mxu0 %v4891
      %v5683 = vpop.f32.mrf.mxu0
      %v5684 = vadd.f32 %v5670, %v5683
      %v5685 = vpop.f32.mrf.mxu0
      %v5686 = vadd.f32 %v5672, %v5685
      %5687 = vdwg.mxu0
      %5688 = vmatpush.bf16.msra.mxu0 %v5461
      %5689 = vmatpush.bf16.msra.mxu0 %v5453
      %5690 = vmatpush.bf16.msra.mxu0 %v5445
      %5691 = vmatpush.bf16.msra.mxu0 %v5437
      %5692 = vmatpush.bf16.msra.mxu0 %v5429
      %5693 = vmatpush.bf16.msra.mxu0 %v5421
      %5694 = vmatpush.bf16.msra.mxu0 %v5413
      %5695 = vmatpush.bf16.msra.mxu0 %v5405
      %5696 = vmatmul.bf16.gmra.mxu0 %v4890
      %v5697 = vpop.f32.mrf.mxu0
      %v5698 = vadd.f32 0.0, %v5697
      %v5699 = vpop.f32.mrf.mxu0
      %v5700 = vadd.f32 0.0, %v5699
      %5701 = vdwg.mxu0
      %5702 = vmatpush.bf16.msra.mxu0 %v5525
      %5703 = vmatpush.bf16.msra.mxu0 %v5517
      %5704 = vmatpush.bf16.msra.mxu0 %v5509
      %5705 = vmatpush.bf16.msra.mxu0 %v5501
      %5706 = vmatpush.bf16.msra.mxu0 %v5493
      %5707 = vmatpush.bf16.msra.mxu0 %v5485
      %5708 = vmatpush.bf16.msra.mxu0 %v5477
      %5709 = vmatpush.bf16.msra.mxu0 %v5469
      %5710 = vmatmul.bf16.gmra.mxu0 %v4891
      %v5711 = vpop.f32.mrf.mxu0
      %v5712 = vadd.f32 %v5698, %v5711
      %v5713 = vpop.f32.mrf.mxu0
      %v5714 = vadd.f32 %v5700, %v5713
      %5715 = vdwg.mxu0
      %5716 = vmatpush.bf16.msra.mxu0 %v5462
      %5717 = vmatpush.bf16.msra.mxu0 %v5454
      %5718 = vmatpush.bf16.msra.mxu0 %v5446
      %5719 = vmatpush.bf16.msra.mxu0 %v5438
      %5720 = vmatpush.bf16.msra.mxu0 %v5430
      %5721 = vmatpush.bf16.msra.mxu0 %v5422
      %5722 = vmatpush.bf16.msra.mxu0 %v5414
      %5723 = vmatpush.bf16.msra.mxu0 %v5406
      %5724 = vmatmul.bf16.gmra.mxu0 %v4890
      %v5725 = vpop.f32.mrf.mxu0
      %v5726 = vadd.f32 0.0, %v5725
      %v5727 = vpop.f32.mrf.mxu0
      %v5728 = vadd.f32 0.0, %v5727
      %5729 = vdwg.mxu0
      %5730 = vmatpush.bf16.msra.mxu0 %v5526
      %5731 = vmatpush.bf16.msra.mxu0 %v5518
      %5732 = vmatpush.bf16.msra.mxu0 %v5510
      %5733 = vmatpush.bf16.msra.mxu0 %v5502
      %5734 = vmatpush.bf16.msra.mxu0 %v5494
      %5735 = vmatpush.bf16.msra.mxu0 %v5486
      %5736 = vmatpush.bf16.msra.mxu0 %v5478
      %5737 = vmatpush.bf16.msra.mxu0 %v5470
      %5738 = vmatmul.bf16.gmra.mxu0 %v4891
      %v5739 = vpop.f32.mrf.mxu0
      %v5740 = vadd.f32 %v5726, %v5739
      %v5741 = vpop.f32.mrf.mxu0
      %v5742 = vadd.f32 %v5728, %v5741
      %5743 = vdwg.mxu0
      %5744 = vmatpush.bf16.msra.mxu0 %v5463
      %5745 = vmatpush.bf16.msra.mxu0 %v5455
      %5746 = vmatpush.bf16.msra.mxu0 %v5447
      %5747 = vmatpush.bf16.msra.mxu0 %v5439
      %5748 = vmatpush.bf16.msra.mxu0 %v5431
      %5749 = vmatpush.bf16.msra.mxu0 %v5423
      %5750 = vmatpush.bf16.msra.mxu0 %v5415
      %5751 = vmatpush.bf16.msra.mxu0 %v5407
      %5752 = vmatmul.bf16.gmra.mxu0 %v4890
      %v5753 = vpop.f32.mrf.mxu0
      %v5754 = vadd.f32 0.0, %v5753
      %v5755 = vpop.f32.mrf.mxu0
      %v5756 = vadd.f32 0.0, %v5755
      %5757 = vdwg.mxu0
      %5758 = vmatpush.bf16.msra.mxu0 %v5527
      %5759 = vmatpush.bf16.msra.mxu0 %v5519
      %5760 = vmatpush.bf16.msra.mxu0 %v5511
      %5761 = vmatpush.bf16.msra.mxu0 %v5503
      %5762 = vmatpush.bf16.msra.mxu0 %v5495
      %5763 = vmatpush.bf16.msra.mxu0 %v5487
      %5764 = vmatpush.bf16.msra.mxu0 %v5479
      %5765 = vmatpush.bf16.msra.mxu0 %v5471
      %5766 = vmatmul.bf16.gmra.mxu0 %v4891
      %v5767 = vpop.f32.mrf.mxu0
      %v5768 = vadd.f32 %v5754, %v5767
      %v5769 = vpop.f32.mrf.mxu0
      %v5770 = vadd.f32 %v5756, %v5769
      %5771 = vdwg.mxu0
      %5772 = vmatpush.bf16.msra.mxu0 %v5464
      %5773 = vmatpush.bf16.msra.mxu0 %v5456
      %5774 = vmatpush.bf16.msra.mxu0 %v5448
      %5775 = vmatpush.bf16.msra.mxu0 %v5440
      %5776 = vmatpush.bf16.msra.mxu0 %v5432
      %5777 = vmatpush.bf16.msra.mxu0 %v5424
      %5778 = vmatpush.bf16.msra.mxu0 %v5416
      %5779 = vmatpush.bf16.msra.mxu0 %v5408
      %5780 = vmatmul.bf16.gmra.mxu0 %v4890
      %v5781 = vpop.f32.mrf.mxu0
      %v5782 = vadd.f32 0.0, %v5781
      %v5783 = vpop.f32.mrf.mxu0
      %v5784 = vadd.f32 0.0, %v5783
      %5785 = vdwg.mxu0
      %5786 = vmatpush.bf16.msra.mxu0 %v5528
      %5787 = vmatpush.bf16.msra.mxu0 %v5520
      %5788 = vmatpush.bf16.msra.mxu0 %v5512
      %5789 = vmatpush.bf16.msra.mxu0 %v5504
      %5790 = vmatpush.bf16.msra.mxu0 %v5496
      %5791 = vmatpush.bf16.msra.mxu0 %v5488
      %5792 = vmatpush.bf16.msra.mxu0 %v5480
      %5793 = vmatpush.bf16.msra.mxu0 %v5472
      %5794 = vmatmul.bf16.gmra.mxu0 %v4891
      %v5795 = vpop.f32.mrf.mxu0
      %v5796 = vadd.f32 %v5782, %v5795
      %v5797 = vpop.f32.mrf.mxu0
      %v5798 = vadd.f32 %v5784, %v5797
      %5799 = vdwg.mxu0
      %5800 = vmatpush.bf16.msra.mxu0 %v5465
      %5801 = vmatpush.bf16.msra.mxu0 %v5457
      %5802 = vmatpush.bf16.msra.mxu0 %v5449
      %5803 = vmatpush.bf16.msra.mxu0 %v5441
      %5804 = vmatpush.bf16.msra.mxu0 %v5433
      %5805 = vmatpush.bf16.msra.mxu0 %v5425
      %5806 = vmatpush.bf16.msra.mxu0 %v5417
      %5807 = vmatpush.bf16.msra.mxu0 %v5409
      %5808 = vmatmul.bf16.gmra.mxu0 %v4890
      %v5809 = vpop.f32.mrf.mxu0
      %v5810 = vadd.f32 0.0, %v5809
      %v5811 = vpop.f32.mrf.mxu0
      %v5812 = vadd.f32 0.0, %v5811
      %5813 = vdwg.mxu0
      %5814 = vmatpush.bf16.msra.mxu0 %v5529
      %5815 = vmatpush.bf16.msra.mxu0 %v5521
      %5816 = vmatpush.bf16.msra.mxu0 %v5513
      %5817 = vmatpush.bf16.msra.mxu0 %v5505
      %5818 = vmatpush.bf16.msra.mxu0 %v5497
      %5819 = vmatpush.bf16.msra.mxu0 %v5489
      %5820 = vmatpush.bf16.msra.mxu0 %v5481
      %5821 = vmatpush.bf16.msra.mxu0 %v5473
      %5822 = vmatmul.bf16.gmra.mxu0 %v4891
      %v5823 = vpop.f32.mrf.mxu0
      %v5824 = vadd.f32 %v5810, %v5823
      %v5825 = vpop.f32.mrf.mxu0
      %v5826 = vadd.f32 %v5812, %v5825
      %5827 = vdwg.mxu0
      %5828 = vmatpush.bf16.msra.mxu0 %v5466
      %5829 = vmatpush.bf16.msra.mxu0 %v5458
      %5830 = vmatpush.bf16.msra.mxu0 %v5450
      %5831 = vmatpush.bf16.msra.mxu0 %v5442
      %5832 = vmatpush.bf16.msra.mxu0 %v5434
      %5833 = vmatpush.bf16.msra.mxu0 %v5426
      %5834 = vmatpush.bf16.msra.mxu0 %v5418
      %5835 = vmatpush.bf16.msra.mxu0 %v5410
      %5836 = vmatmul.bf16.gmra.mxu0 %v4890
      %v5837 = vpop.f32.mrf.mxu0
      %v5838 = vadd.f32 0.0, %v5837
      %v5839 = vpop.f32.mrf.mxu0
      %v5840 = vadd.f32 0.0, %v5839
      %5841 = vdwg.mxu0
      %5842 = vmatpush.bf16.msra.mxu0 %v5530
      %5843 = vmatpush.bf16.msra.mxu0 %v5522
      %5844 = vmatpush.bf16.msra.mxu0 %v5514
      %5845 = vmatpush.bf16.msra.mxu0 %v5506
      %5846 = vmatpush.bf16.msra.mxu0 %v5498
      %5847 = vmatpush.bf16.msra.mxu0 %v5490
      %5848 = vmatpush.bf16.msra.mxu0 %v5482
      %5849 = vmatpush.bf16.msra.mxu0 %v5474
      %5850 = vmatmul.bf16.gmra.mxu0 %v4891
      %v5851 = vpop.f32.mrf.mxu0
      %v5852 = vadd.f32 %v5838, %v5851
      %v5853 = vpop.f32.mrf.mxu0
      %v5854 = vadd.f32 %v5840, %v5853
      %5855 = vdwg.mxu0
      %5856 = vmatpush.bf16.msra.mxu0 %v5467
      %5857 = vmatpush.bf16.msra.mxu0 %v5459
      %5858 = vmatpush.bf16.msra.mxu0 %v5451
      %5859 = vmatpush.bf16.msra.mxu0 %v5443
      %5860 = vmatpush.bf16.msra.mxu0 %v5435
      %5861 = vmatpush.bf16.msra.mxu0 %v5427
      %5862 = vmatpush.bf16.msra.mxu0 %v5419
      %5863 = vmatpush.bf16.msra.mxu0 %v5411
      %5864 = vmatmul.bf16.gmra.mxu0 %v4890
      %v5865 = vpop.f32.mrf.mxu0
      %v5866 = vadd.f32 0.0, %v5865
      %v5867 = vpop.f32.mrf.mxu0
      %v5868 = vadd.f32 0.0, %v5867
      %5869 = vdwg.mxu0
      %5870 = vmatpush.bf16.msra.mxu0 %v5531
      %5871 = vmatpush.bf16.msra.mxu0 %v5523
      %5872 = vmatpush.bf16.msra.mxu0 %v5515
      %5873 = vmatpush.bf16.msra.mxu0 %v5507
      %5874 = vmatpush.bf16.msra.mxu0 %v5499
      %5875 = vmatpush.bf16.msra.mxu0 %v5491
      %5876 = vmatpush.bf16.msra.mxu0 %v5483
      %5877 = vmatpush.bf16.msra.mxu0 %v5475
      %5878 = vmatmul.bf16.gmra.mxu0 %v4891
      %v5879 = vpop.f32.mrf.mxu0
      %v5880 = vadd.f32 %v5866, %v5879
      %v5881 = vpop.f32.mrf.mxu0
      %v5882 = vadd.f32 %v5868, %v5881
      %5883 = vdwg.mxu0
      %s5884 = sshra.s32 %s4880, 3
      %s5885 = sand.u32 %s4880, 7
      %s5886 = smul.u32 %s5884, 8
      %s5887 = smul.addr %s5886, 4
      %s5888 = scalar_lea.vmem [#allocation2], %s5887
      %v5889 = vld [vmem:[%s5888] sm:$0xff]
      %v5890 = vld [vmem:[%s5888 + $0x8] sm:$0xff]
      %v5891 = vld [vmem:[%s5888 + $0x20] sm:$0xff]
      %v5892 = vld [vmem:[%s5888 + $0x28] sm:$0xff]
      %v5893 = vunpack.c.l.bf16 %v5889
      %v5894 = vunpack.c.h.bf16 %v5889
      %v5895 = vunpack.c.l.bf16 %v5890
      %v5896 = vunpack.c.h.bf16 %v5890
      %v5897 = vunpack.c.l.bf16 %v5891
      %v5898 = vunpack.c.h.bf16 %v5891
      %v5899 = vunpack.c.l.bf16 %v5892
      %v5900 = vunpack.c.h.bf16 %v5892
      %v5901 = vadd.f32 %v5893, %v5684
      %v5902 = vadd.f32 %v5894, %v5712
      %v5903 = vadd.f32 %v5895, %v5740
      %v5904 = vadd.f32 %v5896, %v5768
      %v5905 = vadd.f32 %v5897, %v5686
      %v5906 = vadd.f32 %v5898, %v5714
      %v5907 = vadd.f32 %v5899, %v5742
      %v5908 = vadd.f32 %v5900, %v5770
      %s5909 = sshra.s32 %s4881, 3
      %s5910 = sand.u32 %s4881, 7
      %s5911 = smul.u32 %s5909, 8
      %s5912 = smul.addr %s5911, 4
      %s5913 = scalar_lea.vmem [#allocation2], %s5912
      %v5914 = vld [vmem:[%s5913 + $0x10] sm:$0xff]
      %v5915 = vld [vmem:[%s5913 + $0x18] sm:$0xff]
      %v5916 = vld [vmem:[%s5913 + $0x30] sm:$0xff]
      %v5917 = vld [vmem:[%s5913 + $0x38] sm:$0xff]
      %v5918 = vunpack.c.l.bf16 %v5914
      %v5919 = vunpack.c.h.bf16 %v5914
      %v5920 = vunpack.c.l.bf16 %v5915
      %v5921 = vunpack.c.h.bf16 %v5915
      %v5922 = vunpack.c.l.bf16 %v5916
      %v5923 = vunpack.c.h.bf16 %v5916
      %v5924 = vunpack.c.l.bf16 %v5917
      %v5925 = vunpack.c.h.bf16 %v5917
      %v5926 = vadd.f32 %v5918, %v5796
      %v5927 = vadd.f32 %v5919, %v5824
      %v5928 = vadd.f32 %v5920, %v5852
      %v5929 = vadd.f32 %v5921, %v5880
      %v5930 = vadd.f32 %v5922, %v5798
      %v5931 = vadd.f32 %v5923, %v5826
      %v5932 = vadd.f32 %v5924, %v5854
      %v5933 = vadd.f32 %v5925, %v5882
      %v5934 = vxor.u32 %v5901, 2147483648
      %v5935 = vxor.u32 %v5902, 2147483648
      %v5936 = vxor.u32 %v5905, 2147483648
      %v5937 = vxor.u32 %v5906, 2147483648
      %v5938 = vmul.f32 %v5934, 1.442695
      %v5939 = vpow.pop %v5938
      %v5940 = vmul.f32 %v5935, 1.442695
      %v5941 = vpow.pop %v5940
      %v5942 = vmul.f32 %v5936, 1.442695
      %v5943 = vpow.pop %v5942
      %v5944 = vmul.f32 %v5937, 1.442695
      %v5945 = vpow.pop %v5944
      %v5946 = vadd.f32 %v5939, 1.0
      %v5947 = vadd.f32 %v5941, 1.0
      %v5948 = vadd.f32 %v5943, 1.0
      %v5949 = vadd.f32 %v5945, 1.0
      %v5950 = vrcp.pop %v5946
      %v5951 = vmul.f32 %v5946, %v5950
      %v5952 = vsub.f32 1.0, %v5951
      %v5953 = vmul.f32 %v5950, %v5952
      %v5954 = vadd.f32 %v5950, %v5953
      %vm5955 = vweird.f32 %v5946
      %vm5956 = vweird.f32 %v5950
      %vm5957 = vmor %vm5955, %vm5956
      %v5958 = vsel %vm5957, %v5950, %v5954
      %v5959 = vand.u32 2147483647, %v5946
      %vm5960 = vcmp.eq.f32.partialorder %v5959, 8.507059e+37
      %v5961 = vand.u32 %v5946, 2147483648
      %v5962 = vor.u32 1.1754944e-38, %v5961
      %v5963 = vsel %vm5960, %v5962, %v5958
      %v5964 = vmul.f32 1.0, %v5963
      %v5965 = vrcp.pop %v5947
      %v5966 = vmul.f32 %v5947, %v5965
      %v5967 = vsub.f32 1.0, %v5966
      %v5968 = vmul.f32 %v5965, %v5967
      %v5969 = vadd.f32 %v5965, %v5968
      %vm5970 = vweird.f32 %v5947
      %vm5971 = vweird.f32 %v5965
      %vm5972 = vmor %vm5970, %vm5971
      %v5973 = vsel %vm5972, %v5965, %v5969
      %v5974 = vand.u32 2147483647, %v5947
      %vm5975 = vcmp.eq.f32.partialorder %v5974, 8.507059e+37
      %v5976 = vand.u32 %v5947, 2147483648
      %v5977 = vor.u32 1.1754944e-38, %v5976
      %v5978 = vsel %vm5975, %v5977, %v5973
      %v5979 = vmul.f32 1.0, %v5978
      %v5980 = vrcp.pop %v5948
      %v5981 = vmul.f32 %v5948, %v5980
      %v5982 = vsub.f32 1.0, %v5981
      %v5983 = vmul.f32 %v5980, %v5982
      %v5984 = vadd.f32 %v5980, %v5983
      %vm5985 = vweird.f32 %v5948
      %vm5986 = vweird.f32 %v5980
      %vm5987 = vmor %vm5985, %vm5986
      %v5988 = vsel %vm5987, %v5980, %v5984
      %v5989 = vand.u32 2147483647, %v5948
      %vm5990 = vcmp.eq.f32.partialorder %v5989, 8.507059e+37
      %v5991 = vand.u32 %v5948, 2147483648
      %v5992 = vor.u32 1.1754944e-38, %v5991
      %v5993 = vsel %vm5990, %v5992, %v5988
      %v5994 = vmul.f32 1.0, %v5993
      %v5995 = vrcp.pop %v5949
      %v5996 = vmul.f32 %v5949, %v5995
      %v5997 = vsub.f32 1.0, %v5996
      %v5998 = vmul.f32 %v5995, %v5997
      %v5999 = vadd.f32 %v5995, %v5998
      %vm6000 = vweird.f32 %v5949
      %vm6001 = vweird.f32 %v5995
      %vm6002 = vmor %vm6000, %vm6001
      %v6003 = vsel %vm6002, %v5995, %v5999
      %v6004 = vand.u32 2147483647, %v5949
      %vm6005 = vcmp.eq.f32.partialorder %v6004, 8.507059e+37
      %v6006 = vand.u32 %v5949, 2147483648
      %v6007 = vor.u32 1.1754944e-38, %v6006
      %v6008 = vsel %vm6005, %v6007, %v6003
      %v6009 = vmul.f32 1.0, %v6008
      %v6010 = vtanh.pop %v5903
      %v6011 = vtanh.pop %v5907
      %v6012 = vxor.u32 %v5904, 2147483648
      %v6013 = vxor.u32 %v5908, 2147483648
      %v6014 = vmul.f32 %v6012, 1.442695
      %v6015 = vpow.pop %v6014
      %v6016 = vmul.f32 %v6013, 1.442695
      %v6017 = vpow.pop %v6016
      %v6018 = vadd.f32 %v6015, 1.0
      %v6019 = vadd.f32 %v6017, 1.0
      %v6020 = vrcp.pop %v6018
      %v6021 = vmul.f32 %v6018, %v6020
      %v6022 = vsub.f32 1.0, %v6021
      %v6023 = vmul.f32 %v6020, %v6022
      %v6024 = vadd.f32 %v6020, %v6023
      %vm6025 = vweird.f32 %v6018
      %vm6026 = vweird.f32 %v6020
      %vm6027 = vmor %vm6025, %vm6026
      %v6028 = vsel %vm6027, %v6020, %v6024
      %v6029 = vand.u32 2147483647, %v6018
      %vm6030 = vcmp.eq.f32.partialorder %v6029, 8.507059e+37
      %v6031 = vand.u32 %v6018, 2147483648
      %v6032 = vor.u32 1.1754944e-38, %v6031
      %v6033 = vsel %vm6030, %v6032, %v6028
      %v6034 = vmul.f32 1.0, %v6033
      %v6035 = vrcp.pop %v6019
      %v6036 = vmul.f32 %v6019, %v6035
      %v6037 = vsub.f32 1.0, %v6036
      %v6038 = vmul.f32 %v6035, %v6037
      %v6039 = vadd.f32 %v6035, %v6038
      %vm6040 = vweird.f32 %v6019
      %vm6041 = vweird.f32 %v6035
      %vm6042 = vmor %vm6040, %vm6041
      %v6043 = vsel %vm6042, %v6035, %v6039
      %v6044 = vand.u32 2147483647, %v6019
      %vm6045 = vcmp.eq.f32.partialorder %v6044, 8.507059e+37
      %v6046 = vand.u32 %v6019, 2147483648
      %v6047 = vor.u32 1.1754944e-38, %v6046
      %v6048 = vsel %vm6045, %v6047, %v6043
      %v6049 = vmul.f32 1.0, %v6048
      %v6050 = vmul.f32 %v5979, %v4886
      %v6051 = vmul.f32 %v6009, %v4888
      %v6052 = vmul.f32 %v5964, %v6010
      %v6053 = vmul.f32 %v5994, %v6011
      %v6054 = vadd.f32 %v6050, %v6052
      %v6055 = vadd.f32 %v6051, %v6053
      %v6056 = vtanh.pop %v6054
      %v6057 = vtanh.pop %v6055
      %v6058 = vmul.f32 %v6034, %v6056
      %v6059 = vmul.f32 %v6049, %v6057
      %v6060 = vxor.u32 %v5926, 2147483648
      %v6061 = vxor.u32 %v5927, 2147483648
      %v6062 = vxor.u32 %v5930, 2147483648
      %v6063 = vxor.u32 %v5931, 2147483648
      %v6064 = vmul.f32 %v6060, 1.442695
      %v6065 = vpow.pop %v6064
      %v6066 = vmul.f32 %v6061, 1.442695
      %v6067 = vpow.pop %v6066
      %v6068 = vmul.f32 %v6062, 1.442695
      %v6069 = vpow.pop %v6068
      %v6070 = vmul.f32 %v6063, 1.442695
      %v6071 = vpow.pop %v6070
      %v6072 = vadd.f32 %v6065, 1.0
      %v6073 = vadd.f32 %v6067, 1.0
      %v6074 = vadd.f32 %v6069, 1.0
      %v6075 = vadd.f32 %v6071, 1.0
      %v6076 = vrcp.pop %v6072
      %v6077 = vmul.f32 %v6072, %v6076
      %v6078 = vsub.f32 1.0, %v6077
      %v6079 = vmul.f32 %v6076, %v6078
      %v6080 = vadd.f32 %v6076, %v6079
      %vm6081 = vweird.f32 %v6072
      %vm6082 = vweird.f32 %v6076
      %vm6083 = vmor %vm6081, %vm6082
      %v6084 = vsel %vm6083, %v6076, %v6080
      %v6085 = vand.u32 2147483647, %v6072
      %vm6086 = vcmp.eq.f32.partialorder %v6085, 8.507059e+37
      %v6087 = vand.u32 %v6072, 2147483648
      %v6088 = vor.u32 1.1754944e-38, %v6087
      %v6089 = vsel %vm6086, %v6088, %v6084
      %v6090 = vmul.f32 1.0, %v6089
      %v6091 = vrcp.pop %v6073
      %v6092 = vmul.f32 %v6073, %v6091
      %v6093 = vsub.f32 1.0, %v6092
      %v6094 = vmul.f32 %v6091, %v6093
      %v6095 = vadd.f32 %v6091, %v6094
      %vm6096 = vweird.f32 %v6073
      %vm6097 = vweird.f32 %v6091
      %vm6098 = vmor %vm6096, %vm6097
      %v6099 = vsel %vm6098, %v6091, %v6095
      %v6100 = vand.u32 2147483647, %v6073
      %vm6101 = vcmp.eq.f32.partialorder %v6100, 8.507059e+37
      %v6102 = vand.u32 %v6073, 2147483648
      %v6103 = vor.u32 1.1754944e-38, %v6102
      %v6104 = vsel %vm6101, %v6103, %v6099
      %v6105 = vmul.f32 1.0, %v6104
      %v6106 = vrcp.pop %v6074
      %v6107 = vmul.f32 %v6074, %v6106
      %v6108 = vsub.f32 1.0, %v6107
      %v6109 = vmul.f32 %v6106, %v6108
      %v6110 = vadd.f32 %v6106, %v6109
      %vm6111 = vweird.f32 %v6074
      %vm6112 = vweird.f32 %v6106
      %vm6113 = vmor %vm6111, %vm6112
      %v6114 = vsel %vm6113, %v6106, %v6110
      %v6115 = vand.u32 2147483647, %v6074
      %vm6116 = vcmp.eq.f32.partialorder %v6115, 8.507059e+37
      %v6117 = vand.u32 %v6074, 2147483648
      %v6118 = vor.u32 1.1754944e-38, %v6117
      %v6119 = vsel %vm6116, %v6118, %v6114
      %v6120 = vmul.f32 1.0, %v6119
      %v6121 = vrcp.pop %v6075
      %v6122 = vmul.f32 %v6075, %v6121
      %v6123 = vsub.f32 1.0, %v6122
      %v6124 = vmul.f32 %v6121, %v6123
      %v6125 = vadd.f32 %v6121, %v6124
      %vm6126 = vweird.f32 %v6075
      %vm6127 = vweird.f32 %v6121
      %vm6128 = vmor %vm6126, %vm6127
      %v6129 = vsel %vm6128, %v6121, %v6125
      %v6130 = vand.u32 2147483647, %v6075
      %vm6131 = vcmp.eq.f32.partialorder %v6130, 8.507059e+37
      %v6132 = vand.u32 %v6075, 2147483648
      %v6133 = vor.u32 1.1754944e-38, %v6132
      %v6134 = vsel %vm6131, %v6133, %v6129
      %v6135 = vmul.f32 1.0, %v6134
      %v6136 = vtanh.pop %v5928
      %v6137 = vtanh.pop %v5932
      %v6138 = vxor.u32 %v5929, 2147483648
      %v6139 = vxor.u32 %v5933, 2147483648
      %v6140 = vmul.f32 %v6138, 1.442695
      %v6141 = vpow.pop %v6140
      %v6142 = vmul.f32 %v6139, 1.442695
      %v6143 = vpow.pop %v6142
      %v6144 = vadd.f32 %v6141, 1.0
      %v6145 = vadd.f32 %v6143, 1.0
      %v6146 = vrcp.pop %v6144
      %v6147 = vmul.f32 %v6144, %v6146
      %v6148 = vsub.f32 1.0, %v6147
      %v6149 = vmul.f32 %v6146, %v6148
      %v6150 = vadd.f32 %v6146, %v6149
      %vm6151 = vweird.f32 %v6144
      %vm6152 = vweird.f32 %v6146
      %vm6153 = vmor %vm6151, %vm6152
      %v6154 = vsel %vm6153, %v6146, %v6150
      %v6155 = vand.u32 2147483647, %v6144
      %vm6156 = vcmp.eq.f32.partialorder %v6155, 8.507059e+37
      %v6157 = vand.u32 %v6144, 2147483648
      %v6158 = vor.u32 1.1754944e-38, %v6157
      %v6159 = vsel %vm6156, %v6158, %v6154
      %v6160 = vmul.f32 1.0, %v6159
      %v6161 = vrcp.pop %v6145
      %v6162 = vmul.f32 %v6145, %v6161
      %v6163 = vsub.f32 1.0, %v6162
      %v6164 = vmul.f32 %v6161, %v6163
      %v6165 = vadd.f32 %v6161, %v6164
      %vm6166 = vweird.f32 %v6145
      %vm6167 = vweird.f32 %v6161
      %vm6168 = vmor %vm6166, %vm6167
      %v6169 = vsel %vm6168, %v6161, %v6165
      %v6170 = vand.u32 2147483647, %v6145
      %vm6171 = vcmp.eq.f32.partialorder %v6170, 8.507059e+37
      %v6172 = vand.u32 %v6145, 2147483648
      %v6173 = vor.u32 1.1754944e-38, %v6172
      %v6174 = vsel %vm6171, %v6173, %v6169
      %v6175 = vmul.f32 1.0, %v6174
      %v6176 = vmul.f32 %v6105, %v4887
      %v6177 = vmul.f32 %v6135, %v4889
      %v6178 = vmul.f32 %v6090, %v6136
      %v6179 = vmul.f32 %v6120, %v6137
      %v6180 = vadd.f32 %v6176, %v6178
      %v6181 = vadd.f32 %v6177, %v6179
      %v6182 = vtanh.pop %v6180
      %v6183 = vtanh.pop %v6181
      %v6184 = vmul.f32 %v6160, %v6182
      %v6185 = vmul.f32 %v6175, %v6183
      %v6186 = vstv %s4873
      %vm6187 = vcmp.gt.s32.totalorder %v683, %v6186
      %vm6188 = vcmp.gt.s32.totalorder %v684, %v6186
      %v6189 = vstv %s4879
      %vm6190 = vcmp.gt.s32.totalorder %v683, %v6189
      %vm6191 = vcmp.gt.s32.totalorder %v684, %v6189
      %v6192 = vsel %vm6187, 1, 0
      %v6193 = vsel %vm6188, 1, 0
      %6194 = vset.pattern.permute.xlu0 0
      %6195 = vperm.xlu0 %6194, %v6192
      %v6196 = vpop.permute.xlu0 %6195
      %6197 = vset.pattern.permute.xlu0 0
      %6198 = vperm.xlu0 %6197, %v6193
      %v6199 = vpop.permute.xlu0 %6198
      %vm6200 = vcmp.eq.s32.totalorder %v6196, 1
      %vm6201 = vcmp.eq.s32.totalorder %v6199, 1
      %v6202 = vsel %vm6200, %v6058, %v4882
      %v6203 = vsel %vm6201, %v6059, %v4884
      %6204 = vst [vmem:[#allocation4] sm:$0xff] %v6202
      %6205 = vst [vmem:[#allocation4 + $0x10] sm:$0xff] %v6203
      %v6206 = vsel %vm6190, 1, 0
      %v6207 = vsel %vm6191, 1, 0
      %6208 = vset.pattern.permute.xlu0 0
      %6209 = vperm.xlu0 %6208, %v6206
      %v6210 = vpop.permute.xlu0 %6209
      %6211 = vset.pattern.permute.xlu0 0
      %6212 = vperm.xlu0 %6211, %v6207
      %v6213 = vpop.permute.xlu0 %6212
      %vm6214 = vcmp.eq.s32.totalorder %v6210, 1
      %vm6215 = vcmp.eq.s32.totalorder %v6213, 1
      %v6216 = vsel %vm6214, %v6184, %v4883
      %v6217 = vsel %vm6215, %v6185, %v4885
      %6218 = vst [vmem:[#allocation4 + $0x8] sm:$0xff] %v6216
      %6219 = vst [vmem:[#allocation4 + $0x18] sm:$0xff] %v6217
      %v6220 = vsel %vm6200, %v6054, %v4886
      %v6221 = vsel %vm6201, %v6055, %v4888
      %6222 = vst [vmem:[#allocation5] sm:$0xff] %v6220
      %6223 = vst [vmem:[#allocation5 + $0x10] sm:$0xff] %v6221
      %v6224 = vsel %vm6214, %v6180, %v4887
      %v6225 = vsel %vm6215, %v6181, %v4889
      %6226 = vst [vmem:[#allocation5 + $0x8] sm:$0xff] %v6224
      %6227 = vst [vmem:[#allocation5 + $0x18] sm:$0xff] %v6225
      %v6228 = vsel %vm6200, %v6058, 0.0
      %v6229 = vsel %vm6201, %v6059, 0.0
      %v6230 = vpack.c.bf16 %v6228, %v6228
      %v6231 = vpack.c.bf16 %v6229, %v6229
      %s6232 = smul.u32 %s5884, 2
      %s6233 = smul.addr %s6232, 4
      %s6234 = scalar_lea.vmem [#allocation3], %s6233
      %6235 = vst [vmem:[%s6234] sm:$0xf] %v6230
      %6236 = vst [vmem:[%s6234 + $0x8] sm:$0xf] %v6231
      %v6237 = vsel %vm6214, %v6184, 0.0
      %v6238 = vsel %vm6215, %v6185, 0.0
      %v6239 = vpack.c.bf16 %v6237, %v6237
      %v6240 = vpack.c.bf16 %v6238, %v6238
      %s6241 = smul.u32 %s5909, 2
      %s6242 = smul.addr %s6241, 4
      %s6243 = scalar_lea.vmem [#allocation3], %s6242
      %6244 = vst [vmem:[%s6243 + $0x4] sm:$0xf] %v6239
      %6245 = vst [vmem:[%s6243 + $0xc] sm:$0xf] %v6240
    $region108: #{tpu_custom_call.1} parent=1 // loop_footer
      %s4875 = sadd.s32 %s4873, 1
    $region109: #{tpu_custom_call.1} parent=1 // loop_footer_branch
      %4872 = sbr.rel target = $region105
    $region110: #{tpu_custom_call.1} parent=1 // loop_exit
      _
    %v6246 = vld [vmem:[#allocation3] sm:$0xff]
    %v6247 = vld [vmem:[#allocation3 + $0x8] sm:$0xff]
    %v6248 = vld [vmem:[#allocation3 + $0x10] sm:$0xff]
    %v6249 = vld [vmem:[#allocation3 + $0x18] sm:$0xff]
    %v6250 = vld [vmem:[#allocation3 + $0x20] sm:$0xff]
    %v6251 = vld [vmem:[#allocation3 + $0x28] sm:$0xff]
    %v6252 = vld [vmem:[#allocation3 + $0x30] sm:$0xff]
    %v6253 = vld [vmem:[#allocation3 + $0x38] sm:$0xff]
    %v6254 = vld [vmem:[#allocation3 + $0x40] sm:$0xff]
    %v6255 = vld [vmem:[#allocation3 + $0x48] sm:$0xff]
    %v6256 = vld [vmem:[#allocation3 + $0x50] sm:$0xff]
    %v6257 = vld [vmem:[#allocation3 + $0x58] sm:$0xff]
    %v6258 = vld [vmem:[#allocation3 + $0x60] sm:$0xff]
    %v6259 = vld [vmem:[#allocation3 + $0x68] sm:$0xff]
    %v6260 = vld [vmem:[#allocation3 + $0x70] sm:$0xff]
    %v6261 = vld [vmem:[#allocation3 + $0x78] sm:$0xff]
    %v6262 = vld [vmem:[#allocation19] sm:$0xff]
    %v6263 = vld [vmem:[#allocation19 + $0x8] sm:$0xff]
    %v6264 = vld [vmem:[#allocation19 + $0x10] sm:$0xff]
    %v6265 = vld [vmem:[#allocation19 + $0x18] sm:$0xff]
    %v6266 = vld [vmem:[#allocation19 + $0x20] sm:$0xff]
    %v6267 = vld [vmem:[#allocation19 + $0x28] sm:$0xff]
    %v6268 = vld [vmem:[#allocation19 + $0x30] sm:$0xff]
    %v6269 = vld [vmem:[#allocation19 + $0x38] sm:$0xff]
    %v6270 = vld [vmem:[#allocation19 + $0x40] sm:$0xff]
    %v6271 = vld [vmem:[#allocation19 + $0x48] sm:$0xff]
    %v6272 = vld [vmem:[#allocation19 + $0x50] sm:$0xff]
    %v6273 = vld [vmem:[#allocation19 + $0x58] sm:$0xff]
    %v6274 = vld [vmem:[#allocation19 + $0x60] sm:$0xff]
    %v6275 = vld [vmem:[#allocation19 + $0x68] sm:$0xff]
    %v6276 = vld [vmem:[#allocation19 + $0x70] sm:$0xff]
    %v6277 = vld [vmem:[#allocation19 + $0x78] sm:$0xff]
    %v6278 = vld [vmem:[#allocation19 + $0x80] sm:$0xff]
    %v6279 = vld [vmem:[#allocation19 + $0x88] sm:$0xff]
    %v6280 = vld [vmem:[#allocation19 + $0x90] sm:$0xff]
    %v6281 = vld [vmem:[#allocation19 + $0x98] sm:$0xff]
    %v6282 = vld [vmem:[#allocation19 + $0xa0] sm:$0xff]
    %v6283 = vld [vmem:[#allocation19 + $0xa8] sm:$0xff]
    %v6284 = vld [vmem:[#allocation19 + $0xb0] sm:$0xff]
    %v6285 = vld [vmem:[#allocation19 + $0xb8] sm:$0xff]
    %v6286 = vld [vmem:[#allocation19 + $0xc0] sm:$0xff]
    %v6287 = vld [vmem:[#allocation19 + $0xc8] sm:$0xff]
    %v6288 = vld [vmem:[#allocation19 + $0xd0] sm:$0xff]
    %v6289 = vld [vmem:[#allocation19 + $0xd8] sm:$0xff]
    %v6290 = vld [vmem:[#allocation19 + $0xe0] sm:$0xff]
    %v6291 = vld [vmem:[#allocation19 + $0xe8] sm:$0xff]
    %v6292 = vld [vmem:[#allocation19 + $0xf0] sm:$0xff]
    %v6293 = vld [vmem:[#allocation19 + $0xf8] sm:$0xff]
    %v6294 = vld [vmem:[%s13] sm:$0x3]
    %v6296 = vperm.slane %v6294, 0
    %v6297 = vperm.slane %v6294, 1
    %v6316 = vunpack.c.l.b16 %v6246
    %v6317 = vunpack.c.h.b16 %v6246
    %v6318 = vunpack.c.l.b16 %v6247
    %v6319 = vunpack.c.h.b16 %v6247
    %v6320 = vunpack.c.l.b16 %v6248
    %v6321 = vunpack.c.h.b16 %v6248
    %v6322 = vunpack.c.l.b16 %v6249
    %v6323 = vunpack.c.h.b16 %v6249
    %v6324 = vunpack.c.l.b16 %v6250
    %v6325 = vunpack.c.h.b16 %v6250
    %v6326 = vunpack.c.l.b16 %v6251
    %v6327 = vunpack.c.h.b16 %v6251
    %v6328 = vunpack.c.l.b16 %v6252
    %v6329 = vunpack.c.h.b16 %v6252
    %v6330 = vunpack.c.l.b16 %v6253
    %v6331 = vunpack.c.h.b16 %v6253
    %v6332 = vunpack.c.l.b16 %v6254
    %v6333 = vunpack.c.h.b16 %v6254
    %v6334 = vunpack.c.l.b16 %v6255
    %v6335 = vunpack.c.h.b16 %v6255
    %v6336 = vunpack.c.l.b16 %v6256
    %v6337 = vunpack.c.h.b16 %v6256
    %v6338 = vunpack.c.l.b16 %v6257
    %v6339 = vunpack.c.h.b16 %v6257
    %v6340 = vunpack.c.l.b16 %v6258
    %v6341 = vunpack.c.h.b16 %v6258
    %v6342 = vunpack.c.l.b16 %v6259
    %v6343 = vunpack.c.h.b16 %v6259
    %v6344 = vunpack.c.l.b16 %v6260
    %v6345 = vunpack.c.h.b16 %v6260
    %v6346 = vunpack.c.l.b16 %v6261
    %v6347 = vunpack.c.h.b16 %v6261
    %v6348 = vpack.c.b16 %v6318, %v6316
    %v6349 = vpack.c.b16 %v6319, %v6317
    %v6350 = vpack.c.b16 %v6322, %v6320
    %v6351 = vpack.c.b16 %v6323, %v6321
    %v6352 = vpack.c.b16 %v6326, %v6324
    %v6353 = vpack.c.b16 %v6327, %v6325
    %v6354 = vpack.c.b16 %v6330, %v6328
    %v6355 = vpack.c.b16 %v6331, %v6329
    %v6356 = vpack.c.b16 %v6334, %v6332
    %v6357 = vpack.c.b16 %v6335, %v6333
    %v6358 = vpack.c.b16 %v6338, %v6336
    %v6359 = vpack.c.b16 %v6339, %v6337
    %v6360 = vpack.c.b16 %v6342, %v6340
    %v6361 = vpack.c.b16 %v6343, %v6341
    %v6362 = vpack.c.b16 %v6346, %v6344
    %v6363 = vpack.c.b16 %v6347, %v6345
    %v6412 = vunpack.c.l.b16 %v6262
    %v6413 = vunpack.c.h.b16 %v6262
    %v6414 = vunpack.c.l.b16 %v6263
    %v6415 = vunpack.c.h.b16 %v6263
    %v6416 = vunpack.c.l.b16 %v6264
    %v6417 = vunpack.c.h.b16 %v6264
    %v6418 = vunpack.c.l.b16 %v6265
    %v6419 = vunpack.c.h.b16 %v6265
    %v6420 = vunpack.c.l.b16 %v6266
    %v6421 = vunpack.c.h.b16 %v6266
    %v6422 = vunpack.c.l.b16 %v6267
    %v6423 = vunpack.c.h.b16 %v6267
    %v6424 = vunpack.c.l.b16 %v6268
    %v6425 = vunpack.c.h.b16 %v6268
    %v6426 = vunpack.c.l.b16 %v6269
    %v6427 = vunpack.c.h.b16 %v6269
    %v6428 = vunpack.c.l.b16 %v6270
    %v6429 = vunpack.c.h.b16 %v6270
    %v6430 = vunpack.c.l.b16 %v6271
    %v6431 = vunpack.c.h.b16 %v6271
    %v6432 = vunpack.c.l.b16 %v6272
    %v6433 = vunpack.c.h.b16 %v6272
    %v6434 = vunpack.c.l.b16 %v6273
    %v6435 = vunpack.c.h.b16 %v6273
    %v6436 = vunpack.c.l.b16 %v6274
    %v6437 = vunpack.c.h.b16 %v6274
    %v6438 = vunpack.c.l.b16 %v6275
    %v6439 = vunpack.c.h.b16 %v6275
    %v6440 = vunpack.c.l.b16 %v6276
    %v6441 = vunpack.c.h.b16 %v6276
    %v6442 = vunpack.c.l.b16 %v6277
    %v6443 = vunpack.c.h.b16 %v6277
    %v6444 = vunpack.c.l.b16 %v6278
    %v6445 = vunpack.c.h.b16 %v6278
    %v6446 = vunpack.c.l.b16 %v6279
    %v6447 = vunpack.c.h.b16 %v6279
    %v6448 = vunpack.c.l.b16 %v6280
    %v6449 = vunpack.c.h.b16 %v6280
    %v6450 = vunpack.c.l.b16 %v6281
    %v6451 = vunpack.c.h.b16 %v6281
    %v6452 = vunpack.c.l.b16 %v6282
    %v6453 = vunpack.c.h.b16 %v6282
    %v6454 = vunpack.c.l.b16 %v6283
    %v6455 = vunpack.c.h.b16 %v6283
    %v6456 = vunpack.c.l.b16 %v6284
    %v6457 = vunpack.c.h.b16 %v6284
    %v6458 = vunpack.c.l.b16 %v6285
    %v6459 = vunpack.c.h.b16 %v6285
    %v6460 = vunpack.c.l.b16 %v6286
    %v6461 = vunpack.c.h.b16 %v6286
    %v6462 = vunpack.c.l.b16 %v6287
    %v6463 = vunpack.c.h.b16 %v6287
    %v6464 = vunpack.c.l.b16 %v6288
    %v6465 = vunpack.c.h.b16 %v6288
    %v6466 = vunpack.c.l.b16 %v6289
    %v6467 = vunpack.c.h.b16 %v6289
    %v6468 = vunpack.c.l.b16 %v6290
    %v6469 = vunpack.c.h.b16 %v6290
    %v6470 = vunpack.c.l.b16 %v6291
    %v6471 = vunpack.c.h.b16 %v6291
    %v6472 = vunpack.c.l.b16 %v6292
    %v6473 = vunpack.c.h.b16 %v6292
    %v6474 = vunpack.c.l.b16 %v6293
    %v6475 = vunpack.c.h.b16 %v6293
    %v6476 = vpack.c.b16 %v6414, %v6412
    %v6477 = vpack.c.b16 %v6415, %v6413
    %v6478 = vpack.c.b16 %v6418, %v6416
    %v6479 = vpack.c.b16 %v6419, %v6417
    %v6480 = vpack.c.b16 %v6422, %v6420
    %v6481 = vpack.c.b16 %v6423, %v6421
    %v6482 = vpack.c.b16 %v6426, %v6424
    %v6483 = vpack.c.b16 %v6427, %v6425
    %v6484 = vpack.c.b16 %v6430, %v6428
    %v6485 = vpack.c.b16 %v6431, %v6429
    %v6486 = vpack.c.b16 %v6434, %v6432
    %v6487 = vpack.c.b16 %v6435, %v6433
    %v6488 = vpack.c.b16 %v6438, %v6436
    %v6489 = vpack.c.b16 %v6439, %v6437
    %v6490 = vpack.c.b16 %v6442, %v6440
    %v6491 = vpack.c.b16 %v6443, %v6441
    %v6492 = vpack.c.b16 %v6446, %v6444
    %v6493 = vpack.c.b16 %v6447, %v6445
    %v6494 = vpack.c.b16 %v6450, %v6448
    %v6495 = vpack.c.b16 %v6451, %v6449
    %v6496 = vpack.c.b16 %v6454, %v6452
    %v6497 = vpack.c.b16 %v6455, %v6453
    %v6498 = vpack.c.b16 %v6458, %v6456
    %v6499 = vpack.c.b16 %v6459, %v6457
    %v6500 = vpack.c.b16 %v6462, %v6460
    %v6501 = vpack.c.b16 %v6463, %v6461
    %v6502 = vpack.c.b16 %v6466, %v6464
    %v6503 = vpack.c.b16 %v6467, %v6465
    %v6504 = vpack.c.b16 %v6470, %v6468
    %v6505 = vpack.c.b16 %v6471, %v6469
    %v6506 = vpack.c.b16 %v6474, %v6472
    %v6507 = vpack.c.b16 %v6475, %v6473
    %6540 = vmatpush.bf16.msra.mxu0 %v6490
    %6541 = vmatpush.bf16.msra.mxu0 %v6488
    %6542 = vmatpush.bf16.msra.mxu0 %v6486
    %6543 = vmatpush.bf16.msra.mxu0 %v6484
    %6544 = vmatpush.bf16.msra.mxu0 %v6482
    %6545 = vmatpush.bf16.msra.mxu0 %v6480
    %6546 = vmatpush.bf16.msra.mxu0 %v6478
    %6547 = vmatpush.bf16.msra.mxu0 %v6476
    %6548 = vmatmul.bf16.gmra.mxu0 %v6348
    %v6549 = vpop.f32.mrf.mxu0
    %v6550 = vadd.f32 %v6296, %v6549
    %v6551 = vpop.f32.mrf.mxu0
    %v6552 = vadd.f32 %v6296, %v6551
    %6553 = vmatmul.bf16.gmra.mxu0 %v6350
    %v6554 = vpop.f32.mrf.mxu0
    %v6555 = vadd.f32 %v6296, %v6554
    %v6556 = vpop.f32.mrf.mxu0
    %v6557 = vadd.f32 %v6296, %v6556
    %6558 = vmatmul.bf16.gmra.mxu0 %v6352
    %v6559 = vpop.f32.mrf.mxu0
    %v6560 = vadd.f32 %v6296, %v6559
    %v6561 = vpop.f32.mrf.mxu0
    %v6562 = vadd.f32 %v6296, %v6561
    %6563 = vmatmul.bf16.gmra.mxu0 %v6354
    %v6564 = vpop.f32.mrf.mxu0
    %v6565 = vadd.f32 %v6296, %v6564
    %v6566 = vpop.f32.mrf.mxu0
    %v6567 = vadd.f32 %v6296, %v6566
    %6568 = vmatmul.bf16.gmra.mxu0 %v6356
    %v6569 = vpop.f32.mrf.mxu0
    %v6570 = vadd.f32 %v6296, %v6569
    %v6571 = vpop.f32.mrf.mxu0
    %v6572 = vadd.f32 %v6296, %v6571
    %6573 = vmatmul.bf16.gmra.mxu0 %v6358
    %v6574 = vpop.f32.mrf.mxu0
    %v6575 = vadd.f32 %v6296, %v6574
    %v6576 = vpop.f32.mrf.mxu0
    %v6577 = vadd.f32 %v6296, %v6576
    %6578 = vmatmul.bf16.gmra.mxu0 %v6360
    %v6579 = vpop.f32.mrf.mxu0
    %v6580 = vadd.f32 %v6296, %v6579
    %v6581 = vpop.f32.mrf.mxu0
    %v6582 = vadd.f32 %v6296, %v6581
    %6583 = vmatmul.bf16.gmra.mxu0 %v6362
    %v6584 = vpop.f32.mrf.mxu0
    %v6585 = vadd.f32 %v6296, %v6584
    %v6586 = vpop.f32.mrf.mxu0
    %v6587 = vadd.f32 %v6296, %v6586
    %6588 = vdwg.mxu0
    %6589 = vmatpush.bf16.msra.mxu0 %v6506
    %6590 = vmatpush.bf16.msra.mxu0 %v6504
    %6591 = vmatpush.bf16.msra.mxu0 %v6502
    %6592 = vmatpush.bf16.msra.mxu0 %v6500
    %6593 = vmatpush.bf16.msra.mxu0 %v6498
    %6594 = vmatpush.bf16.msra.mxu0 %v6496
    %6595 = vmatpush.bf16.msra.mxu0 %v6494
    %6596 = vmatpush.bf16.msra.mxu0 %v6492
    %6597 = vmatmul.bf16.gmra.mxu0 %v6349
    %v6598 = vpop.f32.mrf.mxu0
    %v6599 = vadd.f32 %v6550, %v6598
    %v6600 = vpop.f32.mrf.mxu0
    %v6601 = vadd.f32 %v6552, %v6600
    %6602 = vmatmul.bf16.gmra.mxu0 %v6351
    %v6603 = vpop.f32.mrf.mxu0
    %v6604 = vadd.f32 %v6555, %v6603
    %v6605 = vpop.f32.mrf.mxu0
    %v6606 = vadd.f32 %v6557, %v6605
    %6607 = vmatmul.bf16.gmra.mxu0 %v6353
    %v6608 = vpop.f32.mrf.mxu0
    %v6609 = vadd.f32 %v6560, %v6608
    %v6610 = vpop.f32.mrf.mxu0
    %v6611 = vadd.f32 %v6562, %v6610
    %6612 = vmatmul.bf16.gmra.mxu0 %v6355
    %v6613 = vpop.f32.mrf.mxu0
    %v6614 = vadd.f32 %v6565, %v6613
    %v6615 = vpop.f32.mrf.mxu0
    %v6616 = vadd.f32 %v6567, %v6615
    %6617 = vmatmul.bf16.gmra.mxu0 %v6357
    %v6618 = vpop.f32.mrf.mxu0
    %v6619 = vadd.f32 %v6570, %v6618
    %v6620 = vpop.f32.mrf.mxu0
    %v6621 = vadd.f32 %v6572, %v6620
    %6622 = vmatmul.bf16.gmra.mxu0 %v6359
    %v6623 = vpop.f32.mrf.mxu0
    %v6624 = vadd.f32 %v6575, %v6623
    %v6625 = vpop.f32.mrf.mxu0
    %v6626 = vadd.f32 %v6577, %v6625
    %6627 = vmatmul.bf16.gmra.mxu0 %v6361
    %v6628 = vpop.f32.mrf.mxu0
    %v6629 = vadd.f32 %v6580, %v6628
    %v6630 = vpop.f32.mrf.mxu0
    %v6631 = vadd.f32 %v6582, %v6630
    %6632 = vmatmul.bf16.gmra.mxu0 %v6363
    %v6633 = vpop.f32.mrf.mxu0
    %v6634 = vadd.f32 %v6585, %v6633
    %v6635 = vpop.f32.mrf.mxu0
    %v6636 = vadd.f32 %v6587, %v6635
    %6637 = vdwg.mxu0
    %6638 = vmatpush.bf16.msra.mxu0 %v6491
    %6639 = vmatpush.bf16.msra.mxu0 %v6489
    %6640 = vmatpush.bf16.msra.mxu0 %v6487
    %6641 = vmatpush.bf16.msra.mxu0 %v6485
    %6642 = vmatpush.bf16.msra.mxu0 %v6483
    %6643 = vmatpush.bf16.msra.mxu0 %v6481
    %6644 = vmatpush.bf16.msra.mxu0 %v6479
    %6645 = vmatpush.bf16.msra.mxu0 %v6477
    %6646 = vmatmul.bf16.gmra.mxu0 %v6348
    %v6647 = vpop.f32.mrf.mxu0
    %v6648 = vadd.f32 %v6297, %v6647
    %v6649 = vpop.f32.mrf.mxu0
    %v6650 = vadd.f32 %v6297, %v6649
    %6651 = vmatmul.bf16.gmra.mxu0 %v6350
    %v6652 = vpop.f32.mrf.mxu0
    %v6653 = vadd.f32 %v6297, %v6652
    %v6654 = vpop.f32.mrf.mxu0
    %v6655 = vadd.f32 %v6297, %v6654
    %6656 = vmatmul.bf16.gmra.mxu0 %v6352
    %v6657 = vpop.f32.mrf.mxu0
    %v6658 = vadd.f32 %v6297, %v6657
    %v6659 = vpop.f32.mrf.mxu0
    %v6660 = vadd.f32 %v6297, %v6659
    %6661 = vmatmul.bf16.gmra.mxu0 %v6354
    %v6662 = vpop.f32.mrf.mxu0
    %v6663 = vadd.f32 %v6297, %v6662
    %v6664 = vpop.f32.mrf.mxu0
    %v6665 = vadd.f32 %v6297, %v6664
    %6666 = vmatmul.bf16.gmra.mxu0 %v6356
    %v6667 = vpop.f32.mrf.mxu0
    %v6668 = vadd.f32 %v6297, %v6667
    %v6669 = vpop.f32.mrf.mxu0
    %v6670 = vadd.f32 %v6297, %v6669
    %6671 = vmatmul.bf16.gmra.mxu0 %v6358
    %v6672 = vpop.f32.mrf.mxu0
    %v6673 = vadd.f32 %v6297, %v6672
    %v6674 = vpop.f32.mrf.mxu0
    %v6675 = vadd.f32 %v6297, %v6674
    %6676 = vmatmul.bf16.gmra.mxu0 %v6360
    %v6677 = vpop.f32.mrf.mxu0
    %v6678 = vadd.f32 %v6297, %v6677
    %v6679 = vpop.f32.mrf.mxu0
    %v6680 = vadd.f32 %v6297, %v6679
    %6681 = vmatmul.bf16.gmra.mxu0 %v6362
    %v6682 = vpop.f32.mrf.mxu0
    %v6683 = vadd.f32 %v6297, %v6682
    %v6684 = vpop.f32.mrf.mxu0
    %v6685 = vadd.f32 %v6297, %v6684
    %6686 = vdwg.mxu0
    %6687 = vmatpush.bf16.msra.mxu0 %v6507
    %6688 = vmatpush.bf16.msra.mxu0 %v6505
    %6689 = vmatpush.bf16.msra.mxu0 %v6503
    %6690 = vmatpush.bf16.msra.mxu0 %v6501
    %6691 = vmatpush.bf16.msra.mxu0 %v6499
    %6692 = vmatpush.bf16.msra.mxu0 %v6497
    %6693 = vmatpush.bf16.msra.mxu0 %v6495
    %6694 = vmatpush.bf16.msra.mxu0 %v6493
    %6695 = vmatmul.bf16.gmra.mxu0 %v6349
    %v6696 = vpop.f32.mrf.mxu0
    %v6697 = vadd.f32 %v6648, %v6696
    %v6698 = vpop.f32.mrf.mxu0
    %v6699 = vadd.f32 %v6650, %v6698
    %6700 = vmatmul.bf16.gmra.mxu0 %v6351
    %v6701 = vpop.f32.mrf.mxu0
    %v6702 = vadd.f32 %v6653, %v6701
    %v6703 = vpop.f32.mrf.mxu0
    %v6704 = vadd.f32 %v6655, %v6703
    %6705 = vmatmul.bf16.gmra.mxu0 %v6353
    %v6706 = vpop.f32.mrf.mxu0
    %v6707 = vadd.f32 %v6658, %v6706
    %v6708 = vpop.f32.mrf.mxu0
    %v6709 = vadd.f32 %v6660, %v6708
    %6710 = vmatmul.bf16.gmra.mxu0 %v6355
    %v6711 = vpop.f32.mrf.mxu0
    %v6712 = vadd.f32 %v6663, %v6711
    %v6713 = vpop.f32.mrf.mxu0
    %v6714 = vadd.f32 %v6665, %v6713
    %6715 = vmatmul.bf16.gmra.mxu0 %v6357
    %v6716 = vpop.f32.mrf.mxu0
    %v6717 = vadd.f32 %v6668, %v6716
    %v6718 = vpop.f32.mrf.mxu0
    %v6719 = vadd.f32 %v6670, %v6718
    %6720 = vmatmul.bf16.gmra.mxu0 %v6359
    %v6721 = vpop.f32.mrf.mxu0
    %v6722 = vadd.f32 %v6673, %v6721
    %v6723 = vpop.f32.mrf.mxu0
    %v6724 = vadd.f32 %v6675, %v6723
    %6725 = vmatmul.bf16.gmra.mxu0 %v6361
    %v6726 = vpop.f32.mrf.mxu0
    %v6727 = vadd.f32 %v6678, %v6726
    %v6728 = vpop.f32.mrf.mxu0
    %v6729 = vadd.f32 %v6680, %v6728
    %6730 = vmatmul.bf16.gmra.mxu0 %v6363
    %v6731 = vpop.f32.mrf.mxu0
    %v6732 = vadd.f32 %v6683, %v6731
    %v6733 = vpop.f32.mrf.mxu0
    %v6734 = vadd.f32 %v6685, %v6733
    %6735 = vdwg.mxu0
    %6736 = vst [vmem:[#allocation21] sm:$0xff] %v6599
    %6737 = vst [vmem:[#allocation21 + $0x8] sm:$0xff] %v6697
    %6738 = vst [vmem:[#allocation21 + $0x10] sm:$0xff] %v6601
    %6739 = vst [vmem:[#allocation21 + $0x18] sm:$0xff] %v6699
    %6740 = vst [vmem:[#allocation21 + $0x20] sm:$0xff] %v6604
    %6741 = vst [vmem:[#allocation21 + $0x28] sm:$0xff] %v6702
    %6742 = vst [vmem:[#allocation21 + $0x30] sm:$0xff] %v6606
    %6743 = vst [vmem:[#allocation21 + $0x38] sm:$0xff] %v6704
    %6744 = vst [vmem:[#allocation21 + $0x40] sm:$0xff] %v6609
    %6745 = vst [vmem:[#allocation21 + $0x48] sm:$0xff] %v6707
    %6746 = vst [vmem:[#allocation21 + $0x50] sm:$0xff] %v6611
    %6747 = vst [vmem:[#allocation21 + $0x58] sm:$0xff] %v6709
    %6748 = vst [vmem:[#allocation21 + $0x60] sm:$0xff] %v6614
    %6749 = vst [vmem:[#allocation21 + $0x68] sm:$0xff] %v6712
    %6750 = vst [vmem:[#allocation21 + $0x70] sm:$0xff] %v6616
    %6751 = vst [vmem:[#allocation21 + $0x78] sm:$0xff] %v6714
    %6752 = vst [vmem:[#allocation21 + $0x80] sm:$0xff] %v6619
    %6753 = vst [vmem:[#allocation21 + $0x88] sm:$0xff] %v6717
    %6754 = vst [vmem:[#allocation21 + $0x90] sm:$0xff] %v6621
    %6755 = vst [vmem:[#allocation21 + $0x98] sm:$0xff] %v6719
    %6756 = vst [vmem:[#allocation21 + $0xa0] sm:$0xff] %v6624
    %6757 = vst [vmem:[#allocation21 + $0xa8] sm:$0xff] %v6722
    %6758 = vst [vmem:[#allocation21 + $0xb0] sm:$0xff] %v6626
    %6759 = vst [vmem:[#allocation21 + $0xb8] sm:$0xff] %v6724
    %6760 = vst [vmem:[#allocation21 + $0xc0] sm:$0xff] %v6629
    %6761 = vst [vmem:[#allocation21 + $0xc8] sm:$0xff] %v6727
    %6762 = vst [vmem:[#allocation21 + $0xd0] sm:$0xff] %v6631
    %6763 = vst [vmem:[#allocation21 + $0xd8] sm:$0xff] %v6729
    %6764 = vst [vmem:[#allocation21 + $0xe0] sm:$0xff] %v6634
    %6765 = vst [vmem:[#allocation21 + $0xe8] sm:$0xff] %v6732
    %6766 = vst [vmem:[#allocation21 + $0xf0] sm:$0xff] %v6636
    %6767 = vst [vmem:[#allocation21 + $0xf8] sm:$0xff] %v6734
    // Predicated region
    $region111: #{tpu_custom_call.1} parent=1 // pred_check
      _
    $region112: #{tpu_custom_call.1} parent=1 // pred_check_branch
      %6769 = sbr.rel (0) target = $region114
    $region113: #{tpu_custom_call.1} parent=1 // pred_region
      %6771 = vsyncadd [#allocation9], 0
      %s6772 = sshll.u32 [#allocation21], 4
      %s6773 = int_to_ptr.vmem [resolvable:$true] %s6772
      %s6774 = sshll.u32 %s14, 4
      %s6775 = int_to_ptr.hbm [resolvable:$true] %s6774
      %6780 = dma.vmem_to_hbm [thread:$0]  %s6773, 4096, %s6775, [#allocation9], 256, 256, 16
    $region114: #{tpu_custom_call.1} parent=1 // pred_fallthru
      _
    // Predicated region
    $region115: #{tpu_custom_call.1} parent=1 // pred_check
      _
    $region116: #{tpu_custom_call.1} parent=1 // pred_check_branch
      %6782 = sbr.rel (0) target = $region118
    $region117: #{tpu_custom_call.1} parent=1 // pred_region
      %6784 = dma.done [#allocation9], 4096
    $region118: #{tpu_custom_call.1} parent=1 // pred_fallthru
      _
    %6785 = vsyncpa [#allocation8], 1
    %6786 = vsyncpa [#allocation11], 1
    %6787 = vsyncpa [#allocation14], 1
    %6788 = vsyncpa [#allocation17], 1
    %6789 = vsyncpa [#allocation20], 1
    %6790 = vsyncpa [#allocation9], 1

</llo_original>
